<compile_context>
chip_gen: v5e
topology: v5e:2x2
jax: 0.10.0
libtpu: 0.0.40
codegen_flags: <defaults>
</compile_context>

<pallas_src>
import functools

import jax
import jax.numpy as jnp
from jax.experimental import pallas as pl
from jax.experimental.pallas import tpu as pltpu


# ----------------------------------------------------------------------------
# Fused ResNetBlock kernel (one batch element per grid step)
# ----------------------------------------------------------------------------
def _resnet_block_kernel(x_ref, w1_ref, w2_ref, o_ref, pad_ref, patch_ref,
                         *, h, w, c, eps):
    """x_ref    : (1, h, w, c)        f32   unpadded NHWC input
       w1_ref   : (9*c, c)            bf16  conv1 weights, im2col-folded
       w2_ref   : (9*c, c)            bf16  conv2 weights, im2col-folded
       o_ref    : (1, h, w, c)        f32   block output
       pad_ref  : (h+2, w+2, c)       bf16  reflection-padded activation scratch
       patch_ref: (h*w, 9*c)          bf16  im2col patch scratch
    """
    hw = h * w

    def reflect_pad_write(img):
        # img: (h, w, c) bf16 -> pad_ref, PyTorch ReflectionPad2d(1) semantics.
        pad_ref[1:h + 1, 1:w + 1, :] = img
        pad_ref[0:1, 1:w + 1, :] = img[1:2]                    # top row
        pad_ref[h + 1:h + 2, 1:w + 1, :] = img[h - 2:h - 1]    # bottom row
        pad_ref[:, 0:1, :] = pad_ref[:, 2:3, :]                # left col (+corners)
        pad_ref[:, w + 1:w + 2, :] = pad_ref[:, w - 1:w, :]    # right col (+corners)

    def conv3x3(w_ref):
        # Build the bf16 im2col patch once, then a single K = 9*c MXU matmul
        # with f32 accumulation (no per-tap accumulator round trips).
        for kh in range(3):
            for kw in range(3):
                t = kh * 3 + kw
                patch_ref[:, t * c:(t + 1) * c] = (
                    pad_ref[kh:kh + h, kw:kw + w, :].reshape(hw, c))
        return jnp.dot(patch_ref[...], w_ref[...],
                       preferred_element_type=jnp.float32)     # (hw, c) f32

    def inst_norm(y):
        # Two-pass statistics (more stable than E[x^2]-mean^2); biased var;
        # eps inside rsqrt — matches PyTorch InstanceNorm2d(affine=False).
        mean = jnp.mean(y, axis=0, keepdims=True)
        yc = y - mean
        var = jnp.mean(yc * yc, axis=0, keepdims=True)
        return yc * jax.lax.rsqrt(var + eps)

    # ---- conv1 + InstanceNorm + ReLU (intermediate never leaves VMEM) ----
    reflect_pad_write(x_ref[0].astype(jnp.bfloat16))
    h1 = jnp.maximum(inst_norm(conv3x3(w1_ref)), 0.0)          # (hw, c) f32

    # ---- in-kernel ReflectionPad of the intermediate, conv2 + IN + residual --
    reflect_pad_write(h1.reshape(h, w, c).astype(jnp.bfloat16))
    out = inst_norm(conv3x3(w2_ref)) + x_ref[0].reshape(hw, c)  # residual in f32
    o_ref[...] = out.reshape(1, h, w, c)


# ----------------------------------------------------------------------------
# Wrapper (public interface is NCHW / OIHW, like the PyTorch module)
# ----------------------------------------------------------------------------
def resnet_block_pallas(x_nchw, w1_oihw, b1, w2_oihw, b2, *, eps=1e-5):
    n, c, hh, ww = x_nchw.shape
    del b1, b2  # exact no-op: conv bias cancels in the non-affine InstanceNorm

    # NCHW -> NHWC (channels on the 128-lane axis).  Padding is done in-kernel.
    x = jnp.transpose(x_nchw, (0, 2, 3, 1)).astype(jnp.float32)

    def fold_weight(w_oihw):
        # OIHW -> HWIO -> (9*Cin, Cout) bf16, row order matches the im2col
        # tap order used in the kernel: row (kh*3 + kw)*Cin + cin.
        return (jnp.transpose(w_oihw, (2, 3, 1, 0))
                .reshape(9 * c, c).astype(jnp.bfloat16))

    w1 = fold_weight(w1_oihw)
    w2 = fold_weight(w2_oihw)

    kernel = functools.partial(_resnet_block_kernel, h=hh, w=ww, c=c, eps=eps)

    flops = 2 * n * 2 * (hh * ww) * (9 * c) * c      # 2 convs, M*K*N MACs each
    bytes_accessed = (2 * n * hh * ww * c * 4        # input + output (f32)
                      + 2 * 9 * c * c * 2)           # folded weights (bf16)

    # Constant block index -> single buffer is enough for the weights.
    w_spec = pl.BlockSpec((9 * c, c), lambda i: (0, 0),
                          pipeline_mode=pl.Buffered(1))

    out = pl.pallas_call(
        kernel,
        grid=(n,),
        in_specs=[
            pl.BlockSpec((1, hh, ww, c), lambda i: (i, 0, 0, 0)),
            w_spec,
            w_spec,
        ],
        out_specs=pl.BlockSpec((1, hh, ww, c), lambda i: (i, 0, 0, 0)),
        out_shape=jax.ShapeDtypeStruct((n, hh, ww, c), jnp.float32),
        scratch_shapes=[
            pltpu.VMEM((hh + 2, ww + 2, c), jnp.bfloat16),   # padded activation
            pltpu.VMEM((hh * ww, 9 * c), jnp.bfloat16),      # im2col patch
        ],
        compiler_params=pltpu.CompilerParams(
            dimension_semantics=("parallel",),
            # 64 MiB is safe on every generation (v7x physical VMEM); v5e/v6e
            # (128 MiB) can raise this further for larger full-image blocks.
            vmem_limit_bytes=64 * 1024 * 1024,
        ),
        cost_estimate=pl.CostEstimate(
            flops=flops, transcendentals=0, bytes_accessed=bytes_accessed),
    )(x, w1, w2)

    return jnp.transpose(out, (0, 3, 1, 2))          # back to NCHW


# ----------------------------------------------------------------------------
# Pure-JAX reference (numerical sanity check)
# ----------------------------------------------------------------------------
def resnet_block_ref(x_nchw, w1, b1, w2, b2, *, eps=1e-5):
    def conv(x, w, b):
        xp = jnp.pad(x, ((0, 0), (0, 0), (1, 1), (1, 1)), mode="reflect")
        y = jax.lax.conv_general_dilated(
            xp, w, window_strides=(1, 1), padding="VALID",
            dimension_numbers=("NCHW", "OIHW", "NCHW"))
        return y + b.reshape(1, -1, 1, 1)

    def inorm(y):
        mean = jnp.mean(y, axis=(2, 3), keepdims=True)
        var = jnp.mean(jnp.square(y - mean), axis=(2, 3), keepdims=True)
        return (y - mean) * jax.lax.rsqrt(var + eps)

    h = jax.nn.relu(inorm(conv(x_nchw, w1, b1)))
    return x_nchw + inorm(conv(h, w2, b2))


# ----------------------------------------------------------------------------
# Main
# ----------------------------------------------------------------------------
if __name__ == "__main__":
    key = jax.random.PRNGKey(0)
    kx, k1, k2, kb1, kb2 = jax.random.split(key, 5)

    # Small shapes consistent with the module: dim=128, batch=2, 16x16 spatial.
    N, C, H, W = 2, 128, 16, 16
    x = jax.random.normal(kx, (N, C, H, W), dtype=jnp.float32)
    w1 = 0.02 * jax.random.normal(k1, (C, C, 3, 3), dtype=jnp.float32)  # OIHW
    w2 = 0.02 * jax.random.normal(k2, (C, C, 3, 3), dtype=jnp.float32)
    b1 = 0.02 * jax.random.normal(kb1, (C,), dtype=jnp.float32)
    b2 = 0.02 * jax.random.normal(kb2, (C,), dtype=jnp.float32)

    fwd = jax.jit(resnet_block_pallas)
    out = jax.block_until_ready(fwd(x, w1, b1, w2, b2))

    assert out.shape == (N, C, H, W), out.shape
    assert bool(jnp.all(jnp.isfinite(out)))

    # Sanity check against a pure-JAX f32 reference.  The kernel runs the MXU
    # in bf16 (and the intermediate activation is bf16), so the tolerance is
    # deliberately loose — acceptable for CycleGAN inference.
    ref = jax.block_until_ready(resnet_block_ref(x, w1, b1, w2, b2))
    max_err = float(jnp.max(jnp.abs(out - ref)))
    assert max_err < 1e-1, f"max abs error vs reference: {max_err}"

    print("KERNEL_OK")
</pallas_src>

<mosaic_0001>
module attributes {stable_mosaic.version = 11 : i64} {
  func.func @_resnet_block_kernel(%arg0: i32, %arg1: memref<1x16x16x128xf32, #tpu.memory_space<vmem>>, %arg2: memref<1152x128xbf16, #tpu.memory_space<vmem>>, %arg3: memref<1152x128xbf16, #tpu.memory_space<vmem>>, %arg4: memref<1x16x16x128xf32, #tpu.memory_space<vmem>>, %arg5: memref<18x18x128xbf16, #tpu.memory_space<vmem>>, %arg6: memref<256x1152xbf16, #tpu.memory_space<vmem>>) attributes {dimension_semantics = [#tpu.dimension_semantics<parallel>], iteration_bounds = array<i64: 2>, scalar_prefetch = 0 : i64, scratch_operands = 2 : i64, tpu.core_type = #tpu.core_type<tc>, window_params = [{transform_indices = @transform_0, window_bounds = array<i64: 1, 16, 16, 128>}, {pipeline_mode = #tpu.pipeline_mode<synchronous>, transform_indices = @transform_1, window_bounds = array<i64: 1152, 128>}, {pipeline_mode = #tpu.pipeline_mode<synchronous>, transform_indices = @transform_2, window_bounds = array<i64: 1152, 128>}, {transform_indices = @transform_3, window_bounds = array<i64: 1, 16, 16, 128>}]} {
    %c0 = arith.constant 0 : index
    %c0_0 = arith.constant 0 : index
    %c0_1 = arith.constant 0 : index
    %c0_2 = arith.constant 0 : index
    %0 = vector.load %arg1[%c0, %c0_0, %c0_1, %c0_2] : memref<1x16x16x128xf32, #tpu.memory_space<vmem>>, vector<1x16x16x128xf32>
    %1 = vector.shape_cast %0 : vector<1x16x16x128xf32> to vector<16x16x128xf32>
    %2 = arith.truncf %1 : vector<16x16x128xf32> to vector<16x16x128xbf16>
    %c1 = arith.constant 1 : index
    %c1_3 = arith.constant 1 : index
    %c0_4 = arith.constant 0 : index
    %3 = vector.load %arg5[%c1, %c1_3, %c0_4] : memref<18x18x128xbf16, #tpu.memory_space<vmem>>, vector<16x16x128xbf16>
    tpu.vector_store %arg5[%c1, %c1_3, %c0_4], %2 {strides = array<i32>} : memref<18x18x128xbf16, #tpu.memory_space<vmem>>, vector<16x16x128xbf16>,
    %4 = vector.extract_strided_slice %2 {offsets = [1, 0, 0], sizes = [1, 16, 128], strides = [1, 1, 1]} : vector<16x16x128xbf16> to vector<1x16x128xbf16>
    %c0_5 = arith.constant 0 : index
    %c1_6 = arith.constant 1 : index
    %c0_7 = arith.constant 0 : index
    %5 = vector.load %arg5[%c0_5, %c1_6, %c0_7] : memref<18x18x128xbf16, #tpu.memory_space<vmem>>, vector<1x16x128xbf16>
    tpu.vector_store %arg5[%c0_5, %c1_6, %c0_7], %4 {strides = array<i32>} : memref<18x18x128xbf16, #tpu.memory_space<vmem>>, vector<1x16x128xbf16>,
    %6 = vector.extract_strided_slice %2 {offsets = [14, 0, 0], sizes = [1, 16, 128], strides = [1, 1, 1]} : vector<16x16x128xbf16> to vector<1x16x128xbf16>
    %c17 = arith.constant 17 : index
    %c1_8 = arith.constant 1 : index
    %c0_9 = arith.constant 0 : index
    %7 = vector.load %arg5[%c17, %c1_8, %c0_9] : memref<18x18x128xbf16, #tpu.memory_space<vmem>>, vector<1x16x128xbf16>
    tpu.vector_store %arg5[%c17, %c1_8, %c0_9], %6 {strides = array<i32>} : memref<18x18x128xbf16, #tpu.memory_space<vmem>>, vector<1x16x128xbf16>,
    %c0_10 = arith.constant 0 : index
    %c2 = arith.constant 2 : index
    %c0_11 = arith.constant 0 : index
    %8 = vector.load %arg5[%c0_10, %c2, %c0_11] : memref<18x18x128xbf16, #tpu.memory_space<vmem>>, vector<18x1x128xbf16>
    %c0_12 = arith.constant 0 : index
    %c0_13 = arith.constant 0 : index
    %c0_14 = arith.constant 0 : index
    %9 = vector.load %arg5[%c0_12, %c0_13, %c0_14] : memref<18x18x128xbf16, #tpu.memory_space<vmem>>, vector<18x1x128xbf16>
    tpu.vector_store %arg5[%c0_12, %c0_13, %c0_14], %8 {strides = array<i32>} : memref<18x18x128xbf16, #tpu.memory_space<vmem>>, vector<18x1x128xbf16>,
    %c0_15 = arith.constant 0 : index
    %c15 = arith.constant 15 : index
    %c0_16 = arith.constant 0 : index
    %10 = vector.load %arg5[%c0_15, %c15, %c0_16] : memref<18x18x128xbf16, #tpu.memory_space<vmem>>, vector<18x1x128xbf16>
    %c0_17 = arith.constant 0 : index
    %c17_18 = arith.constant 17 : index
    %c0_19 = arith.constant 0 : index
    %11 = vector.load %arg5[%c0_17, %c17_18, %c0_19] : memref<18x18x128xbf16, #tpu.memory_space<vmem>>, vector<18x1x128xbf16>
    tpu.vector_store %arg5[%c0_17, %c17_18, %c0_19], %10 {strides = array<i32>} : memref<18x18x128xbf16, #tpu.memory_space<vmem>>, vector<18x1x128xbf16>,
    %c0_20 = arith.constant 0 : index
    %c0_21 = arith.constant 0 : index
    %c0_22 = arith.constant 0 : index
    %12 = vector.load %arg5[%c0_20, %c0_21, %c0_22] : memref<18x18x128xbf16, #tpu.memory_space<vmem>>, vector<16x16x128xbf16>
    %13 = vector.shape_cast %12 : vector<16x16x128xbf16> to vector<256x128xbf16>
    %c0_23 = arith.constant 0 : index
    %c0_24 = arith.constant 0 : index
    %14 = vector.load %arg6[%c0_23, %c0_24] : memref<256x1152xbf16, #tpu.memory_space<vmem>>, vector<256x128xbf16>
    tpu.vector_store %arg6[%c0_23, %c0_24], %13 {strides = array<i32>} : memref<256x1152xbf16, #tpu.memory_space<vmem>>, vector<256x128xbf16>,
    %c0_25 = arith.constant 0 : index
    %c1_26 = arith.constant 1 : index
    %c0_27 = arith.constant 0 : index
    %15 = vector.load %arg5[%c0_25, %c1_26, %c0_27] : memref<18x18x128xbf16, #tpu.memory_space<vmem>>, vector<16x16x128xbf16>
    %16 = vector.shape_cast %15 : vector<16x16x128xbf16> to vector<256x128xbf16>
    %c0_28 = arith.constant 0 : index
    %c128 = arith.constant 128 : index
    %17 = vector.load %arg6[%c0_28, %c128] : memref<256x1152xbf16, #tpu.memory_space<vmem>>, vector<256x128xbf16>
    tpu.vector_store %arg6[%c0_28, %c128], %16 {strides = array<i32>} : memref<256x1152xbf16, #tpu.memory_space<vmem>>, vector<256x128xbf16>,
    %c0_29 = arith.constant 0 : index
    %c2_30 = arith.constant 2 : index
    %c0_31 = arith.constant 0 : index
    %18 = vector.load %arg5[%c0_29, %c2_30, %c0_31] : memref<18x18x128xbf16, #tpu.memory_space<vmem>>, vector<16x16x128xbf16>
    %19 = vector.shape_cast %18 : vector<16x16x128xbf16> to vector<256x128xbf16>
    %c0_32 = arith.constant 0 : index
    %c256 = arith.constant 256 : index
    %20 = vector.load %arg6[%c0_32, %c256] : memref<256x1152xbf16, #tpu.memory_space<vmem>>, vector<256x128xbf16>
    tpu.vector_store %arg6[%c0_32, %c256], %19 {strides = array<i32>} : memref<256x1152xbf16, #tpu.memory_space<vmem>>, vector<256x128xbf16>,
    %c1_33 = arith.constant 1 : index
    %c0_34 = arith.constant 0 : index
    %c0_35 = arith.constant 0 : index
    %21 = vector.load %arg5[%c1_33, %c0_34, %c0_35] : memref<18x18x128xbf16, #tpu.memory_space<vmem>>, vector<16x16x128xbf16>
    %22 = vector.shape_cast %21 : vector<16x16x128xbf16> to vector<256x128xbf16>
    %c0_36 = arith.constant 0 : index
    %c384 = arith.constant 384 : index
    %23 = vector.load %arg6[%c0_36, %c384] : memref<256x1152xbf16, #tpu.memory_space<vmem>>, vector<256x128xbf16>
    tpu.vector_store %arg6[%c0_36, %c384], %22 {strides = array<i32>} : memref<256x1152xbf16, #tpu.memory_space<vmem>>, vector<256x128xbf16>,
    %c1_37 = arith.constant 1 : index
    %c1_38 = arith.constant 1 : index
    %c0_39 = arith.constant 0 : index
    %24 = vector.load %arg5[%c1_37, %c1_38, %c0_39] : memref<18x18x128xbf16, #tpu.memory_space<vmem>>, vector<16x16x128xbf16>
    %25 = vector.shape_cast %24 : vector<16x16x128xbf16> to vector<256x128xbf16>
    %c0_40 = arith.constant 0 : index
    %c512 = arith.constant 512 : index
    %26 = vector.load %arg6[%c0_40, %c512] : memref<256x1152xbf16, #tpu.memory_space<vmem>>, vector<256x128xbf16>
    tpu.vector_store %arg6[%c0_40, %c512], %25 {strides = array<i32>} : memref<256x1152xbf16, #tpu.memory_space<vmem>>, vector<256x128xbf16>,
    %c1_41 = arith.constant 1 : index
    %c2_42 = arith.constant 2 : index
    %c0_43 = arith.constant 0 : index
    %27 = vector.load %arg5[%c1_41, %c2_42, %c0_43] : memref<18x18x128xbf16, #tpu.memory_space<vmem>>, vector<16x16x128xbf16>
    %28 = vector.shape_cast %27 : vector<16x16x128xbf16> to vector<256x128xbf16>
    %c0_44 = arith.constant 0 : index
    %c640 = arith.constant 640 : index
    %29 = vector.load %arg6[%c0_44, %c640] : memref<256x1152xbf16, #tpu.memory_space<vmem>>, vector<256x128xbf16>
    tpu.vector_store %arg6[%c0_44, %c640], %28 {strides = array<i32>} : memref<256x1152xbf16, #tpu.memory_space<vmem>>, vector<256x128xbf16>,
    %c2_45 = arith.constant 2 : index
    %c0_46 = arith.constant 0 : index
    %c0_47 = arith.constant 0 : index
    %30 = vector.load %arg5[%c2_45, %c0_46, %c0_47] : memref<18x18x128xbf16, #tpu.memory_space<vmem>>, vector<16x16x128xbf16>
    %31 = vector.shape_cast %30 : vector<16x16x128xbf16> to vector<256x128xbf16>
    %c0_48 = arith.constant 0 : index
    %c768 = arith.constant 768 : index
    %32 = vector.load %arg6[%c0_48, %c768] : memref<256x1152xbf16, #tpu.memory_space<vmem>>, vector<256x128xbf16>
    tpu.vector_store %arg6[%c0_48, %c768], %31 {strides = array<i32>} : memref<256x1152xbf16, #tpu.memory_space<vmem>>, vector<256x128xbf16>,
    %c2_49 = arith.constant 2 : index
    %c1_50 = arith.constant 1 : index
    %c0_51 = arith.constant 0 : index
    %33 = vector.load %arg5[%c2_49, %c1_50, %c0_51] : memref<18x18x128xbf16, #tpu.memory_space<vmem>>, vector<16x16x128xbf16>
    %34 = vector.shape_cast %33 : vector<16x16x128xbf16> to vector<256x128xbf16>
    %c0_52 = arith.constant 0 : index
    %c896 = arith.constant 896 : index
    %35 = vector.load %arg6[%c0_52, %c896] : memref<256x1152xbf16, #tpu.memory_space<vmem>>, vector<256x128xbf16>
    tpu.vector_store %arg6[%c0_52, %c896], %34 {strides = array<i32>} : memref<256x1152xbf16, #tpu.memory_space<vmem>>, vector<256x128xbf16>,
    %c2_53 = arith.constant 2 : index
    %c2_54 = arith.constant 2 : index
    %c0_55 = arith.constant 0 : index
    %36 = vector.load %arg5[%c2_53, %c2_54, %c0_55] : memref<18x18x128xbf16, #tpu.memory_space<vmem>>, vector<16x16x128xbf16>
    %37 = vector.shape_cast %36 : vector<16x16x128xbf16> to vector<256x128xbf16>
    %c0_56 = arith.constant 0 : index
    %c1024 = arith.constant 1024 : index
    %38 = vector.load %arg6[%c0_56, %c1024] : memref<256x1152xbf16, #tpu.memory_space<vmem>>, vector<256x128xbf16>
    tpu.vector_store %arg6[%c0_56, %c1024], %37 {strides = array<i32>} : memref<256x1152xbf16, #tpu.memory_space<vmem>>, vector<256x128xbf16>,
    %c0_57 = arith.constant 0 : index
    %c0_58 = arith.constant 0 : index
    %39 = vector.load %arg6[%c0_57, %c0_58] : memref<256x1152xbf16, #tpu.memory_space<vmem>>, vector<256x1152xbf16>
    %c0_59 = arith.constant 0 : index
    %c0_60 = arith.constant 0 : index
    %40 = vector.load %arg2[%c0_59, %c0_60] : memref<1152x128xbf16, #tpu.memory_space<vmem>>, vector<1152x128xbf16>
    %cst = arith.constant dense<0.000000e+00> : vector<256x128xf32>
    %41 = tpu.matmul %39, %40, %cst {dimension_numbers = #tpu.dot_dimension_numbers<[1], [0], [0], [1], [0, 0, 1, 1], [], []>} : vector<256x1152xbf16>, vector<1152x128xbf16>, vector<256x128xf32> -> vector<256x128xf32>
    %cst_61 = arith.constant dense<0.000000e+00> : vector<128xf32>
    %42 = vector.multi_reduction <add>, %41, %cst_61 [0] : vector<256x128xf32> to vector<128xf32>
    %43 = vector.shape_cast %42 : vector<128xf32> to vector<1x128xf32>
    %cst_62 = arith.constant 2.560000e+02 : f32
    %44 = vector.broadcast %cst_62 : f32 to vector<1x128xf32>
    %45 = arith.divf %43, %44 : vector<1x128xf32>
    %46 = vector.broadcast %45 : vector<1x128xf32> to vector<256x128xf32>
    %47 = arith.subf %41, %46 : vector<256x128xf32>
    %48 = arith.mulf %47, %47 : vector<256x128xf32>
    %cst_63 = arith.constant dense<0.000000e+00> : vector<128xf32>
    %49 = vector.multi_reduction <add>, %48, %cst_63 [0] : vector<256x128xf32> to vector<128xf32>
    %50 = vector.shape_cast %49 : vector<128xf32> to vector<1x128xf32>
    %cst_64 = arith.constant 2.560000e+02 : f32
    %51 = vector.broadcast %cst_64 : f32 to vector<1x128xf32>
    %52 = arith.divf %50, %51 : vector<1x128xf32>
    %cst_65 = arith.constant 9.99999974E-6 : f32
    %53 = vector.broadcast %cst_65 : f32 to vector<1x128xf32>
    %54 = arith.addf %52, %53 : vector<1x128xf32>
    %55 = math.rsqrt %54 : vector<1x128xf32>
    %56 = vector.broadcast %55 : vector<1x128xf32> to vector<256x128xf32>
    %57 = arith.mulf %47, %56 : vector<256x128xf32>
    %cst_66 = arith.constant 0.000000e+00 : f32
    %58 = vector.broadcast %cst_66 : f32 to vector<256x128xf32>
    %59 = arith.maximumf %57, %58 : vector<256x128xf32>
    %60 = vector.shape_cast %59 : vector<256x128xf32> to vector<16x16x128xf32>
    %61 = arith.truncf %60 : vector<16x16x128xf32> to vector<16x16x128xbf16>
    %c1_67 = arith.constant 1 : index
    %c1_68 = arith.constant 1 : index
    %c0_69 = arith.constant 0 : index
    %62 = vector.load %arg5[%c1_67, %c1_68, %c0_69] : memref<18x18x128xbf16, #tpu.memory_space<vmem>>, vector<16x16x128xbf16>
    tpu.vector_store %arg5[%c1_67, %c1_68, %c0_69], %61 {strides = array<i32>} : memref<18x18x128xbf16, #tpu.memory_space<vmem>>, vector<16x16x128xbf16>,
    %63 = vector.extract_strided_slice %61 {offsets = [1, 0, 0], sizes = [1, 16, 128], strides = [1, 1, 1]} : vector<16x16x128xbf16> to vector<1x16x128xbf16>
    %c0_70 = arith.constant 0 : index
    %c1_71 = arith.constant 1 : index
    %c0_72 = arith.constant 0 : index
    %64 = vector.load %arg5[%c0_70, %c1_71, %c0_72] : memref<18x18x128xbf16, #tpu.memory_space<vmem>>, vector<1x16x128xbf16>
    tpu.vector_store %arg5[%c0_70, %c1_71, %c0_72], %63 {strides = array<i32>} : memref<18x18x128xbf16, #tpu.memory_space<vmem>>, vector<1x16x128xbf16>,
    %65 = vector.extract_strided_slice %61 {offsets = [14, 0, 0], sizes = [1, 16, 128], strides = [1, 1, 1]} : vector<16x16x128xbf16> to vector<1x16x128xbf16>
    %c17_73 = arith.constant 17 : index
    %c1_74 = arith.constant 1 : index
    %c0_75 = arith.constant 0 : index
    %66 = vector.load %arg5[%c17_73, %c1_74, %c0_75] : memref<18x18x128xbf16, #tpu.memory_space<vmem>>, vector<1x16x128xbf16>
    tpu.vector_store %arg5[%c17_73, %c1_74, %c0_75], %65 {strides = array<i32>} : memref<18x18x128xbf16, #tpu.memory_space<vmem>>, vector<1x16x128xbf16>,
    %c0_76 = arith.constant 0 : index
    %c2_77 = arith.constant 2 : index
    %c0_78 = arith.constant 0 : index
    %67 = vector.load %arg5[%c0_76, %c2_77, %c0_78] : memref<18x18x128xbf16, #tpu.memory_space<vmem>>, vector<18x1x128xbf16>
    %c0_79 = arith.constant 0 : index
    %c0_80 = arith.constant 0 : index
    %c0_81 = arith.constant 0 : index
    %68 = vector.load %arg5[%c0_79, %c0_80, %c0_81] : memref<18x18x128xbf16, #tpu.memory_space<vmem>>, vector<18x1x128xbf16>
    tpu.vector_store %arg5[%c0_79, %c0_80, %c0_81], %67 {strides = array<i32>} : memref<18x18x128xbf16, #tpu.memory_space<vmem>>, vector<18x1x128xbf16>,
    %c0_82 = arith.constant 0 : index
    %c15_83 = arith.constant 15 : index
    %c0_84 = arith.constant 0 : index
    %69 = vector.load %arg5[%c0_82, %c15_83, %c0_84] : memref<18x18x128xbf16, #tpu.memory_space<vmem>>, vector<18x1x128xbf16>
    %c0_85 = arith.constant 0 : index
    %c17_86 = arith.constant 17 : index
    %c0_87 = arith.constant 0 : index
    %70 = vector.load %arg5[%c0_85, %c17_86, %c0_87] : memref<18x18x128xbf16, #tpu.memory_space<vmem>>, vector<18x1x128xbf16>
    tpu.vector_store %arg5[%c0_85, %c17_86, %c0_87], %69 {strides = array<i32>} : memref<18x18x128xbf16, #tpu.memory_space<vmem>>, vector<18x1x128xbf16>,
    %c0_88 = arith.constant 0 : index
    %c0_89 = arith.constant 0 : index
    %c0_90 = arith.constant 0 : index
    %71 = vector.load %arg5[%c0_88, %c0_89, %c0_90] : memref<18x18x128xbf16, #tpu.memory_space<vmem>>, vector<16x16x128xbf16>
    %72 = vector.shape_cast %71 : vector<16x16x128xbf16> to vector<256x128xbf16>
    %c0_91 = arith.constant 0 : index
    %c0_92 = arith.constant 0 : index
    %73 = vector.load %arg6[%c0_91, %c0_92] : memref<256x1152xbf16, #tpu.memory_space<vmem>>, vector<256x128xbf16>
    tpu.vector_store %arg6[%c0_91, %c0_92], %72 {strides = array<i32>} : memref<256x1152xbf16, #tpu.memory_space<vmem>>, vector<256x128xbf16>,
    %c0_93 = arith.constant 0 : index
    %c1_94 = arith.constant 1 : index
    %c0_95 = arith.constant 0 : index
    %74 = vector.load %arg5[%c0_93, %c1_94, %c0_95] : memref<18x18x128xbf16, #tpu.memory_space<vmem>>, vector<16x16x128xbf16>
    %75 = vector.shape_cast %74 : vector<16x16x128xbf16> to vector<256x128xbf16>
    %c0_96 = arith.constant 0 : index
    %c128_97 = arith.constant 128 : index
    %76 = vector.load %arg6[%c0_96, %c128_97] : memref<256x1152xbf16, #tpu.memory_space<vmem>>, vector<256x128xbf16>
    tpu.vector_store %arg6[%c0_96, %c128_97], %75 {strides = array<i32>} : memref<256x1152xbf16, #tpu.memory_space<vmem>>, vector<256x128xbf16>,
    %c0_98 = arith.constant 0 : index
    %c2_99 = arith.constant 2 : index
    %c0_100 = arith.constant 0 : index
    %77 = vector.load %arg5[%c0_98, %c2_99, %c0_100] : memref<18x18x128xbf16, #tpu.memory_space<vmem>>, vector<16x16x128xbf16>
    %78 = vector.shape_cast %77 : vector<16x16x128xbf16> to vector<256x128xbf16>
    %c0_101 = arith.constant 0 : index
    %c256_102 = arith.constant 256 : index
    %79 = vector.load %arg6[%c0_101, %c256_102] : memref<256x1152xbf16, #tpu.memory_space<vmem>>, vector<256x128xbf16>
    tpu.vector_store %arg6[%c0_101, %c256_102], %78 {strides = array<i32>} : memref<256x1152xbf16, #tpu.memory_space<vmem>>, vector<256x128xbf16>,
    %c1_103 = arith.constant 1 : index
    %c0_104 = arith.constant 0 : index
    %c0_105 = arith.constant 0 : index
    %80 = vector.load %arg5[%c1_103, %c0_104, %c0_105] : memref<18x18x128xbf16, #tpu.memory_space<vmem>>, vector<16x16x128xbf16>
    %81 = vector.shape_cast %80 : vector<16x16x128xbf16> to vector<256x128xbf16>
    %c0_106 = arith.constant 0 : index
    %c384_107 = arith.constant 384 : index
    %82 = vector.load %arg6[%c0_106, %c384_107] : memref<256x1152xbf16, #tpu.memory_space<vmem>>, vector<256x128xbf16>
    tpu.vector_store %arg6[%c0_106, %c384_107], %81 {strides = array<i32>} : memref<256x1152xbf16, #tpu.memory_space<vmem>>, vector<256x128xbf16>,
    %c1_108 = arith.constant 1 : index
    %c1_109 = arith.constant 1 : index
    %c0_110 = arith.constant 0 : index
    %83 = vector.load %arg5[%c1_108, %c1_109, %c0_110] : memref<18x18x128xbf16, #tpu.memory_space<vmem>>, vector<16x16x128xbf16>
    %84 = vector.shape_cast %83 : vector<16x16x128xbf16> to vector<256x128xbf16>
    %c0_111 = arith.constant 0 : index
    %c512_112 = arith.constant 512 : index
    %85 = vector.load %arg6[%c0_111, %c512_112] : memref<256x1152xbf16, #tpu.memory_space<vmem>>, vector<256x128xbf16>
    tpu.vector_store %arg6[%c0_111, %c512_112], %84 {strides = array<i32>} : memref<256x1152xbf16, #tpu.memory_space<vmem>>, vector<256x128xbf16>,
    %c1_113 = arith.constant 1 : index
    %c2_114 = arith.constant 2 : index
    %c0_115 = arith.constant 0 : index
    %86 = vector.load %arg5[%c1_113, %c2_114, %c0_115] : memref<18x18x128xbf16, #tpu.memory_space<vmem>>, vector<16x16x128xbf16>
    %87 = vector.shape_cast %86 : vector<16x16x128xbf16> to vector<256x128xbf16>
    %c0_116 = arith.constant 0 : index
    %c640_117 = arith.constant 640 : index
    %88 = vector.load %arg6[%c0_116, %c640_117] : memref<256x1152xbf16, #tpu.memory_space<vmem>>, vector<256x128xbf16>
    tpu.vector_store %arg6[%c0_116, %c640_117], %87 {strides = array<i32>} : memref<256x1152xbf16, #tpu.memory_space<vmem>>, vector<256x128xbf16>,
    %c2_118 = arith.constant 2 : index
    %c0_119 = arith.constant 0 : index
    %c0_120 = arith.constant 0 : index
    %89 = vector.load %arg5[%c2_118, %c0_119, %c0_120] : memref<18x18x128xbf16, #tpu.memory_space<vmem>>, vector<16x16x128xbf16>
    %90 = vector.shape_cast %89 : vector<16x16x128xbf16> to vector<256x128xbf16>
    %c0_121 = arith.constant 0 : index
    %c768_122 = arith.constant 768 : index
    %91 = vector.load %arg6[%c0_121, %c768_122] : memref<256x1152xbf16, #tpu.memory_space<vmem>>, vector<256x128xbf16>
    tpu.vector_store %arg6[%c0_121, %c768_122], %90 {strides = array<i32>} : memref<256x1152xbf16, #tpu.memory_space<vmem>>, vector<256x128xbf16>,
    %c2_123 = arith.constant 2 : index
    %c1_124 = arith.constant 1 : index
    %c0_125 = arith.constant 0 : index
    %92 = vector.load %arg5[%c2_123, %c1_124, %c0_125] : memref<18x18x128xbf16, #tpu.memory_space<vmem>>, vector<16x16x128xbf16>
    %93 = vector.shape_cast %92 : vector<16x16x128xbf16> to vector<256x128xbf16>
    %c0_126 = arith.constant 0 : index
    %c896_127 = arith.constant 896 : index
    %94 = vector.load %arg6[%c0_126, %c896_127] : memref<256x1152xbf16, #tpu.memory_space<vmem>>, vector<256x128xbf16>
    tpu.vector_store %arg6[%c0_126, %c896_127], %93 {strides = array<i32>} : memref<256x1152xbf16, #tpu.memory_space<vmem>>, vector<256x128xbf16>,
    %c2_128 = arith.constant 2 : index
    %c2_129 = arith.constant 2 : index
    %c0_130 = arith.constant 0 : index
    %95 = vector.load %arg5[%c2_128, %c2_129, %c0_130] : memref<18x18x128xbf16, #tpu.memory_space<vmem>>, vector<16x16x128xbf16>
    %96 = vector.shape_cast %95 : vector<16x16x128xbf16> to vector<256x128xbf16>
    %c0_131 = arith.constant 0 : index
    %c1024_132 = arith.constant 1024 : index
    %97 = vector.load %arg6[%c0_131, %c1024_132] : memref<256x1152xbf16, #tpu.memory_space<vmem>>, vector<256x128xbf16>
    tpu.vector_store %arg6[%c0_131, %c1024_132], %96 {strides = array<i32>} : memref<256x1152xbf16, #tpu.memory_space<vmem>>, vector<256x128xbf16>,
    %c0_133 = arith.constant 0 : index
    %c0_134 = arith.constant 0 : index
    %98 = vector.load %arg6[%c0_133, %c0_134] : memref<256x1152xbf16, #tpu.memory_space<vmem>>, vector<256x1152xbf16>
    %c0_135 = arith.constant 0 : index
    %c0_136 = arith.constant 0 : index
    %99 = vector.load %arg3[%c0_135, %c0_136] : memref<1152x128xbf16, #tpu.memory_space<vmem>>, vector<1152x128xbf16>
    %cst_137 = arith.constant dense<0.000000e+00> : vector<256x128xf32>
    %100 = tpu.matmul %98, %99, %cst_137 {dimension_numbers = #tpu.dot_dimension_numbers<[1], [0], [0], [1], [0, 0, 1, 1], [], []>} : vector<256x1152xbf16>, vector<1152x128xbf16>, vector<256x128xf32> -> vector<256x128xf32>
    %cst_138 = arith.constant dense<0.000000e+00> : vector<128xf32>
    %101 = vector.multi_reduction <add>, %100, %cst_138 [0] : vector<256x128xf32> to vector<128xf32>
    %102 = vector.shape_cast %101 : vector<128xf32> to vector<1x128xf32>
    %cst_139 = arith.constant 2.560000e+02 : f32
    %103 = vector.broadcast %cst_139 : f32 to vector<1x128xf32>
    %104 = arith.divf %102, %103 : vector<1x128xf32>
    %105 = vector.broadcast %104 : vector<1x128xf32> to vector<256x128xf32>
    %106 = arith.subf %100, %105 : vector<256x128xf32>
    %107 = arith.mulf %106, %106 : vector<256x128xf32>
    %cst_140 = arith.constant dense<0.000000e+00> : vector<128xf32>
    %108 = vector.multi_reduction <add>, %107, %cst_140 [0] : vector<256x128xf32> to vector<128xf32>
    %109 = vector.shape_cast %108 : vector<128xf32> to vector<1x128xf32>
    %cst_141 = arith.constant 2.560000e+02 : f32
    %110 = vector.broadcast %cst_141 : f32 to vector<1x128xf32>
    %111 = arith.divf %109, %110 : vector<1x128xf32>
    %cst_142 = arith.constant 9.99999974E-6 : f32
    %112 = vector.broadcast %cst_142 : f32 to vector<1x128xf32>
    %113 = arith.addf %111, %112 : vector<1x128xf32>
    %114 = math.rsqrt %113 : vector<1x128xf32>
    %115 = vector.broadcast %114 : vector<1x128xf32> to vector<256x128xf32>
    %116 = arith.mulf %106, %115 : vector<256x128xf32>
    %c0_143 = arith.constant 0 : index
    %c0_144 = arith.constant 0 : index
    %c0_145 = arith.constant 0 : index
    %c0_146 = arith.constant 0 : index
    %117 = vector.load %arg1[%c0_143, %c0_144, %c0_145, %c0_146] : memref<1x16x16x128xf32, #tpu.memory_space<vmem>>, vector<1x16x16x128xf32>
    %118 = vector.shape_cast %117 : vector<1x16x16x128xf32> to vector<16x16x128xf32>
    %119 = vector.shape_cast %118 : vector<16x16x128xf32> to vector<256x128xf32>
    %120 = arith.addf %116, %119 : vector<256x128xf32>
    %121 = vector.shape_cast %120 : vector<256x128xf32> to vector<1x16x16x128xf32>
    %c0_147 = arith.constant 0 : index
    %c0_148 = arith.constant 0 : index
    %c0_149 = arith.constant 0 : index
    %c0_150 = arith.constant 0 : index
    %122 = vector.load %arg4[%c0_147, %c0_148, %c0_149, %c0_150] : memref<1x16x16x128xf32, #tpu.memory_space<vmem>>, vector<1x16x16x128xf32>
    tpu.vector_store %arg4[%c0_147, %c0_148, %c0_149, %c0_150], %121 {strides = array<i32>} : memref<1x16x16x128xf32, #tpu.memory_space<vmem>>, vector<1x16x16x128xf32>,
    return
  }
  func.func @transform_0(%arg0: i32) -> (i32, i32, i32, i32) {
    %c0_i32 = arith.constant 0 : i32
    %c0_i32_0 = arith.constant 0 : i32
    %c0_i32_1 = arith.constant 0 : i32
    %c0_i32_2 = arith.constant 0 : i32
    return %arg0, %c0_i32, %c0_i32_0, %c0_i32_1 : i32, i32, i32, i32
  }
  func.func @transform_1(%arg0: i32) -> (i32, i32) {
    %c0_i32 = arith.constant 0 : i32
    %c0_i32_0 = arith.constant 0 : i32
    %c0_i32_1 = arith.constant 0 : i32
    return %c0_i32, %c0_i32_0 : i32, i32
  }
  func.func @transform_2(%arg0: i32) -> (i32, i32) {
    %c0_i32 = arith.constant 0 : i32
    %c0_i32_0 = arith.constant 0 : i32
    %c0_i32_1 = arith.constant 0 : i32
    return %c0_i32, %c0_i32_0 : i32, i32
  }
  func.func @transform_3(%arg0: i32) -> (i32, i32, i32, i32) {
    %c0_i32 = arith.constant 0 : i32
    %c0_i32_0 = arith.constant 0 : i32
    %c0_i32_1 = arith.constant 0 : i32
    %c0_i32_2 = arith.constant 0 : i32
    return %arg0, %c0_i32, %c0_i32_0, %c0_i32_1 : i32, i32, i32, i32
  }
}

</mosaic_0001>

<llo_original>
// kernel: resnet_block_pallas.1
$region0: #{resnet_block_pallas.1}
  #allocation0 [shape = 'u32[]', space=smem, size = 0x4, offset = 0x4, fixed_abs, tag = 'smem constant byte address 0x4 - core index']
  #allocation1 [shape = 'u32[72,128]{1,0:T(1,128)}', space=vmem, size = 0x9000, scoped, tag = 'internal scratch']
  #allocation2 [shape = 'bf16[18,18,128]{2,1,0:T(8,128)(2,1)}', space=vmem, size = 0x1b000, scoped, tag = 'scratch operand']
  #allocation3 [shape = 'bf16[256,1152]{1,0:T(8,128)(2,1)}', space=vmem, size = 0x90000, scoped, tag = 'scratch operand']
  %s0 = inlined_call_operand.vmem [shape: f32[2,16,16,128], index: 0, kind: input, shape index: {}]
  %s1 = inlined_call_operand.vmem [shape: bf16[1152,128], index: 1, kind: input, shape index: {}]
  %s2 = inlined_call_operand.vmem [shape: bf16[1152,128], index: 2, kind: input, shape index: {}]
  %s3 = inlined_call_operand.hbm [shape: f32[2,16,16,128], index: 3, kind: output, shape index: {}]
  %s4 = sld [smem:[#allocation0]]
  $region45: #{resnet_block_pallas.1} parent=0
    _
  %s6 = ssub.s32 1, %s4
  %s7 = scalar_select 0, %s6, %s4
  $region1: #{resnet_block_pallas.1} parent=0
    #allocation4 [shape = 'u8[262144]{0}', space=vmem, size = 0x40000, scoped, tag = 'output window, operand 0']
    #allocation5 [shape = 's32[2]{0}', space=sflag, size = 0x8, scoped, tag = 'scoped memory for resnet_block_pallas.1']
    %8 = vsyncpa [#allocation5], 0
    %s9 = scalar_lea.sflag [#allocation5], 1
    %10 = vsyncpa %s9, 0
    loop: start=0, step=1, limit=4
    $region2: #{resnet_block_pallas.1} parent=1 // loop_pre_header
      _
    $region3: #{resnet_block_pallas.1} parent=1 // loop_header
      %s12 = sphi 0, %s16
      %p13 = scmp.ge.s32.totalorder %s12, 4
      %s22 = sphi 0, %s24
      %s25 = sphi 0, %s22
      %s26 = sphi 0, %s25
      %s42 = sphi 0, %s26
      %s46 = sphi 0, %s46
      %s48 = sphi 0, %s46
      %s49 = sphi 0, %s48
      %s63 = sphi 0, %s49
      %s67 = sphi 0, %s67
      %s69 = sphi 0, %s67
      %s70 = sphi 0, %s69
      %s84 = sphi 0, %s70
      %s90 = sphi 0, %s92
      %s93 = sphi 0, %s90
      %s94 = sphi 0, %s93
      %s110 = sphi 0, %s94
    $region4: #{resnet_block_pallas.1} parent=1 // loop_header_branch
      %15 = sbr.rel (%p13) target = $region8
    $region5: #{resnet_block_pallas.1} parent=1 // loop_body
      %s17 = ssub.s32 %s12, 1
      %s18 = ssub.s32 %s12, 2
      %s19 = sadd.s32 %s12, 1
      %s20 = ssub.s32 %s12, %s19
      %p21 = scmp.eq.s32.totalorder %s20, 0
      %s23 = sadd.s32 %s22, 1
      %s24 = scalar_select %p21, %s22, %s23
      %p27 = pneg %p21
      %p28 = scmp.eq.s32.totalorder %s12, 1
      %p29 = por %p27, %p28
      %p30 = scmp.ne.s32.totalorder %s22, %s25
      %p31 = scmp.eq.s32.totalorder %s12, 0
      %p32 = por %p30, %p31
      %p33 = scmp.ne.s32.totalorder %s22, %s25
      %p34 = scmp.eq.s32.totalorder %s17, 1
      %p35 = por %p33, %p34
      %p36 = scmp.ne.s32.totalorder %s25, %s26
      %p37 = scmp.eq.s32.totalorder %s17, 0
      %p38 = por %p36, %p37
      %p39 = scmp.ne.s32.totalorder %s25, %s26
      %p40 = scmp.eq.s32.totalorder %s18, 1
      %p41 = por %p39, %p40
      %p43 = scmp.ne.s32.totalorder %s26, %s42
      %p44 = scmp.eq.s32.totalorder %s18, 0
      %p45 = por %p43, %p44
      %s47 = sadd.s32 %s46, 1
      %p50 = scmp.eq.s32.totalorder %s12, 1
      %p51 = scmp.ne.s32.totalorder %s46, %s48
      %p52 = scmp.eq.s32.totalorder %s12, 0
      %p53 = por %p51, %p52
      %p54 = scmp.ne.s32.totalorder %s46, %s48
      %p55 = scmp.eq.s32.totalorder %s17, 1
      %p56 = por %p54, %p55
      %p57 = scmp.ne.s32.totalorder %s48, %s49
      %p58 = scmp.eq.s32.totalorder %s17, 0
      %p59 = por %p57, %p58
      %p60 = scmp.ne.s32.totalorder %s48, %s49
      %p61 = scmp.eq.s32.totalorder %s18, 1
      %p62 = por %p60, %p61
      %p64 = scmp.ne.s32.totalorder %s49, %s63
      %p65 = scmp.eq.s32.totalorder %s18, 0
      %p66 = por %p64, %p65
      %s68 = sadd.s32 %s67, 1
      %p71 = scmp.eq.s32.totalorder %s12, 1
      %p72 = scmp.ne.s32.totalorder %s67, %s69
      %p73 = scmp.eq.s32.totalorder %s12, 0
      %p74 = por %p72, %p73
      %p75 = scmp.ne.s32.totalorder %s67, %s69
      %p76 = scmp.eq.s32.totalorder %s17, 1
      %p77 = por %p75, %p76
      %p78 = scmp.ne.s32.totalorder %s69, %s70
      %p79 = scmp.eq.s32.totalorder %s17, 0
      %p80 = por %p78, %p79
      %p81 = scmp.ne.s32.totalorder %s69, %s70
      %p82 = scmp.eq.s32.totalorder %s18, 1
      %p83 = por %p81, %p82
      %p85 = scmp.ne.s32.totalorder %s70, %s84
      %p86 = scmp.eq.s32.totalorder %s18, 0
      %p87 = por %p85, %p86
      %s88 = ssub.s32 %s12, %s19
      %p89 = scmp.eq.s32.totalorder %s88, 0
      %s91 = sadd.s32 %s90, 1
      %s92 = scalar_select %p89, %s90, %s91
      %p95 = pneg %p89
      %p96 = scmp.eq.s32.totalorder %s12, 1
      %p97 = por %p95, %p96
      %p98 = scmp.ne.s32.totalorder %s90, %s93
      %p99 = scmp.eq.s32.totalorder %s12, 0
      %p100 = por %p98, %p99
      %p101 = scmp.ne.s32.totalorder %s90, %s93
      %p102 = scmp.eq.s32.totalorder %s17, 1
      %p103 = por %p101, %p102
      %p104 = scmp.ne.s32.totalorder %s93, %s94
      %p105 = scmp.eq.s32.totalorder %s17, 0
      %p106 = por %p104, %p105
      %p107 = scmp.ne.s32.totalorder %s93, %s94
      %p108 = scmp.eq.s32.totalorder %s18, 1
      %p109 = por %p107, %p108
      %p111 = scmp.ne.s32.totalorder %s94, %s110
      %p112 = scmp.eq.s32.totalorder %s18, 0
      %p113 = por %p111, %p112
      %p114 = scmp.le.s32.totalorder 1, %s12
      %p115 = scmp.lt.s32.totalorder %s12, 3
      %p116 = pnand %p114, %p115
      %p117 = pneg %p116
      // Predicated region
      $region9: #{resnet_block_pallas.1} parent=5 // pred_check
        _
      $region10: #{resnet_block_pallas.1} parent=5 // pred_check_branch
        %119 = sbr.rel (%p116) target = $region12
      $region11: #{resnet_block_pallas.1} parent=5 // pred_region
        %s120 = ssub.s32 %s12, 1
        // Predicated region
        $region13: #{resnet_block_pallas.1} parent=11 // pred_check
          %p121 = pneg %p59
        $region14: #{resnet_block_pallas.1} parent=11 // pred_check_branch
          %123 = sbr.rel (%p121) target = $region16
        $region15: #{resnet_block_pallas.1} parent=11 // pred_region
          _
        $region16: #{resnet_block_pallas.1} parent=11 // pred_fallthru
          _
        // Predicated region
        $region17: #{resnet_block_pallas.1} parent=11 // pred_check
          %p124 = pneg %p80
        $region18: #{resnet_block_pallas.1} parent=11 // pred_check_branch
          %126 = sbr.rel (%p124) target = $region20
        $region19: #{resnet_block_pallas.1} parent=11 // pred_region
          _
        $region20: #{resnet_block_pallas.1} parent=11 // pred_fallthru
          _
      $region12: #{resnet_block_pallas.1} parent=5 // pred_fallthru
        _
      %p127 = scmp.lt.s32.totalorder %s12, 2
      // Predicated region
      $region21: #{resnet_block_pallas.1} parent=5 // pred_check
        %p128 = pneg %p127
      $region22: #{resnet_block_pallas.1} parent=5 // pred_check_branch
        %130 = sbr.rel (%p128) target = $region24
      $region23: #{resnet_block_pallas.1} parent=5 // pred_region
        // Predicated region
        $region25: #{resnet_block_pallas.1} parent=23 // pred_check
          %p131 = pneg %p32
        $region26: #{resnet_block_pallas.1} parent=23 // pred_check_branch
          %133 = sbr.rel (%p131) target = $region28
        $region27: #{resnet_block_pallas.1} parent=23 // pred_region
          %p134 = scmp.lt.s32.totalorder %s12, 1
          %s135 = scalar_select %p134, %s12, 1
          %s136 = smul.addr %s135, 32
          %s137 = smul.addr %s136, 8
          %s138 = scalar_lea.vmem %s0, %s137
        $region28: #{resnet_block_pallas.1} parent=23 // pred_fallthru
          _
      $region24: #{resnet_block_pallas.1} parent=5 // pred_fallthru
        _
      %p139 = scmp.le.s32.totalorder 1, %s12
      %p140 = scmp.lt.s32.totalorder %s12, 3
      %p141 = pnand %p139, %p140
      %p142 = pneg %p141
      // Predicated region
      $region29: #{resnet_block_pallas.1} parent=5 // pred_check
        _
      $region30: #{resnet_block_pallas.1} parent=5 // pred_check_branch
        %144 = sbr.rel (%p141) target = $region32
      $region31: #{resnet_block_pallas.1} parent=5 // pred_region
        %s145 = ssub.s32 %s12, 1
        %p146 = scmp.lt.s32.totalorder %s17, 1
        %s147 = scalar_select %p146, %s17, 1
        %s148 = smul.addr %s147, 32
        %s149 = smul.addr %s148, 8
        %s150 = scalar_lea.vmem %s0, %s149
        %p151 = pneg %p38
        %p152 = pneg %p35
        %p153 = pneg %p59
        %p154 = pneg %p56
        %p155 = pneg %p80
        %p156 = pneg %p77
        %p157 = pneg %p106
        %p158 = pneg %p103
        %s159 = sand.u32 %s93, 1
        %s160 = scalar_lea.sflag [#allocation5], %s159
        %s161 = sand.u32 %s93, 1
        %s162 = smul.addr %s161, 256
        %s163 = scalar_lea.vmem [#allocation4], %s162
        %p164 = scmp.lt.s32.totalorder %s17, 1
        %s165 = scalar_select %p164, %s17, 1
        %s166 = smul.addr %s165, 32
        %s167 = smul.addr %s166, 8
        %s168 = scalar_lea.vmem %s0, %s167
        %v169 = vld [vmem:[%s168] sm:$0xff]
        %v170 = vld [vmem:[%s168 + $0x8] sm:$0xff]
        %v171 = vld [vmem:[%s168 + $0x10] sm:$0xff]
        %v172 = vld [vmem:[%s168 + $0x18] sm:$0xff]
        %v173 = vld [vmem:[%s168 + $0x20] sm:$0xff]
        %v174 = vld [vmem:[%s168 + $0x28] sm:$0xff]
        %v175 = vld [vmem:[%s168 + $0x30] sm:$0xff]
        %v176 = vld [vmem:[%s168 + $0x38] sm:$0xff]
        %v177 = vld [vmem:[%s168 + $0x40] sm:$0xff]
        %v178 = vld [vmem:[%s168 + $0x48] sm:$0xff]
        %v179 = vld [vmem:[%s168 + $0x50] sm:$0xff]
        %v180 = vld [vmem:[%s168 + $0x58] sm:$0xff]
        %v181 = vld [vmem:[%s168 + $0x60] sm:$0xff]
        %v182 = vld [vmem:[%s168 + $0x68] sm:$0xff]
        %v183 = vld [vmem:[%s168 + $0x70] sm:$0xff]
        %v184 = vld [vmem:[%s168 + $0x78] sm:$0xff]
        %v185 = vld [vmem:[%s168 + $0x80] sm:$0xff]
        %v186 = vld [vmem:[%s168 + $0x88] sm:$0xff]
        %v187 = vld [vmem:[%s168 + $0x90] sm:$0xff]
        %v188 = vld [vmem:[%s168 + $0x98] sm:$0xff]
        %v189 = vld [vmem:[%s168 + $0xa0] sm:$0xff]
        %v190 = vld [vmem:[%s168 + $0xa8] sm:$0xff]
        %v191 = vld [vmem:[%s168 + $0xb0] sm:$0xff]
        %v192 = vld [vmem:[%s168 + $0xb8] sm:$0xff]
        %v193 = vld [vmem:[%s168 + $0xc0] sm:$0xff]
        %v194 = vld [vmem:[%s168 + $0xc8] sm:$0xff]
        %v195 = vld [vmem:[%s168 + $0xd0] sm:$0xff]
        %v196 = vld [vmem:[%s168 + $0xd8] sm:$0xff]
        %v197 = vld [vmem:[%s168 + $0xe0] sm:$0xff]
        %v198 = vld [vmem:[%s168 + $0xe8] sm:$0xff]
        %v199 = vld [vmem:[%s168 + $0xf0] sm:$0xff]
        %v200 = vld [vmem:[%s168 + $0xf8] sm:$0xff]
        %v201 = vpack.c.bf16 %v169, %v169
        %v202 = vpack.c.bf16 %v170, %v170
        %v203 = vpack.c.bf16 %v171, %v171
        %v204 = vpack.c.bf16 %v172, %v172
        %v205 = vpack.c.bf16 %v173, %v173
        %v206 = vpack.c.bf16 %v174, %v174
        %v207 = vpack.c.bf16 %v175, %v175
        %v208 = vpack.c.bf16 %v176, %v176
        %v209 = vpack.c.bf16 %v177, %v177
        %v210 = vpack.c.bf16 %v178, %v178
        %v211 = vpack.c.bf16 %v179, %v179
        %v212 = vpack.c.bf16 %v180, %v180
        %v213 = vpack.c.bf16 %v181, %v181
        %v214 = vpack.c.bf16 %v182, %v182
        %v215 = vpack.c.bf16 %v183, %v183
        %v216 = vpack.c.bf16 %v184, %v184
        %v217 = vpack.c.bf16 %v185, %v185
        %v218 = vpack.c.bf16 %v186, %v186
        %v219 = vpack.c.bf16 %v187, %v187
        %v220 = vpack.c.bf16 %v188, %v188
        %v221 = vpack.c.bf16 %v189, %v189
        %v222 = vpack.c.bf16 %v190, %v190
        %v223 = vpack.c.bf16 %v191, %v191
        %v224 = vpack.c.bf16 %v192, %v192
        %v225 = vpack.c.bf16 %v193, %v193
        %v226 = vpack.c.bf16 %v194, %v194
        %v227 = vpack.c.bf16 %v195, %v195
        %v228 = vpack.c.bf16 %v196, %v196
        %v229 = vpack.c.bf16 %v197, %v197
        %v230 = vpack.c.bf16 %v198, %v198
        %v231 = vpack.c.bf16 %v199, %v199
        %v232 = vpack.c.bf16 %v200, %v200
        %vm233 = vsmask.f32 256
        %vm234 = vsmask.f32 4368
        %vm235 = vmor %vm233, %vm234
        %v237 = vshrl.u32 %v201, 16
        %v239 = vrot.slane %v237, 7
        %v240 = vshll.u32 %v201, 16
        %v242 = vor.u32 %v239, %v240
        %v243 = vrot.slane %v239, 4
        %v245 = vshrl.u32 %v202, 16
        %v247 = vrot.slane %v245, 7
        %v248 = vshll.u32 %v202, 16
        %v250 = vor.u32 %v247, %v248
        %v251 = vsel %vm235, %v243, %v250
        %v252 = vrot.slane %v247, 4
        %v254 = vshrl.u32 %v203, 16
        %v256 = vrot.slane %v254, 7
        %v257 = vshll.u32 %v203, 16
        %v259 = vor.u32 %v256, %v257
        %v260 = vrot.slane %v256, 4
        %v262 = vshrl.u32 %v204, 16
        %v264 = vrot.slane %v262, 7
        %v265 = vshll.u32 %v204, 16
        %v267 = vor.u32 %v264, %v265
        %v268 = vsel %vm235, %v260, %v267
        %v269 = vrot.slane %v264, 4
        %v271 = vshrl.u32 %v205, 16
        %v273 = vrot.slane %v271, 7
        %v274 = vshll.u32 %v205, 16
        %v276 = vor.u32 %v273, %v274
        %v277 = vrot.slane %v273, 4
        %v279 = vshrl.u32 %v206, 16
        %v281 = vrot.slane %v279, 7
        %v282 = vshll.u32 %v206, 16
        %v284 = vor.u32 %v281, %v282
        %v285 = vsel %vm235, %v277, %v284
        %v286 = vrot.slane %v281, 4
        %v288 = vshrl.u32 %v207, 16
        %v290 = vrot.slane %v288, 7
        %v291 = vshll.u32 %v207, 16
        %v293 = vor.u32 %v290, %v291
        %v294 = vrot.slane %v290, 4
        %v296 = vshrl.u32 %v208, 16
        %v298 = vrot.slane %v296, 7
        %v299 = vshll.u32 %v208, 16
        %v301 = vor.u32 %v298, %v299
        %v302 = vsel %vm235, %v294, %v301
        %v303 = vrot.slane %v298, 4
        %v305 = vshrl.u32 %v209, 16
        %v307 = vrot.slane %v305, 7
        %v308 = vshll.u32 %v209, 16
        %v310 = vor.u32 %v307, %v308
        %v311 = vrot.slane %v307, 4
        %v313 = vshrl.u32 %v210, 16
        %v315 = vrot.slane %v313, 7
        %v316 = vshll.u32 %v210, 16
        %v318 = vor.u32 %v315, %v316
        %v319 = vsel %vm235, %v311, %v318
        %v320 = vrot.slane %v315, 4
        %v322 = vshrl.u32 %v211, 16
        %v324 = vrot.slane %v322, 7
        %v325 = vshll.u32 %v211, 16
        %v327 = vor.u32 %v324, %v325
        %v328 = vrot.slane %v324, 4
        %v330 = vshrl.u32 %v212, 16
        %v332 = vrot.slane %v330, 7
        %v333 = vshll.u32 %v212, 16
        %v335 = vor.u32 %v332, %v333
        %v336 = vsel %vm235, %v328, %v335
        %v337 = vrot.slane %v332, 4
        %v339 = vshrl.u32 %v213, 16
        %v341 = vrot.slane %v339, 7
        %v342 = vshll.u32 %v213, 16
        %v344 = vor.u32 %v341, %v342
        %v345 = vrot.slane %v341, 4
        %v347 = vshrl.u32 %v214, 16
        %v349 = vrot.slane %v347, 7
        %v350 = vshll.u32 %v214, 16
        %v352 = vor.u32 %v349, %v350
        %v353 = vsel %vm235, %v345, %v352
        %v354 = vrot.slane %v349, 4
        %v356 = vshrl.u32 %v215, 16
        %v358 = vrot.slane %v356, 7
        %v359 = vshll.u32 %v215, 16
        %v361 = vor.u32 %v358, %v359
        %v362 = vrot.slane %v358, 4
        %v364 = vshrl.u32 %v216, 16
        %v366 = vrot.slane %v364, 7
        %v367 = vshll.u32 %v216, 16
        %v369 = vor.u32 %v366, %v367
        %v370 = vsel %vm235, %v362, %v369
        %v371 = vrot.slane %v366, 4
        %v373 = vshrl.u32 %v217, 16
        %v375 = vrot.slane %v373, 7
        %v376 = vshll.u32 %v217, 16
        %v378 = vor.u32 %v375, %v376
        %v379 = vrot.slane %v375, 4
        %v381 = vshrl.u32 %v218, 16
        %v383 = vrot.slane %v381, 7
        %v384 = vshll.u32 %v218, 16
        %v386 = vor.u32 %v383, %v384
        %v387 = vsel %vm235, %v379, %v386
        %v388 = vrot.slane %v383, 4
        %v390 = vshrl.u32 %v219, 16
        %v392 = vrot.slane %v390, 7
        %v393 = vshll.u32 %v219, 16
        %v395 = vor.u32 %v392, %v393
        %v396 = vrot.slane %v392, 4
        %v398 = vshrl.u32 %v220, 16
        %v400 = vrot.slane %v398, 7
        %v401 = vshll.u32 %v220, 16
        %v403 = vor.u32 %v400, %v401
        %v404 = vsel %vm235, %v396, %v403
        %v405 = vrot.slane %v400, 4
        %v407 = vshrl.u32 %v221, 16
        %v409 = vrot.slane %v407, 7
        %v410 = vshll.u32 %v221, 16
        %v412 = vor.u32 %v409, %v410
        %v413 = vrot.slane %v409, 4
        %v415 = vshrl.u32 %v222, 16
        %v417 = vrot.slane %v415, 7
        %v418 = vshll.u32 %v222, 16
        %v420 = vor.u32 %v417, %v418
        %v421 = vsel %vm235, %v413, %v420
        %v422 = vrot.slane %v417, 4
        %v424 = vshrl.u32 %v223, 16
        %v426 = vrot.slane %v424, 7
        %v427 = vshll.u32 %v223, 16
        %v429 = vor.u32 %v426, %v427
        %v430 = vrot.slane %v426, 4
        %v432 = vshrl.u32 %v224, 16
        %v434 = vrot.slane %v432, 7
        %v435 = vshll.u32 %v224, 16
        %v437 = vor.u32 %v434, %v435
        %v438 = vsel %vm235, %v430, %v437
        %v439 = vrot.slane %v434, 4
        %v441 = vshrl.u32 %v225, 16
        %v443 = vrot.slane %v441, 7
        %v444 = vshll.u32 %v225, 16
        %v446 = vor.u32 %v443, %v444
        %v447 = vrot.slane %v443, 4
        %v449 = vshrl.u32 %v226, 16
        %v451 = vrot.slane %v449, 7
        %v452 = vshll.u32 %v226, 16
        %v454 = vor.u32 %v451, %v452
        %v455 = vsel %vm235, %v447, %v454
        %v456 = vrot.slane %v451, 4
        %v458 = vshrl.u32 %v227, 16
        %v460 = vrot.slane %v458, 7
        %v461 = vshll.u32 %v227, 16
        %v463 = vor.u32 %v460, %v461
        %v464 = vrot.slane %v460, 4
        %v466 = vshrl.u32 %v228, 16
        %v468 = vrot.slane %v466, 7
        %v469 = vshll.u32 %v228, 16
        %v471 = vor.u32 %v468, %v469
        %v472 = vsel %vm235, %v464, %v471
        %v473 = vrot.slane %v468, 4
        %v475 = vshrl.u32 %v229, 16
        %v477 = vrot.slane %v475, 7
        %v478 = vshll.u32 %v229, 16
        %v480 = vor.u32 %v477, %v478
        %v481 = vrot.slane %v477, 4
        %v483 = vshrl.u32 %v230, 16
        %v485 = vrot.slane %v483, 7
        %v486 = vshll.u32 %v230, 16
        %v488 = vor.u32 %v485, %v486
        %v489 = vsel %vm235, %v481, %v488
        %v490 = vrot.slane %v485, 4
        %v492 = vshrl.u32 %v231, 16
        %v494 = vrot.slane %v492, 7
        %v495 = vshll.u32 %v231, 16
        %v497 = vor.u32 %v494, %v495
        %v498 = vrot.slane %v494, 4
        %v500 = vshrl.u32 %v232, 16
        %v502 = vrot.slane %v500, 7
        %v503 = vshll.u32 %v232, 16
        %v505 = vor.u32 %v502, %v503
        %v506 = vsel %vm235, %v498, %v505
        %v507 = vrot.slane %v502, 4
        %s556 = scalar_lea.vmem [#allocation2], 12
        %vm557 = vcmask 1043456
        %vm558 = vsmask.f32 7938
        %vm559 = vmand %vm557, %vm558
        %v560 = vld [vmem:[%s556] sm:$0xf]
        %v561 = vsel %vm559, %v242, %v560
        %562 = vst [vmem:[%s556] sm:$0xf] %v561
        %563 = vst [vmem:[%s556 + $0x4] sm:$0xf] %v251
        %vm564 = vcmask 1040384
        %vm565 = vmand %vm564, %vm233
        %v566 = vld [vmem:[%s556 + $0x8] sm:$0x1]
        %v567 = vsel %vm565, %v252, %v566
        %568 = vst [vmem:[%s556 + $0x8] sm:$0x1] %v567
        %v569 = vld [vmem:[%s556 + $0xc] sm:$0xf]
        %v570 = vsel %vm559, %v259, %v569
        %571 = vst [vmem:[%s556 + $0xc] sm:$0xf] %v570
        %572 = vst [vmem:[%s556 + $0x10] sm:$0xf] %v268
        %v573 = vld [vmem:[%s556 + $0x14] sm:$0x1]
        %v574 = vsel %vm565, %v269, %v573
        %575 = vst [vmem:[%s556 + $0x14] sm:$0x1] %v574
        %v576 = vld [vmem:[%s556 + $0x18] sm:$0xf]
        %v577 = vsel %vm559, %v276, %v576
        %578 = vst [vmem:[%s556 + $0x18] sm:$0xf] %v577
        %579 = vst [vmem:[%s556 + $0x1c] sm:$0xf] %v285
        %v580 = vld [vmem:[%s556 + $0x20] sm:$0x1]
        %v581 = vsel %vm565, %v286, %v580
        %582 = vst [vmem:[%s556 + $0x20] sm:$0x1] %v581
        %v583 = vld [vmem:[%s556 + $0x24] sm:$0xf]
        %v584 = vsel %vm559, %v293, %v583
        %585 = vst [vmem:[%s556 + $0x24] sm:$0xf] %v584
        %586 = vst [vmem:[%s556 + $0x28] sm:$0xf] %v302
        %v587 = vld [vmem:[%s556 + $0x2c] sm:$0x1]
        %v588 = vsel %vm565, %v303, %v587
        %589 = vst [vmem:[%s556 + $0x2c] sm:$0x1] %v588
        %v590 = vld [vmem:[%s556 + $0x30] sm:$0xf]
        %v591 = vsel %vm559, %v310, %v590
        %592 = vst [vmem:[%s556 + $0x30] sm:$0xf] %v591
        %593 = vst [vmem:[%s556 + $0x34] sm:$0xf] %v319
        %v594 = vld [vmem:[%s556 + $0x38] sm:$0x1]
        %v595 = vsel %vm565, %v320, %v594
        %596 = vst [vmem:[%s556 + $0x38] sm:$0x1] %v595
        %v597 = vld [vmem:[%s556 + $0x3c] sm:$0xf]
        %v598 = vsel %vm559, %v327, %v597
        %599 = vst [vmem:[%s556 + $0x3c] sm:$0xf] %v598
        %600 = vst [vmem:[%s556 + $0x40] sm:$0xf] %v336
        %v601 = vld [vmem:[%s556 + $0x44] sm:$0x1]
        %v602 = vsel %vm565, %v337, %v601
        %603 = vst [vmem:[%s556 + $0x44] sm:$0x1] %v602
        %v604 = vld [vmem:[%s556 + $0x48] sm:$0xf]
        %v605 = vsel %vm559, %v344, %v604
        %606 = vst [vmem:[%s556 + $0x48] sm:$0xf] %v605
        %607 = vst [vmem:[%s556 + $0x4c] sm:$0xf] %v353
        %v608 = vld [vmem:[%s556 + $0x50] sm:$0x1]
        %v609 = vsel %vm565, %v354, %v608
        %610 = vst [vmem:[%s556 + $0x50] sm:$0x1] %v609
        %v611 = vld [vmem:[%s556 + $0x54] sm:$0xf]
        %v612 = vsel %vm559, %v361, %v611
        %613 = vst [vmem:[%s556 + $0x54] sm:$0xf] %v612
        %614 = vst [vmem:[%s556 + $0x58] sm:$0xf] %v370
        %v615 = vld [vmem:[%s556 + $0x5c] sm:$0x1]
        %v616 = vsel %vm565, %v371, %v615
        %617 = vst [vmem:[%s556 + $0x5c] sm:$0x1] %v616
        %v618 = vld [vmem:[%s556 + $0x60] sm:$0xf]
        %v619 = vsel %vm559, %v378, %v618
        %620 = vst [vmem:[%s556 + $0x60] sm:$0xf] %v619
        %621 = vst [vmem:[%s556 + $0x64] sm:$0xf] %v387
        %v622 = vld [vmem:[%s556 + $0x68] sm:$0x1]
        %v623 = vsel %vm565, %v388, %v622
        %624 = vst [vmem:[%s556 + $0x68] sm:$0x1] %v623
        %v625 = vld [vmem:[%s556 + $0x6c] sm:$0xf]
        %v626 = vsel %vm559, %v395, %v625
        %627 = vst [vmem:[%s556 + $0x6c] sm:$0xf] %v626
        %628 = vst [vmem:[%s556 + $0x70] sm:$0xf] %v404
        %v629 = vld [vmem:[%s556 + $0x74] sm:$0x1]
        %v630 = vsel %vm565, %v405, %v629
        %631 = vst [vmem:[%s556 + $0x74] sm:$0x1] %v630
        %v632 = vld [vmem:[%s556 + $0x78] sm:$0xf]
        %v633 = vsel %vm559, %v412, %v632
        %634 = vst [vmem:[%s556 + $0x78] sm:$0xf] %v633
        %635 = vst [vmem:[%s556 + $0x7c] sm:$0xf] %v421
        %v636 = vld [vmem:[%s556 + $0x80] sm:$0x1]
        %v637 = vsel %vm565, %v422, %v636
        %638 = vst [vmem:[%s556 + $0x80] sm:$0x1] %v637
        %v639 = vld [vmem:[%s556 + $0x84] sm:$0xf]
        %v640 = vsel %vm559, %v429, %v639
        %641 = vst [vmem:[%s556 + $0x84] sm:$0xf] %v640
        %642 = vst [vmem:[%s556 + $0x88] sm:$0xf] %v438
        %v643 = vld [vmem:[%s556 + $0x8c] sm:$0x1]
        %v644 = vsel %vm565, %v439, %v643
        %645 = vst [vmem:[%s556 + $0x8c] sm:$0x1] %v644
        %v646 = vld [vmem:[%s556 + $0x90] sm:$0xf]
        %v647 = vsel %vm559, %v446, %v646
        %648 = vst [vmem:[%s556 + $0x90] sm:$0xf] %v647
        %649 = vst [vmem:[%s556 + $0x94] sm:$0xf] %v455
        %v650 = vld [vmem:[%s556 + $0x98] sm:$0x1]
        %v651 = vsel %vm565, %v456, %v650
        %652 = vst [vmem:[%s556 + $0x98] sm:$0x1] %v651
        %v653 = vld [vmem:[%s556 + $0x9c] sm:$0xf]
        %v654 = vsel %vm559, %v463, %v653
        %655 = vst [vmem:[%s556 + $0x9c] sm:$0xf] %v654
        %656 = vst [vmem:[%s556 + $0xa0] sm:$0xf] %v472
        %v657 = vld [vmem:[%s556 + $0xa4] sm:$0x1]
        %v658 = vsel %vm565, %v473, %v657
        %659 = vst [vmem:[%s556 + $0xa4] sm:$0x1] %v658
        %v660 = vld [vmem:[%s556 + $0xa8] sm:$0xf]
        %v661 = vsel %vm559, %v480, %v660
        %662 = vst [vmem:[%s556 + $0xa8] sm:$0xf] %v661
        %663 = vst [vmem:[%s556 + $0xac] sm:$0xf] %v489
        %v664 = vld [vmem:[%s556 + $0xb0] sm:$0x1]
        %v665 = vsel %vm565, %v490, %v664
        %666 = vst [vmem:[%s556 + $0xb0] sm:$0x1] %v665
        %v667 = vld [vmem:[%s556 + $0xb4] sm:$0xf]
        %v668 = vsel %vm559, %v497, %v667
        %669 = vst [vmem:[%s556 + $0xb4] sm:$0xf] %v668
        %670 = vst [vmem:[%s556 + $0xb8] sm:$0xf] %v506
        %v671 = vld [vmem:[%s556 + $0xbc] sm:$0x1]
        %v672 = vsel %vm565, %v507, %v671
        %673 = vst [vmem:[%s556 + $0xbc] sm:$0x1] %v672
        %v674 = vld [vmem:[#allocation2] sm:$0xf]
        %v675 = vsel %vm559, %v259, %v674
        %676 = vst [vmem:[#allocation2] sm:$0xf] %v675
        %677 = vst [vmem:[#allocation2 + $0x4] sm:$0xf] %v268
        %v678 = vld [vmem:[#allocation2 + $0x8] sm:$0x1]
        %v679 = vsel %vm565, %v269, %v678
        %680 = vst [vmem:[#allocation2 + $0x8] sm:$0x1] %v679
        %s681 = scalar_lea.vmem [#allocation2], 204
        %v682 = vld [vmem:[%s681] sm:$0xf]
        %v683 = vsel %vm559, %v480, %v682
        %684 = vst [vmem:[%s681] sm:$0xf] %v683
        %685 = vst [vmem:[%s681 + $0x4] sm:$0xf] %v489
        %v686 = vld [vmem:[%s681 + $0x8] sm:$0x1]
        %v687 = vsel %vm565, %v490, %v686
        %688 = vst [vmem:[%s681 + $0x8] sm:$0x1] %v687
        %v689 = vld [vmem:[#allocation2] sm:$0x2]
        %v690 = vld [vmem:[#allocation2 + $0xc] sm:$0x2]
        %v691 = vld [vmem:[#allocation2 + $0x18] sm:$0x2]
        %v692 = vld [vmem:[#allocation2 + $0x24] sm:$0x2]
        %v693 = vld [vmem:[#allocation2 + $0x30] sm:$0x2]
        %v694 = vld [vmem:[#allocation2 + $0x3c] sm:$0x2]
        %v695 = vld [vmem:[#allocation2 + $0x48] sm:$0x2]
        %v696 = vld [vmem:[#allocation2 + $0x54] sm:$0x2]
        %v697 = vld [vmem:[#allocation2 + $0x60] sm:$0x2]
        %v698 = vld [vmem:[#allocation2 + $0x6c] sm:$0x2]
        %v699 = vld [vmem:[#allocation2 + $0x78] sm:$0x2]
        %v700 = vld [vmem:[#allocation2 + $0x84] sm:$0x2]
        %v701 = vld [vmem:[#allocation2 + $0x90] sm:$0x2]
        %v702 = vld [vmem:[#allocation2 + $0x9c] sm:$0x2]
        %v703 = vld [vmem:[#allocation2 + $0xa8] sm:$0x2]
        %v704 = vld [vmem:[#allocation2 + $0xb4] sm:$0x2]
        %v705 = vld [vmem:[#allocation2 + $0xc0] sm:$0x2]
        %v706 = vld [vmem:[#allocation2 + $0xcc] sm:$0x2]
        %v725 = vrot.slane %v689, 5
        %v726 = vrot.slane %v725, 4
        %v727 = vrot.slane %v690, 5
        %v728 = vrot.slane %v727, 4
        %v729 = vrot.slane %v691, 5
        %v730 = vrot.slane %v729, 4
        %v731 = vrot.slane %v692, 5
        %v732 = vrot.slane %v731, 4
        %v733 = vrot.slane %v693, 5
        %v734 = vrot.slane %v733, 4
        %v735 = vrot.slane %v694, 5
        %v736 = vrot.slane %v735, 4
        %v737 = vrot.slane %v695, 5
        %v738 = vrot.slane %v737, 4
        %v739 = vrot.slane %v696, 5
        %v740 = vrot.slane %v739, 4
        %v741 = vrot.slane %v697, 5
        %v742 = vrot.slane %v741, 4
        %v743 = vrot.slane %v698, 5
        %v744 = vrot.slane %v743, 4
        %v745 = vrot.slane %v699, 5
        %v746 = vrot.slane %v745, 4
        %v747 = vrot.slane %v700, 5
        %v748 = vrot.slane %v747, 4
        %v749 = vrot.slane %v701, 5
        %v750 = vrot.slane %v749, 4
        %v751 = vrot.slane %v702, 5
        %v752 = vrot.slane %v751, 4
        %v753 = vrot.slane %v703, 5
        %v754 = vrot.slane %v753, 4
        %v755 = vrot.slane %v704, 5
        %v756 = vrot.slane %v755, 4
        %v757 = vrot.slane %v705, 5
        %v758 = vrot.slane %v757, 4
        %v759 = vrot.slane %v706, 5
        %v760 = vrot.slane %v759, 4
        %v779 = vld [vmem:[#allocation2] sm:$0x1]
        %v780 = vsel %vm565, %v726, %v779
        %781 = vst [vmem:[#allocation2] sm:$0x1] %v780
        %v782 = vld [vmem:[#allocation2 + $0xc] sm:$0x1]
        %v783 = vsel %vm565, %v728, %v782
        %784 = vst [vmem:[#allocation2 + $0xc] sm:$0x1] %v783
        %v785 = vld [vmem:[#allocation2 + $0x18] sm:$0x1]
        %v786 = vsel %vm565, %v730, %v785
        %787 = vst [vmem:[#allocation2 + $0x18] sm:$0x1] %v786
        %v788 = vld [vmem:[#allocation2 + $0x24] sm:$0x1]
        %v789 = vsel %vm565, %v732, %v788
        %790 = vst [vmem:[#allocation2 + $0x24] sm:$0x1] %v789
        %v791 = vld [vmem:[#allocation2 + $0x30] sm:$0x1]
        %v792 = vsel %vm565, %v734, %v791
        %793 = vst [vmem:[#allocation2 + $0x30] sm:$0x1] %v792
        %v794 = vld [vmem:[#allocation2 + $0x3c] sm:$0x1]
        %v795 = vsel %vm565, %v736, %v794
        %796 = vst [vmem:[#allocation2 + $0x3c] sm:$0x1] %v795
        %v797 = vld [vmem:[#allocation2 + $0x48] sm:$0x1]
        %v798 = vsel %vm565, %v738, %v797
        %799 = vst [vmem:[#allocation2 + $0x48] sm:$0x1] %v798
        %v800 = vld [vmem:[#allocation2 + $0x54] sm:$0x1]
        %v801 = vsel %vm565, %v740, %v800
        %802 = vst [vmem:[#allocation2 + $0x54] sm:$0x1] %v801
        %v803 = vld [vmem:[#allocation2 + $0x60] sm:$0x1]
        %v804 = vsel %vm565, %v742, %v803
        %805 = vst [vmem:[#allocation2 + $0x60] sm:$0x1] %v804
        %v806 = vld [vmem:[#allocation2 + $0x6c] sm:$0x1]
        %v807 = vsel %vm565, %v744, %v806
        %808 = vst [vmem:[#allocation2 + $0x6c] sm:$0x1] %v807
        %v809 = vld [vmem:[#allocation2 + $0x78] sm:$0x1]
        %v810 = vsel %vm565, %v746, %v809
        %811 = vst [vmem:[#allocation2 + $0x78] sm:$0x1] %v810
        %v812 = vld [vmem:[#allocation2 + $0x84] sm:$0x1]
        %v813 = vsel %vm565, %v748, %v812
        %814 = vst [vmem:[#allocation2 + $0x84] sm:$0x1] %v813
        %v815 = vld [vmem:[#allocation2 + $0x90] sm:$0x1]
        %v816 = vsel %vm565, %v750, %v815
        %817 = vst [vmem:[#allocation2 + $0x90] sm:$0x1] %v816
        %v818 = vld [vmem:[#allocation2 + $0x9c] sm:$0x1]
        %v819 = vsel %vm565, %v752, %v818
        %820 = vst [vmem:[#allocation2 + $0x9c] sm:$0x1] %v819
        %v821 = vld [vmem:[#allocation2 + $0xa8] sm:$0x1]
        %v822 = vsel %vm565, %v754, %v821
        %823 = vst [vmem:[#allocation2 + $0xa8] sm:$0x1] %v822
        %v824 = vld [vmem:[#allocation2 + $0xb4] sm:$0x1]
        %v825 = vsel %vm565, %v756, %v824
        %826 = vst [vmem:[#allocation2 + $0xb4] sm:$0x1] %v825
        %v827 = vld [vmem:[#allocation2 + $0xc0] sm:$0x1]
        %v828 = vsel %vm565, %v758, %v827
        %829 = vst [vmem:[#allocation2 + $0xc0] sm:$0x1] %v828
        %v830 = vld [vmem:[#allocation2 + $0xcc] sm:$0x1]
        %v831 = vsel %vm565, %v760, %v830
        %832 = vst [vmem:[#allocation2 + $0xcc] sm:$0x1] %v831
        %v833 = vld [vmem:[#allocation2 + $0x4] sm:$0x8]
        %v834 = vld [vmem:[#allocation2 + $0x10] sm:$0x8]
        %v835 = vld [vmem:[#allocation2 + $0x1c] sm:$0x8]
        %v836 = vld [vmem:[#allocation2 + $0x28] sm:$0x8]
        %v837 = vld [vmem:[#allocation2 + $0x34] sm:$0x8]
        %v838 = vld [vmem:[#allocation2 + $0x40] sm:$0x8]
        %v839 = vld [vmem:[#allocation2 + $0x4c] sm:$0x8]
        %v840 = vld [vmem:[#allocation2 + $0x58] sm:$0x8]
        %v841 = vld [vmem:[#allocation2 + $0x64] sm:$0x8]
        %v842 = vld [vmem:[#allocation2 + $0x70] sm:$0x8]
        %v843 = vld [vmem:[#allocation2 + $0x7c] sm:$0x8]
        %v844 = vld [vmem:[#allocation2 + $0x88] sm:$0x8]
        %v845 = vld [vmem:[#allocation2 + $0x94] sm:$0x8]
        %v846 = vld [vmem:[#allocation2 + $0xa0] sm:$0x8]
        %v847 = vld [vmem:[#allocation2 + $0xac] sm:$0x8]
        %v848 = vld [vmem:[#allocation2 + $0xb8] sm:$0x8]
        %v849 = vld [vmem:[#allocation2 + $0xc4] sm:$0x8]
        %v850 = vld [vmem:[#allocation2 + $0xd0] sm:$0x8]
        %v869 = vrot.slane %v833, 7
        %v870 = vrot.slane %v869, 4
        %v871 = vrot.slane %v834, 7
        %v872 = vrot.slane %v871, 4
        %v873 = vrot.slane %v835, 7
        %v874 = vrot.slane %v873, 4
        %v875 = vrot.slane %v836, 7
        %v876 = vrot.slane %v875, 4
        %v877 = vrot.slane %v837, 7
        %v878 = vrot.slane %v877, 4
        %v879 = vrot.slane %v838, 7
        %v880 = vrot.slane %v879, 4
        %v881 = vrot.slane %v839, 7
        %v882 = vrot.slane %v881, 4
        %v883 = vrot.slane %v840, 7
        %v884 = vrot.slane %v883, 4
        %v885 = vrot.slane %v841, 7
        %v886 = vrot.slane %v885, 4
        %v887 = vrot.slane %v842, 7
        %v888 = vrot.slane %v887, 4
        %v889 = vrot.slane %v843, 7
        %v890 = vrot.slane %v889, 4
        %v891 = vrot.slane %v844, 7
        %v892 = vrot.slane %v891, 4
        %v893 = vrot.slane %v845, 7
        %v894 = vrot.slane %v893, 4
        %v895 = vrot.slane %v846, 7
        %v896 = vrot.slane %v895, 4
        %v897 = vrot.slane %v847, 7
        %v898 = vrot.slane %v897, 4
        %v899 = vrot.slane %v848, 7
        %v900 = vrot.slane %v899, 4
        %v901 = vrot.slane %v849, 7
        %v902 = vrot.slane %v901, 4
        %v903 = vrot.slane %v850, 7
        %v904 = vrot.slane %v903, 4
        %vm923 = vmand %vm564, %vm558
        %v924 = vld [vmem:[#allocation2 + $0x8] sm:$0x1]
        %v925 = vsel %vm923, %v870, %v924
        %926 = vst [vmem:[#allocation2 + $0x8] sm:$0x1] %v925
        %v927 = vld [vmem:[#allocation2 + $0x14] sm:$0x1]
        %v928 = vsel %vm923, %v872, %v927
        %929 = vst [vmem:[#allocation2 + $0x14] sm:$0x1] %v928
        %v930 = vld [vmem:[#allocation2 + $0x20] sm:$0x1]
        %v931 = vsel %vm923, %v874, %v930
        %932 = vst [vmem:[#allocation2 + $0x20] sm:$0x1] %v931
        %v933 = vld [vmem:[#allocation2 + $0x2c] sm:$0x1]
        %v934 = vsel %vm923, %v876, %v933
        %935 = vst [vmem:[#allocation2 + $0x2c] sm:$0x1] %v934
        %v936 = vld [vmem:[#allocation2 + $0x38] sm:$0x1]
        %v937 = vsel %vm923, %v878, %v936
        %938 = vst [vmem:[#allocation2 + $0x38] sm:$0x1] %v937
        %v939 = vld [vmem:[#allocation2 + $0x44] sm:$0x1]
        %v940 = vsel %vm923, %v880, %v939
        %941 = vst [vmem:[#allocation2 + $0x44] sm:$0x1] %v940
        %v942 = vld [vmem:[#allocation2 + $0x50] sm:$0x1]
        %v943 = vsel %vm923, %v882, %v942
        %944 = vst [vmem:[#allocation2 + $0x50] sm:$0x1] %v943
        %v945 = vld [vmem:[#allocation2 + $0x5c] sm:$0x1]
        %v946 = vsel %vm923, %v884, %v945
        %947 = vst [vmem:[#allocation2 + $0x5c] sm:$0x1] %v946
        %v948 = vld [vmem:[#allocation2 + $0x68] sm:$0x1]
        %v949 = vsel %vm923, %v886, %v948
        %950 = vst [vmem:[#allocation2 + $0x68] sm:$0x1] %v949
        %v951 = vld [vmem:[#allocation2 + $0x74] sm:$0x1]
        %v952 = vsel %vm923, %v888, %v951
        %953 = vst [vmem:[#allocation2 + $0x74] sm:$0x1] %v952
        %v954 = vld [vmem:[#allocation2 + $0x80] sm:$0x1]
        %v955 = vsel %vm923, %v890, %v954
        %956 = vst [vmem:[#allocation2 + $0x80] sm:$0x1] %v955
        %v957 = vld [vmem:[#allocation2 + $0x8c] sm:$0x1]
        %v958 = vsel %vm923, %v892, %v957
        %959 = vst [vmem:[#allocation2 + $0x8c] sm:$0x1] %v958
        %v960 = vld [vmem:[#allocation2 + $0x98] sm:$0x1]
        %v961 = vsel %vm923, %v894, %v960
        %962 = vst [vmem:[#allocation2 + $0x98] sm:$0x1] %v961
        %v963 = vld [vmem:[#allocation2 + $0xa4] sm:$0x1]
        %v964 = vsel %vm923, %v896, %v963
        %965 = vst [vmem:[#allocation2 + $0xa4] sm:$0x1] %v964
        %v966 = vld [vmem:[#allocation2 + $0xb0] sm:$0x1]
        %v967 = vsel %vm923, %v898, %v966
        %968 = vst [vmem:[#allocation2 + $0xb0] sm:$0x1] %v967
        %v969 = vld [vmem:[#allocation2 + $0xbc] sm:$0x1]
        %v970 = vsel %vm923, %v900, %v969
        %971 = vst [vmem:[#allocation2 + $0xbc] sm:$0x1] %v970
        %v972 = vld [vmem:[#allocation2 + $0xc8] sm:$0x1]
        %v973 = vsel %vm923, %v902, %v972
        %974 = vst [vmem:[#allocation2 + $0xc8] sm:$0x1] %v973
        %v975 = vld [vmem:[#allocation2 + $0xd4] sm:$0x1]
        %v976 = vsel %vm923, %v904, %v975
        %977 = vst [vmem:[#allocation2 + $0xd4] sm:$0x1] %v976
        %v978 = vld [vmem:[#allocation2] sm:$0xf]
        %v979 = vld [vmem:[#allocation2 + $0x4] sm:$0xf]
        %v980 = vld [vmem:[#allocation2 + $0xc] sm:$0xf]
        %v981 = vld [vmem:[#allocation2 + $0x10] sm:$0xf]
        %v982 = vld [vmem:[#allocation2 + $0x18] sm:$0xf]
        %v983 = vld [vmem:[#allocation2 + $0x1c] sm:$0xf]
        %v984 = vld [vmem:[#allocation2 + $0x24] sm:$0xf]
        %v985 = vld [vmem:[#allocation2 + $0x28] sm:$0xf]
        %v986 = vld [vmem:[#allocation2 + $0x30] sm:$0xf]
        %v987 = vld [vmem:[#allocation2 + $0x34] sm:$0xf]
        %v988 = vld [vmem:[#allocation2 + $0x3c] sm:$0xf]
        %v989 = vld [vmem:[#allocation2 + $0x40] sm:$0xf]
        %v990 = vld [vmem:[#allocation2 + $0x48] sm:$0xf]
        %v991 = vld [vmem:[#allocation2 + $0x4c] sm:$0xf]
        %v992 = vld [vmem:[#allocation2 + $0x54] sm:$0xf]
        %v993 = vld [vmem:[#allocation2 + $0x58] sm:$0xf]
        %v994 = vld [vmem:[#allocation2 + $0x60] sm:$0xf]
        %v995 = vld [vmem:[#allocation2 + $0x64] sm:$0xf]
        %v996 = vld [vmem:[#allocation2 + $0x6c] sm:$0xf]
        %v997 = vld [vmem:[#allocation2 + $0x70] sm:$0xf]
        %v998 = vld [vmem:[#allocation2 + $0x78] sm:$0xf]
        %v999 = vld [vmem:[#allocation2 + $0x7c] sm:$0xf]
        %v1000 = vld [vmem:[#allocation2 + $0x84] sm:$0xf]
        %v1001 = vld [vmem:[#allocation2 + $0x88] sm:$0xf]
        %v1002 = vld [vmem:[#allocation2 + $0x90] sm:$0xf]
        %v1003 = vld [vmem:[#allocation2 + $0x94] sm:$0xf]
        %v1004 = vld [vmem:[#allocation2 + $0x9c] sm:$0xf]
        %v1005 = vld [vmem:[#allocation2 + $0xa0] sm:$0xf]
        %v1006 = vld [vmem:[#allocation2 + $0xa8] sm:$0xf]
        %v1007 = vld [vmem:[#allocation2 + $0xac] sm:$0xf]
        %v1008 = vld [vmem:[#allocation2 + $0xb4] sm:$0xf]
        %v1009 = vld [vmem:[#allocation2 + $0xb8] sm:$0xf]
        %1010 = vst [vmem:[#allocation3] sm:$0xf] %v978
        %1011 = vst [vmem:[#allocation3 + $0x24] sm:$0xf] %v979
        %1012 = vst [vmem:[#allocation3 + $0x48] sm:$0xf] %v980
        %1013 = vst [vmem:[#allocation3 + $0x6c] sm:$0xf] %v981
        %1014 = vst [vmem:[#allocation3 + $0x90] sm:$0xf] %v982
        %1015 = vst [vmem:[#allocation3 + $0xb4] sm:$0xf] %v983
        %1016 = vst [vmem:[#allocation3 + $0xd8] sm:$0xf] %v984
        %1017 = vst [vmem:[#allocation3 + $0xfc] sm:$0xf] %v985
        %1018 = vst [vmem:[#allocation3 + $0x120] sm:$0xf] %v986
        %1019 = vst [vmem:[#allocation3 + $0x144] sm:$0xf] %v987
        %1020 = vst [vmem:[#allocation3 + $0x168] sm:$0xf] %v988
        %1021 = vst [vmem:[#allocation3 + $0x18c] sm:$0xf] %v989
        %1022 = vst [vmem:[#allocation3 + $0x1b0] sm:$0xf] %v990
        %1023 = vst [vmem:[#allocation3 + $0x1d4] sm:$0xf] %v991
        %1024 = vst [vmem:[#allocation3 + $0x1f8] sm:$0xf] %v992
        %1025 = vst [vmem:[#allocation3 + $0x21c] sm:$0xf] %v993
        %1026 = vst [vmem:[#allocation3 + $0x240] sm:$0xf] %v994
        %1027 = vst [vmem:[#allocation3 + $0x264] sm:$0xf] %v995
        %1028 = vst [vmem:[#allocation3 + $0x288] sm:$0xf] %v996
        %1029 = vst [vmem:[#allocation3 + $0x2ac] sm:$0xf] %v997
        %1030 = vst [vmem:[#allocation3 + $0x2d0] sm:$0xf] %v998
        %1031 = vst [vmem:[#allocation3 + $0x2f4] sm:$0xf] %v999
        %1032 = vst [vmem:[#allocation3 + $0x318] sm:$0xf] %v1000
        %1033 = vst [vmem:[#allocation3 + $0x33c] sm:$0xf] %v1001
        %1034 = vst [vmem:[#allocation3 + $0x360] sm:$0xf] %v1002
        %1035 = vst [vmem:[#allocation3 + $0x384] sm:$0xf] %v1003
        %1036 = vst [vmem:[#allocation3 + $0x3a8] sm:$0xf] %v1004
        %1037 = vst [vmem:[#allocation3 + $0x3cc] sm:$0xf] %v1005
        %1038 = vst [vmem:[#allocation3 + $0x3f0] sm:$0xf] %v1006
        %1039 = vst [vmem:[#allocation3 + $0x414] sm:$0xf] %v1007
        %1040 = vst [vmem:[#allocation3 + $0x438] sm:$0xf] %v1008
        %1041 = vst [vmem:[#allocation3 + $0x45c] sm:$0xf] %v1009
        %v1042 = vld [vmem:[#allocation2] sm:$0xf]
        %v1043 = vld [vmem:[#allocation2 + $0x4] sm:$0xf]
        %v1044 = vld [vmem:[#allocation2 + $0x8] sm:$0x1]
        %v1045 = vld [vmem:[#allocation2 + $0xc] sm:$0xf]
        %v1046 = vld [vmem:[#allocation2 + $0x10] sm:$0xf]
        %v1047 = vld [vmem:[#allocation2 + $0x14] sm:$0x1]
        %v1048 = vld [vmem:[#allocation2 + $0x18] sm:$0xf]
        %v1049 = vld [vmem:[#allocation2 + $0x1c] sm:$0xf]
        %v1050 = vld [vmem:[#allocation2 + $0x20] sm:$0x1]
        %v1051 = vld [vmem:[#allocation2 + $0x24] sm:$0xf]
        %v1052 = vld [vmem:[#allocation2 + $0x28] sm:$0xf]
        %v1053 = vld [vmem:[#allocation2 + $0x2c] sm:$0x1]
        %v1054 = vld [vmem:[#allocation2 + $0x30] sm:$0xf]
        %v1055 = vld [vmem:[#allocation2 + $0x34] sm:$0xf]
        %v1056 = vld [vmem:[#allocation2 + $0x38] sm:$0x1]
        %v1057 = vld [vmem:[#allocation2 + $0x3c] sm:$0xf]
        %v1058 = vld [vmem:[#allocation2 + $0x40] sm:$0xf]
        %v1059 = vld [vmem:[#allocation2 + $0x44] sm:$0x1]
        %v1060 = vld [vmem:[#allocation2 + $0x48] sm:$0xf]
        %v1061 = vld [vmem:[#allocation2 + $0x4c] sm:$0xf]
        %v1062 = vld [vmem:[#allocation2 + $0x50] sm:$0x1]
        %v1063 = vld [vmem:[#allocation2 + $0x54] sm:$0xf]
        %v1064 = vld [vmem:[#allocation2 + $0x58] sm:$0xf]
        %v1065 = vld [vmem:[#allocation2 + $0x5c] sm:$0x1]
        %v1066 = vld [vmem:[#allocation2 + $0x60] sm:$0xf]
        %v1067 = vld [vmem:[#allocation2 + $0x64] sm:$0xf]
        %v1068 = vld [vmem:[#allocation2 + $0x68] sm:$0x1]
        %v1069 = vld [vmem:[#allocation2 + $0x6c] sm:$0xf]
        %v1070 = vld [vmem:[#allocation2 + $0x70] sm:$0xf]
        %v1071 = vld [vmem:[#allocation2 + $0x74] sm:$0x1]
        %v1072 = vld [vmem:[#allocation2 + $0x78] sm:$0xf]
        %v1073 = vld [vmem:[#allocation2 + $0x7c] sm:$0xf]
        %v1074 = vld [vmem:[#allocation2 + $0x80] sm:$0x1]
        %v1075 = vld [vmem:[#allocation2 + $0x84] sm:$0xf]
        %v1076 = vld [vmem:[#allocation2 + $0x88] sm:$0xf]
        %v1077 = vld [vmem:[#allocation2 + $0x8c] sm:$0x1]
        %v1078 = vld [vmem:[#allocation2 + $0x90] sm:$0xf]
        %v1079 = vld [vmem:[#allocation2 + $0x94] sm:$0xf]
        %v1080 = vld [vmem:[#allocation2 + $0x98] sm:$0x1]
        %v1081 = vld [vmem:[#allocation2 + $0x9c] sm:$0xf]
        %v1082 = vld [vmem:[#allocation2 + $0xa0] sm:$0xf]
        %v1083 = vld [vmem:[#allocation2 + $0xa4] sm:$0x1]
        %v1084 = vld [vmem:[#allocation2 + $0xa8] sm:$0xf]
        %v1085 = vld [vmem:[#allocation2 + $0xac] sm:$0xf]
        %v1086 = vld [vmem:[#allocation2 + $0xb0] sm:$0x1]
        %v1087 = vld [vmem:[#allocation2 + $0xb4] sm:$0xf]
        %v1088 = vld [vmem:[#allocation2 + $0xb8] sm:$0xf]
        %v1089 = vld [vmem:[#allocation2 + $0xbc] sm:$0x1]
        %vm1090 = vsmask.f32 3328
        %vm1091 = vsmask.f32 7440
        %vm1092 = vmor %vm1090, %vm1091
        %v1094 = vshrl.u32 %v1042, 16
        %v1096 = vrot.slane %v1094, 4
        %v1097 = vshll.u32 %v1042, 16
        %v1099 = vrot.slane %v1097, 5
        %v1100 = vor.u32 %v1096, %v1099
        %v1101 = vrot.slane %v1100, 4
        %v1103 = vshll.u32 %v1043, 16
        %v1105 = vrot.slane %v1103, 5
        %v1106 = vsel %vm1092, %v1101, %v1105
        %v1107 = vshrl.u32 %v1043, 16
        %v1109 = vrot.slane %v1107, 4
        %v1110 = vor.u32 %v1109, %v1105
        %v1111 = vrot.slane %v1110, 4
        %v1113 = vshll.u32 %v1044, 16
        %v1115 = vrot.slane %v1113, 5
        %v1116 = vsel %vm1092, %v1111, %v1115
        %v1118 = vshrl.u32 %v1045, 16
        %v1120 = vrot.slane %v1118, 4
        %v1121 = vshll.u32 %v1045, 16
        %v1123 = vrot.slane %v1121, 5
        %v1124 = vor.u32 %v1120, %v1123
        %v1125 = vrot.slane %v1124, 4
        %v1127 = vshll.u32 %v1046, 16
        %v1129 = vrot.slane %v1127, 5
        %v1130 = vsel %vm1092, %v1125, %v1129
        %v1131 = vshrl.u32 %v1046, 16
        %v1133 = vrot.slane %v1131, 4
        %v1134 = vor.u32 %v1133, %v1129
        %v1135 = vrot.slane %v1134, 4
        %v1137 = vshll.u32 %v1047, 16
        %v1139 = vrot.slane %v1137, 5
        %v1140 = vsel %vm1092, %v1135, %v1139
        %v1142 = vshrl.u32 %v1048, 16
        %v1144 = vrot.slane %v1142, 4
        %v1145 = vshll.u32 %v1048, 16
        %v1147 = vrot.slane %v1145, 5
        %v1148 = vor.u32 %v1144, %v1147
        %v1149 = vrot.slane %v1148, 4
        %v1151 = vshll.u32 %v1049, 16
        %v1153 = vrot.slane %v1151, 5
        %v1154 = vsel %vm1092, %v1149, %v1153
        %v1155 = vshrl.u32 %v1049, 16
        %v1157 = vrot.slane %v1155, 4
        %v1158 = vor.u32 %v1157, %v1153
        %v1159 = vrot.slane %v1158, 4
        %v1161 = vshll.u32 %v1050, 16
        %v1163 = vrot.slane %v1161, 5
        %v1164 = vsel %vm1092, %v1159, %v1163
        %v1166 = vshrl.u32 %v1051, 16
        %v1168 = vrot.slane %v1166, 4
        %v1169 = vshll.u32 %v1051, 16
        %v1171 = vrot.slane %v1169, 5
        %v1172 = vor.u32 %v1168, %v1171
        %v1173 = vrot.slane %v1172, 4
        %v1175 = vshll.u32 %v1052, 16
        %v1177 = vrot.slane %v1175, 5
        %v1178 = vsel %vm1092, %v1173, %v1177
        %v1179 = vshrl.u32 %v1052, 16
        %v1181 = vrot.slane %v1179, 4
        %v1182 = vor.u32 %v1181, %v1177
        %v1183 = vrot.slane %v1182, 4
        %v1185 = vshll.u32 %v1053, 16
        %v1187 = vrot.slane %v1185, 5
        %v1188 = vsel %vm1092, %v1183, %v1187
        %v1190 = vshrl.u32 %v1054, 16
        %v1192 = vrot.slane %v1190, 4
        %v1193 = vshll.u32 %v1054, 16
        %v1195 = vrot.slane %v1193, 5
        %v1196 = vor.u32 %v1192, %v1195
        %v1197 = vrot.slane %v1196, 4
        %v1199 = vshll.u32 %v1055, 16
        %v1201 = vrot.slane %v1199, 5
        %v1202 = vsel %vm1092, %v1197, %v1201
        %v1203 = vshrl.u32 %v1055, 16
        %v1205 = vrot.slane %v1203, 4
        %v1206 = vor.u32 %v1205, %v1201
        %v1207 = vrot.slane %v1206, 4
        %v1209 = vshll.u32 %v1056, 16
        %v1211 = vrot.slane %v1209, 5
        %v1212 = vsel %vm1092, %v1207, %v1211
        %v1214 = vshrl.u32 %v1057, 16
        %v1216 = vrot.slane %v1214, 4
        %v1217 = vshll.u32 %v1057, 16
        %v1219 = vrot.slane %v1217, 5
        %v1220 = vor.u32 %v1216, %v1219
        %v1221 = vrot.slane %v1220, 4
        %v1223 = vshll.u32 %v1058, 16
        %v1225 = vrot.slane %v1223, 5
        %v1226 = vsel %vm1092, %v1221, %v1225
        %v1227 = vshrl.u32 %v1058, 16
        %v1229 = vrot.slane %v1227, 4
        %v1230 = vor.u32 %v1229, %v1225
        %v1231 = vrot.slane %v1230, 4
        %v1233 = vshll.u32 %v1059, 16
        %v1235 = vrot.slane %v1233, 5
        %v1236 = vsel %vm1092, %v1231, %v1235
        %v1238 = vshrl.u32 %v1060, 16
        %v1240 = vrot.slane %v1238, 4
        %v1241 = vshll.u32 %v1060, 16
        %v1243 = vrot.slane %v1241, 5
        %v1244 = vor.u32 %v1240, %v1243
        %v1245 = vrot.slane %v1244, 4
        %v1247 = vshll.u32 %v1061, 16
        %v1249 = vrot.slane %v1247, 5
        %v1250 = vsel %vm1092, %v1245, %v1249
        %v1251 = vshrl.u32 %v1061, 16
        %v1253 = vrot.slane %v1251, 4
        %v1254 = vor.u32 %v1253, %v1249
        %v1255 = vrot.slane %v1254, 4
        %v1257 = vshll.u32 %v1062, 16
        %v1259 = vrot.slane %v1257, 5
        %v1260 = vsel %vm1092, %v1255, %v1259
        %v1262 = vshrl.u32 %v1063, 16
        %v1264 = vrot.slane %v1262, 4
        %v1265 = vshll.u32 %v1063, 16
        %v1267 = vrot.slane %v1265, 5
        %v1268 = vor.u32 %v1264, %v1267
        %v1269 = vrot.slane %v1268, 4
        %v1271 = vshll.u32 %v1064, 16
        %v1273 = vrot.slane %v1271, 5
        %v1274 = vsel %vm1092, %v1269, %v1273
        %v1275 = vshrl.u32 %v1064, 16
        %v1277 = vrot.slane %v1275, 4
        %v1278 = vor.u32 %v1277, %v1273
        %v1279 = vrot.slane %v1278, 4
        %v1281 = vshll.u32 %v1065, 16
        %v1283 = vrot.slane %v1281, 5
        %v1284 = vsel %vm1092, %v1279, %v1283
        %v1286 = vshrl.u32 %v1066, 16
        %v1288 = vrot.slane %v1286, 4
        %v1289 = vshll.u32 %v1066, 16
        %v1291 = vrot.slane %v1289, 5
        %v1292 = vor.u32 %v1288, %v1291
        %v1293 = vrot.slane %v1292, 4
        %v1295 = vshll.u32 %v1067, 16
        %v1297 = vrot.slane %v1295, 5
        %v1298 = vsel %vm1092, %v1293, %v1297
        %v1299 = vshrl.u32 %v1067, 16
        %v1301 = vrot.slane %v1299, 4
        %v1302 = vor.u32 %v1301, %v1297
        %v1303 = vrot.slane %v1302, 4
        %v1305 = vshll.u32 %v1068, 16
        %v1307 = vrot.slane %v1305, 5
        %v1308 = vsel %vm1092, %v1303, %v1307
        %v1310 = vshrl.u32 %v1069, 16
        %v1312 = vrot.slane %v1310, 4
        %v1313 = vshll.u32 %v1069, 16
        %v1315 = vrot.slane %v1313, 5
        %v1316 = vor.u32 %v1312, %v1315
        %v1317 = vrot.slane %v1316, 4
        %v1319 = vshll.u32 %v1070, 16
        %v1321 = vrot.slane %v1319, 5
        %v1322 = vsel %vm1092, %v1317, %v1321
        %v1323 = vshrl.u32 %v1070, 16
        %v1325 = vrot.slane %v1323, 4
        %v1326 = vor.u32 %v1325, %v1321
        %v1327 = vrot.slane %v1326, 4
        %v1329 = vshll.u32 %v1071, 16
        %v1331 = vrot.slane %v1329, 5
        %v1332 = vsel %vm1092, %v1327, %v1331
        %v1334 = vshrl.u32 %v1072, 16
        %v1336 = vrot.slane %v1334, 4
        %v1337 = vshll.u32 %v1072, 16
        %v1339 = vrot.slane %v1337, 5
        %v1340 = vor.u32 %v1336, %v1339
        %v1341 = vrot.slane %v1340, 4
        %v1343 = vshll.u32 %v1073, 16
        %v1345 = vrot.slane %v1343, 5
        %v1346 = vsel %vm1092, %v1341, %v1345
        %v1347 = vshrl.u32 %v1073, 16
        %v1349 = vrot.slane %v1347, 4
        %v1350 = vor.u32 %v1349, %v1345
        %v1351 = vrot.slane %v1350, 4
        %v1353 = vshll.u32 %v1074, 16
        %v1355 = vrot.slane %v1353, 5
        %v1356 = vsel %vm1092, %v1351, %v1355
        %v1358 = vshrl.u32 %v1075, 16
        %v1360 = vrot.slane %v1358, 4
        %v1361 = vshll.u32 %v1075, 16
        %v1363 = vrot.slane %v1361, 5
        %v1364 = vor.u32 %v1360, %v1363
        %v1365 = vrot.slane %v1364, 4
        %v1367 = vshll.u32 %v1076, 16
        %v1369 = vrot.slane %v1367, 5
        %v1370 = vsel %vm1092, %v1365, %v1369
        %v1371 = vshrl.u32 %v1076, 16
        %v1373 = vrot.slane %v1371, 4
        %v1374 = vor.u32 %v1373, %v1369
        %v1375 = vrot.slane %v1374, 4
        %v1377 = vshll.u32 %v1077, 16
        %v1379 = vrot.slane %v1377, 5
        %v1380 = vsel %vm1092, %v1375, %v1379
        %v1382 = vshrl.u32 %v1078, 16
        %v1384 = vrot.slane %v1382, 4
        %v1385 = vshll.u32 %v1078, 16
        %v1387 = vrot.slane %v1385, 5
        %v1388 = vor.u32 %v1384, %v1387
        %v1389 = vrot.slane %v1388, 4
        %v1391 = vshll.u32 %v1079, 16
        %v1393 = vrot.slane %v1391, 5
        %v1394 = vsel %vm1092, %v1389, %v1393
        %v1395 = vshrl.u32 %v1079, 16
        %v1397 = vrot.slane %v1395, 4
        %v1398 = vor.u32 %v1397, %v1393
        %v1399 = vrot.slane %v1398, 4
        %v1401 = vshll.u32 %v1080, 16
        %v1403 = vrot.slane %v1401, 5
        %v1404 = vsel %vm1092, %v1399, %v1403
        %v1406 = vshrl.u32 %v1081, 16
        %v1408 = vrot.slane %v1406, 4
        %v1409 = vshll.u32 %v1081, 16
        %v1411 = vrot.slane %v1409, 5
        %v1412 = vor.u32 %v1408, %v1411
        %v1413 = vrot.slane %v1412, 4
        %v1415 = vshll.u32 %v1082, 16
        %v1417 = vrot.slane %v1415, 5
        %v1418 = vsel %vm1092, %v1413, %v1417
        %v1419 = vshrl.u32 %v1082, 16
        %v1421 = vrot.slane %v1419, 4
        %v1422 = vor.u32 %v1421, %v1417
        %v1423 = vrot.slane %v1422, 4
        %v1425 = vshll.u32 %v1083, 16
        %v1427 = vrot.slane %v1425, 5
        %v1428 = vsel %vm1092, %v1423, %v1427
        %v1430 = vshrl.u32 %v1084, 16
        %v1432 = vrot.slane %v1430, 4
        %v1433 = vshll.u32 %v1084, 16
        %v1435 = vrot.slane %v1433, 5
        %v1436 = vor.u32 %v1432, %v1435
        %v1437 = vrot.slane %v1436, 4
        %v1439 = vshll.u32 %v1085, 16
        %v1441 = vrot.slane %v1439, 5
        %v1442 = vsel %vm1092, %v1437, %v1441
        %v1443 = vshrl.u32 %v1085, 16
        %v1445 = vrot.slane %v1443, 4
        %v1446 = vor.u32 %v1445, %v1441
        %v1447 = vrot.slane %v1446, 4
        %v1449 = vshll.u32 %v1086, 16
        %v1451 = vrot.slane %v1449, 5
        %v1452 = vsel %vm1092, %v1447, %v1451
        %v1454 = vshrl.u32 %v1087, 16
        %v1456 = vrot.slane %v1454, 4
        %v1457 = vshll.u32 %v1087, 16
        %v1459 = vrot.slane %v1457, 5
        %v1460 = vor.u32 %v1456, %v1459
        %v1461 = vrot.slane %v1460, 4
        %v1463 = vshll.u32 %v1088, 16
        %v1465 = vrot.slane %v1463, 5
        %v1466 = vsel %vm1092, %v1461, %v1465
        %v1467 = vshrl.u32 %v1088, 16
        %v1469 = vrot.slane %v1467, 4
        %v1470 = vor.u32 %v1469, %v1465
        %v1471 = vrot.slane %v1470, 4
        %v1473 = vshll.u32 %v1089, 16
        %v1475 = vrot.slane %v1473, 5
        %v1476 = vsel %vm1092, %v1471, %v1475
        %1509 = vst [vmem:[#allocation3 + $0x4] sm:$0xf] %v1106
        %1510 = vst [vmem:[#allocation3 + $0x28] sm:$0xf] %v1116
        %1511 = vst [vmem:[#allocation3 + $0x4c] sm:$0xf] %v1130
        %1512 = vst [vmem:[#allocation3 + $0x70] sm:$0xf] %v1140
        %1513 = vst [vmem:[#allocation3 + $0x94] sm:$0xf] %v1154
        %1514 = vst [vmem:[#allocation3 + $0xb8] sm:$0xf] %v1164
        %1515 = vst [vmem:[#allocation3 + $0xdc] sm:$0xf] %v1178
        %1516 = vst [vmem:[#allocation3 + $0x100] sm:$0xf] %v1188
        %1517 = vst [vmem:[#allocation3 + $0x124] sm:$0xf] %v1202
        %1518 = vst [vmem:[#allocation3 + $0x148] sm:$0xf] %v1212
        %1519 = vst [vmem:[#allocation3 + $0x16c] sm:$0xf] %v1226
        %1520 = vst [vmem:[#allocation3 + $0x190] sm:$0xf] %v1236
        %1521 = vst [vmem:[#allocation3 + $0x1b4] sm:$0xf] %v1250
        %1522 = vst [vmem:[#allocation3 + $0x1d8] sm:$0xf] %v1260
        %1523 = vst [vmem:[#allocation3 + $0x1fc] sm:$0xf] %v1274
        %1524 = vst [vmem:[#allocation3 + $0x220] sm:$0xf] %v1284
        %1525 = vst [vmem:[#allocation3 + $0x244] sm:$0xf] %v1298
        %1526 = vst [vmem:[#allocation3 + $0x268] sm:$0xf] %v1308
        %1527 = vst [vmem:[#allocation3 + $0x28c] sm:$0xf] %v1322
        %1528 = vst [vmem:[#allocation3 + $0x2b0] sm:$0xf] %v1332
        %1529 = vst [vmem:[#allocation3 + $0x2d4] sm:$0xf] %v1346
        %1530 = vst [vmem:[#allocation3 + $0x2f8] sm:$0xf] %v1356
        %1531 = vst [vmem:[#allocation3 + $0x31c] sm:$0xf] %v1370
        %1532 = vst [vmem:[#allocation3 + $0x340] sm:$0xf] %v1380
        %1533 = vst [vmem:[#allocation3 + $0x364] sm:$0xf] %v1394
        %1534 = vst [vmem:[#allocation3 + $0x388] sm:$0xf] %v1404
        %1535 = vst [vmem:[#allocation3 + $0x3ac] sm:$0xf] %v1418
        %1536 = vst [vmem:[#allocation3 + $0x3d0] sm:$0xf] %v1428
        %1537 = vst [vmem:[#allocation3 + $0x3f4] sm:$0xf] %v1442
        %1538 = vst [vmem:[#allocation3 + $0x418] sm:$0xf] %v1452
        %1539 = vst [vmem:[#allocation3 + $0x43c] sm:$0xf] %v1466
        %1540 = vst [vmem:[#allocation3 + $0x460] sm:$0xf] %v1476
        %v1541 = vld [vmem:[#allocation2] sm:$0xe]
        %v1542 = vld [vmem:[#allocation2 + $0x4] sm:$0xf]
        %v1543 = vld [vmem:[#allocation2 + $0x8] sm:$0x1]
        %v1544 = vld [vmem:[#allocation2 + $0xc] sm:$0xe]
        %v1545 = vld [vmem:[#allocation2 + $0x10] sm:$0xf]
        %v1546 = vld [vmem:[#allocation2 + $0x14] sm:$0x1]
        %v1547 = vld [vmem:[#allocation2 + $0x18] sm:$0xe]
        %v1548 = vld [vmem:[#allocation2 + $0x1c] sm:$0xf]
        %v1549 = vld [vmem:[#allocation2 + $0x20] sm:$0x1]
        %v1550 = vld [vmem:[#allocation2 + $0x24] sm:$0xe]
        %v1551 = vld [vmem:[#allocation2 + $0x28] sm:$0xf]
        %v1552 = vld [vmem:[#allocation2 + $0x2c] sm:$0x1]
        %v1553 = vld [vmem:[#allocation2 + $0x30] sm:$0xe]
        %v1554 = vld [vmem:[#allocation2 + $0x34] sm:$0xf]
        %v1555 = vld [vmem:[#allocation2 + $0x38] sm:$0x1]
        %v1556 = vld [vmem:[#allocation2 + $0x3c] sm:$0xe]
        %v1557 = vld [vmem:[#allocation2 + $0x40] sm:$0xf]
        %v1558 = vld [vmem:[#allocation2 + $0x44] sm:$0x1]
        %v1559 = vld [vmem:[#allocation2 + $0x48] sm:$0xe]
        %v1560 = vld [vmem:[#allocation2 + $0x4c] sm:$0xf]
        %v1561 = vld [vmem:[#allocation2 + $0x50] sm:$0x1]
        %v1562 = vld [vmem:[#allocation2 + $0x54] sm:$0xe]
        %v1563 = vld [vmem:[#allocation2 + $0x58] sm:$0xf]
        %v1564 = vld [vmem:[#allocation2 + $0x5c] sm:$0x1]
        %v1565 = vld [vmem:[#allocation2 + $0x60] sm:$0xe]
        %v1566 = vld [vmem:[#allocation2 + $0x64] sm:$0xf]
        %v1567 = vld [vmem:[#allocation2 + $0x68] sm:$0x1]
        %v1568 = vld [vmem:[#allocation2 + $0x6c] sm:$0xe]
        %v1569 = vld [vmem:[#allocation2 + $0x70] sm:$0xf]
        %v1570 = vld [vmem:[#allocation2 + $0x74] sm:$0x1]
        %v1571 = vld [vmem:[#allocation2 + $0x78] sm:$0xe]
        %v1572 = vld [vmem:[#allocation2 + $0x7c] sm:$0xf]
        %v1573 = vld [vmem:[#allocation2 + $0x80] sm:$0x1]
        %v1574 = vld [vmem:[#allocation2 + $0x84] sm:$0xe]
        %v1575 = vld [vmem:[#allocation2 + $0x88] sm:$0xf]
        %v1576 = vld [vmem:[#allocation2 + $0x8c] sm:$0x1]
        %v1577 = vld [vmem:[#allocation2 + $0x90] sm:$0xe]
        %v1578 = vld [vmem:[#allocation2 + $0x94] sm:$0xf]
        %v1579 = vld [vmem:[#allocation2 + $0x98] sm:$0x1]
        %v1580 = vld [vmem:[#allocation2 + $0x9c] sm:$0xe]
        %v1581 = vld [vmem:[#allocation2 + $0xa0] sm:$0xf]
        %v1582 = vld [vmem:[#allocation2 + $0xa4] sm:$0x1]
        %v1583 = vld [vmem:[#allocation2 + $0xa8] sm:$0xe]
        %v1584 = vld [vmem:[#allocation2 + $0xac] sm:$0xf]
        %v1585 = vld [vmem:[#allocation2 + $0xb0] sm:$0x1]
        %v1586 = vld [vmem:[#allocation2 + $0xb4] sm:$0xe]
        %v1587 = vld [vmem:[#allocation2 + $0xb8] sm:$0xf]
        %v1588 = vld [vmem:[#allocation2 + $0xbc] sm:$0x1]
        %vm1637 = vcmask 1042432
        %vm1638 = vcmask 1046532
        %vm1639 = vmor %vm1637, %vm1638
        %v1640 = vrot.slane %v1541, 5
        %v1641 = vrot.slane %v1640, 4
        %v1642 = vrot.slane %v1542, 5
        %v1643 = vsel %vm1639, %v1641, %v1642
        %v1644 = vrot.slane %v1642, 4
        %v1645 = vrot.slane %v1543, 5
        %v1646 = vsel %vm1639, %v1644, %v1645
        %v1647 = vrot.slane %v1544, 5
        %v1648 = vrot.slane %v1647, 4
        %v1649 = vrot.slane %v1545, 5
        %v1650 = vsel %vm1639, %v1648, %v1649
        %v1651 = vrot.slane %v1649, 4
        %v1652 = vrot.slane %v1546, 5
        %v1653 = vsel %vm1639, %v1651, %v1652
        %v1654 = vrot.slane %v1547, 5
        %v1655 = vrot.slane %v1654, 4
        %v1656 = vrot.slane %v1548, 5
        %v1657 = vsel %vm1639, %v1655, %v1656
        %v1658 = vrot.slane %v1656, 4
        %v1659 = vrot.slane %v1549, 5
        %v1660 = vsel %vm1639, %v1658, %v1659
        %v1661 = vrot.slane %v1550, 5
        %v1662 = vrot.slane %v1661, 4
        %v1663 = vrot.slane %v1551, 5
        %v1664 = vsel %vm1639, %v1662, %v1663
        %v1665 = vrot.slane %v1663, 4
        %v1666 = vrot.slane %v1552, 5
        %v1667 = vsel %vm1639, %v1665, %v1666
        %v1668 = vrot.slane %v1553, 5
        %v1669 = vrot.slane %v1668, 4
        %v1670 = vrot.slane %v1554, 5
        %v1671 = vsel %vm1639, %v1669, %v1670
        %v1672 = vrot.slane %v1670, 4
        %v1673 = vrot.slane %v1555, 5
        %v1674 = vsel %vm1639, %v1672, %v1673
        %v1675 = vrot.slane %v1556, 5
        %v1676 = vrot.slane %v1675, 4
        %v1677 = vrot.slane %v1557, 5
        %v1678 = vsel %vm1639, %v1676, %v1677
        %v1679 = vrot.slane %v1677, 4
        %v1680 = vrot.slane %v1558, 5
        %v1681 = vsel %vm1639, %v1679, %v1680
        %v1682 = vrot.slane %v1559, 5
        %v1683 = vrot.slane %v1682, 4
        %v1684 = vrot.slane %v1560, 5
        %v1685 = vsel %vm1639, %v1683, %v1684
        %v1686 = vrot.slane %v1684, 4
        %v1687 = vrot.slane %v1561, 5
        %v1688 = vsel %vm1639, %v1686, %v1687
        %v1689 = vrot.slane %v1562, 5
        %v1690 = vrot.slane %v1689, 4
        %v1691 = vrot.slane %v1563, 5
        %v1692 = vsel %vm1639, %v1690, %v1691
        %v1693 = vrot.slane %v1691, 4
        %v1694 = vrot.slane %v1564, 5
        %v1695 = vsel %vm1639, %v1693, %v1694
        %v1696 = vrot.slane %v1565, 5
        %v1697 = vrot.slane %v1696, 4
        %v1698 = vrot.slane %v1566, 5
        %v1699 = vsel %vm1639, %v1697, %v1698
        %v1700 = vrot.slane %v1698, 4
        %v1701 = vrot.slane %v1567, 5
        %v1702 = vsel %vm1639, %v1700, %v1701
        %v1703 = vrot.slane %v1568, 5
        %v1704 = vrot.slane %v1703, 4
        %v1705 = vrot.slane %v1569, 5
        %v1706 = vsel %vm1639, %v1704, %v1705
        %v1707 = vrot.slane %v1705, 4
        %v1708 = vrot.slane %v1570, 5
        %v1709 = vsel %vm1639, %v1707, %v1708
        %v1710 = vrot.slane %v1571, 5
        %v1711 = vrot.slane %v1710, 4
        %v1712 = vrot.slane %v1572, 5
        %v1713 = vsel %vm1639, %v1711, %v1712
        %v1714 = vrot.slane %v1712, 4
        %v1715 = vrot.slane %v1573, 5
        %v1716 = vsel %vm1639, %v1714, %v1715
        %v1717 = vrot.slane %v1574, 5
        %v1718 = vrot.slane %v1717, 4
        %v1719 = vrot.slane %v1575, 5
        %v1720 = vsel %vm1639, %v1718, %v1719
        %v1721 = vrot.slane %v1719, 4
        %v1722 = vrot.slane %v1576, 5
        %v1723 = vsel %vm1639, %v1721, %v1722
        %v1724 = vrot.slane %v1577, 5
        %v1725 = vrot.slane %v1724, 4
        %v1726 = vrot.slane %v1578, 5
        %v1727 = vsel %vm1639, %v1725, %v1726
        %v1728 = vrot.slane %v1726, 4
        %v1729 = vrot.slane %v1579, 5
        %v1730 = vsel %vm1639, %v1728, %v1729
        %v1731 = vrot.slane %v1580, 5
        %v1732 = vrot.slane %v1731, 4
        %v1733 = vrot.slane %v1581, 5
        %v1734 = vsel %vm1639, %v1732, %v1733
        %v1735 = vrot.slane %v1733, 4
        %v1736 = vrot.slane %v1582, 5
        %v1737 = vsel %vm1639, %v1735, %v1736
        %v1738 = vrot.slane %v1583, 5
        %v1739 = vrot.slane %v1738, 4
        %v1740 = vrot.slane %v1584, 5
        %v1741 = vsel %vm1639, %v1739, %v1740
        %v1742 = vrot.slane %v1740, 4
        %v1743 = vrot.slane %v1585, 5
        %v1744 = vsel %vm1639, %v1742, %v1743
        %v1745 = vrot.slane %v1586, 5
        %v1746 = vrot.slane %v1745, 4
        %v1747 = vrot.slane %v1587, 5
        %v1748 = vsel %vm1639, %v1746, %v1747
        %v1749 = vrot.slane %v1747, 4
        %v1750 = vrot.slane %v1588, 5
        %v1751 = vsel %vm1639, %v1749, %v1750
        %1784 = vst [vmem:[#allocation3 + $0x8] sm:$0xf] %v1643
        %1785 = vst [vmem:[#allocation3 + $0x2c] sm:$0xf] %v1646
        %1786 = vst [vmem:[#allocation3 + $0x50] sm:$0xf] %v1650
        %1787 = vst [vmem:[#allocation3 + $0x74] sm:$0xf] %v1653
        %1788 = vst [vmem:[#allocation3 + $0x98] sm:$0xf] %v1657
        %1789 = vst [vmem:[#allocation3 + $0xbc] sm:$0xf] %v1660
        %1790 = vst [vmem:[#allocation3 + $0xe0] sm:$0xf] %v1664
        %1791 = vst [vmem:[#allocation3 + $0x104] sm:$0xf] %v1667
        %1792 = vst [vmem:[#allocation3 + $0x128] sm:$0xf] %v1671
        %1793 = vst [vmem:[#allocation3 + $0x14c] sm:$0xf] %v1674
        %1794 = vst [vmem:[#allocation3 + $0x170] sm:$0xf] %v1678
        %1795 = vst [vmem:[#allocation3 + $0x194] sm:$0xf] %v1681
        %1796 = vst [vmem:[#allocation3 + $0x1b8] sm:$0xf] %v1685
        %1797 = vst [vmem:[#allocation3 + $0x1dc] sm:$0xf] %v1688
        %1798 = vst [vmem:[#allocation3 + $0x200] sm:$0xf] %v1692
        %1799 = vst [vmem:[#allocation3 + $0x224] sm:$0xf] %v1695
        %1800 = vst [vmem:[#allocation3 + $0x248] sm:$0xf] %v1699
        %1801 = vst [vmem:[#allocation3 + $0x26c] sm:$0xf] %v1702
        %1802 = vst [vmem:[#allocation3 + $0x290] sm:$0xf] %v1706
        %1803 = vst [vmem:[#allocation3 + $0x2b4] sm:$0xf] %v1709
        %1804 = vst [vmem:[#allocation3 + $0x2d8] sm:$0xf] %v1713
        %1805 = vst [vmem:[#allocation3 + $0x2fc] sm:$0xf] %v1716
        %1806 = vst [vmem:[#allocation3 + $0x320] sm:$0xf] %v1720
        %1807 = vst [vmem:[#allocation3 + $0x344] sm:$0xf] %v1723
        %1808 = vst [vmem:[#allocation3 + $0x368] sm:$0xf] %v1727
        %1809 = vst [vmem:[#allocation3 + $0x38c] sm:$0xf] %v1730
        %1810 = vst [vmem:[#allocation3 + $0x3b0] sm:$0xf] %v1734
        %1811 = vst [vmem:[#allocation3 + $0x3d4] sm:$0xf] %v1737
        %1812 = vst [vmem:[#allocation3 + $0x3f8] sm:$0xf] %v1741
        %1813 = vst [vmem:[#allocation3 + $0x41c] sm:$0xf] %v1744
        %1814 = vst [vmem:[#allocation3 + $0x440] sm:$0xf] %v1748
        %1815 = vst [vmem:[#allocation3 + $0x464] sm:$0xf] %v1751
        %v1816 = vld [vmem:[%s556] sm:$0xf]
        %v1817 = vld [vmem:[%s556 + $0x4] sm:$0xf]
        %v1818 = vld [vmem:[%s556 + $0xc] sm:$0xf]
        %v1819 = vld [vmem:[%s556 + $0x10] sm:$0xf]
        %v1820 = vld [vmem:[%s556 + $0x18] sm:$0xf]
        %v1821 = vld [vmem:[%s556 + $0x1c] sm:$0xf]
        %v1822 = vld [vmem:[%s556 + $0x24] sm:$0xf]
        %v1823 = vld [vmem:[%s556 + $0x28] sm:$0xf]
        %v1824 = vld [vmem:[%s556 + $0x30] sm:$0xf]
        %v1825 = vld [vmem:[%s556 + $0x34] sm:$0xf]
        %v1826 = vld [vmem:[%s556 + $0x3c] sm:$0xf]
        %v1827 = vld [vmem:[%s556 + $0x40] sm:$0xf]
        %v1828 = vld [vmem:[%s556 + $0x48] sm:$0xf]
        %v1829 = vld [vmem:[%s556 + $0x4c] sm:$0xf]
        %v1830 = vld [vmem:[%s556 + $0x54] sm:$0xf]
        %v1831 = vld [vmem:[%s556 + $0x58] sm:$0xf]
        %v1832 = vld [vmem:[%s556 + $0x60] sm:$0xf]
        %v1833 = vld [vmem:[%s556 + $0x64] sm:$0xf]
        %v1834 = vld [vmem:[%s556 + $0x6c] sm:$0xf]
        %v1835 = vld [vmem:[%s556 + $0x70] sm:$0xf]
        %v1836 = vld [vmem:[%s556 + $0x78] sm:$0xf]
        %v1837 = vld [vmem:[%s556 + $0x7c] sm:$0xf]
        %v1838 = vld [vmem:[%s556 + $0x84] sm:$0xf]
        %v1839 = vld [vmem:[%s556 + $0x88] sm:$0xf]
        %v1840 = vld [vmem:[%s556 + $0x90] sm:$0xf]
        %v1841 = vld [vmem:[%s556 + $0x94] sm:$0xf]
        %v1842 = vld [vmem:[%s556 + $0x9c] sm:$0xf]
        %v1843 = vld [vmem:[%s556 + $0xa0] sm:$0xf]
        %v1844 = vld [vmem:[%s556 + $0xa8] sm:$0xf]
        %v1845 = vld [vmem:[%s556 + $0xac] sm:$0xf]
        %v1846 = vld [vmem:[%s556 + $0xb4] sm:$0xf]
        %v1847 = vld [vmem:[%s556 + $0xb8] sm:$0xf]
        %1848 = vst [vmem:[#allocation3 + $0xc] sm:$0xf] %v1816
        %1849 = vst [vmem:[#allocation3 + $0x30] sm:$0xf] %v1817
        %1850 = vst [vmem:[#allocation3 + $0x54] sm:$0xf] %v1818
        %1851 = vst [vmem:[#allocation3 + $0x78] sm:$0xf] %v1819
        %1852 = vst [vmem:[#allocation3 + $0x9c] sm:$0xf] %v1820
        %1853 = vst [vmem:[#allocation3 + $0xc0] sm:$0xf] %v1821
        %1854 = vst [vmem:[#allocation3 + $0xe4] sm:$0xf] %v1822
        %1855 = vst [vmem:[#allocation3 + $0x108] sm:$0xf] %v1823
        %1856 = vst [vmem:[#allocation3 + $0x12c] sm:$0xf] %v1824
        %1857 = vst [vmem:[#allocation3 + $0x150] sm:$0xf] %v1825
        %1858 = vst [vmem:[#allocation3 + $0x174] sm:$0xf] %v1826
        %1859 = vst [vmem:[#allocation3 + $0x198] sm:$0xf] %v1827
        %1860 = vst [vmem:[#allocation3 + $0x1bc] sm:$0xf] %v1828
        %1861 = vst [vmem:[#allocation3 + $0x1e0] sm:$0xf] %v1829
        %1862 = vst [vmem:[#allocation3 + $0x204] sm:$0xf] %v1830
        %1863 = vst [vmem:[#allocation3 + $0x228] sm:$0xf] %v1831
        %1864 = vst [vmem:[#allocation3 + $0x24c] sm:$0xf] %v1832
        %1865 = vst [vmem:[#allocation3 + $0x270] sm:$0xf] %v1833
        %1866 = vst [vmem:[#allocation3 + $0x294] sm:$0xf] %v1834
        %1867 = vst [vmem:[#allocation3 + $0x2b8] sm:$0xf] %v1835
        %1868 = vst [vmem:[#allocation3 + $0x2dc] sm:$0xf] %v1836
        %1869 = vst [vmem:[#allocation3 + $0x300] sm:$0xf] %v1837
        %1870 = vst [vmem:[#allocation3 + $0x324] sm:$0xf] %v1838
        %1871 = vst [vmem:[#allocation3 + $0x348] sm:$0xf] %v1839
        %1872 = vst [vmem:[#allocation3 + $0x36c] sm:$0xf] %v1840
        %1873 = vst [vmem:[#allocation3 + $0x390] sm:$0xf] %v1841
        %1874 = vst [vmem:[#allocation3 + $0x3b4] sm:$0xf] %v1842
        %1875 = vst [vmem:[#allocation3 + $0x3d8] sm:$0xf] %v1843
        %1876 = vst [vmem:[#allocation3 + $0x3fc] sm:$0xf] %v1844
        %1877 = vst [vmem:[#allocation3 + $0x420] sm:$0xf] %v1845
        %1878 = vst [vmem:[#allocation3 + $0x444] sm:$0xf] %v1846
        %1879 = vst [vmem:[#allocation3 + $0x468] sm:$0xf] %v1847
        %v1880 = vld [vmem:[%s556] sm:$0xf]
        %v1881 = vld [vmem:[%s556 + $0x4] sm:$0xf]
        %v1882 = vld [vmem:[%s556 + $0x8] sm:$0x1]
        %v1883 = vld [vmem:[%s556 + $0xc] sm:$0xf]
        %v1884 = vld [vmem:[%s556 + $0x10] sm:$0xf]
        %v1885 = vld [vmem:[%s556 + $0x14] sm:$0x1]
        %v1886 = vld [vmem:[%s556 + $0x18] sm:$0xf]
        %v1887 = vld [vmem:[%s556 + $0x1c] sm:$0xf]
        %v1888 = vld [vmem:[%s556 + $0x20] sm:$0x1]
        %v1889 = vld [vmem:[%s556 + $0x24] sm:$0xf]
        %v1890 = vld [vmem:[%s556 + $0x28] sm:$0xf]
        %v1891 = vld [vmem:[%s556 + $0x2c] sm:$0x1]
        %v1892 = vld [vmem:[%s556 + $0x30] sm:$0xf]
        %v1893 = vld [vmem:[%s556 + $0x34] sm:$0xf]
        %v1894 = vld [vmem:[%s556 + $0x38] sm:$0x1]
        %v1895 = vld [vmem:[%s556 + $0x3c] sm:$0xf]
        %v1896 = vld [vmem:[%s556 + $0x40] sm:$0xf]
        %v1897 = vld [vmem:[%s556 + $0x44] sm:$0x1]
        %v1898 = vld [vmem:[%s556 + $0x48] sm:$0xf]
        %v1899 = vld [vmem:[%s556 + $0x4c] sm:$0xf]
        %v1900 = vld [vmem:[%s556 + $0x50] sm:$0x1]
        %v1901 = vld [vmem:[%s556 + $0x54] sm:$0xf]
        %v1902 = vld [vmem:[%s556 + $0x58] sm:$0xf]
        %v1903 = vld [vmem:[%s556 + $0x5c] sm:$0x1]
        %v1904 = vld [vmem:[%s556 + $0x60] sm:$0xf]
        %v1905 = vld [vmem:[%s556 + $0x64] sm:$0xf]
        %v1906 = vld [vmem:[%s556 + $0x68] sm:$0x1]
        %v1907 = vld [vmem:[%s556 + $0x6c] sm:$0xf]
        %v1908 = vld [vmem:[%s556 + $0x70] sm:$0xf]
        %v1909 = vld [vmem:[%s556 + $0x74] sm:$0x1]
        %v1910 = vld [vmem:[%s556 + $0x78] sm:$0xf]
        %v1911 = vld [vmem:[%s556 + $0x7c] sm:$0xf]
        %v1912 = vld [vmem:[%s556 + $0x80] sm:$0x1]
        %v1913 = vld [vmem:[%s556 + $0x84] sm:$0xf]
        %v1914 = vld [vmem:[%s556 + $0x88] sm:$0xf]
        %v1915 = vld [vmem:[%s556 + $0x8c] sm:$0x1]
        %v1916 = vld [vmem:[%s556 + $0x90] sm:$0xf]
        %v1917 = vld [vmem:[%s556 + $0x94] sm:$0xf]
        %v1918 = vld [vmem:[%s556 + $0x98] sm:$0x1]
        %v1919 = vld [vmem:[%s556 + $0x9c] sm:$0xf]
        %v1920 = vld [vmem:[%s556 + $0xa0] sm:$0xf]
        %v1921 = vld [vmem:[%s556 + $0xa4] sm:$0x1]
        %v1922 = vld [vmem:[%s556 + $0xa8] sm:$0xf]
        %v1923 = vld [vmem:[%s556 + $0xac] sm:$0xf]
        %v1924 = vld [vmem:[%s556 + $0xb0] sm:$0x1]
        %v1925 = vld [vmem:[%s556 + $0xb4] sm:$0xf]
        %v1926 = vld [vmem:[%s556 + $0xb8] sm:$0xf]
        %v1927 = vld [vmem:[%s556 + $0xbc] sm:$0x1]
        %v1929 = vshrl.u32 %v1880, 16
        %v1931 = vrot.slane %v1929, 4
        %v1932 = vshll.u32 %v1880, 16
        %v1934 = vrot.slane %v1932, 5
        %v1935 = vor.u32 %v1931, %v1934
        %v1936 = vrot.slane %v1935, 4
        %v1938 = vshll.u32 %v1881, 16
        %v1940 = vrot.slane %v1938, 5
        %v1941 = vsel %vm1092, %v1936, %v1940
        %v1942 = vshrl.u32 %v1881, 16
        %v1944 = vrot.slane %v1942, 4
        %v1945 = vor.u32 %v1944, %v1940
        %v1946 = vrot.slane %v1945, 4
        %v1948 = vshll.u32 %v1882, 16
        %v1950 = vrot.slane %v1948, 5
        %v1951 = vsel %vm1092, %v1946, %v1950
        %v1953 = vshrl.u32 %v1883, 16
        %v1955 = vrot.slane %v1953, 4
        %v1956 = vshll.u32 %v1883, 16
        %v1958 = vrot.slane %v1956, 5
        %v1959 = vor.u32 %v1955, %v1958
        %v1960 = vrot.slane %v1959, 4
        %v1962 = vshll.u32 %v1884, 16
        %v1964 = vrot.slane %v1962, 5
        %v1965 = vsel %vm1092, %v1960, %v1964
        %v1966 = vshrl.u32 %v1884, 16
        %v1968 = vrot.slane %v1966, 4
        %v1969 = vor.u32 %v1968, %v1964
        %v1970 = vrot.slane %v1969, 4
        %v1972 = vshll.u32 %v1885, 16
        %v1974 = vrot.slane %v1972, 5
        %v1975 = vsel %vm1092, %v1970, %v1974
        %v1977 = vshrl.u32 %v1886, 16
        %v1979 = vrot.slane %v1977, 4
        %v1980 = vshll.u32 %v1886, 16
        %v1982 = vrot.slane %v1980, 5
        %v1983 = vor.u32 %v1979, %v1982
        %v1984 = vrot.slane %v1983, 4
        %v1986 = vshll.u32 %v1887, 16
        %v1988 = vrot.slane %v1986, 5
        %v1989 = vsel %vm1092, %v1984, %v1988
        %v1990 = vshrl.u32 %v1887, 16
        %v1992 = vrot.slane %v1990, 4
        %v1993 = vor.u32 %v1992, %v1988
        %v1994 = vrot.slane %v1993, 4
        %v1996 = vshll.u32 %v1888, 16
        %v1998 = vrot.slane %v1996, 5
        %v1999 = vsel %vm1092, %v1994, %v1998
        %v2001 = vshrl.u32 %v1889, 16
        %v2003 = vrot.slane %v2001, 4
        %v2004 = vshll.u32 %v1889, 16
        %v2006 = vrot.slane %v2004, 5
        %v2007 = vor.u32 %v2003, %v2006
        %v2008 = vrot.slane %v2007, 4
        %v2010 = vshll.u32 %v1890, 16
        %v2012 = vrot.slane %v2010, 5
        %v2013 = vsel %vm1092, %v2008, %v2012
        %v2014 = vshrl.u32 %v1890, 16
        %v2016 = vrot.slane %v2014, 4
        %v2017 = vor.u32 %v2016, %v2012
        %v2018 = vrot.slane %v2017, 4
        %v2020 = vshll.u32 %v1891, 16
        %v2022 = vrot.slane %v2020, 5
        %v2023 = vsel %vm1092, %v2018, %v2022
        %v2025 = vshrl.u32 %v1892, 16
        %v2027 = vrot.slane %v2025, 4
        %v2028 = vshll.u32 %v1892, 16
        %v2030 = vrot.slane %v2028, 5
        %v2031 = vor.u32 %v2027, %v2030
        %v2032 = vrot.slane %v2031, 4
        %v2034 = vshll.u32 %v1893, 16
        %v2036 = vrot.slane %v2034, 5
        %v2037 = vsel %vm1092, %v2032, %v2036
        %v2038 = vshrl.u32 %v1893, 16
        %v2040 = vrot.slane %v2038, 4
        %v2041 = vor.u32 %v2040, %v2036
        %v2042 = vrot.slane %v2041, 4
        %v2044 = vshll.u32 %v1894, 16
        %v2046 = vrot.slane %v2044, 5
        %v2047 = vsel %vm1092, %v2042, %v2046
        %v2049 = vshrl.u32 %v1895, 16
        %v2051 = vrot.slane %v2049, 4
        %v2052 = vshll.u32 %v1895, 16
        %v2054 = vrot.slane %v2052, 5
        %v2055 = vor.u32 %v2051, %v2054
        %v2056 = vrot.slane %v2055, 4
        %v2058 = vshll.u32 %v1896, 16
        %v2060 = vrot.slane %v2058, 5
        %v2061 = vsel %vm1092, %v2056, %v2060
        %v2062 = vshrl.u32 %v1896, 16
        %v2064 = vrot.slane %v2062, 4
        %v2065 = vor.u32 %v2064, %v2060
        %v2066 = vrot.slane %v2065, 4
        %v2068 = vshll.u32 %v1897, 16
        %v2070 = vrot.slane %v2068, 5
        %v2071 = vsel %vm1092, %v2066, %v2070
        %v2073 = vshrl.u32 %v1898, 16
        %v2075 = vrot.slane %v2073, 4
        %v2076 = vshll.u32 %v1898, 16
        %v2078 = vrot.slane %v2076, 5
        %v2079 = vor.u32 %v2075, %v2078
        %v2080 = vrot.slane %v2079, 4
        %v2082 = vshll.u32 %v1899, 16
        %v2084 = vrot.slane %v2082, 5
        %v2085 = vsel %vm1092, %v2080, %v2084
        %v2086 = vshrl.u32 %v1899, 16
        %v2088 = vrot.slane %v2086, 4
        %v2089 = vor.u32 %v2088, %v2084
        %v2090 = vrot.slane %v2089, 4
        %v2092 = vshll.u32 %v1900, 16
        %v2094 = vrot.slane %v2092, 5
        %v2095 = vsel %vm1092, %v2090, %v2094
        %v2097 = vshrl.u32 %v1901, 16
        %v2099 = vrot.slane %v2097, 4
        %v2100 = vshll.u32 %v1901, 16
        %v2102 = vrot.slane %v2100, 5
        %v2103 = vor.u32 %v2099, %v2102
        %v2104 = vrot.slane %v2103, 4
        %v2106 = vshll.u32 %v1902, 16
        %v2108 = vrot.slane %v2106, 5
        %v2109 = vsel %vm1092, %v2104, %v2108
        %v2110 = vshrl.u32 %v1902, 16
        %v2112 = vrot.slane %v2110, 4
        %v2113 = vor.u32 %v2112, %v2108
        %v2114 = vrot.slane %v2113, 4
        %v2116 = vshll.u32 %v1903, 16
        %v2118 = vrot.slane %v2116, 5
        %v2119 = vsel %vm1092, %v2114, %v2118
        %v2121 = vshrl.u32 %v1904, 16
        %v2123 = vrot.slane %v2121, 4
        %v2124 = vshll.u32 %v1904, 16
        %v2126 = vrot.slane %v2124, 5
        %v2127 = vor.u32 %v2123, %v2126
        %v2128 = vrot.slane %v2127, 4
        %v2130 = vshll.u32 %v1905, 16
        %v2132 = vrot.slane %v2130, 5
        %v2133 = vsel %vm1092, %v2128, %v2132
        %v2134 = vshrl.u32 %v1905, 16
        %v2136 = vrot.slane %v2134, 4
        %v2137 = vor.u32 %v2136, %v2132
        %v2138 = vrot.slane %v2137, 4
        %v2140 = vshll.u32 %v1906, 16
        %v2142 = vrot.slane %v2140, 5
        %v2143 = vsel %vm1092, %v2138, %v2142
        %v2145 = vshrl.u32 %v1907, 16
        %v2147 = vrot.slane %v2145, 4
        %v2148 = vshll.u32 %v1907, 16
        %v2150 = vrot.slane %v2148, 5
        %v2151 = vor.u32 %v2147, %v2150
        %v2152 = vrot.slane %v2151, 4
        %v2154 = vshll.u32 %v1908, 16
        %v2156 = vrot.slane %v2154, 5
        %v2157 = vsel %vm1092, %v2152, %v2156
        %v2158 = vshrl.u32 %v1908, 16
        %v2160 = vrot.slane %v2158, 4
        %v2161 = vor.u32 %v2160, %v2156
        %v2162 = vrot.slane %v2161, 4
        %v2164 = vshll.u32 %v1909, 16
        %v2166 = vrot.slane %v2164, 5
        %v2167 = vsel %vm1092, %v2162, %v2166
        %v2169 = vshrl.u32 %v1910, 16
        %v2171 = vrot.slane %v2169, 4
        %v2172 = vshll.u32 %v1910, 16
        %v2174 = vrot.slane %v2172, 5
        %v2175 = vor.u32 %v2171, %v2174
        %v2176 = vrot.slane %v2175, 4
        %v2178 = vshll.u32 %v1911, 16
        %v2180 = vrot.slane %v2178, 5
        %v2181 = vsel %vm1092, %v2176, %v2180
        %v2182 = vshrl.u32 %v1911, 16
        %v2184 = vrot.slane %v2182, 4
        %v2185 = vor.u32 %v2184, %v2180
        %v2186 = vrot.slane %v2185, 4
        %v2188 = vshll.u32 %v1912, 16
        %v2190 = vrot.slane %v2188, 5
        %v2191 = vsel %vm1092, %v2186, %v2190
        %v2193 = vshrl.u32 %v1913, 16
        %v2195 = vrot.slane %v2193, 4
        %v2196 = vshll.u32 %v1913, 16
        %v2198 = vrot.slane %v2196, 5
        %v2199 = vor.u32 %v2195, %v2198
        %v2200 = vrot.slane %v2199, 4
        %v2202 = vshll.u32 %v1914, 16
        %v2204 = vrot.slane %v2202, 5
        %v2205 = vsel %vm1092, %v2200, %v2204
        %v2206 = vshrl.u32 %v1914, 16
        %v2208 = vrot.slane %v2206, 4
        %v2209 = vor.u32 %v2208, %v2204
        %v2210 = vrot.slane %v2209, 4
        %v2212 = vshll.u32 %v1915, 16
        %v2214 = vrot.slane %v2212, 5
        %v2215 = vsel %vm1092, %v2210, %v2214
        %v2217 = vshrl.u32 %v1916, 16
        %v2219 = vrot.slane %v2217, 4
        %v2220 = vshll.u32 %v1916, 16
        %v2222 = vrot.slane %v2220, 5
        %v2223 = vor.u32 %v2219, %v2222
        %v2224 = vrot.slane %v2223, 4
        %v2226 = vshll.u32 %v1917, 16
        %v2228 = vrot.slane %v2226, 5
        %v2229 = vsel %vm1092, %v2224, %v2228
        %v2230 = vshrl.u32 %v1917, 16
        %v2232 = vrot.slane %v2230, 4
        %v2233 = vor.u32 %v2232, %v2228
        %v2234 = vrot.slane %v2233, 4
        %v2236 = vshll.u32 %v1918, 16
        %v2238 = vrot.slane %v2236, 5
        %v2239 = vsel %vm1092, %v2234, %v2238
        %v2241 = vshrl.u32 %v1919, 16
        %v2243 = vrot.slane %v2241, 4
        %v2244 = vshll.u32 %v1919, 16
        %v2246 = vrot.slane %v2244, 5
        %v2247 = vor.u32 %v2243, %v2246
        %v2248 = vrot.slane %v2247, 4
        %v2250 = vshll.u32 %v1920, 16
        %v2252 = vrot.slane %v2250, 5
        %v2253 = vsel %vm1092, %v2248, %v2252
        %v2254 = vshrl.u32 %v1920, 16
        %v2256 = vrot.slane %v2254, 4
        %v2257 = vor.u32 %v2256, %v2252
        %v2258 = vrot.slane %v2257, 4
        %v2260 = vshll.u32 %v1921, 16
        %v2262 = vrot.slane %v2260, 5
        %v2263 = vsel %vm1092, %v2258, %v2262
        %v2265 = vshrl.u32 %v1922, 16
        %v2267 = vrot.slane %v2265, 4
        %v2268 = vshll.u32 %v1922, 16
        %v2270 = vrot.slane %v2268, 5
        %v2271 = vor.u32 %v2267, %v2270
        %v2272 = vrot.slane %v2271, 4
        %v2274 = vshll.u32 %v1923, 16
        %v2276 = vrot.slane %v2274, 5
        %v2277 = vsel %vm1092, %v2272, %v2276
        %v2278 = vshrl.u32 %v1923, 16
        %v2280 = vrot.slane %v2278, 4
        %v2281 = vor.u32 %v2280, %v2276
        %v2282 = vrot.slane %v2281, 4
        %v2284 = vshll.u32 %v1924, 16
        %v2286 = vrot.slane %v2284, 5
        %v2287 = vsel %vm1092, %v2282, %v2286
        %v2289 = vshrl.u32 %v1925, 16
        %v2291 = vrot.slane %v2289, 4
        %v2292 = vshll.u32 %v1925, 16
        %v2294 = vrot.slane %v2292, 5
        %v2295 = vor.u32 %v2291, %v2294
        %v2296 = vrot.slane %v2295, 4
        %v2298 = vshll.u32 %v1926, 16
        %v2300 = vrot.slane %v2298, 5
        %v2301 = vsel %vm1092, %v2296, %v2300
        %v2302 = vshrl.u32 %v1926, 16
        %v2304 = vrot.slane %v2302, 4
        %v2305 = vor.u32 %v2304, %v2300
        %v2306 = vrot.slane %v2305, 4
        %v2308 = vshll.u32 %v1927, 16
        %v2310 = vrot.slane %v2308, 5
        %v2311 = vsel %vm1092, %v2306, %v2310
        %2344 = vst [vmem:[#allocation3 + $0x10] sm:$0xf] %v1941
        %2345 = vst [vmem:[#allocation3 + $0x34] sm:$0xf] %v1951
        %2346 = vst [vmem:[#allocation3 + $0x58] sm:$0xf] %v1965
        %2347 = vst [vmem:[#allocation3 + $0x7c] sm:$0xf] %v1975
        %2348 = vst [vmem:[#allocation3 + $0xa0] sm:$0xf] %v1989
        %2349 = vst [vmem:[#allocation3 + $0xc4] sm:$0xf] %v1999
        %2350 = vst [vmem:[#allocation3 + $0xe8] sm:$0xf] %v2013
        %2351 = vst [vmem:[#allocation3 + $0x10c] sm:$0xf] %v2023
        %2352 = vst [vmem:[#allocation3 + $0x130] sm:$0xf] %v2037
        %2353 = vst [vmem:[#allocation3 + $0x154] sm:$0xf] %v2047
        %2354 = vst [vmem:[#allocation3 + $0x178] sm:$0xf] %v2061
        %2355 = vst [vmem:[#allocation3 + $0x19c] sm:$0xf] %v2071
        %2356 = vst [vmem:[#allocation3 + $0x1c0] sm:$0xf] %v2085
        %2357 = vst [vmem:[#allocation3 + $0x1e4] sm:$0xf] %v2095
        %2358 = vst [vmem:[#allocation3 + $0x208] sm:$0xf] %v2109
        %2359 = vst [vmem:[#allocation3 + $0x22c] sm:$0xf] %v2119
        %2360 = vst [vmem:[#allocation3 + $0x250] sm:$0xf] %v2133
        %2361 = vst [vmem:[#allocation3 + $0x274] sm:$0xf] %v2143
        %2362 = vst [vmem:[#allocation3 + $0x298] sm:$0xf] %v2157
        %2363 = vst [vmem:[#allocation3 + $0x2bc] sm:$0xf] %v2167
        %2364 = vst [vmem:[#allocation3 + $0x2e0] sm:$0xf] %v2181
        %2365 = vst [vmem:[#allocation3 + $0x304] sm:$0xf] %v2191
        %2366 = vst [vmem:[#allocation3 + $0x328] sm:$0xf] %v2205
        %2367 = vst [vmem:[#allocation3 + $0x34c] sm:$0xf] %v2215
        %2368 = vst [vmem:[#allocation3 + $0x370] sm:$0xf] %v2229
        %2369 = vst [vmem:[#allocation3 + $0x394] sm:$0xf] %v2239
        %2370 = vst [vmem:[#allocation3 + $0x3b8] sm:$0xf] %v2253
        %2371 = vst [vmem:[#allocation3 + $0x3dc] sm:$0xf] %v2263
        %2372 = vst [vmem:[#allocation3 + $0x400] sm:$0xf] %v2277
        %2373 = vst [vmem:[#allocation3 + $0x424] sm:$0xf] %v2287
        %2374 = vst [vmem:[#allocation3 + $0x448] sm:$0xf] %v2301
        %2375 = vst [vmem:[#allocation3 + $0x46c] sm:$0xf] %v2311
        %v2376 = vld [vmem:[%s556] sm:$0xe]
        %v2377 = vld [vmem:[%s556 + $0x4] sm:$0xf]
        %v2378 = vld [vmem:[%s556 + $0x8] sm:$0x1]
        %v2379 = vld [vmem:[%s556 + $0xc] sm:$0xe]
        %v2380 = vld [vmem:[%s556 + $0x10] sm:$0xf]
        %v2381 = vld [vmem:[%s556 + $0x14] sm:$0x1]
        %v2382 = vld [vmem:[%s556 + $0x18] sm:$0xe]
        %v2383 = vld [vmem:[%s556 + $0x1c] sm:$0xf]
        %v2384 = vld [vmem:[%s556 + $0x20] sm:$0x1]
        %v2385 = vld [vmem:[%s556 + $0x24] sm:$0xe]
        %v2386 = vld [vmem:[%s556 + $0x28] sm:$0xf]
        %v2387 = vld [vmem:[%s556 + $0x2c] sm:$0x1]
        %v2388 = vld [vmem:[%s556 + $0x30] sm:$0xe]
        %v2389 = vld [vmem:[%s556 + $0x34] sm:$0xf]
        %v2390 = vld [vmem:[%s556 + $0x38] sm:$0x1]
        %v2391 = vld [vmem:[%s556 + $0x3c] sm:$0xe]
        %v2392 = vld [vmem:[%s556 + $0x40] sm:$0xf]
        %v2393 = vld [vmem:[%s556 + $0x44] sm:$0x1]
        %v2394 = vld [vmem:[%s556 + $0x48] sm:$0xe]
        %v2395 = vld [vmem:[%s556 + $0x4c] sm:$0xf]
        %v2396 = vld [vmem:[%s556 + $0x50] sm:$0x1]
        %v2397 = vld [vmem:[%s556 + $0x54] sm:$0xe]
        %v2398 = vld [vmem:[%s556 + $0x58] sm:$0xf]
        %v2399 = vld [vmem:[%s556 + $0x5c] sm:$0x1]
        %v2400 = vld [vmem:[%s556 + $0x60] sm:$0xe]
        %v2401 = vld [vmem:[%s556 + $0x64] sm:$0xf]
        %v2402 = vld [vmem:[%s556 + $0x68] sm:$0x1]
        %v2403 = vld [vmem:[%s556 + $0x6c] sm:$0xe]
        %v2404 = vld [vmem:[%s556 + $0x70] sm:$0xf]
        %v2405 = vld [vmem:[%s556 + $0x74] sm:$0x1]
        %v2406 = vld [vmem:[%s556 + $0x78] sm:$0xe]
        %v2407 = vld [vmem:[%s556 + $0x7c] sm:$0xf]
        %v2408 = vld [vmem:[%s556 + $0x80] sm:$0x1]
        %v2409 = vld [vmem:[%s556 + $0x84] sm:$0xe]
        %v2410 = vld [vmem:[%s556 + $0x88] sm:$0xf]
        %v2411 = vld [vmem:[%s556 + $0x8c] sm:$0x1]
        %v2412 = vld [vmem:[%s556 + $0x90] sm:$0xe]
        %v2413 = vld [vmem:[%s556 + $0x94] sm:$0xf]
        %v2414 = vld [vmem:[%s556 + $0x98] sm:$0x1]
        %v2415 = vld [vmem:[%s556 + $0x9c] sm:$0xe]
        %v2416 = vld [vmem:[%s556 + $0xa0] sm:$0xf]
        %v2417 = vld [vmem:[%s556 + $0xa4] sm:$0x1]
        %v2418 = vld [vmem:[%s556 + $0xa8] sm:$0xe]
        %v2419 = vld [vmem:[%s556 + $0xac] sm:$0xf]
        %v2420 = vld [vmem:[%s556 + $0xb0] sm:$0x1]
        %v2421 = vld [vmem:[%s556 + $0xb4] sm:$0xe]
        %v2422 = vld [vmem:[%s556 + $0xb8] sm:$0xf]
        %v2423 = vld [vmem:[%s556 + $0xbc] sm:$0x1]
        %v2472 = vrot.slane %v2376, 5
        %v2473 = vrot.slane %v2472, 4
        %v2474 = vrot.slane %v2377, 5
        %v2475 = vsel %vm1639, %v2473, %v2474
        %v2476 = vrot.slane %v2474, 4
        %v2477 = vrot.slane %v2378, 5
        %v2478 = vsel %vm1639, %v2476, %v2477
        %v2479 = vrot.slane %v2379, 5
        %v2480 = vrot.slane %v2479, 4
        %v2481 = vrot.slane %v2380, 5
        %v2482 = vsel %vm1639, %v2480, %v2481
        %v2483 = vrot.slane %v2481, 4
        %v2484 = vrot.slane %v2381, 5
        %v2485 = vsel %vm1639, %v2483, %v2484
        %v2486 = vrot.slane %v2382, 5
        %v2487 = vrot.slane %v2486, 4
        %v2488 = vrot.slane %v2383, 5
        %v2489 = vsel %vm1639, %v2487, %v2488
        %v2490 = vrot.slane %v2488, 4
        %v2491 = vrot.slane %v2384, 5
        %v2492 = vsel %vm1639, %v2490, %v2491
        %v2493 = vrot.slane %v2385, 5
        %v2494 = vrot.slane %v2493, 4
        %v2495 = vrot.slane %v2386, 5
        %v2496 = vsel %vm1639, %v2494, %v2495
        %v2497 = vrot.slane %v2495, 4
        %v2498 = vrot.slane %v2387, 5
        %v2499 = vsel %vm1639, %v2497, %v2498
        %v2500 = vrot.slane %v2388, 5
        %v2501 = vrot.slane %v2500, 4
        %v2502 = vrot.slane %v2389, 5
        %v2503 = vsel %vm1639, %v2501, %v2502
        %v2504 = vrot.slane %v2502, 4
        %v2505 = vrot.slane %v2390, 5
        %v2506 = vsel %vm1639, %v2504, %v2505
        %v2507 = vrot.slane %v2391, 5
        %v2508 = vrot.slane %v2507, 4
        %v2509 = vrot.slane %v2392, 5
        %v2510 = vsel %vm1639, %v2508, %v2509
        %v2511 = vrot.slane %v2509, 4
        %v2512 = vrot.slane %v2393, 5
        %v2513 = vsel %vm1639, %v2511, %v2512
        %v2514 = vrot.slane %v2394, 5
        %v2515 = vrot.slane %v2514, 4
        %v2516 = vrot.slane %v2395, 5
        %v2517 = vsel %vm1639, %v2515, %v2516
        %v2518 = vrot.slane %v2516, 4
        %v2519 = vrot.slane %v2396, 5
        %v2520 = vsel %vm1639, %v2518, %v2519
        %v2521 = vrot.slane %v2397, 5
        %v2522 = vrot.slane %v2521, 4
        %v2523 = vrot.slane %v2398, 5
        %v2524 = vsel %vm1639, %v2522, %v2523
        %v2525 = vrot.slane %v2523, 4
        %v2526 = vrot.slane %v2399, 5
        %v2527 = vsel %vm1639, %v2525, %v2526
        %v2528 = vrot.slane %v2400, 5
        %v2529 = vrot.slane %v2528, 4
        %v2530 = vrot.slane %v2401, 5
        %v2531 = vsel %vm1639, %v2529, %v2530
        %v2532 = vrot.slane %v2530, 4
        %v2533 = vrot.slane %v2402, 5
        %v2534 = vsel %vm1639, %v2532, %v2533
        %v2535 = vrot.slane %v2403, 5
        %v2536 = vrot.slane %v2535, 4
        %v2537 = vrot.slane %v2404, 5
        %v2538 = vsel %vm1639, %v2536, %v2537
        %v2539 = vrot.slane %v2537, 4
        %v2540 = vrot.slane %v2405, 5
        %v2541 = vsel %vm1639, %v2539, %v2540
        %v2542 = vrot.slane %v2406, 5
        %v2543 = vrot.slane %v2542, 4
        %v2544 = vrot.slane %v2407, 5
        %v2545 = vsel %vm1639, %v2543, %v2544
        %v2546 = vrot.slane %v2544, 4
        %v2547 = vrot.slane %v2408, 5
        %v2548 = vsel %vm1639, %v2546, %v2547
        %v2549 = vrot.slane %v2409, 5
        %v2550 = vrot.slane %v2549, 4
        %v2551 = vrot.slane %v2410, 5
        %v2552 = vsel %vm1639, %v2550, %v2551
        %v2553 = vrot.slane %v2551, 4
        %v2554 = vrot.slane %v2411, 5
        %v2555 = vsel %vm1639, %v2553, %v2554
        %v2556 = vrot.slane %v2412, 5
        %v2557 = vrot.slane %v2556, 4
        %v2558 = vrot.slane %v2413, 5
        %v2559 = vsel %vm1639, %v2557, %v2558
        %v2560 = vrot.slane %v2558, 4
        %v2561 = vrot.slane %v2414, 5
        %v2562 = vsel %vm1639, %v2560, %v2561
        %v2563 = vrot.slane %v2415, 5
        %v2564 = vrot.slane %v2563, 4
        %v2565 = vrot.slane %v2416, 5
        %v2566 = vsel %vm1639, %v2564, %v2565
        %v2567 = vrot.slane %v2565, 4
        %v2568 = vrot.slane %v2417, 5
        %v2569 = vsel %vm1639, %v2567, %v2568
        %v2570 = vrot.slane %v2418, 5
        %v2571 = vrot.slane %v2570, 4
        %v2572 = vrot.slane %v2419, 5
        %v2573 = vsel %vm1639, %v2571, %v2572
        %v2574 = vrot.slane %v2572, 4
        %v2575 = vrot.slane %v2420, 5
        %v2576 = vsel %vm1639, %v2574, %v2575
        %v2577 = vrot.slane %v2421, 5
        %v2578 = vrot.slane %v2577, 4
        %v2579 = vrot.slane %v2422, 5
        %v2580 = vsel %vm1639, %v2578, %v2579
        %v2581 = vrot.slane %v2579, 4
        %v2582 = vrot.slane %v2423, 5
        %v2583 = vsel %vm1639, %v2581, %v2582
        %2616 = vst [vmem:[#allocation3 + $0x14] sm:$0xf] %v2475
        %2617 = vst [vmem:[#allocation3 + $0x38] sm:$0xf] %v2478
        %2618 = vst [vmem:[#allocation3 + $0x5c] sm:$0xf] %v2482
        %2619 = vst [vmem:[#allocation3 + $0x80] sm:$0xf] %v2485
        %2620 = vst [vmem:[#allocation3 + $0xa4] sm:$0xf] %v2489
        %2621 = vst [vmem:[#allocation3 + $0xc8] sm:$0xf] %v2492
        %2622 = vst [vmem:[#allocation3 + $0xec] sm:$0xf] %v2496
        %2623 = vst [vmem:[#allocation3 + $0x110] sm:$0xf] %v2499
        %2624 = vst [vmem:[#allocation3 + $0x134] sm:$0xf] %v2503
        %2625 = vst [vmem:[#allocation3 + $0x158] sm:$0xf] %v2506
        %2626 = vst [vmem:[#allocation3 + $0x17c] sm:$0xf] %v2510
        %2627 = vst [vmem:[#allocation3 + $0x1a0] sm:$0xf] %v2513
        %2628 = vst [vmem:[#allocation3 + $0x1c4] sm:$0xf] %v2517
        %2629 = vst [vmem:[#allocation3 + $0x1e8] sm:$0xf] %v2520
        %2630 = vst [vmem:[#allocation3 + $0x20c] sm:$0xf] %v2524
        %2631 = vst [vmem:[#allocation3 + $0x230] sm:$0xf] %v2527
        %2632 = vst [vmem:[#allocation3 + $0x254] sm:$0xf] %v2531
        %2633 = vst [vmem:[#allocation3 + $0x278] sm:$0xf] %v2534
        %2634 = vst [vmem:[#allocation3 + $0x29c] sm:$0xf] %v2538
        %2635 = vst [vmem:[#allocation3 + $0x2c0] sm:$0xf] %v2541
        %2636 = vst [vmem:[#allocation3 + $0x2e4] sm:$0xf] %v2545
        %2637 = vst [vmem:[#allocation3 + $0x308] sm:$0xf] %v2548
        %2638 = vst [vmem:[#allocation3 + $0x32c] sm:$0xf] %v2552
        %2639 = vst [vmem:[#allocation3 + $0x350] sm:$0xf] %v2555
        %2640 = vst [vmem:[#allocation3 + $0x374] sm:$0xf] %v2559
        %2641 = vst [vmem:[#allocation3 + $0x398] sm:$0xf] %v2562
        %2642 = vst [vmem:[#allocation3 + $0x3bc] sm:$0xf] %v2566
        %2643 = vst [vmem:[#allocation3 + $0x3e0] sm:$0xf] %v2569
        %2644 = vst [vmem:[#allocation3 + $0x404] sm:$0xf] %v2573
        %2645 = vst [vmem:[#allocation3 + $0x428] sm:$0xf] %v2576
        %2646 = vst [vmem:[#allocation3 + $0x44c] sm:$0xf] %v2580
        %2647 = vst [vmem:[#allocation3 + $0x470] sm:$0xf] %v2583
        %s2648 = scalar_lea.vmem [#allocation2], 24
        %v2649 = vld [vmem:[%s2648] sm:$0xf]
        %v2650 = vld [vmem:[%s2648 + $0x4] sm:$0xf]
        %v2651 = vld [vmem:[%s2648 + $0xc] sm:$0xf]
        %v2652 = vld [vmem:[%s2648 + $0x10] sm:$0xf]
        %v2653 = vld [vmem:[%s2648 + $0x18] sm:$0xf]
        %v2654 = vld [vmem:[%s2648 + $0x1c] sm:$0xf]
        %v2655 = vld [vmem:[%s2648 + $0x24] sm:$0xf]
        %v2656 = vld [vmem:[%s2648 + $0x28] sm:$0xf]
        %v2657 = vld [vmem:[%s2648 + $0x30] sm:$0xf]
        %v2658 = vld [vmem:[%s2648 + $0x34] sm:$0xf]
        %v2659 = vld [vmem:[%s2648 + $0x3c] sm:$0xf]
        %v2660 = vld [vmem:[%s2648 + $0x40] sm:$0xf]
        %v2661 = vld [vmem:[%s2648 + $0x48] sm:$0xf]
        %v2662 = vld [vmem:[%s2648 + $0x4c] sm:$0xf]
        %v2663 = vld [vmem:[%s2648 + $0x54] sm:$0xf]
        %v2664 = vld [vmem:[%s2648 + $0x58] sm:$0xf]
        %v2665 = vld [vmem:[%s2648 + $0x60] sm:$0xf]
        %v2666 = vld [vmem:[%s2648 + $0x64] sm:$0xf]
        %v2667 = vld [vmem:[%s2648 + $0x6c] sm:$0xf]
        %v2668 = vld [vmem:[%s2648 + $0x70] sm:$0xf]
        %v2669 = vld [vmem:[%s2648 + $0x78] sm:$0xf]
        %v2670 = vld [vmem:[%s2648 + $0x7c] sm:$0xf]
        %v2671 = vld [vmem:[%s2648 + $0x84] sm:$0xf]
        %v2672 = vld [vmem:[%s2648 + $0x88] sm:$0xf]
        %v2673 = vld [vmem:[%s2648 + $0x90] sm:$0xf]
        %v2674 = vld [vmem:[%s2648 + $0x94] sm:$0xf]
        %v2675 = vld [vmem:[%s2648 + $0x9c] sm:$0xf]
        %v2676 = vld [vmem:[%s2648 + $0xa0] sm:$0xf]
        %v2677 = vld [vmem:[%s2648 + $0xa8] sm:$0xf]
        %v2678 = vld [vmem:[%s2648 + $0xac] sm:$0xf]
        %v2679 = vld [vmem:[%s2648 + $0xb4] sm:$0xf]
        %v2680 = vld [vmem:[%s2648 + $0xb8] sm:$0xf]
        %2681 = vst [vmem:[#allocation3 + $0x18] sm:$0xf] %v2649
        %2682 = vst [vmem:[#allocation3 + $0x3c] sm:$0xf] %v2650
        %2683 = vst [vmem:[#allocation3 + $0x60] sm:$0xf] %v2651
        %2684 = vst [vmem:[#allocation3 + $0x84] sm:$0xf] %v2652
        %2685 = vst [vmem:[#allocation3 + $0xa8] sm:$0xf] %v2653
        %2686 = vst [vmem:[#allocation3 + $0xcc] sm:$0xf] %v2654
        %2687 = vst [vmem:[#allocation3 + $0xf0] sm:$0xf] %v2655
        %2688 = vst [vmem:[#allocation3 + $0x114] sm:$0xf] %v2656
        %2689 = vst [vmem:[#allocation3 + $0x138] sm:$0xf] %v2657
        %2690 = vst [vmem:[#allocation3 + $0x15c] sm:$0xf] %v2658
        %2691 = vst [vmem:[#allocation3 + $0x180] sm:$0xf] %v2659
        %2692 = vst [vmem:[#allocation3 + $0x1a4] sm:$0xf] %v2660
        %2693 = vst [vmem:[#allocation3 + $0x1c8] sm:$0xf] %v2661
        %2694 = vst [vmem:[#allocation3 + $0x1ec] sm:$0xf] %v2662
        %2695 = vst [vmem:[#allocation3 + $0x210] sm:$0xf] %v2663
        %2696 = vst [vmem:[#allocation3 + $0x234] sm:$0xf] %v2664
        %2697 = vst [vmem:[#allocation3 + $0x258] sm:$0xf] %v2665
        %2698 = vst [vmem:[#allocation3 + $0x27c] sm:$0xf] %v2666
        %2699 = vst [vmem:[#allocation3 + $0x2a0] sm:$0xf] %v2667
        %2700 = vst [vmem:[#allocation3 + $0x2c4] sm:$0xf] %v2668
        %2701 = vst [vmem:[#allocation3 + $0x2e8] sm:$0xf] %v2669
        %2702 = vst [vmem:[#allocation3 + $0x30c] sm:$0xf] %v2670
        %2703 = vst [vmem:[#allocation3 + $0x330] sm:$0xf] %v2671
        %2704 = vst [vmem:[#allocation3 + $0x354] sm:$0xf] %v2672
        %2705 = vst [vmem:[#allocation3 + $0x378] sm:$0xf] %v2673
        %2706 = vst [vmem:[#allocation3 + $0x39c] sm:$0xf] %v2674
        %2707 = vst [vmem:[#allocation3 + $0x3c0] sm:$0xf] %v2675
        %2708 = vst [vmem:[#allocation3 + $0x3e4] sm:$0xf] %v2676
        %2709 = vst [vmem:[#allocation3 + $0x408] sm:$0xf] %v2677
        %2710 = vst [vmem:[#allocation3 + $0x42c] sm:$0xf] %v2678
        %2711 = vst [vmem:[#allocation3 + $0x450] sm:$0xf] %v2679
        %2712 = vst [vmem:[#allocation3 + $0x474] sm:$0xf] %v2680
        %v2713 = vld [vmem:[%s2648] sm:$0xf]
        %v2714 = vld [vmem:[%s2648 + $0x4] sm:$0xf]
        %v2715 = vld [vmem:[%s2648 + $0x8] sm:$0x1]
        %v2716 = vld [vmem:[%s2648 + $0xc] sm:$0xf]
        %v2717 = vld [vmem:[%s2648 + $0x10] sm:$0xf]
        %v2718 = vld [vmem:[%s2648 + $0x14] sm:$0x1]
        %v2719 = vld [vmem:[%s2648 + $0x18] sm:$0xf]
        %v2720 = vld [vmem:[%s2648 + $0x1c] sm:$0xf]
        %v2721 = vld [vmem:[%s2648 + $0x20] sm:$0x1]
        %v2722 = vld [vmem:[%s2648 + $0x24] sm:$0xf]
        %v2723 = vld [vmem:[%s2648 + $0x28] sm:$0xf]
        %v2724 = vld [vmem:[%s2648 + $0x2c] sm:$0x1]
        %v2725 = vld [vmem:[%s2648 + $0x30] sm:$0xf]
        %v2726 = vld [vmem:[%s2648 + $0x34] sm:$0xf]
        %v2727 = vld [vmem:[%s2648 + $0x38] sm:$0x1]
        %v2728 = vld [vmem:[%s2648 + $0x3c] sm:$0xf]
        %v2729 = vld [vmem:[%s2648 + $0x40] sm:$0xf]
        %v2730 = vld [vmem:[%s2648 + $0x44] sm:$0x1]
        %v2731 = vld [vmem:[%s2648 + $0x48] sm:$0xf]
        %v2732 = vld [vmem:[%s2648 + $0x4c] sm:$0xf]
        %v2733 = vld [vmem:[%s2648 + $0x50] sm:$0x1]
        %v2734 = vld [vmem:[%s2648 + $0x54] sm:$0xf]
        %v2735 = vld [vmem:[%s2648 + $0x58] sm:$0xf]
        %v2736 = vld [vmem:[%s2648 + $0x5c] sm:$0x1]
        %v2737 = vld [vmem:[%s2648 + $0x60] sm:$0xf]
        %v2738 = vld [vmem:[%s2648 + $0x64] sm:$0xf]
        %v2739 = vld [vmem:[%s2648 + $0x68] sm:$0x1]
        %v2740 = vld [vmem:[%s2648 + $0x6c] sm:$0xf]
        %v2741 = vld [vmem:[%s2648 + $0x70] sm:$0xf]
        %v2742 = vld [vmem:[%s2648 + $0x74] sm:$0x1]
        %v2743 = vld [vmem:[%s2648 + $0x78] sm:$0xf]
        %v2744 = vld [vmem:[%s2648 + $0x7c] sm:$0xf]
        %v2745 = vld [vmem:[%s2648 + $0x80] sm:$0x1]
        %v2746 = vld [vmem:[%s2648 + $0x84] sm:$0xf]
        %v2747 = vld [vmem:[%s2648 + $0x88] sm:$0xf]
        %v2748 = vld [vmem:[%s2648 + $0x8c] sm:$0x1]
        %v2749 = vld [vmem:[%s2648 + $0x90] sm:$0xf]
        %v2750 = vld [vmem:[%s2648 + $0x94] sm:$0xf]
        %v2751 = vld [vmem:[%s2648 + $0x98] sm:$0x1]
        %v2752 = vld [vmem:[%s2648 + $0x9c] sm:$0xf]
        %v2753 = vld [vmem:[%s2648 + $0xa0] sm:$0xf]
        %v2754 = vld [vmem:[%s2648 + $0xa4] sm:$0x1]
        %v2755 = vld [vmem:[%s2648 + $0xa8] sm:$0xf]
        %v2756 = vld [vmem:[%s2648 + $0xac] sm:$0xf]
        %v2757 = vld [vmem:[%s2648 + $0xb0] sm:$0x1]
        %v2758 = vld [vmem:[%s2648 + $0xb4] sm:$0xf]
        %v2759 = vld [vmem:[%s2648 + $0xb8] sm:$0xf]
        %v2760 = vld [vmem:[%s2648 + $0xbc] sm:$0x1]
        %v2762 = vshrl.u32 %v2713, 16
        %v2764 = vrot.slane %v2762, 4
        %v2765 = vshll.u32 %v2713, 16
        %v2767 = vrot.slane %v2765, 5
        %v2768 = vor.u32 %v2764, %v2767
        %v2769 = vrot.slane %v2768, 4
        %v2771 = vshll.u32 %v2714, 16
        %v2773 = vrot.slane %v2771, 5
        %v2774 = vsel %vm1092, %v2769, %v2773
        %v2775 = vshrl.u32 %v2714, 16
        %v2777 = vrot.slane %v2775, 4
        %v2778 = vor.u32 %v2777, %v2773
        %v2779 = vrot.slane %v2778, 4
        %v2781 = vshll.u32 %v2715, 16
        %v2783 = vrot.slane %v2781, 5
        %v2784 = vsel %vm1092, %v2779, %v2783
        %v2786 = vshrl.u32 %v2716, 16
        %v2788 = vrot.slane %v2786, 4
        %v2789 = vshll.u32 %v2716, 16
        %v2791 = vrot.slane %v2789, 5
        %v2792 = vor.u32 %v2788, %v2791
        %v2793 = vrot.slane %v2792, 4
        %v2795 = vshll.u32 %v2717, 16
        %v2797 = vrot.slane %v2795, 5
        %v2798 = vsel %vm1092, %v2793, %v2797
        %v2799 = vshrl.u32 %v2717, 16
        %v2801 = vrot.slane %v2799, 4
        %v2802 = vor.u32 %v2801, %v2797
        %v2803 = vrot.slane %v2802, 4
        %v2805 = vshll.u32 %v2718, 16
        %v2807 = vrot.slane %v2805, 5
        %v2808 = vsel %vm1092, %v2803, %v2807
        %v2810 = vshrl.u32 %v2719, 16
        %v2812 = vrot.slane %v2810, 4
        %v2813 = vshll.u32 %v2719, 16
        %v2815 = vrot.slane %v2813, 5
        %v2816 = vor.u32 %v2812, %v2815
        %v2817 = vrot.slane %v2816, 4
        %v2819 = vshll.u32 %v2720, 16
        %v2821 = vrot.slane %v2819, 5
        %v2822 = vsel %vm1092, %v2817, %v2821
        %v2823 = vshrl.u32 %v2720, 16
        %v2825 = vrot.slane %v2823, 4
        %v2826 = vor.u32 %v2825, %v2821
        %v2827 = vrot.slane %v2826, 4
        %v2829 = vshll.u32 %v2721, 16
        %v2831 = vrot.slane %v2829, 5
        %v2832 = vsel %vm1092, %v2827, %v2831
        %v2834 = vshrl.u32 %v2722, 16
        %v2836 = vrot.slane %v2834, 4
        %v2837 = vshll.u32 %v2722, 16
        %v2839 = vrot.slane %v2837, 5
        %v2840 = vor.u32 %v2836, %v2839
        %v2841 = vrot.slane %v2840, 4
        %v2843 = vshll.u32 %v2723, 16
        %v2845 = vrot.slane %v2843, 5
        %v2846 = vsel %vm1092, %v2841, %v2845
        %v2847 = vshrl.u32 %v2723, 16
        %v2849 = vrot.slane %v2847, 4
        %v2850 = vor.u32 %v2849, %v2845
        %v2851 = vrot.slane %v2850, 4
        %v2853 = vshll.u32 %v2724, 16
        %v2855 = vrot.slane %v2853, 5
        %v2856 = vsel %vm1092, %v2851, %v2855
        %v2858 = vshrl.u32 %v2725, 16
        %v2860 = vrot.slane %v2858, 4
        %v2861 = vshll.u32 %v2725, 16
        %v2863 = vrot.slane %v2861, 5
        %v2864 = vor.u32 %v2860, %v2863
        %v2865 = vrot.slane %v2864, 4
        %v2867 = vshll.u32 %v2726, 16
        %v2869 = vrot.slane %v2867, 5
        %v2870 = vsel %vm1092, %v2865, %v2869
        %v2871 = vshrl.u32 %v2726, 16
        %v2873 = vrot.slane %v2871, 4
        %v2874 = vor.u32 %v2873, %v2869
        %v2875 = vrot.slane %v2874, 4
        %v2877 = vshll.u32 %v2727, 16
        %v2879 = vrot.slane %v2877, 5
        %v2880 = vsel %vm1092, %v2875, %v2879
        %v2882 = vshrl.u32 %v2728, 16
        %v2884 = vrot.slane %v2882, 4
        %v2885 = vshll.u32 %v2728, 16
        %v2887 = vrot.slane %v2885, 5
        %v2888 = vor.u32 %v2884, %v2887
        %v2889 = vrot.slane %v2888, 4
        %v2891 = vshll.u32 %v2729, 16
        %v2893 = vrot.slane %v2891, 5
        %v2894 = vsel %vm1092, %v2889, %v2893
        %v2895 = vshrl.u32 %v2729, 16
        %v2897 = vrot.slane %v2895, 4
        %v2898 = vor.u32 %v2897, %v2893
        %v2899 = vrot.slane %v2898, 4
        %v2901 = vshll.u32 %v2730, 16
        %v2903 = vrot.slane %v2901, 5
        %v2904 = vsel %vm1092, %v2899, %v2903
        %v2906 = vshrl.u32 %v2731, 16
        %v2908 = vrot.slane %v2906, 4
        %v2909 = vshll.u32 %v2731, 16
        %v2911 = vrot.slane %v2909, 5
        %v2912 = vor.u32 %v2908, %v2911
        %v2913 = vrot.slane %v2912, 4
        %v2915 = vshll.u32 %v2732, 16
        %v2917 = vrot.slane %v2915, 5
        %v2918 = vsel %vm1092, %v2913, %v2917
        %v2919 = vshrl.u32 %v2732, 16
        %v2921 = vrot.slane %v2919, 4
        %v2922 = vor.u32 %v2921, %v2917
        %v2923 = vrot.slane %v2922, 4
        %v2925 = vshll.u32 %v2733, 16
        %v2927 = vrot.slane %v2925, 5
        %v2928 = vsel %vm1092, %v2923, %v2927
        %v2930 = vshrl.u32 %v2734, 16
        %v2932 = vrot.slane %v2930, 4
        %v2933 = vshll.u32 %v2734, 16
        %v2935 = vrot.slane %v2933, 5
        %v2936 = vor.u32 %v2932, %v2935
        %v2937 = vrot.slane %v2936, 4
        %v2939 = vshll.u32 %v2735, 16
        %v2941 = vrot.slane %v2939, 5
        %v2942 = vsel %vm1092, %v2937, %v2941
        %v2943 = vshrl.u32 %v2735, 16
        %v2945 = vrot.slane %v2943, 4
        %v2946 = vor.u32 %v2945, %v2941
        %v2947 = vrot.slane %v2946, 4
        %v2949 = vshll.u32 %v2736, 16
        %v2951 = vrot.slane %v2949, 5
        %v2952 = vsel %vm1092, %v2947, %v2951
        %v2954 = vshrl.u32 %v2737, 16
        %v2956 = vrot.slane %v2954, 4
        %v2957 = vshll.u32 %v2737, 16
        %v2959 = vrot.slane %v2957, 5
        %v2960 = vor.u32 %v2956, %v2959
        %v2961 = vrot.slane %v2960, 4
        %v2963 = vshll.u32 %v2738, 16
        %v2965 = vrot.slane %v2963, 5
        %v2966 = vsel %vm1092, %v2961, %v2965
        %v2967 = vshrl.u32 %v2738, 16
        %v2969 = vrot.slane %v2967, 4
        %v2970 = vor.u32 %v2969, %v2965
        %v2971 = vrot.slane %v2970, 4
        %v2973 = vshll.u32 %v2739, 16
        %v2975 = vrot.slane %v2973, 5
        %v2976 = vsel %vm1092, %v2971, %v2975
        %v2978 = vshrl.u32 %v2740, 16
        %v2980 = vrot.slane %v2978, 4
        %v2981 = vshll.u32 %v2740, 16
        %v2983 = vrot.slane %v2981, 5
        %v2984 = vor.u32 %v2980, %v2983
        %v2985 = vrot.slane %v2984, 4
        %v2987 = vshll.u32 %v2741, 16
        %v2989 = vrot.slane %v2987, 5
        %v2990 = vsel %vm1092, %v2985, %v2989
        %v2991 = vshrl.u32 %v2741, 16
        %v2993 = vrot.slane %v2991, 4
        %v2994 = vor.u32 %v2993, %v2989
        %v2995 = vrot.slane %v2994, 4
        %v2997 = vshll.u32 %v2742, 16
        %v2999 = vrot.slane %v2997, 5
        %v3000 = vsel %vm1092, %v2995, %v2999
        %v3002 = vshrl.u32 %v2743, 16
        %v3004 = vrot.slane %v3002, 4
        %v3005 = vshll.u32 %v2743, 16
        %v3007 = vrot.slane %v3005, 5
        %v3008 = vor.u32 %v3004, %v3007
        %v3009 = vrot.slane %v3008, 4
        %v3011 = vshll.u32 %v2744, 16
        %v3013 = vrot.slane %v3011, 5
        %v3014 = vsel %vm1092, %v3009, %v3013
        %v3015 = vshrl.u32 %v2744, 16
        %v3017 = vrot.slane %v3015, 4
        %v3018 = vor.u32 %v3017, %v3013
        %v3019 = vrot.slane %v3018, 4
        %v3021 = vshll.u32 %v2745, 16
        %v3023 = vrot.slane %v3021, 5
        %v3024 = vsel %vm1092, %v3019, %v3023
        %v3026 = vshrl.u32 %v2746, 16
        %v3028 = vrot.slane %v3026, 4
        %v3029 = vshll.u32 %v2746, 16
        %v3031 = vrot.slane %v3029, 5
        %v3032 = vor.u32 %v3028, %v3031
        %v3033 = vrot.slane %v3032, 4
        %v3035 = vshll.u32 %v2747, 16
        %v3037 = vrot.slane %v3035, 5
        %v3038 = vsel %vm1092, %v3033, %v3037
        %v3039 = vshrl.u32 %v2747, 16
        %v3041 = vrot.slane %v3039, 4
        %v3042 = vor.u32 %v3041, %v3037
        %v3043 = vrot.slane %v3042, 4
        %v3045 = vshll.u32 %v2748, 16
        %v3047 = vrot.slane %v3045, 5
        %v3048 = vsel %vm1092, %v3043, %v3047
        %v3050 = vshrl.u32 %v2749, 16
        %v3052 = vrot.slane %v3050, 4
        %v3053 = vshll.u32 %v2749, 16
        %v3055 = vrot.slane %v3053, 5
        %v3056 = vor.u32 %v3052, %v3055
        %v3057 = vrot.slane %v3056, 4
        %v3059 = vshll.u32 %v2750, 16
        %v3061 = vrot.slane %v3059, 5
        %v3062 = vsel %vm1092, %v3057, %v3061
        %v3063 = vshrl.u32 %v2750, 16
        %v3065 = vrot.slane %v3063, 4
        %v3066 = vor.u32 %v3065, %v3061
        %v3067 = vrot.slane %v3066, 4
        %v3069 = vshll.u32 %v2751, 16
        %v3071 = vrot.slane %v3069, 5
        %v3072 = vsel %vm1092, %v3067, %v3071
        %v3074 = vshrl.u32 %v2752, 16
        %v3076 = vrot.slane %v3074, 4
        %v3077 = vshll.u32 %v2752, 16
        %v3079 = vrot.slane %v3077, 5
        %v3080 = vor.u32 %v3076, %v3079
        %v3081 = vrot.slane %v3080, 4
        %v3083 = vshll.u32 %v2753, 16
        %v3085 = vrot.slane %v3083, 5
        %v3086 = vsel %vm1092, %v3081, %v3085
        %v3087 = vshrl.u32 %v2753, 16
        %v3089 = vrot.slane %v3087, 4
        %v3090 = vor.u32 %v3089, %v3085
        %v3091 = vrot.slane %v3090, 4
        %v3093 = vshll.u32 %v2754, 16
        %v3095 = vrot.slane %v3093, 5
        %v3096 = vsel %vm1092, %v3091, %v3095
        %v3098 = vshrl.u32 %v2755, 16
        %v3100 = vrot.slane %v3098, 4
        %v3101 = vshll.u32 %v2755, 16
        %v3103 = vrot.slane %v3101, 5
        %v3104 = vor.u32 %v3100, %v3103
        %v3105 = vrot.slane %v3104, 4
        %v3107 = vshll.u32 %v2756, 16
        %v3109 = vrot.slane %v3107, 5
        %v3110 = vsel %vm1092, %v3105, %v3109
        %v3111 = vshrl.u32 %v2756, 16
        %v3113 = vrot.slane %v3111, 4
        %v3114 = vor.u32 %v3113, %v3109
        %v3115 = vrot.slane %v3114, 4
        %v3117 = vshll.u32 %v2757, 16
        %v3119 = vrot.slane %v3117, 5
        %v3120 = vsel %vm1092, %v3115, %v3119
        %v3122 = vshrl.u32 %v2758, 16
        %v3124 = vrot.slane %v3122, 4
        %v3125 = vshll.u32 %v2758, 16
        %v3127 = vrot.slane %v3125, 5
        %v3128 = vor.u32 %v3124, %v3127
        %v3129 = vrot.slane %v3128, 4
        %v3131 = vshll.u32 %v2759, 16
        %v3133 = vrot.slane %v3131, 5
        %v3134 = vsel %vm1092, %v3129, %v3133
        %v3135 = vshrl.u32 %v2759, 16
        %v3137 = vrot.slane %v3135, 4
        %v3138 = vor.u32 %v3137, %v3133
        %v3139 = vrot.slane %v3138, 4
        %v3141 = vshll.u32 %v2760, 16
        %v3143 = vrot.slane %v3141, 5
        %v3144 = vsel %vm1092, %v3139, %v3143
        %3177 = vst [vmem:[#allocation3 + $0x1c] sm:$0xf] %v2774
        %3178 = vst [vmem:[#allocation3 + $0x40] sm:$0xf] %v2784
        %3179 = vst [vmem:[#allocation3 + $0x64] sm:$0xf] %v2798
        %3180 = vst [vmem:[#allocation3 + $0x88] sm:$0xf] %v2808
        %3181 = vst [vmem:[#allocation3 + $0xac] sm:$0xf] %v2822
        %3182 = vst [vmem:[#allocation3 + $0xd0] sm:$0xf] %v2832
        %3183 = vst [vmem:[#allocation3 + $0xf4] sm:$0xf] %v2846
        %3184 = vst [vmem:[#allocation3 + $0x118] sm:$0xf] %v2856
        %3185 = vst [vmem:[#allocation3 + $0x13c] sm:$0xf] %v2870
        %3186 = vst [vmem:[#allocation3 + $0x160] sm:$0xf] %v2880
        %3187 = vst [vmem:[#allocation3 + $0x184] sm:$0xf] %v2894
        %3188 = vst [vmem:[#allocation3 + $0x1a8] sm:$0xf] %v2904
        %3189 = vst [vmem:[#allocation3 + $0x1cc] sm:$0xf] %v2918
        %3190 = vst [vmem:[#allocation3 + $0x1f0] sm:$0xf] %v2928
        %3191 = vst [vmem:[#allocation3 + $0x214] sm:$0xf] %v2942
        %3192 = vst [vmem:[#allocation3 + $0x238] sm:$0xf] %v2952
        %3193 = vst [vmem:[#allocation3 + $0x25c] sm:$0xf] %v2966
        %3194 = vst [vmem:[#allocation3 + $0x280] sm:$0xf] %v2976
        %3195 = vst [vmem:[#allocation3 + $0x2a4] sm:$0xf] %v2990
        %3196 = vst [vmem:[#allocation3 + $0x2c8] sm:$0xf] %v3000
        %3197 = vst [vmem:[#allocation3 + $0x2ec] sm:$0xf] %v3014
        %3198 = vst [vmem:[#allocation3 + $0x310] sm:$0xf] %v3024
        %3199 = vst [vmem:[#allocation3 + $0x334] sm:$0xf] %v3038
        %3200 = vst [vmem:[#allocation3 + $0x358] sm:$0xf] %v3048
        %3201 = vst [vmem:[#allocation3 + $0x37c] sm:$0xf] %v3062
        %3202 = vst [vmem:[#allocation3 + $0x3a0] sm:$0xf] %v3072
        %3203 = vst [vmem:[#allocation3 + $0x3c4] sm:$0xf] %v3086
        %3204 = vst [vmem:[#allocation3 + $0x3e8] sm:$0xf] %v3096
        %3205 = vst [vmem:[#allocation3 + $0x40c] sm:$0xf] %v3110
        %3206 = vst [vmem:[#allocation3 + $0x430] sm:$0xf] %v3120
        %3207 = vst [vmem:[#allocation3 + $0x454] sm:$0xf] %v3134
        %3208 = vst [vmem:[#allocation3 + $0x478] sm:$0xf] %v3144
        %v3209 = vld [vmem:[%s2648] sm:$0xe]
        %v3210 = vld [vmem:[%s2648 + $0x4] sm:$0xf]
        %v3211 = vld [vmem:[%s2648 + $0x8] sm:$0x1]
        %v3212 = vld [vmem:[%s2648 + $0xc] sm:$0xe]
        %v3213 = vld [vmem:[%s2648 + $0x10] sm:$0xf]
        %v3214 = vld [vmem:[%s2648 + $0x14] sm:$0x1]
        %v3215 = vld [vmem:[%s2648 + $0x18] sm:$0xe]
        %v3216 = vld [vmem:[%s2648 + $0x1c] sm:$0xf]
        %v3217 = vld [vmem:[%s2648 + $0x20] sm:$0x1]
        %v3218 = vld [vmem:[%s2648 + $0x24] sm:$0xe]
        %v3219 = vld [vmem:[%s2648 + $0x28] sm:$0xf]
        %v3220 = vld [vmem:[%s2648 + $0x2c] sm:$0x1]
        %v3221 = vld [vmem:[%s2648 + $0x30] sm:$0xe]
        %v3222 = vld [vmem:[%s2648 + $0x34] sm:$0xf]
        %v3223 = vld [vmem:[%s2648 + $0x38] sm:$0x1]
        %v3224 = vld [vmem:[%s2648 + $0x3c] sm:$0xe]
        %v3225 = vld [vmem:[%s2648 + $0x40] sm:$0xf]
        %v3226 = vld [vmem:[%s2648 + $0x44] sm:$0x1]
        %v3227 = vld [vmem:[%s2648 + $0x48] sm:$0xe]
        %v3228 = vld [vmem:[%s2648 + $0x4c] sm:$0xf]
        %v3229 = vld [vmem:[%s2648 + $0x50] sm:$0x1]
        %v3230 = vld [vmem:[%s2648 + $0x54] sm:$0xe]
        %v3231 = vld [vmem:[%s2648 + $0x58] sm:$0xf]
        %v3232 = vld [vmem:[%s2648 + $0x5c] sm:$0x1]
        %v3233 = vld [vmem:[%s2648 + $0x60] sm:$0xe]
        %v3234 = vld [vmem:[%s2648 + $0x64] sm:$0xf]
        %v3235 = vld [vmem:[%s2648 + $0x68] sm:$0x1]
        %v3236 = vld [vmem:[%s2648 + $0x6c] sm:$0xe]
        %v3237 = vld [vmem:[%s2648 + $0x70] sm:$0xf]
        %v3238 = vld [vmem:[%s2648 + $0x74] sm:$0x1]
        %v3239 = vld [vmem:[%s2648 + $0x78] sm:$0xe]
        %v3240 = vld [vmem:[%s2648 + $0x7c] sm:$0xf]
        %v3241 = vld [vmem:[%s2648 + $0x80] sm:$0x1]
        %v3242 = vld [vmem:[%s2648 + $0x84] sm:$0xe]
        %v3243 = vld [vmem:[%s2648 + $0x88] sm:$0xf]
        %v3244 = vld [vmem:[%s2648 + $0x8c] sm:$0x1]
        %v3245 = vld [vmem:[%s2648 + $0x90] sm:$0xe]
        %v3246 = vld [vmem:[%s2648 + $0x94] sm:$0xf]
        %v3247 = vld [vmem:[%s2648 + $0x98] sm:$0x1]
        %v3248 = vld [vmem:[%s2648 + $0x9c] sm:$0xe]
        %v3249 = vld [vmem:[%s2648 + $0xa0] sm:$0xf]
        %v3250 = vld [vmem:[%s2648 + $0xa4] sm:$0x1]
        %v3251 = vld [vmem:[%s2648 + $0xa8] sm:$0xe]
        %v3252 = vld [vmem:[%s2648 + $0xac] sm:$0xf]
        %v3253 = vld [vmem:[%s2648 + $0xb0] sm:$0x1]
        %v3254 = vld [vmem:[%s2648 + $0xb4] sm:$0xe]
        %v3255 = vld [vmem:[%s2648 + $0xb8] sm:$0xf]
        %v3256 = vld [vmem:[%s2648 + $0xbc] sm:$0x1]
        %v3305 = vrot.slane %v3209, 5
        %v3306 = vrot.slane %v3305, 4
        %v3307 = vrot.slane %v3210, 5
        %v3308 = vsel %vm1639, %v3306, %v3307
        %v3309 = vrot.slane %v3307, 4
        %v3310 = vrot.slane %v3211, 5
        %v3311 = vsel %vm1639, %v3309, %v3310
        %v3312 = vrot.slane %v3212, 5
        %v3313 = vrot.slane %v3312, 4
        %v3314 = vrot.slane %v3213, 5
        %v3315 = vsel %vm1639, %v3313, %v3314
        %v3316 = vrot.slane %v3314, 4
        %v3317 = vrot.slane %v3214, 5
        %v3318 = vsel %vm1639, %v3316, %v3317
        %v3319 = vrot.slane %v3215, 5
        %v3320 = vrot.slane %v3319, 4
        %v3321 = vrot.slane %v3216, 5
        %v3322 = vsel %vm1639, %v3320, %v3321
        %v3323 = vrot.slane %v3321, 4
        %v3324 = vrot.slane %v3217, 5
        %v3325 = vsel %vm1639, %v3323, %v3324
        %v3326 = vrot.slane %v3218, 5
        %v3327 = vrot.slane %v3326, 4
        %v3328 = vrot.slane %v3219, 5
        %v3329 = vsel %vm1639, %v3327, %v3328
        %v3330 = vrot.slane %v3328, 4
        %v3331 = vrot.slane %v3220, 5
        %v3332 = vsel %vm1639, %v3330, %v3331
        %v3333 = vrot.slane %v3221, 5
        %v3334 = vrot.slane %v3333, 4
        %v3335 = vrot.slane %v3222, 5
        %v3336 = vsel %vm1639, %v3334, %v3335
        %v3337 = vrot.slane %v3335, 4
        %v3338 = vrot.slane %v3223, 5
        %v3339 = vsel %vm1639, %v3337, %v3338
        %v3340 = vrot.slane %v3224, 5
        %v3341 = vrot.slane %v3340, 4
        %v3342 = vrot.slane %v3225, 5
        %v3343 = vsel %vm1639, %v3341, %v3342
        %v3344 = vrot.slane %v3342, 4
        %v3345 = vrot.slane %v3226, 5
        %v3346 = vsel %vm1639, %v3344, %v3345
        %v3347 = vrot.slane %v3227, 5
        %v3348 = vrot.slane %v3347, 4
        %v3349 = vrot.slane %v3228, 5
        %v3350 = vsel %vm1639, %v3348, %v3349
        %v3351 = vrot.slane %v3349, 4
        %v3352 = vrot.slane %v3229, 5
        %v3353 = vsel %vm1639, %v3351, %v3352
        %v3354 = vrot.slane %v3230, 5
        %v3355 = vrot.slane %v3354, 4
        %v3356 = vrot.slane %v3231, 5
        %v3357 = vsel %vm1639, %v3355, %v3356
        %v3358 = vrot.slane %v3356, 4
        %v3359 = vrot.slane %v3232, 5
        %v3360 = vsel %vm1639, %v3358, %v3359
        %v3361 = vrot.slane %v3233, 5
        %v3362 = vrot.slane %v3361, 4
        %v3363 = vrot.slane %v3234, 5
        %v3364 = vsel %vm1639, %v3362, %v3363
        %v3365 = vrot.slane %v3363, 4
        %v3366 = vrot.slane %v3235, 5
        %v3367 = vsel %vm1639, %v3365, %v3366
        %v3368 = vrot.slane %v3236, 5
        %v3369 = vrot.slane %v3368, 4
        %v3370 = vrot.slane %v3237, 5
        %v3371 = vsel %vm1639, %v3369, %v3370
        %v3372 = vrot.slane %v3370, 4
        %v3373 = vrot.slane %v3238, 5
        %v3374 = vsel %vm1639, %v3372, %v3373
        %v3375 = vrot.slane %v3239, 5
        %v3376 = vrot.slane %v3375, 4
        %v3377 = vrot.slane %v3240, 5
        %v3378 = vsel %vm1639, %v3376, %v3377
        %v3379 = vrot.slane %v3377, 4
        %v3380 = vrot.slane %v3241, 5
        %v3381 = vsel %vm1639, %v3379, %v3380
        %v3382 = vrot.slane %v3242, 5
        %v3383 = vrot.slane %v3382, 4
        %v3384 = vrot.slane %v3243, 5
        %v3385 = vsel %vm1639, %v3383, %v3384
        %v3386 = vrot.slane %v3384, 4
        %v3387 = vrot.slane %v3244, 5
        %v3388 = vsel %vm1639, %v3386, %v3387
        %v3389 = vrot.slane %v3245, 5
        %v3390 = vrot.slane %v3389, 4
        %v3391 = vrot.slane %v3246, 5
        %v3392 = vsel %vm1639, %v3390, %v3391
        %v3393 = vrot.slane %v3391, 4
        %v3394 = vrot.slane %v3247, 5
        %v3395 = vsel %vm1639, %v3393, %v3394
        %v3396 = vrot.slane %v3248, 5
        %v3397 = vrot.slane %v3396, 4
        %v3398 = vrot.slane %v3249, 5
        %v3399 = vsel %vm1639, %v3397, %v3398
        %v3400 = vrot.slane %v3398, 4
        %v3401 = vrot.slane %v3250, 5
        %v3402 = vsel %vm1639, %v3400, %v3401
        %v3403 = vrot.slane %v3251, 5
        %v3404 = vrot.slane %v3403, 4
        %v3405 = vrot.slane %v3252, 5
        %v3406 = vsel %vm1639, %v3404, %v3405
        %v3407 = vrot.slane %v3405, 4
        %v3408 = vrot.slane %v3253, 5
        %v3409 = vsel %vm1639, %v3407, %v3408
        %v3410 = vrot.slane %v3254, 5
        %v3411 = vrot.slane %v3410, 4
        %v3412 = vrot.slane %v3255, 5
        %v3413 = vsel %vm1639, %v3411, %v3412
        %v3414 = vrot.slane %v3412, 4
        %v3415 = vrot.slane %v3256, 5
        %v3416 = vsel %vm1639, %v3414, %v3415
        %3449 = vst [vmem:[#allocation3 + $0x20] sm:$0xf] %v3308
        %3450 = vst [vmem:[#allocation3 + $0x44] sm:$0xf] %v3311
        %3451 = vst [vmem:[#allocation3 + $0x68] sm:$0xf] %v3315
        %3452 = vst [vmem:[#allocation3 + $0x8c] sm:$0xf] %v3318
        %3453 = vst [vmem:[#allocation3 + $0xb0] sm:$0xf] %v3322
        %3454 = vst [vmem:[#allocation3 + $0xd4] sm:$0xf] %v3325
        %3455 = vst [vmem:[#allocation3 + $0xf8] sm:$0xf] %v3329
        %3456 = vst [vmem:[#allocation3 + $0x11c] sm:$0xf] %v3332
        %3457 = vst [vmem:[#allocation3 + $0x140] sm:$0xf] %v3336
        %3458 = vst [vmem:[#allocation3 + $0x164] sm:$0xf] %v3339
        %3459 = vst [vmem:[#allocation3 + $0x188] sm:$0xf] %v3343
        %3460 = vst [vmem:[#allocation3 + $0x1ac] sm:$0xf] %v3346
        %3461 = vst [vmem:[#allocation3 + $0x1d0] sm:$0xf] %v3350
        %3462 = vst [vmem:[#allocation3 + $0x1f4] sm:$0xf] %v3353
        %3463 = vst [vmem:[#allocation3 + $0x218] sm:$0xf] %v3357
        %3464 = vst [vmem:[#allocation3 + $0x23c] sm:$0xf] %v3360
        %3465 = vst [vmem:[#allocation3 + $0x260] sm:$0xf] %v3364
        %3466 = vst [vmem:[#allocation3 + $0x284] sm:$0xf] %v3367
        %3467 = vst [vmem:[#allocation3 + $0x2a8] sm:$0xf] %v3371
        %3468 = vst [vmem:[#allocation3 + $0x2cc] sm:$0xf] %v3374
        %3469 = vst [vmem:[#allocation3 + $0x2f0] sm:$0xf] %v3378
        %3470 = vst [vmem:[#allocation3 + $0x314] sm:$0xf] %v3381
        %3471 = vst [vmem:[#allocation3 + $0x338] sm:$0xf] %v3385
        %3472 = vst [vmem:[#allocation3 + $0x35c] sm:$0xf] %v3388
        %3473 = vst [vmem:[#allocation3 + $0x380] sm:$0xf] %v3392
        %3474 = vst [vmem:[#allocation3 + $0x3a4] sm:$0xf] %v3395
        %3475 = vst [vmem:[#allocation3 + $0x3c8] sm:$0xf] %v3399
        %3476 = vst [vmem:[#allocation3 + $0x3ec] sm:$0xf] %v3402
        %3477 = vst [vmem:[#allocation3 + $0x410] sm:$0xf] %v3406
        %3478 = vst [vmem:[#allocation3 + $0x434] sm:$0xf] %v3409
        %3479 = vst [vmem:[#allocation3 + $0x458] sm:$0xf] %v3413
        %3480 = vst [vmem:[#allocation3 + $0x47c] sm:$0xf] %v3416
        %v3481 = vld [vmem:[#allocation3] sm:$0xff]
        %v3482 = vld [vmem:[#allocation3 + $0x8] sm:$0xff]
        %v3483 = vld [vmem:[#allocation3 + $0x10] sm:$0xff]
        %v3484 = vld [vmem:[#allocation3 + $0x18] sm:$0xff]
        %v3485 = vld [vmem:[#allocation3 + $0x20] sm:$0xf]
        %v3486 = vld [vmem:[#allocation3 + $0x24] sm:$0xff]
        %v3487 = vld [vmem:[#allocation3 + $0x2c] sm:$0xff]
        %v3488 = vld [vmem:[#allocation3 + $0x34] sm:$0xff]
        %v3489 = vld [vmem:[#allocation3 + $0x3c] sm:$0xff]
        %v3490 = vld [vmem:[#allocation3 + $0x44] sm:$0xf]
        %v3491 = vld [vmem:[#allocation3 + $0x48] sm:$0xff]
        %v3492 = vld [vmem:[#allocation3 + $0x50] sm:$0xff]
        %v3493 = vld [vmem:[#allocation3 + $0x58] sm:$0xff]
        %v3494 = vld [vmem:[#allocation3 + $0x60] sm:$0xff]
        %v3495 = vld [vmem:[#allocation3 + $0x68] sm:$0xf]
        %v3496 = vld [vmem:[#allocation3 + $0x6c] sm:$0xff]
        %v3497 = vld [vmem:[#allocation3 + $0x74] sm:$0xff]
        %v3498 = vld [vmem:[#allocation3 + $0x7c] sm:$0xff]
        %v3499 = vld [vmem:[#allocation3 + $0x84] sm:$0xff]
        %v3500 = vld [vmem:[#allocation3 + $0x8c] sm:$0xf]
        %v3501 = vld [vmem:[#allocation3 + $0x90] sm:$0xff]
        %v3502 = vld [vmem:[#allocation3 + $0x98] sm:$0xff]
        %v3503 = vld [vmem:[#allocation3 + $0xa0] sm:$0xff]
        %v3504 = vld [vmem:[#allocation3 + $0xa8] sm:$0xff]
        %v3505 = vld [vmem:[#allocation3 + $0xb0] sm:$0xf]
        %v3506 = vld [vmem:[#allocation3 + $0xb4] sm:$0xff]
        %v3507 = vld [vmem:[#allocation3 + $0xbc] sm:$0xff]
        %v3508 = vld [vmem:[#allocation3 + $0xc4] sm:$0xff]
        %v3509 = vld [vmem:[#allocation3 + $0xcc] sm:$0xff]
        %v3510 = vld [vmem:[#allocation3 + $0xd4] sm:$0xf]
        %v3511 = vld [vmem:[#allocation3 + $0xd8] sm:$0xff]
        %v3512 = vld [vmem:[#allocation3 + $0xe0] sm:$0xff]
        %v3513 = vld [vmem:[#allocation3 + $0xe8] sm:$0xff]
        %v3514 = vld [vmem:[#allocation3 + $0xf0] sm:$0xff]
        %v3515 = vld [vmem:[#allocation3 + $0xf8] sm:$0xf]
        %v3516 = vld [vmem:[#allocation3 + $0xfc] sm:$0xff]
        %v3517 = vld [vmem:[#allocation3 + $0x104] sm:$0xff]
        %v3518 = vld [vmem:[#allocation3 + $0x10c] sm:$0xff]
        %v3519 = vld [vmem:[#allocation3 + $0x114] sm:$0xff]
        %v3520 = vld [vmem:[#allocation3 + $0x11c] sm:$0xf]
        %v3521 = vld [vmem:[#allocation3 + $0x120] sm:$0xff]
        %v3522 = vld [vmem:[#allocation3 + $0x128] sm:$0xff]
        %v3523 = vld [vmem:[#allocation3 + $0x130] sm:$0xff]
        %v3524 = vld [vmem:[#allocation3 + $0x138] sm:$0xff]
        %v3525 = vld [vmem:[#allocation3 + $0x140] sm:$0xf]
        %v3526 = vld [vmem:[#allocation3 + $0x144] sm:$0xff]
        %v3527 = vld [vmem:[#allocation3 + $0x14c] sm:$0xff]
        %v3528 = vld [vmem:[#allocation3 + $0x154] sm:$0xff]
        %v3529 = vld [vmem:[#allocation3 + $0x15c] sm:$0xff]
        %v3530 = vld [vmem:[#allocation3 + $0x164] sm:$0xf]
        %v3531 = vld [vmem:[#allocation3 + $0x168] sm:$0xff]
        %v3532 = vld [vmem:[#allocation3 + $0x170] sm:$0xff]
        %v3533 = vld [vmem:[#allocation3 + $0x178] sm:$0xff]
        %v3534 = vld [vmem:[#allocation3 + $0x180] sm:$0xff]
        %v3535 = vld [vmem:[#allocation3 + $0x188] sm:$0xf]
        %v3536 = vld [vmem:[#allocation3 + $0x18c] sm:$0xff]
        %v3537 = vld [vmem:[#allocation3 + $0x194] sm:$0xff]
        %v3538 = vld [vmem:[#allocation3 + $0x19c] sm:$0xff]
        %v3539 = vld [vmem:[#allocation3 + $0x1a4] sm:$0xff]
        %v3540 = vld [vmem:[#allocation3 + $0x1ac] sm:$0xf]
        %v3541 = vld [vmem:[#allocation3 + $0x1b0] sm:$0xff]
        %v3542 = vld [vmem:[#allocation3 + $0x1b8] sm:$0xff]
        %v3543 = vld [vmem:[#allocation3 + $0x1c0] sm:$0xff]
        %v3544 = vld [vmem:[#allocation3 + $0x1c8] sm:$0xff]
        %v3545 = vld [vmem:[#allocation3 + $0x1d0] sm:$0xf]
        %v3546 = vld [vmem:[#allocation3 + $0x1d4] sm:$0xff]
        %v3547 = vld [vmem:[#allocation3 + $0x1dc] sm:$0xff]
        %v3548 = vld [vmem:[#allocation3 + $0x1e4] sm:$0xff]
        %v3549 = vld [vmem:[#allocation3 + $0x1ec] sm:$0xff]
        %v3550 = vld [vmem:[#allocation3 + $0x1f4] sm:$0xf]
        %v3551 = vld [vmem:[#allocation3 + $0x1f8] sm:$0xff]
        %v3552 = vld [vmem:[#allocation3 + $0x200] sm:$0xff]
        %v3553 = vld [vmem:[#allocation3 + $0x208] sm:$0xff]
        %v3554 = vld [vmem:[#allocation3 + $0x210] sm:$0xff]
        %v3555 = vld [vmem:[#allocation3 + $0x218] sm:$0xf]
        %v3556 = vld [vmem:[#allocation3 + $0x21c] sm:$0xff]
        %v3557 = vld [vmem:[#allocation3 + $0x224] sm:$0xff]
        %v3558 = vld [vmem:[#allocation3 + $0x22c] sm:$0xff]
        %v3559 = vld [vmem:[#allocation3 + $0x234] sm:$0xff]
        %v3560 = vld [vmem:[#allocation3 + $0x23c] sm:$0xf]
        %v3561 = vld [vmem:[#allocation3 + $0x240] sm:$0xff]
        %v3562 = vld [vmem:[#allocation3 + $0x248] sm:$0xff]
        %v3563 = vld [vmem:[#allocation3 + $0x250] sm:$0xff]
        %v3564 = vld [vmem:[#allocation3 + $0x258] sm:$0xff]
        %v3565 = vld [vmem:[#allocation3 + $0x260] sm:$0xf]
        %v3566 = vld [vmem:[#allocation3 + $0x264] sm:$0xff]
        %v3567 = vld [vmem:[#allocation3 + $0x26c] sm:$0xff]
        %v3568 = vld [vmem:[#allocation3 + $0x274] sm:$0xff]
        %v3569 = vld [vmem:[#allocation3 + $0x27c] sm:$0xff]
        %v3570 = vld [vmem:[#allocation3 + $0x284] sm:$0xf]
        %v3571 = vld [vmem:[#allocation3 + $0x288] sm:$0xff]
        %v3572 = vld [vmem:[#allocation3 + $0x290] sm:$0xff]
        %v3573 = vld [vmem:[#allocation3 + $0x298] sm:$0xff]
        %v3574 = vld [vmem:[#allocation3 + $0x2a0] sm:$0xff]
        %v3575 = vld [vmem:[#allocation3 + $0x2a8] sm:$0xf]
        %v3576 = vld [vmem:[#allocation3 + $0x2ac] sm:$0xff]
        %v3577 = vld [vmem:[#allocation3 + $0x2b4] sm:$0xff]
        %v3578 = vld [vmem:[#allocation3 + $0x2bc] sm:$0xff]
        %v3579 = vld [vmem:[#allocation3 + $0x2c4] sm:$0xff]
        %v3580 = vld [vmem:[#allocation3 + $0x2cc] sm:$0xf]
        %v3581 = vld [vmem:[#allocation3 + $0x2d0] sm:$0xff]
        %v3582 = vld [vmem:[#allocation3 + $0x2d8] sm:$0xff]
        %v3583 = vld [vmem:[#allocation3 + $0x2e0] sm:$0xff]
        %v3584 = vld [vmem:[#allocation3 + $0x2e8] sm:$0xff]
        %v3585 = vld [vmem:[#allocation3 + $0x2f0] sm:$0xf]
        %v3586 = vld [vmem:[#allocation3 + $0x2f4] sm:$0xff]
        %v3587 = vld [vmem:[#allocation3 + $0x2fc] sm:$0xff]
        %v3588 = vld [vmem:[#allocation3 + $0x304] sm:$0xff]
        %v3589 = vld [vmem:[#allocation3 + $0x30c] sm:$0xff]
        %v3590 = vld [vmem:[#allocation3 + $0x314] sm:$0xf]
        %v3591 = vld [vmem:[#allocation3 + $0x318] sm:$0xff]
        %v3592 = vld [vmem:[#allocation3 + $0x320] sm:$0xff]
        %v3593 = vld [vmem:[#allocation3 + $0x328] sm:$0xff]
        %v3594 = vld [vmem:[#allocation3 + $0x330] sm:$0xff]
        %v3595 = vld [vmem:[#allocation3 + $0x338] sm:$0xf]
        %v3596 = vld [vmem:[#allocation3 + $0x33c] sm:$0xff]
        %v3597 = vld [vmem:[#allocation3 + $0x344] sm:$0xff]
        %v3598 = vld [vmem:[#allocation3 + $0x34c] sm:$0xff]
        %v3599 = vld [vmem:[#allocation3 + $0x354] sm:$0xff]
        %v3600 = vld [vmem:[#allocation3 + $0x35c] sm:$0xf]
        %v3601 = vld [vmem:[#allocation3 + $0x360] sm:$0xff]
        %v3602 = vld [vmem:[#allocation3 + $0x368] sm:$0xff]
        %v3603 = vld [vmem:[#allocation3 + $0x370] sm:$0xff]
        %v3604 = vld [vmem:[#allocation3 + $0x378] sm:$0xff]
        %v3605 = vld [vmem:[#allocation3 + $0x380] sm:$0xf]
        %v3606 = vld [vmem:[#allocation3 + $0x384] sm:$0xff]
        %v3607 = vld [vmem:[#allocation3 + $0x38c] sm:$0xff]
        %v3608 = vld [vmem:[#allocation3 + $0x394] sm:$0xff]
        %v3609 = vld [vmem:[#allocation3 + $0x39c] sm:$0xff]
        %v3610 = vld [vmem:[#allocation3 + $0x3a4] sm:$0xf]
        %v3611 = vld [vmem:[#allocation3 + $0x3a8] sm:$0xff]
        %v3612 = vld [vmem:[#allocation3 + $0x3b0] sm:$0xff]
        %v3613 = vld [vmem:[#allocation3 + $0x3b8] sm:$0xff]
        %v3614 = vld [vmem:[#allocation3 + $0x3c0] sm:$0xff]
        %v3615 = vld [vmem:[#allocation3 + $0x3c8] sm:$0xf]
        %v3616 = vld [vmem:[#allocation3 + $0x3cc] sm:$0xff]
        %v3617 = vld [vmem:[#allocation3 + $0x3d4] sm:$0xff]
        %v3618 = vld [vmem:[#allocation3 + $0x3dc] sm:$0xff]
        %v3619 = vld [vmem:[#allocation3 + $0x3e4] sm:$0xff]
        %v3620 = vld [vmem:[#allocation3 + $0x3ec] sm:$0xf]
        %v3621 = vld [vmem:[#allocation3 + $0x3f0] sm:$0xff]
        %v3622 = vld [vmem:[#allocation3 + $0x3f8] sm:$0xff]
        %v3623 = vld [vmem:[#allocation3 + $0x400] sm:$0xff]
        %v3624 = vld [vmem:[#allocation3 + $0x408] sm:$0xff]
        %v3625 = vld [vmem:[#allocation3 + $0x410] sm:$0xf]
        %v3626 = vld [vmem:[#allocation3 + $0x414] sm:$0xff]
        %v3627 = vld [vmem:[#allocation3 + $0x41c] sm:$0xff]
        %v3628 = vld [vmem:[#allocation3 + $0x424] sm:$0xff]
        %v3629 = vld [vmem:[#allocation3 + $0x42c] sm:$0xff]
        %v3630 = vld [vmem:[#allocation3 + $0x434] sm:$0xf]
        %v3631 = vld [vmem:[#allocation3 + $0x438] sm:$0xff]
        %v3632 = vld [vmem:[#allocation3 + $0x440] sm:$0xff]
        %v3633 = vld [vmem:[#allocation3 + $0x448] sm:$0xff]
        %v3634 = vld [vmem:[#allocation3 + $0x450] sm:$0xff]
        %v3635 = vld [vmem:[#allocation3 + $0x458] sm:$0xf]
        %v3636 = vld [vmem:[#allocation3 + $0x45c] sm:$0xff]
        %v3637 = vld [vmem:[#allocation3 + $0x464] sm:$0xff]
        %v3638 = vld [vmem:[#allocation3 + $0x46c] sm:$0xff]
        %v3639 = vld [vmem:[#allocation3 + $0x474] sm:$0xff]
        %v3640 = vld [vmem:[#allocation3 + $0x47c] sm:$0xf]
        %v3641 = vld [vmem:[%s1] sm:$0xf]
        %v3642 = vld [vmem:[%s1 + $0x4] sm:$0xf]
        %v3643 = vld [vmem:[%s1 + $0x8] sm:$0xf]
        %v3644 = vld [vmem:[%s1 + $0xc] sm:$0xf]
        %v3645 = vld [vmem:[%s1 + $0x10] sm:$0xf]
        %v3646 = vld [vmem:[%s1 + $0x14] sm:$0xf]
        %v3647 = vld [vmem:[%s1 + $0x18] sm:$0xf]
        %v3648 = vld [vmem:[%s1 + $0x1c] sm:$0xf]
        %v3649 = vld [vmem:[%s1 + $0x20] sm:$0xf]
        %v3650 = vld [vmem:[%s1 + $0x24] sm:$0xf]
        %v3651 = vld [vmem:[%s1 + $0x28] sm:$0xf]
        %v3652 = vld [vmem:[%s1 + $0x2c] sm:$0xf]
        %v3653 = vld [vmem:[%s1 + $0x30] sm:$0xf]
        %v3654 = vld [vmem:[%s1 + $0x34] sm:$0xf]
        %v3655 = vld [vmem:[%s1 + $0x38] sm:$0xf]
        %v3656 = vld [vmem:[%s1 + $0x3c] sm:$0xf]
        %v3657 = vld [vmem:[%s1 + $0x40] sm:$0xf]
        %v3658 = vld [vmem:[%s1 + $0x44] sm:$0xf]
        %v3659 = vld [vmem:[%s1 + $0x48] sm:$0xf]
        %v3660 = vld [vmem:[%s1 + $0x4c] sm:$0xf]
        %v3661 = vld [vmem:[%s1 + $0x50] sm:$0xf]
        %v3662 = vld [vmem:[%s1 + $0x54] sm:$0xf]
        %v3663 = vld [vmem:[%s1 + $0x58] sm:$0xf]
        %v3664 = vld [vmem:[%s1 + $0x5c] sm:$0xf]
        %v3665 = vld [vmem:[%s1 + $0x60] sm:$0xf]
        %v3666 = vld [vmem:[%s1 + $0x64] sm:$0xf]
        %v3667 = vld [vmem:[%s1 + $0x68] sm:$0xf]
        %v3668 = vld [vmem:[%s1 + $0x6c] sm:$0xf]
        %v3669 = vld [vmem:[%s1 + $0x70] sm:$0xf]
        %v3670 = vld [vmem:[%s1 + $0x74] sm:$0xf]
        %v3671 = vld [vmem:[%s1 + $0x78] sm:$0xf]
        %v3672 = vld [vmem:[%s1 + $0x7c] sm:$0xf]
        %v3673 = vld [vmem:[%s1 + $0x80] sm:$0xf]
        %v3674 = vld [vmem:[%s1 + $0x84] sm:$0xf]
        %v3675 = vld [vmem:[%s1 + $0x88] sm:$0xf]
        %v3676 = vld [vmem:[%s1 + $0x8c] sm:$0xf]
        %v3677 = vld [vmem:[%s1 + $0x90] sm:$0xf]
        %v3678 = vld [vmem:[%s1 + $0x94] sm:$0xf]
        %v3679 = vld [vmem:[%s1 + $0x98] sm:$0xf]
        %v3680 = vld [vmem:[%s1 + $0x9c] sm:$0xf]
        %v3681 = vld [vmem:[%s1 + $0xa0] sm:$0xf]
        %v3682 = vld [vmem:[%s1 + $0xa4] sm:$0xf]
        %v3683 = vld [vmem:[%s1 + $0xa8] sm:$0xf]
        %v3684 = vld [vmem:[%s1 + $0xac] sm:$0xf]
        %v3685 = vld [vmem:[%s1 + $0xb0] sm:$0xf]
        %v3686 = vld [vmem:[%s1 + $0xb4] sm:$0xf]
        %v3687 = vld [vmem:[%s1 + $0xb8] sm:$0xf]
        %v3688 = vld [vmem:[%s1 + $0xbc] sm:$0xf]
        %v3689 = vld [vmem:[%s1 + $0xc0] sm:$0xf]
        %v3690 = vld [vmem:[%s1 + $0xc4] sm:$0xf]
        %v3691 = vld [vmem:[%s1 + $0xc8] sm:$0xf]
        %v3692 = vld [vmem:[%s1 + $0xcc] sm:$0xf]
        %v3693 = vld [vmem:[%s1 + $0xd0] sm:$0xf]
        %v3694 = vld [vmem:[%s1 + $0xd4] sm:$0xf]
        %v3695 = vld [vmem:[%s1 + $0xd8] sm:$0xf]
        %v3696 = vld [vmem:[%s1 + $0xdc] sm:$0xf]
        %v3697 = vld [vmem:[%s1 + $0xe0] sm:$0xf]
        %v3698 = vld [vmem:[%s1 + $0xe4] sm:$0xf]
        %v3699 = vld [vmem:[%s1 + $0xe8] sm:$0xf]
        %v3700 = vld [vmem:[%s1 + $0xec] sm:$0xf]
        %v3701 = vld [vmem:[%s1 + $0xf0] sm:$0xf]
        %v3702 = vld [vmem:[%s1 + $0xf4] sm:$0xf]
        %v3703 = vld [vmem:[%s1 + $0xf8] sm:$0xf]
        %v3704 = vld [vmem:[%s1 + $0xfc] sm:$0xf]
        %v3705 = vld [vmem:[%s1 + $0x100] sm:$0xf]
        %v3706 = vld [vmem:[%s1 + $0x104] sm:$0xf]
        %v3707 = vld [vmem:[%s1 + $0x108] sm:$0xf]
        %v3708 = vld [vmem:[%s1 + $0x10c] sm:$0xf]
        %v3709 = vld [vmem:[%s1 + $0x110] sm:$0xf]
        %v3710 = vld [vmem:[%s1 + $0x114] sm:$0xf]
        %v3711 = vld [vmem:[%s1 + $0x118] sm:$0xf]
        %v3712 = vld [vmem:[%s1 + $0x11c] sm:$0xf]
        %v3713 = vld [vmem:[%s1 + $0x120] sm:$0xf]
        %v3714 = vld [vmem:[%s1 + $0x124] sm:$0xf]
        %v3715 = vld [vmem:[%s1 + $0x128] sm:$0xf]
        %v3716 = vld [vmem:[%s1 + $0x12c] sm:$0xf]
        %v3717 = vld [vmem:[%s1 + $0x130] sm:$0xf]
        %v3718 = vld [vmem:[%s1 + $0x134] sm:$0xf]
        %v3719 = vld [vmem:[%s1 + $0x138] sm:$0xf]
        %v3720 = vld [vmem:[%s1 + $0x13c] sm:$0xf]
        %v3721 = vld [vmem:[%s1 + $0x140] sm:$0xf]
        %v3722 = vld [vmem:[%s1 + $0x144] sm:$0xf]
        %v3723 = vld [vmem:[%s1 + $0x148] sm:$0xf]
        %v3724 = vld [vmem:[%s1 + $0x14c] sm:$0xf]
        %v3725 = vld [vmem:[%s1 + $0x150] sm:$0xf]
        %v3726 = vld [vmem:[%s1 + $0x154] sm:$0xf]
        %v3727 = vld [vmem:[%s1 + $0x158] sm:$0xf]
        %v3728 = vld [vmem:[%s1 + $0x15c] sm:$0xf]
        %v3729 = vld [vmem:[%s1 + $0x160] sm:$0xf]
        %v3730 = vld [vmem:[%s1 + $0x164] sm:$0xf]
        %v3731 = vld [vmem:[%s1 + $0x168] sm:$0xf]
        %v3732 = vld [vmem:[%s1 + $0x16c] sm:$0xf]
        %v3733 = vld [vmem:[%s1 + $0x170] sm:$0xf]
        %v3734 = vld [vmem:[%s1 + $0x174] sm:$0xf]
        %v3735 = vld [vmem:[%s1 + $0x178] sm:$0xf]
        %v3736 = vld [vmem:[%s1 + $0x17c] sm:$0xf]
        %v3737 = vld [vmem:[%s1 + $0x180] sm:$0xf]
        %v3738 = vld [vmem:[%s1 + $0x184] sm:$0xf]
        %v3739 = vld [vmem:[%s1 + $0x188] sm:$0xf]
        %v3740 = vld [vmem:[%s1 + $0x18c] sm:$0xf]
        %v3741 = vld [vmem:[%s1 + $0x190] sm:$0xf]
        %v3742 = vld [vmem:[%s1 + $0x194] sm:$0xf]
        %v3743 = vld [vmem:[%s1 + $0x198] sm:$0xf]
        %v3744 = vld [vmem:[%s1 + $0x19c] sm:$0xf]
        %v3745 = vld [vmem:[%s1 + $0x1a0] sm:$0xf]
        %v3746 = vld [vmem:[%s1 + $0x1a4] sm:$0xf]
        %v3747 = vld [vmem:[%s1 + $0x1a8] sm:$0xf]
        %v3748 = vld [vmem:[%s1 + $0x1ac] sm:$0xf]
        %v3749 = vld [vmem:[%s1 + $0x1b0] sm:$0xf]
        %v3750 = vld [vmem:[%s1 + $0x1b4] sm:$0xf]
        %v3751 = vld [vmem:[%s1 + $0x1b8] sm:$0xf]
        %v3752 = vld [vmem:[%s1 + $0x1bc] sm:$0xf]
        %v3753 = vld [vmem:[%s1 + $0x1c0] sm:$0xf]
        %v3754 = vld [vmem:[%s1 + $0x1c4] sm:$0xf]
        %v3755 = vld [vmem:[%s1 + $0x1c8] sm:$0xf]
        %v3756 = vld [vmem:[%s1 + $0x1cc] sm:$0xf]
        %v3757 = vld [vmem:[%s1 + $0x1d0] sm:$0xf]
        %v3758 = vld [vmem:[%s1 + $0x1d4] sm:$0xf]
        %v3759 = vld [vmem:[%s1 + $0x1d8] sm:$0xf]
        %v3760 = vld [vmem:[%s1 + $0x1dc] sm:$0xf]
        %v3761 = vld [vmem:[%s1 + $0x1e0] sm:$0xf]
        %v3762 = vld [vmem:[%s1 + $0x1e4] sm:$0xf]
        %v3763 = vld [vmem:[%s1 + $0x1e8] sm:$0xf]
        %v3764 = vld [vmem:[%s1 + $0x1ec] sm:$0xf]
        %v3765 = vld [vmem:[%s1 + $0x1f0] sm:$0xf]
        %v3766 = vld [vmem:[%s1 + $0x1f4] sm:$0xf]
        %v3767 = vld [vmem:[%s1 + $0x1f8] sm:$0xf]
        %v3768 = vld [vmem:[%s1 + $0x1fc] sm:$0xf]
        %v3769 = vld [vmem:[%s1 + $0x200] sm:$0xf]
        %v3770 = vld [vmem:[%s1 + $0x204] sm:$0xf]
        %v3771 = vld [vmem:[%s1 + $0x208] sm:$0xf]
        %v3772 = vld [vmem:[%s1 + $0x20c] sm:$0xf]
        %v3773 = vld [vmem:[%s1 + $0x210] sm:$0xf]
        %v3774 = vld [vmem:[%s1 + $0x214] sm:$0xf]
        %v3775 = vld [vmem:[%s1 + $0x218] sm:$0xf]
        %v3776 = vld [vmem:[%s1 + $0x21c] sm:$0xf]
        %v3777 = vld [vmem:[%s1 + $0x220] sm:$0xf]
        %v3778 = vld [vmem:[%s1 + $0x224] sm:$0xf]
        %v3779 = vld [vmem:[%s1 + $0x228] sm:$0xf]
        %v3780 = vld [vmem:[%s1 + $0x22c] sm:$0xf]
        %v3781 = vld [vmem:[%s1 + $0x230] sm:$0xf]
        %v3782 = vld [vmem:[%s1 + $0x234] sm:$0xf]
        %v3783 = vld [vmem:[%s1 + $0x238] sm:$0xf]
        %v3784 = vld [vmem:[%s1 + $0x23c] sm:$0xf]
        %v3945 = vunpack.c.l.b16 %v3481
        %v3946 = vunpack.c.h.b16 %v3481
        %v3947 = vunpack.c.l.b16 %v3482
        %v3948 = vunpack.c.h.b16 %v3482
        %v3949 = vunpack.c.l.b16 %v3483
        %v3950 = vunpack.c.h.b16 %v3483
        %v3951 = vunpack.c.l.b16 %v3484
        %v3952 = vunpack.c.h.b16 %v3484
        %v3953 = vunpack.c.l.b16 %v3485
        %v3954 = vunpack.c.l.b16 %v3486
        %v3955 = vunpack.c.h.b16 %v3486
        %v3956 = vunpack.c.l.b16 %v3487
        %v3957 = vunpack.c.h.b16 %v3487
        %v3958 = vunpack.c.l.b16 %v3488
        %v3959 = vunpack.c.h.b16 %v3488
        %v3960 = vunpack.c.l.b16 %v3489
        %v3961 = vunpack.c.h.b16 %v3489
        %v3962 = vunpack.c.l.b16 %v3490
        %v3963 = vunpack.c.l.b16 %v3491
        %v3964 = vunpack.c.h.b16 %v3491
        %v3965 = vunpack.c.l.b16 %v3492
        %v3966 = vunpack.c.h.b16 %v3492
        %v3967 = vunpack.c.l.b16 %v3493
        %v3968 = vunpack.c.h.b16 %v3493
        %v3969 = vunpack.c.l.b16 %v3494
        %v3970 = vunpack.c.h.b16 %v3494
        %v3971 = vunpack.c.l.b16 %v3495
        %v3972 = vunpack.c.l.b16 %v3496
        %v3973 = vunpack.c.h.b16 %v3496
        %v3974 = vunpack.c.l.b16 %v3497
        %v3975 = vunpack.c.h.b16 %v3497
        %v3976 = vunpack.c.l.b16 %v3498
        %v3977 = vunpack.c.h.b16 %v3498
        %v3978 = vunpack.c.l.b16 %v3499
        %v3979 = vunpack.c.h.b16 %v3499
        %v3980 = vunpack.c.l.b16 %v3500
        %v3981 = vunpack.c.l.b16 %v3501
        %v3982 = vunpack.c.h.b16 %v3501
        %v3983 = vunpack.c.l.b16 %v3502
        %v3984 = vunpack.c.h.b16 %v3502
        %v3985 = vunpack.c.l.b16 %v3503
        %v3986 = vunpack.c.h.b16 %v3503
        %v3987 = vunpack.c.l.b16 %v3504
        %v3988 = vunpack.c.h.b16 %v3504
        %v3989 = vunpack.c.l.b16 %v3505
        %v3990 = vunpack.c.l.b16 %v3506
        %v3991 = vunpack.c.h.b16 %v3506
        %v3992 = vunpack.c.l.b16 %v3507
        %v3993 = vunpack.c.h.b16 %v3507
        %v3994 = vunpack.c.l.b16 %v3508
        %v3995 = vunpack.c.h.b16 %v3508
        %v3996 = vunpack.c.l.b16 %v3509
        %v3997 = vunpack.c.h.b16 %v3509
        %v3998 = vunpack.c.l.b16 %v3510
        %v3999 = vunpack.c.l.b16 %v3511
        %v4000 = vunpack.c.h.b16 %v3511
        %v4001 = vunpack.c.l.b16 %v3512
        %v4002 = vunpack.c.h.b16 %v3512
        %v4003 = vunpack.c.l.b16 %v3513
        %v4004 = vunpack.c.h.b16 %v3513
        %v4005 = vunpack.c.l.b16 %v3514
        %v4006 = vunpack.c.h.b16 %v3514
        %v4007 = vunpack.c.l.b16 %v3515
        %v4008 = vunpack.c.l.b16 %v3516
        %v4009 = vunpack.c.h.b16 %v3516
        %v4010 = vunpack.c.l.b16 %v3517
        %v4011 = vunpack.c.h.b16 %v3517
        %v4012 = vunpack.c.l.b16 %v3518
        %v4013 = vunpack.c.h.b16 %v3518
        %v4014 = vunpack.c.l.b16 %v3519
        %v4015 = vunpack.c.h.b16 %v3519
        %v4016 = vunpack.c.l.b16 %v3520
        %v4017 = vunpack.c.l.b16 %v3521
        %v4018 = vunpack.c.h.b16 %v3521
        %v4019 = vunpack.c.l.b16 %v3522
        %v4020 = vunpack.c.h.b16 %v3522
        %v4021 = vunpack.c.l.b16 %v3523
        %v4022 = vunpack.c.h.b16 %v3523
        %v4023 = vunpack.c.l.b16 %v3524
        %v4024 = vunpack.c.h.b16 %v3524
        %v4025 = vunpack.c.l.b16 %v3525
        %v4026 = vunpack.c.l.b16 %v3526
        %v4027 = vunpack.c.h.b16 %v3526
        %v4028 = vunpack.c.l.b16 %v3527
        %v4029 = vunpack.c.h.b16 %v3527
        %v4030 = vunpack.c.l.b16 %v3528
        %v4031 = vunpack.c.h.b16 %v3528
        %v4032 = vunpack.c.l.b16 %v3529
        %v4033 = vunpack.c.h.b16 %v3529
        %v4034 = vunpack.c.l.b16 %v3530
        %v4035 = vunpack.c.l.b16 %v3531
        %v4036 = vunpack.c.h.b16 %v3531
        %v4037 = vunpack.c.l.b16 %v3532
        %v4038 = vunpack.c.h.b16 %v3532
        %v4039 = vunpack.c.l.b16 %v3533
        %v4040 = vunpack.c.h.b16 %v3533
        %v4041 = vunpack.c.l.b16 %v3534
        %v4042 = vunpack.c.h.b16 %v3534
        %v4043 = vunpack.c.l.b16 %v3535
        %v4044 = vunpack.c.l.b16 %v3536
        %v4045 = vunpack.c.h.b16 %v3536
        %v4046 = vunpack.c.l.b16 %v3537
        %v4047 = vunpack.c.h.b16 %v3537
        %v4048 = vunpack.c.l.b16 %v3538
        %v4049 = vunpack.c.h.b16 %v3538
        %v4050 = vunpack.c.l.b16 %v3539
        %v4051 = vunpack.c.h.b16 %v3539
        %v4052 = vunpack.c.l.b16 %v3540
        %v4053 = vunpack.c.l.b16 %v3541
        %v4054 = vunpack.c.h.b16 %v3541
        %v4055 = vunpack.c.l.b16 %v3542
        %v4056 = vunpack.c.h.b16 %v3542
        %v4057 = vunpack.c.l.b16 %v3543
        %v4058 = vunpack.c.h.b16 %v3543
        %v4059 = vunpack.c.l.b16 %v3544
        %v4060 = vunpack.c.h.b16 %v3544
        %v4061 = vunpack.c.l.b16 %v3545
        %v4062 = vunpack.c.l.b16 %v3546
        %v4063 = vunpack.c.h.b16 %v3546
        %v4064 = vunpack.c.l.b16 %v3547
        %v4065 = vunpack.c.h.b16 %v3547
        %v4066 = vunpack.c.l.b16 %v3548
        %v4067 = vunpack.c.h.b16 %v3548
        %v4068 = vunpack.c.l.b16 %v3549
        %v4069 = vunpack.c.h.b16 %v3549
        %v4070 = vunpack.c.l.b16 %v3550
        %v4071 = vunpack.c.l.b16 %v3551
        %v4072 = vunpack.c.h.b16 %v3551
        %v4073 = vunpack.c.l.b16 %v3552
        %v4074 = vunpack.c.h.b16 %v3552
        %v4075 = vunpack.c.l.b16 %v3553
        %v4076 = vunpack.c.h.b16 %v3553
        %v4077 = vunpack.c.l.b16 %v3554
        %v4078 = vunpack.c.h.b16 %v3554
        %v4079 = vunpack.c.l.b16 %v3555
        %v4080 = vunpack.c.l.b16 %v3556
        %v4081 = vunpack.c.h.b16 %v3556
        %v4082 = vunpack.c.l.b16 %v3557
        %v4083 = vunpack.c.h.b16 %v3557
        %v4084 = vunpack.c.l.b16 %v3558
        %v4085 = vunpack.c.h.b16 %v3558
        %v4086 = vunpack.c.l.b16 %v3559
        %v4087 = vunpack.c.h.b16 %v3559
        %v4088 = vunpack.c.l.b16 %v3560
        %v4089 = vunpack.c.l.b16 %v3561
        %v4090 = vunpack.c.h.b16 %v3561
        %v4091 = vunpack.c.l.b16 %v3562
        %v4092 = vunpack.c.h.b16 %v3562
        %v4093 = vunpack.c.l.b16 %v3563
        %v4094 = vunpack.c.h.b16 %v3563
        %v4095 = vunpack.c.l.b16 %v3564
        %v4096 = vunpack.c.h.b16 %v3564
        %v4097 = vunpack.c.l.b16 %v3565
        %v4098 = vunpack.c.l.b16 %v3566
        %v4099 = vunpack.c.h.b16 %v3566
        %v4100 = vunpack.c.l.b16 %v3567
        %v4101 = vunpack.c.h.b16 %v3567
        %v4102 = vunpack.c.l.b16 %v3568
        %v4103 = vunpack.c.h.b16 %v3568
        %v4104 = vunpack.c.l.b16 %v3569
        %v4105 = vunpack.c.h.b16 %v3569
        %v4106 = vunpack.c.l.b16 %v3570
        %v4107 = vunpack.c.l.b16 %v3571
        %v4108 = vunpack.c.h.b16 %v3571
        %v4109 = vunpack.c.l.b16 %v3572
        %v4110 = vunpack.c.h.b16 %v3572
        %v4111 = vunpack.c.l.b16 %v3573
        %v4112 = vunpack.c.h.b16 %v3573
        %v4113 = vunpack.c.l.b16 %v3574
        %v4114 = vunpack.c.h.b16 %v3574
        %v4115 = vunpack.c.l.b16 %v3575
        %v4116 = vunpack.c.l.b16 %v3576
        %v4117 = vunpack.c.h.b16 %v3576
        %v4118 = vunpack.c.l.b16 %v3577
        %v4119 = vunpack.c.h.b16 %v3577
        %v4120 = vunpack.c.l.b16 %v3578
        %v4121 = vunpack.c.h.b16 %v3578
        %v4122 = vunpack.c.l.b16 %v3579
        %v4123 = vunpack.c.h.b16 %v3579
        %v4124 = vunpack.c.l.b16 %v3580
        %v4125 = vunpack.c.l.b16 %v3581
        %v4126 = vunpack.c.h.b16 %v3581
        %v4127 = vunpack.c.l.b16 %v3582
        %v4128 = vunpack.c.h.b16 %v3582
        %v4129 = vunpack.c.l.b16 %v3583
        %v4130 = vunpack.c.h.b16 %v3583
        %v4131 = vunpack.c.l.b16 %v3584
        %v4132 = vunpack.c.h.b16 %v3584
        %v4133 = vunpack.c.l.b16 %v3585
        %v4134 = vunpack.c.l.b16 %v3586
        %v4135 = vunpack.c.h.b16 %v3586
        %v4136 = vunpack.c.l.b16 %v3587
        %v4137 = vunpack.c.h.b16 %v3587
        %v4138 = vunpack.c.l.b16 %v3588
        %v4139 = vunpack.c.h.b16 %v3588
        %v4140 = vunpack.c.l.b16 %v3589
        %v4141 = vunpack.c.h.b16 %v3589
        %v4142 = vunpack.c.l.b16 %v3590
        %v4143 = vunpack.c.l.b16 %v3591
        %v4144 = vunpack.c.h.b16 %v3591
        %v4145 = vunpack.c.l.b16 %v3592
        %v4146 = vunpack.c.h.b16 %v3592
        %v4147 = vunpack.c.l.b16 %v3593
        %v4148 = vunpack.c.h.b16 %v3593
        %v4149 = vunpack.c.l.b16 %v3594
        %v4150 = vunpack.c.h.b16 %v3594
        %v4151 = vunpack.c.l.b16 %v3595
        %v4152 = vunpack.c.l.b16 %v3596
        %v4153 = vunpack.c.h.b16 %v3596
        %v4154 = vunpack.c.l.b16 %v3597
        %v4155 = vunpack.c.h.b16 %v3597
        %v4156 = vunpack.c.l.b16 %v3598
        %v4157 = vunpack.c.h.b16 %v3598
        %v4158 = vunpack.c.l.b16 %v3599
        %v4159 = vunpack.c.h.b16 %v3599
        %v4160 = vunpack.c.l.b16 %v3600
        %v4161 = vunpack.c.l.b16 %v3601
        %v4162 = vunpack.c.h.b16 %v3601
        %v4163 = vunpack.c.l.b16 %v3602
        %v4164 = vunpack.c.h.b16 %v3602
        %v4165 = vunpack.c.l.b16 %v3603
        %v4166 = vunpack.c.h.b16 %v3603
        %v4167 = vunpack.c.l.b16 %v3604
        %v4168 = vunpack.c.h.b16 %v3604
        %v4169 = vunpack.c.l.b16 %v3605
        %v4170 = vunpack.c.l.b16 %v3606
        %v4171 = vunpack.c.h.b16 %v3606
        %v4172 = vunpack.c.l.b16 %v3607
        %v4173 = vunpack.c.h.b16 %v3607
        %v4174 = vunpack.c.l.b16 %v3608
        %v4175 = vunpack.c.h.b16 %v3608
        %v4176 = vunpack.c.l.b16 %v3609
        %v4177 = vunpack.c.h.b16 %v3609
        %v4178 = vunpack.c.l.b16 %v3610
        %v4179 = vunpack.c.l.b16 %v3611
        %v4180 = vunpack.c.h.b16 %v3611
        %v4181 = vunpack.c.l.b16 %v3612
        %v4182 = vunpack.c.h.b16 %v3612
        %v4183 = vunpack.c.l.b16 %v3613
        %v4184 = vunpack.c.h.b16 %v3613
        %v4185 = vunpack.c.l.b16 %v3614
        %v4186 = vunpack.c.h.b16 %v3614
        %v4187 = vunpack.c.l.b16 %v3615
        %v4188 = vunpack.c.l.b16 %v3616
        %v4189 = vunpack.c.h.b16 %v3616
        %v4190 = vunpack.c.l.b16 %v3617
        %v4191 = vunpack.c.h.b16 %v3617
        %v4192 = vunpack.c.l.b16 %v3618
        %v4193 = vunpack.c.h.b16 %v3618
        %v4194 = vunpack.c.l.b16 %v3619
        %v4195 = vunpack.c.h.b16 %v3619
        %v4196 = vunpack.c.l.b16 %v3620
        %v4197 = vunpack.c.l.b16 %v3621
        %v4198 = vunpack.c.h.b16 %v3621
        %v4199 = vunpack.c.l.b16 %v3622
        %v4200 = vunpack.c.h.b16 %v3622
        %v4201 = vunpack.c.l.b16 %v3623
        %v4202 = vunpack.c.h.b16 %v3623
        %v4203 = vunpack.c.l.b16 %v3624
        %v4204 = vunpack.c.h.b16 %v3624
        %v4205 = vunpack.c.l.b16 %v3625
        %v4206 = vunpack.c.l.b16 %v3626
        %v4207 = vunpack.c.h.b16 %v3626
        %v4208 = vunpack.c.l.b16 %v3627
        %v4209 = vunpack.c.h.b16 %v3627
        %v4210 = vunpack.c.l.b16 %v3628
        %v4211 = vunpack.c.h.b16 %v3628
        %v4212 = vunpack.c.l.b16 %v3629
        %v4213 = vunpack.c.h.b16 %v3629
        %v4214 = vunpack.c.l.b16 %v3630
        %v4215 = vunpack.c.l.b16 %v3631
        %v4216 = vunpack.c.h.b16 %v3631
        %v4217 = vunpack.c.l.b16 %v3632
        %v4218 = vunpack.c.h.b16 %v3632
        %v4219 = vunpack.c.l.b16 %v3633
        %v4220 = vunpack.c.h.b16 %v3633
        %v4221 = vunpack.c.l.b16 %v3634
        %v4222 = vunpack.c.h.b16 %v3634
        %v4223 = vunpack.c.l.b16 %v3635
        %v4224 = vunpack.c.l.b16 %v3636
        %v4225 = vunpack.c.h.b16 %v3636
        %v4226 = vunpack.c.l.b16 %v3637
        %v4227 = vunpack.c.h.b16 %v3637
        %v4228 = vunpack.c.l.b16 %v3638
        %v4229 = vunpack.c.h.b16 %v3638
        %v4230 = vunpack.c.l.b16 %v3639
        %v4231 = vunpack.c.h.b16 %v3639
        %v4232 = vunpack.c.l.b16 %v3640
        %v4233 = vpack.c.b16 %v3954, %v3945
        %v4234 = vpack.c.b16 %v3955, %v3946
        %v4235 = vpack.c.b16 %v3956, %v3947
        %v4236 = vpack.c.b16 %v3957, %v3948
        %v4237 = vpack.c.b16 %v3958, %v3949
        %v4238 = vpack.c.b16 %v3959, %v3950
        %v4239 = vpack.c.b16 %v3960, %v3951
        %v4240 = vpack.c.b16 %v3961, %v3952
        %v4241 = vpack.c.b16 %v3962, %v3953
        %v4242 = vpack.c.b16 %v3972, %v3963
        %v4243 = vpack.c.b16 %v3973, %v3964
        %v4244 = vpack.c.b16 %v3974, %v3965
        %v4245 = vpack.c.b16 %v3975, %v3966
        %v4246 = vpack.c.b16 %v3976, %v3967
        %v4247 = vpack.c.b16 %v3977, %v3968
        %v4248 = vpack.c.b16 %v3978, %v3969
        %v4249 = vpack.c.b16 %v3979, %v3970
        %v4250 = vpack.c.b16 %v3980, %v3971
        %v4251 = vpack.c.b16 %v3990, %v3981
        %v4252 = vpack.c.b16 %v3991, %v3982
        %v4253 = vpack.c.b16 %v3992, %v3983
        %v4254 = vpack.c.b16 %v3993, %v3984
        %v4255 = vpack.c.b16 %v3994, %v3985
        %v4256 = vpack.c.b16 %v3995, %v3986
        %v4257 = vpack.c.b16 %v3996, %v3987
        %v4258 = vpack.c.b16 %v3997, %v3988
        %v4259 = vpack.c.b16 %v3998, %v3989
        %v4260 = vpack.c.b16 %v4008, %v3999
        %v4261 = vpack.c.b16 %v4009, %v4000
        %v4262 = vpack.c.b16 %v4010, %v4001
        %v4263 = vpack.c.b16 %v4011, %v4002
        %v4264 = vpack.c.b16 %v4012, %v4003
        %v4265 = vpack.c.b16 %v4013, %v4004
        %v4266 = vpack.c.b16 %v4014, %v4005
        %v4267 = vpack.c.b16 %v4015, %v4006
        %v4268 = vpack.c.b16 %v4016, %v4007
        %v4269 = vpack.c.b16 %v4026, %v4017
        %v4270 = vpack.c.b16 %v4027, %v4018
        %v4271 = vpack.c.b16 %v4028, %v4019
        %v4272 = vpack.c.b16 %v4029, %v4020
        %v4273 = vpack.c.b16 %v4030, %v4021
        %v4274 = vpack.c.b16 %v4031, %v4022
        %v4275 = vpack.c.b16 %v4032, %v4023
        %v4276 = vpack.c.b16 %v4033, %v4024
        %v4277 = vpack.c.b16 %v4034, %v4025
        %v4278 = vpack.c.b16 %v4044, %v4035
        %v4279 = vpack.c.b16 %v4045, %v4036
        %v4280 = vpack.c.b16 %v4046, %v4037
        %v4281 = vpack.c.b16 %v4047, %v4038
        %v4282 = vpack.c.b16 %v4048, %v4039
        %v4283 = vpack.c.b16 %v4049, %v4040
        %v4284 = vpack.c.b16 %v4050, %v4041
        %v4285 = vpack.c.b16 %v4051, %v4042
        %v4286 = vpack.c.b16 %v4052, %v4043
        %v4287 = vpack.c.b16 %v4062, %v4053
        %v4288 = vpack.c.b16 %v4063, %v4054
        %v4289 = vpack.c.b16 %v4064, %v4055
        %v4290 = vpack.c.b16 %v4065, %v4056
        %v4291 = vpack.c.b16 %v4066, %v4057
        %v4292 = vpack.c.b16 %v4067, %v4058
        %v4293 = vpack.c.b16 %v4068, %v4059
        %v4294 = vpack.c.b16 %v4069, %v4060
        %v4295 = vpack.c.b16 %v4070, %v4061
        %v4296 = vpack.c.b16 %v4080, %v4071
        %v4297 = vpack.c.b16 %v4081, %v4072
        %v4298 = vpack.c.b16 %v4082, %v4073
        %v4299 = vpack.c.b16 %v4083, %v4074
        %v4300 = vpack.c.b16 %v4084, %v4075
        %v4301 = vpack.c.b16 %v4085, %v4076
        %v4302 = vpack.c.b16 %v4086, %v4077
        %v4303 = vpack.c.b16 %v4087, %v4078
        %v4304 = vpack.c.b16 %v4088, %v4079
        %v4305 = vpack.c.b16 %v4098, %v4089
        %v4306 = vpack.c.b16 %v4099, %v4090
        %v4307 = vpack.c.b16 %v4100, %v4091
        %v4308 = vpack.c.b16 %v4101, %v4092
        %v4309 = vpack.c.b16 %v4102, %v4093
        %v4310 = vpack.c.b16 %v4103, %v4094
        %v4311 = vpack.c.b16 %v4104, %v4095
        %v4312 = vpack.c.b16 %v4105, %v4096
        %v4313 = vpack.c.b16 %v4106, %v4097
        %v4314 = vpack.c.b16 %v4116, %v4107
        %v4315 = vpack.c.b16 %v4117, %v4108
        %v4316 = vpack.c.b16 %v4118, %v4109
        %v4317 = vpack.c.b16 %v4119, %v4110
        %v4318 = vpack.c.b16 %v4120, %v4111
        %v4319 = vpack.c.b16 %v4121, %v4112
        %v4320 = vpack.c.b16 %v4122, %v4113
        %v4321 = vpack.c.b16 %v4123, %v4114
        %v4322 = vpack.c.b16 %v4124, %v4115
        %v4323 = vpack.c.b16 %v4134, %v4125
        %v4324 = vpack.c.b16 %v4135, %v4126
        %v4325 = vpack.c.b16 %v4136, %v4127
        %v4326 = vpack.c.b16 %v4137, %v4128
        %v4327 = vpack.c.b16 %v4138, %v4129
        %v4328 = vpack.c.b16 %v4139, %v4130
        %v4329 = vpack.c.b16 %v4140, %v4131
        %v4330 = vpack.c.b16 %v4141, %v4132
        %v4331 = vpack.c.b16 %v4142, %v4133
        %v4332 = vpack.c.b16 %v4152, %v4143
        %v4333 = vpack.c.b16 %v4153, %v4144
        %v4334 = vpack.c.b16 %v4154, %v4145
        %v4335 = vpack.c.b16 %v4155, %v4146
        %v4336 = vpack.c.b16 %v4156, %v4147
        %v4337 = vpack.c.b16 %v4157, %v4148
        %v4338 = vpack.c.b16 %v4158, %v4149
        %v4339 = vpack.c.b16 %v4159, %v4150
        %v4340 = vpack.c.b16 %v4160, %v4151
        %v4341 = vpack.c.b16 %v4170, %v4161
        %v4342 = vpack.c.b16 %v4171, %v4162
        %v4343 = vpack.c.b16 %v4172, %v4163
        %v4344 = vpack.c.b16 %v4173, %v4164
        %v4345 = vpack.c.b16 %v4174, %v4165
        %v4346 = vpack.c.b16 %v4175, %v4166
        %v4347 = vpack.c.b16 %v4176, %v4167
        %v4348 = vpack.c.b16 %v4177, %v4168
        %v4349 = vpack.c.b16 %v4178, %v4169
        %v4350 = vpack.c.b16 %v4188, %v4179
        %v4351 = vpack.c.b16 %v4189, %v4180
        %v4352 = vpack.c.b16 %v4190, %v4181
        %v4353 = vpack.c.b16 %v4191, %v4182
        %v4354 = vpack.c.b16 %v4192, %v4183
        %v4355 = vpack.c.b16 %v4193, %v4184
        %v4356 = vpack.c.b16 %v4194, %v4185
        %v4357 = vpack.c.b16 %v4195, %v4186
        %v4358 = vpack.c.b16 %v4196, %v4187
        %v4359 = vpack.c.b16 %v4206, %v4197
        %v4360 = vpack.c.b16 %v4207, %v4198
        %v4361 = vpack.c.b16 %v4208, %v4199
        %v4362 = vpack.c.b16 %v4209, %v4200
        %v4363 = vpack.c.b16 %v4210, %v4201
        %v4364 = vpack.c.b16 %v4211, %v4202
        %v4365 = vpack.c.b16 %v4212, %v4203
        %v4366 = vpack.c.b16 %v4213, %v4204
        %v4367 = vpack.c.b16 %v4214, %v4205
        %v4368 = vpack.c.b16 %v4224, %v4215
        %v4369 = vpack.c.b16 %v4225, %v4216
        %v4370 = vpack.c.b16 %v4226, %v4217
        %v4371 = vpack.c.b16 %v4227, %v4218
        %v4372 = vpack.c.b16 %v4228, %v4219
        %v4373 = vpack.c.b16 %v4229, %v4220
        %v4374 = vpack.c.b16 %v4230, %v4221
        %v4375 = vpack.c.b16 %v4231, %v4222
        %v4376 = vpack.c.b16 %v4232, %v4223
        %v4665 = vunpack.c.l.b16 %v3641
        %v4666 = vunpack.c.l.b16 %v3642
        %v4667 = vunpack.c.l.b16 %v3643
        %v4668 = vunpack.c.l.b16 %v3644
        %v4669 = vunpack.c.l.b16 %v3645
        %v4670 = vunpack.c.l.b16 %v3646
        %v4671 = vunpack.c.l.b16 %v3647
        %v4672 = vunpack.c.l.b16 %v3648
        %v4673 = vunpack.c.l.b16 %v3649
        %v4674 = vunpack.c.l.b16 %v3650
        %v4675 = vunpack.c.l.b16 %v3651
        %v4676 = vunpack.c.l.b16 %v3652
        %v4677 = vunpack.c.l.b16 %v3653
        %v4678 = vunpack.c.l.b16 %v3654
        %v4679 = vunpack.c.l.b16 %v3655
        %v4680 = vunpack.c.l.b16 %v3656
        %v4681 = vunpack.c.l.b16 %v3657
        %v4682 = vunpack.c.l.b16 %v3658
        %v4683 = vunpack.c.l.b16 %v3659
        %v4684 = vunpack.c.l.b16 %v3660
        %v4685 = vunpack.c.l.b16 %v3661
        %v4686 = vunpack.c.l.b16 %v3662
        %v4687 = vunpack.c.l.b16 %v3663
        %v4688 = vunpack.c.l.b16 %v3664
        %v4689 = vunpack.c.l.b16 %v3665
        %v4690 = vunpack.c.l.b16 %v3666
        %v4691 = vunpack.c.l.b16 %v3667
        %v4692 = vunpack.c.l.b16 %v3668
        %v4693 = vunpack.c.l.b16 %v3669
        %v4694 = vunpack.c.l.b16 %v3670
        %v4695 = vunpack.c.l.b16 %v3671
        %v4696 = vunpack.c.l.b16 %v3672
        %v4697 = vunpack.c.l.b16 %v3673
        %v4698 = vunpack.c.l.b16 %v3674
        %v4699 = vunpack.c.l.b16 %v3675
        %v4700 = vunpack.c.l.b16 %v3676
        %v4701 = vunpack.c.l.b16 %v3677
        %v4702 = vunpack.c.l.b16 %v3678
        %v4703 = vunpack.c.l.b16 %v3679
        %v4704 = vunpack.c.l.b16 %v3680
        %v4705 = vunpack.c.l.b16 %v3681
        %v4706 = vunpack.c.l.b16 %v3682
        %v4707 = vunpack.c.l.b16 %v3683
        %v4708 = vunpack.c.l.b16 %v3684
        %v4709 = vunpack.c.l.b16 %v3685
        %v4710 = vunpack.c.l.b16 %v3686
        %v4711 = vunpack.c.l.b16 %v3687
        %v4712 = vunpack.c.l.b16 %v3688
        %v4713 = vunpack.c.l.b16 %v3689
        %v4714 = vunpack.c.l.b16 %v3690
        %v4715 = vunpack.c.l.b16 %v3691
        %v4716 = vunpack.c.l.b16 %v3692
        %v4717 = vunpack.c.l.b16 %v3693
        %v4718 = vunpack.c.l.b16 %v3694
        %v4719 = vunpack.c.l.b16 %v3695
        %v4720 = vunpack.c.l.b16 %v3696
        %v4721 = vunpack.c.l.b16 %v3697
        %v4722 = vunpack.c.l.b16 %v3698
        %v4723 = vunpack.c.l.b16 %v3699
        %v4724 = vunpack.c.l.b16 %v3700
        %v4725 = vunpack.c.l.b16 %v3701
        %v4726 = vunpack.c.l.b16 %v3702
        %v4727 = vunpack.c.l.b16 %v3703
        %v4728 = vunpack.c.l.b16 %v3704
        %v4729 = vunpack.c.l.b16 %v3705
        %v4730 = vunpack.c.l.b16 %v3706
        %v4731 = vunpack.c.l.b16 %v3707
        %v4732 = vunpack.c.l.b16 %v3708
        %v4733 = vunpack.c.l.b16 %v3709
        %v4734 = vunpack.c.l.b16 %v3710
        %v4735 = vunpack.c.l.b16 %v3711
        %v4736 = vunpack.c.l.b16 %v3712
        %v4737 = vunpack.c.l.b16 %v3713
        %v4738 = vunpack.c.l.b16 %v3714
        %v4739 = vunpack.c.l.b16 %v3715
        %v4740 = vunpack.c.l.b16 %v3716
        %v4741 = vunpack.c.l.b16 %v3717
        %v4742 = vunpack.c.l.b16 %v3718
        %v4743 = vunpack.c.l.b16 %v3719
        %v4744 = vunpack.c.l.b16 %v3720
        %v4745 = vunpack.c.l.b16 %v3721
        %v4746 = vunpack.c.l.b16 %v3722
        %v4747 = vunpack.c.l.b16 %v3723
        %v4748 = vunpack.c.l.b16 %v3724
        %v4749 = vunpack.c.l.b16 %v3725
        %v4750 = vunpack.c.l.b16 %v3726
        %v4751 = vunpack.c.l.b16 %v3727
        %v4752 = vunpack.c.l.b16 %v3728
        %v4753 = vunpack.c.l.b16 %v3729
        %v4754 = vunpack.c.l.b16 %v3730
        %v4755 = vunpack.c.l.b16 %v3731
        %v4756 = vunpack.c.l.b16 %v3732
        %v4757 = vunpack.c.l.b16 %v3733
        %v4758 = vunpack.c.l.b16 %v3734
        %v4759 = vunpack.c.l.b16 %v3735
        %v4760 = vunpack.c.l.b16 %v3736
        %v4761 = vunpack.c.l.b16 %v3737
        %v4762 = vunpack.c.l.b16 %v3738
        %v4763 = vunpack.c.l.b16 %v3739
        %v4764 = vunpack.c.l.b16 %v3740
        %v4765 = vunpack.c.l.b16 %v3741
        %v4766 = vunpack.c.l.b16 %v3742
        %v4767 = vunpack.c.l.b16 %v3743
        %v4768 = vunpack.c.l.b16 %v3744
        %v4769 = vunpack.c.l.b16 %v3745
        %v4770 = vunpack.c.l.b16 %v3746
        %v4771 = vunpack.c.l.b16 %v3747
        %v4772 = vunpack.c.l.b16 %v3748
        %v4773 = vunpack.c.l.b16 %v3749
        %v4774 = vunpack.c.l.b16 %v3750
        %v4775 = vunpack.c.l.b16 %v3751
        %v4776 = vunpack.c.l.b16 %v3752
        %v4777 = vunpack.c.l.b16 %v3753
        %v4778 = vunpack.c.l.b16 %v3754
        %v4779 = vunpack.c.l.b16 %v3755
        %v4780 = vunpack.c.l.b16 %v3756
        %v4781 = vunpack.c.l.b16 %v3757
        %v4782 = vunpack.c.l.b16 %v3758
        %v4783 = vunpack.c.l.b16 %v3759
        %v4784 = vunpack.c.l.b16 %v3760
        %v4785 = vunpack.c.l.b16 %v3761
        %v4786 = vunpack.c.l.b16 %v3762
        %v4787 = vunpack.c.l.b16 %v3763
        %v4788 = vunpack.c.l.b16 %v3764
        %v4789 = vunpack.c.l.b16 %v3765
        %v4790 = vunpack.c.l.b16 %v3766
        %v4791 = vunpack.c.l.b16 %v3767
        %v4792 = vunpack.c.l.b16 %v3768
        %v4793 = vunpack.c.l.b16 %v3769
        %v4794 = vunpack.c.l.b16 %v3770
        %v4795 = vunpack.c.l.b16 %v3771
        %v4796 = vunpack.c.l.b16 %v3772
        %v4797 = vunpack.c.l.b16 %v3773
        %v4798 = vunpack.c.l.b16 %v3774
        %v4799 = vunpack.c.l.b16 %v3775
        %v4800 = vunpack.c.l.b16 %v3776
        %v4801 = vunpack.c.l.b16 %v3777
        %v4802 = vunpack.c.l.b16 %v3778
        %v4803 = vunpack.c.l.b16 %v3779
        %v4804 = vunpack.c.l.b16 %v3780
        %v4805 = vunpack.c.l.b16 %v3781
        %v4806 = vunpack.c.l.b16 %v3782
        %v4807 = vunpack.c.l.b16 %v3783
        %v4808 = vunpack.c.l.b16 %v3784
        %v4809 = vpack.c.b16 %v4666, %v4665
        %v4810 = vpack.c.b16 %v4668, %v4667
        %v4811 = vpack.c.b16 %v4670, %v4669
        %v4812 = vpack.c.b16 %v4672, %v4671
        %v4813 = vpack.c.b16 %v4674, %v4673
        %v4814 = vpack.c.b16 %v4676, %v4675
        %v4815 = vpack.c.b16 %v4678, %v4677
        %v4816 = vpack.c.b16 %v4680, %v4679
        %v4817 = vpack.c.b16 %v4682, %v4681
        %v4818 = vpack.c.b16 %v4684, %v4683
        %v4819 = vpack.c.b16 %v4686, %v4685
        %v4820 = vpack.c.b16 %v4688, %v4687
        %v4821 = vpack.c.b16 %v4690, %v4689
        %v4822 = vpack.c.b16 %v4692, %v4691
        %v4823 = vpack.c.b16 %v4694, %v4693
        %v4824 = vpack.c.b16 %v4696, %v4695
        %v4825 = vpack.c.b16 %v4698, %v4697
        %v4826 = vpack.c.b16 %v4700, %v4699
        %v4827 = vpack.c.b16 %v4702, %v4701
        %v4828 = vpack.c.b16 %v4704, %v4703
        %v4829 = vpack.c.b16 %v4706, %v4705
        %v4830 = vpack.c.b16 %v4708, %v4707
        %v4831 = vpack.c.b16 %v4710, %v4709
        %v4832 = vpack.c.b16 %v4712, %v4711
        %v4833 = vpack.c.b16 %v4714, %v4713
        %v4834 = vpack.c.b16 %v4716, %v4715
        %v4835 = vpack.c.b16 %v4718, %v4717
        %v4836 = vpack.c.b16 %v4720, %v4719
        %v4837 = vpack.c.b16 %v4722, %v4721
        %v4838 = vpack.c.b16 %v4724, %v4723
        %v4839 = vpack.c.b16 %v4726, %v4725
        %v4840 = vpack.c.b16 %v4728, %v4727
        %v4841 = vpack.c.b16 %v4730, %v4729
        %v4842 = vpack.c.b16 %v4732, %v4731
        %v4843 = vpack.c.b16 %v4734, %v4733
        %v4844 = vpack.c.b16 %v4736, %v4735
        %v4845 = vpack.c.b16 %v4738, %v4737
        %v4846 = vpack.c.b16 %v4740, %v4739
        %v4847 = vpack.c.b16 %v4742, %v4741
        %v4848 = vpack.c.b16 %v4744, %v4743
        %v4849 = vpack.c.b16 %v4746, %v4745
        %v4850 = vpack.c.b16 %v4748, %v4747
        %v4851 = vpack.c.b16 %v4750, %v4749
        %v4852 = vpack.c.b16 %v4752, %v4751
        %v4853 = vpack.c.b16 %v4754, %v4753
        %v4854 = vpack.c.b16 %v4756, %v4755
        %v4855 = vpack.c.b16 %v4758, %v4757
        %v4856 = vpack.c.b16 %v4760, %v4759
        %v4857 = vpack.c.b16 %v4762, %v4761
        %v4858 = vpack.c.b16 %v4764, %v4763
        %v4859 = vpack.c.b16 %v4766, %v4765
        %v4860 = vpack.c.b16 %v4768, %v4767
        %v4861 = vpack.c.b16 %v4770, %v4769
        %v4862 = vpack.c.b16 %v4772, %v4771
        %v4863 = vpack.c.b16 %v4774, %v4773
        %v4864 = vpack.c.b16 %v4776, %v4775
        %v4865 = vpack.c.b16 %v4778, %v4777
        %v4866 = vpack.c.b16 %v4780, %v4779
        %v4867 = vpack.c.b16 %v4782, %v4781
        %v4868 = vpack.c.b16 %v4784, %v4783
        %v4869 = vpack.c.b16 %v4786, %v4785
        %v4870 = vpack.c.b16 %v4788, %v4787
        %v4871 = vpack.c.b16 %v4790, %v4789
        %v4872 = vpack.c.b16 %v4792, %v4791
        %v4873 = vpack.c.b16 %v4794, %v4793
        %v4874 = vpack.c.b16 %v4796, %v4795
        %v4875 = vpack.c.b16 %v4798, %v4797
        %v4876 = vpack.c.b16 %v4800, %v4799
        %v4877 = vpack.c.b16 %v4802, %v4801
        %v4878 = vpack.c.b16 %v4804, %v4803
        %v4879 = vpack.c.b16 %v4806, %v4805
        %v4880 = vpack.c.b16 %v4808, %v4807
        %4953 = vmatpush.bf16.msra.mxu0 %v4816
        %4954 = vmatpush.bf16.msra.mxu0 %v4815
        %4955 = vmatpush.bf16.msra.mxu0 %v4814
        %4956 = vmatpush.bf16.msra.mxu0 %v4813
        %4957 = vmatpush.bf16.msra.mxu0 %v4812
        %4958 = vmatpush.bf16.msra.mxu0 %v4811
        %4959 = vmatpush.bf16.msra.mxu0 %v4810
        %4960 = vmatpush.bf16.msra.mxu0 %v4809
        %4961 = vmatmul.bf16.gmra.mxu0 %v4233
        %v4962 = vpop.f32.mrf.mxu0
        %v4963 = vadd.f32 0.0, %v4962
        %v4964 = vpop.f32.mrf.mxu0
        %v4965 = vadd.f32 0.0, %v4964
        %4966 = vmatmul.bf16.gmra.mxu0 %v4242
        %v4967 = vpop.f32.mrf.mxu0
        %v4968 = vadd.f32 0.0, %v4967
        %v4969 = vpop.f32.mrf.mxu0
        %v4970 = vadd.f32 0.0, %v4969
        %4971 = vmatmul.bf16.gmra.mxu0 %v4251
        %v4972 = vpop.f32.mrf.mxu0
        %v4973 = vadd.f32 0.0, %v4972
        %v4974 = vpop.f32.mrf.mxu0
        %v4975 = vadd.f32 0.0, %v4974
        %4976 = vmatmul.bf16.gmra.mxu0 %v4260
        %v4977 = vpop.f32.mrf.mxu0
        %v4978 = vadd.f32 0.0, %v4977
        %v4979 = vpop.f32.mrf.mxu0
        %v4980 = vadd.f32 0.0, %v4979
        %4981 = vmatmul.bf16.gmra.mxu0 %v4269
        %v4982 = vpop.f32.mrf.mxu0
        %v4983 = vadd.f32 0.0, %v4982
        %v4984 = vpop.f32.mrf.mxu0
        %v4985 = vadd.f32 0.0, %v4984
        %4986 = vmatmul.bf16.gmra.mxu0 %v4278
        %v4987 = vpop.f32.mrf.mxu0
        %v4988 = vadd.f32 0.0, %v4987
        %v4989 = vpop.f32.mrf.mxu0
        %v4990 = vadd.f32 0.0, %v4989
        %4991 = vmatmul.bf16.gmra.mxu0 %v4287
        %v4992 = vpop.f32.mrf.mxu0
        %v4993 = vadd.f32 0.0, %v4992
        %v4994 = vpop.f32.mrf.mxu0
        %v4995 = vadd.f32 0.0, %v4994
        %4996 = vmatmul.bf16.gmra.mxu0 %v4296
        %v4997 = vpop.f32.mrf.mxu0
        %v4998 = vadd.f32 0.0, %v4997
        %v4999 = vpop.f32.mrf.mxu0
        %v5000 = vadd.f32 0.0, %v4999
        %5001 = vmatmul.bf16.gmra.mxu0 %v4305
        %v5002 = vpop.f32.mrf.mxu0
        %v5003 = vadd.f32 0.0, %v5002
        %v5004 = vpop.f32.mrf.mxu0
        %v5005 = vadd.f32 0.0, %v5004
        %5006 = vmatmul.bf16.gmra.mxu0 %v4314
        %v5007 = vpop.f32.mrf.mxu0
        %v5008 = vadd.f32 0.0, %v5007
        %v5009 = vpop.f32.mrf.mxu0
        %v5010 = vadd.f32 0.0, %v5009
        %5011 = vmatmul.bf16.gmra.mxu0 %v4323
        %v5012 = vpop.f32.mrf.mxu0
        %v5013 = vadd.f32 0.0, %v5012
        %v5014 = vpop.f32.mrf.mxu0
        %v5015 = vadd.f32 0.0, %v5014
        %5016 = vmatmul.bf16.gmra.mxu0 %v4332
        %v5017 = vpop.f32.mrf.mxu0
        %v5018 = vadd.f32 0.0, %v5017
        %v5019 = vpop.f32.mrf.mxu0
        %v5020 = vadd.f32 0.0, %v5019
        %5021 = vmatmul.bf16.gmra.mxu0 %v4341
        %v5022 = vpop.f32.mrf.mxu0
        %v5023 = vadd.f32 0.0, %v5022
        %v5024 = vpop.f32.mrf.mxu0
        %v5025 = vadd.f32 0.0, %v5024
        %5026 = vmatmul.bf16.gmra.mxu0 %v4350
        %v5027 = vpop.f32.mrf.mxu0
        %v5028 = vadd.f32 0.0, %v5027
        %v5029 = vpop.f32.mrf.mxu0
        %v5030 = vadd.f32 0.0, %v5029
        %5031 = vmatmul.bf16.gmra.mxu0 %v4359
        %v5032 = vpop.f32.mrf.mxu0
        %v5033 = vadd.f32 0.0, %v5032
        %v5034 = vpop.f32.mrf.mxu0
        %v5035 = vadd.f32 0.0, %v5034
        %5036 = vmatmul.bf16.gmra.mxu0 %v4368
        %v5037 = vpop.f32.mrf.mxu0
        %v5038 = vadd.f32 0.0, %v5037
        %v5039 = vpop.f32.mrf.mxu0
        %v5040 = vadd.f32 0.0, %v5039
        %5041 = vdwg.mxu0
        %5042 = vmatpush.bf16.msra.mxu0 %v4824
        %5043 = vmatpush.bf16.msra.mxu0 %v4823
        %5044 = vmatpush.bf16.msra.mxu0 %v4822
        %5045 = vmatpush.bf16.msra.mxu0 %v4821
        %5046 = vmatpush.bf16.msra.mxu0 %v4820
        %5047 = vmatpush.bf16.msra.mxu0 %v4819
        %5048 = vmatpush.bf16.msra.mxu0 %v4818
        %5049 = vmatpush.bf16.msra.mxu0 %v4817
        %5050 = vmatmul.bf16.gmra.mxu0 %v4234
        %v5051 = vpop.f32.mrf.mxu0
        %v5052 = vadd.f32 %v4963, %v5051
        %v5053 = vpop.f32.mrf.mxu0
        %v5054 = vadd.f32 %v4965, %v5053
        %5055 = vmatmul.bf16.gmra.mxu0 %v4243
        %v5056 = vpop.f32.mrf.mxu0
        %v5057 = vadd.f32 %v4968, %v5056
        %v5058 = vpop.f32.mrf.mxu0
        %v5059 = vadd.f32 %v4970, %v5058
        %5060 = vmatmul.bf16.gmra.mxu0 %v4252
        %v5061 = vpop.f32.mrf.mxu0
        %v5062 = vadd.f32 %v4973, %v5061
        %v5063 = vpop.f32.mrf.mxu0
        %v5064 = vadd.f32 %v4975, %v5063
        %5065 = vmatmul.bf16.gmra.mxu0 %v4261
        %v5066 = vpop.f32.mrf.mxu0
        %v5067 = vadd.f32 %v4978, %v5066
        %v5068 = vpop.f32.mrf.mxu0
        %v5069 = vadd.f32 %v4980, %v5068
        %5070 = vmatmul.bf16.gmra.mxu0 %v4270
        %v5071 = vpop.f32.mrf.mxu0
        %v5072 = vadd.f32 %v4983, %v5071
        %v5073 = vpop.f32.mrf.mxu0
        %v5074 = vadd.f32 %v4985, %v5073
        %5075 = vmatmul.bf16.gmra.mxu0 %v4279
        %v5076 = vpop.f32.mrf.mxu0
        %v5077 = vadd.f32 %v4988, %v5076
        %v5078 = vpop.f32.mrf.mxu0
        %v5079 = vadd.f32 %v4990, %v5078
        %5080 = vmatmul.bf16.gmra.mxu0 %v4288
        %v5081 = vpop.f32.mrf.mxu0
        %v5082 = vadd.f32 %v4993, %v5081
        %v5083 = vpop.f32.mrf.mxu0
        %v5084 = vadd.f32 %v4995, %v5083
        %5085 = vmatmul.bf16.gmra.mxu0 %v4297
        %v5086 = vpop.f32.mrf.mxu0
        %v5087 = vadd.f32 %v4998, %v5086
        %v5088 = vpop.f32.mrf.mxu0
        %v5089 = vadd.f32 %v5000, %v5088
        %5090 = vmatmul.bf16.gmra.mxu0 %v4306
        %v5091 = vpop.f32.mrf.mxu0
        %v5092 = vadd.f32 %v5003, %v5091
        %v5093 = vpop.f32.mrf.mxu0
        %v5094 = vadd.f32 %v5005, %v5093
        %5095 = vmatmul.bf16.gmra.mxu0 %v4315
        %v5096 = vpop.f32.mrf.mxu0
        %v5097 = vadd.f32 %v5008, %v5096
        %v5098 = vpop.f32.mrf.mxu0
        %v5099 = vadd.f32 %v5010, %v5098
        %5100 = vmatmul.bf16.gmra.mxu0 %v4324
        %v5101 = vpop.f32.mrf.mxu0
        %v5102 = vadd.f32 %v5013, %v5101
        %v5103 = vpop.f32.mrf.mxu0
        %v5104 = vadd.f32 %v5015, %v5103
        %5105 = vmatmul.bf16.gmra.mxu0 %v4333
        %v5106 = vpop.f32.mrf.mxu0
        %v5107 = vadd.f32 %v5018, %v5106
        %v5108 = vpop.f32.mrf.mxu0
        %v5109 = vadd.f32 %v5020, %v5108
        %5110 = vmatmul.bf16.gmra.mxu0 %v4342
        %v5111 = vpop.f32.mrf.mxu0
        %v5112 = vadd.f32 %v5023, %v5111
        %v5113 = vpop.f32.mrf.mxu0
        %v5114 = vadd.f32 %v5025, %v5113
        %5115 = vmatmul.bf16.gmra.mxu0 %v4351
        %v5116 = vpop.f32.mrf.mxu0
        %v5117 = vadd.f32 %v5028, %v5116
        %v5118 = vpop.f32.mrf.mxu0
        %v5119 = vadd.f32 %v5030, %v5118
        %5120 = vmatmul.bf16.gmra.mxu0 %v4360
        %v5121 = vpop.f32.mrf.mxu0
        %v5122 = vadd.f32 %v5033, %v5121
        %v5123 = vpop.f32.mrf.mxu0
        %v5124 = vadd.f32 %v5035, %v5123
        %5125 = vmatmul.bf16.gmra.mxu0 %v4369
        %v5126 = vpop.f32.mrf.mxu0
        %v5127 = vadd.f32 %v5038, %v5126
        %v5128 = vpop.f32.mrf.mxu0
        %v5129 = vadd.f32 %v5040, %v5128
        %5130 = vdwg.mxu0
        %5131 = vmatpush.bf16.msra.mxu0 %v4832
        %5132 = vmatpush.bf16.msra.mxu0 %v4831
        %5133 = vmatpush.bf16.msra.mxu0 %v4830
        %5134 = vmatpush.bf16.msra.mxu0 %v4829
        %5135 = vmatpush.bf16.msra.mxu0 %v4828
        %5136 = vmatpush.bf16.msra.mxu0 %v4827
        %5137 = vmatpush.bf16.msra.mxu0 %v4826
        %5138 = vmatpush.bf16.msra.mxu0 %v4825
        %5139 = vmatmul.bf16.gmra.mxu0 %v4235
        %v5140 = vpop.f32.mrf.mxu0
        %v5141 = vadd.f32 %v5052, %v5140
        %v5142 = vpop.f32.mrf.mxu0
        %v5143 = vadd.f32 %v5054, %v5142
        %5144 = vmatmul.bf16.gmra.mxu0 %v4244
        %v5145 = vpop.f32.mrf.mxu0
        %v5146 = vadd.f32 %v5057, %v5145
        %v5147 = vpop.f32.mrf.mxu0
        %v5148 = vadd.f32 %v5059, %v5147
        %5149 = vmatmul.bf16.gmra.mxu0 %v4253
        %v5150 = vpop.f32.mrf.mxu0
        %v5151 = vadd.f32 %v5062, %v5150
        %v5152 = vpop.f32.mrf.mxu0
        %v5153 = vadd.f32 %v5064, %v5152
        %5154 = vmatmul.bf16.gmra.mxu0 %v4262
        %v5155 = vpop.f32.mrf.mxu0
        %v5156 = vadd.f32 %v5067, %v5155
        %v5157 = vpop.f32.mrf.mxu0
        %v5158 = vadd.f32 %v5069, %v5157
        %5159 = vmatmul.bf16.gmra.mxu0 %v4271
        %v5160 = vpop.f32.mrf.mxu0
        %v5161 = vadd.f32 %v5072, %v5160
        %v5162 = vpop.f32.mrf.mxu0
        %v5163 = vadd.f32 %v5074, %v5162
        %5164 = vmatmul.bf16.gmra.mxu0 %v4280
        %v5165 = vpop.f32.mrf.mxu0
        %v5166 = vadd.f32 %v5077, %v5165
        %v5167 = vpop.f32.mrf.mxu0
        %v5168 = vadd.f32 %v5079, %v5167
        %5169 = vmatmul.bf16.gmra.mxu0 %v4289
        %v5170 = vpop.f32.mrf.mxu0
        %v5171 = vadd.f32 %v5082, %v5170
        %v5172 = vpop.f32.mrf.mxu0
        %v5173 = vadd.f32 %v5084, %v5172
        %5174 = vmatmul.bf16.gmra.mxu0 %v4298
        %v5175 = vpop.f32.mrf.mxu0
        %v5176 = vadd.f32 %v5087, %v5175
        %v5177 = vpop.f32.mrf.mxu0
        %v5178 = vadd.f32 %v5089, %v5177
        %5179 = vmatmul.bf16.gmra.mxu0 %v4307
        %v5180 = vpop.f32.mrf.mxu0
        %v5181 = vadd.f32 %v5092, %v5180
        %v5182 = vpop.f32.mrf.mxu0
        %v5183 = vadd.f32 %v5094, %v5182
        %5184 = vmatmul.bf16.gmra.mxu0 %v4316
        %v5185 = vpop.f32.mrf.mxu0
        %v5186 = vadd.f32 %v5097, %v5185
        %v5187 = vpop.f32.mrf.mxu0
        %v5188 = vadd.f32 %v5099, %v5187
        %5189 = vmatmul.bf16.gmra.mxu0 %v4325
        %v5190 = vpop.f32.mrf.mxu0
        %v5191 = vadd.f32 %v5102, %v5190
        %v5192 = vpop.f32.mrf.mxu0
        %v5193 = vadd.f32 %v5104, %v5192
        %5194 = vmatmul.bf16.gmra.mxu0 %v4334
        %v5195 = vpop.f32.mrf.mxu0
        %v5196 = vadd.f32 %v5107, %v5195
        %v5197 = vpop.f32.mrf.mxu0
        %v5198 = vadd.f32 %v5109, %v5197
        %5199 = vmatmul.bf16.gmra.mxu0 %v4343
        %v5200 = vpop.f32.mrf.mxu0
        %v5201 = vadd.f32 %v5112, %v5200
        %v5202 = vpop.f32.mrf.mxu0
        %v5203 = vadd.f32 %v5114, %v5202
        %5204 = vmatmul.bf16.gmra.mxu0 %v4352
        %v5205 = vpop.f32.mrf.mxu0
        %v5206 = vadd.f32 %v5117, %v5205
        %v5207 = vpop.f32.mrf.mxu0
        %v5208 = vadd.f32 %v5119, %v5207
        %5209 = vmatmul.bf16.gmra.mxu0 %v4361
        %v5210 = vpop.f32.mrf.mxu0
        %v5211 = vadd.f32 %v5122, %v5210
        %v5212 = vpop.f32.mrf.mxu0
        %v5213 = vadd.f32 %v5124, %v5212
        %5214 = vmatmul.bf16.gmra.mxu0 %v4370
        %v5215 = vpop.f32.mrf.mxu0
        %v5216 = vadd.f32 %v5127, %v5215
        %v5217 = vpop.f32.mrf.mxu0
        %v5218 = vadd.f32 %v5129, %v5217
        %5219 = vdwg.mxu0
        %5220 = vmatpush.bf16.msra.mxu0 %v4840
        %5221 = vmatpush.bf16.msra.mxu0 %v4839
        %5222 = vmatpush.bf16.msra.mxu0 %v4838
        %5223 = vmatpush.bf16.msra.mxu0 %v4837
        %5224 = vmatpush.bf16.msra.mxu0 %v4836
        %5225 = vmatpush.bf16.msra.mxu0 %v4835
        %5226 = vmatpush.bf16.msra.mxu0 %v4834
        %5227 = vmatpush.bf16.msra.mxu0 %v4833
        %5228 = vmatmul.bf16.gmra.mxu0 %v4236
        %v5229 = vpop.f32.mrf.mxu0
        %v5230 = vadd.f32 %v5141, %v5229
        %v5231 = vpop.f32.mrf.mxu0
        %v5232 = vadd.f32 %v5143, %v5231
        %5233 = vmatmul.bf16.gmra.mxu0 %v4245
        %v5234 = vpop.f32.mrf.mxu0
        %v5235 = vadd.f32 %v5146, %v5234
        %v5236 = vpop.f32.mrf.mxu0
        %v5237 = vadd.f32 %v5148, %v5236
        %5238 = vmatmul.bf16.gmra.mxu0 %v4254
        %v5239 = vpop.f32.mrf.mxu0
        %v5240 = vadd.f32 %v5151, %v5239
        %v5241 = vpop.f32.mrf.mxu0
        %v5242 = vadd.f32 %v5153, %v5241
        %5243 = vmatmul.bf16.gmra.mxu0 %v4263
        %v5244 = vpop.f32.mrf.mxu0
        %v5245 = vadd.f32 %v5156, %v5244
        %v5246 = vpop.f32.mrf.mxu0
        %v5247 = vadd.f32 %v5158, %v5246
        %5248 = vmatmul.bf16.gmra.mxu0 %v4272
        %v5249 = vpop.f32.mrf.mxu0
        %v5250 = vadd.f32 %v5161, %v5249
        %v5251 = vpop.f32.mrf.mxu0
        %v5252 = vadd.f32 %v5163, %v5251
        %5253 = vmatmul.bf16.gmra.mxu0 %v4281
        %v5254 = vpop.f32.mrf.mxu0
        %v5255 = vadd.f32 %v5166, %v5254
        %v5256 = vpop.f32.mrf.mxu0
        %v5257 = vadd.f32 %v5168, %v5256
        %5258 = vmatmul.bf16.gmra.mxu0 %v4290
        %v5259 = vpop.f32.mrf.mxu0
        %v5260 = vadd.f32 %v5171, %v5259
        %v5261 = vpop.f32.mrf.mxu0
        %v5262 = vadd.f32 %v5173, %v5261
        %5263 = vmatmul.bf16.gmra.mxu0 %v4299
        %v5264 = vpop.f32.mrf.mxu0
        %v5265 = vadd.f32 %v5176, %v5264
        %v5266 = vpop.f32.mrf.mxu0
        %v5267 = vadd.f32 %v5178, %v5266
        %5268 = vmatmul.bf16.gmra.mxu0 %v4308
        %v5269 = vpop.f32.mrf.mxu0
        %v5270 = vadd.f32 %v5181, %v5269
        %v5271 = vpop.f32.mrf.mxu0
        %v5272 = vadd.f32 %v5183, %v5271
        %5273 = vmatmul.bf16.gmra.mxu0 %v4317
        %v5274 = vpop.f32.mrf.mxu0
        %v5275 = vadd.f32 %v5186, %v5274
        %v5276 = vpop.f32.mrf.mxu0
        %v5277 = vadd.f32 %v5188, %v5276
        %5278 = vmatmul.bf16.gmra.mxu0 %v4326
        %v5279 = vpop.f32.mrf.mxu0
        %v5280 = vadd.f32 %v5191, %v5279
        %v5281 = vpop.f32.mrf.mxu0
        %v5282 = vadd.f32 %v5193, %v5281
        %5283 = vmatmul.bf16.gmra.mxu0 %v4335
        %v5284 = vpop.f32.mrf.mxu0
        %v5285 = vadd.f32 %v5196, %v5284
        %v5286 = vpop.f32.mrf.mxu0
        %v5287 = vadd.f32 %v5198, %v5286
        %5288 = vmatmul.bf16.gmra.mxu0 %v4344
        %v5289 = vpop.f32.mrf.mxu0
        %v5290 = vadd.f32 %v5201, %v5289
        %v5291 = vpop.f32.mrf.mxu0
        %v5292 = vadd.f32 %v5203, %v5291
        %5293 = vmatmul.bf16.gmra.mxu0 %v4353
        %v5294 = vpop.f32.mrf.mxu0
        %v5295 = vadd.f32 %v5206, %v5294
        %v5296 = vpop.f32.mrf.mxu0
        %v5297 = vadd.f32 %v5208, %v5296
        %5298 = vmatmul.bf16.gmra.mxu0 %v4362
        %v5299 = vpop.f32.mrf.mxu0
        %v5300 = vadd.f32 %v5211, %v5299
        %v5301 = vpop.f32.mrf.mxu0
        %v5302 = vadd.f32 %v5213, %v5301
        %5303 = vmatmul.bf16.gmra.mxu0 %v4371
        %v5304 = vpop.f32.mrf.mxu0
        %v5305 = vadd.f32 %v5216, %v5304
        %v5306 = vpop.f32.mrf.mxu0
        %v5307 = vadd.f32 %v5218, %v5306
        %5308 = vdwg.mxu0
        %5309 = vmatpush.bf16.msra.mxu0 %v4848
        %5310 = vmatpush.bf16.msra.mxu0 %v4847
        %5311 = vmatpush.bf16.msra.mxu0 %v4846
        %5312 = vmatpush.bf16.msra.mxu0 %v4845
        %5313 = vmatpush.bf16.msra.mxu0 %v4844
        %5314 = vmatpush.bf16.msra.mxu0 %v4843
        %5315 = vmatpush.bf16.msra.mxu0 %v4842
        %5316 = vmatpush.bf16.msra.mxu0 %v4841
        %5317 = vmatmul.bf16.gmra.mxu0 %v4237
        %v5318 = vpop.f32.mrf.mxu0
        %v5319 = vadd.f32 %v5230, %v5318
        %v5320 = vpop.f32.mrf.mxu0
        %v5321 = vadd.f32 %v5232, %v5320
        %5322 = vmatmul.bf16.gmra.mxu0 %v4246
        %v5323 = vpop.f32.mrf.mxu0
        %v5324 = vadd.f32 %v5235, %v5323
        %v5325 = vpop.f32.mrf.mxu0
        %v5326 = vadd.f32 %v5237, %v5325
        %5327 = vmatmul.bf16.gmra.mxu0 %v4255
        %v5328 = vpop.f32.mrf.mxu0
        %v5329 = vadd.f32 %v5240, %v5328
        %v5330 = vpop.f32.mrf.mxu0
        %v5331 = vadd.f32 %v5242, %v5330
        %5332 = vmatmul.bf16.gmra.mxu0 %v4264
        %v5333 = vpop.f32.mrf.mxu0
        %v5334 = vadd.f32 %v5245, %v5333
        %v5335 = vpop.f32.mrf.mxu0
        %v5336 = vadd.f32 %v5247, %v5335
        %5337 = vmatmul.bf16.gmra.mxu0 %v4273
        %v5338 = vpop.f32.mrf.mxu0
        %v5339 = vadd.f32 %v5250, %v5338
        %v5340 = vpop.f32.mrf.mxu0
        %v5341 = vadd.f32 %v5252, %v5340
        %5342 = vmatmul.bf16.gmra.mxu0 %v4282
        %v5343 = vpop.f32.mrf.mxu0
        %v5344 = vadd.f32 %v5255, %v5343
        %v5345 = vpop.f32.mrf.mxu0
        %v5346 = vadd.f32 %v5257, %v5345
        %5347 = vmatmul.bf16.gmra.mxu0 %v4291
        %v5348 = vpop.f32.mrf.mxu0
        %v5349 = vadd.f32 %v5260, %v5348
        %v5350 = vpop.f32.mrf.mxu0
        %v5351 = vadd.f32 %v5262, %v5350
        %5352 = vmatmul.bf16.gmra.mxu0 %v4300
        %v5353 = vpop.f32.mrf.mxu0
        %v5354 = vadd.f32 %v5265, %v5353
        %v5355 = vpop.f32.mrf.mxu0
        %v5356 = vadd.f32 %v5267, %v5355
        %5357 = vmatmul.bf16.gmra.mxu0 %v4309
        %v5358 = vpop.f32.mrf.mxu0
        %v5359 = vadd.f32 %v5270, %v5358
        %v5360 = vpop.f32.mrf.mxu0
        %v5361 = vadd.f32 %v5272, %v5360
        %5362 = vmatmul.bf16.gmra.mxu0 %v4318
        %v5363 = vpop.f32.mrf.mxu0
        %v5364 = vadd.f32 %v5275, %v5363
        %v5365 = vpop.f32.mrf.mxu0
        %v5366 = vadd.f32 %v5277, %v5365
        %5367 = vmatmul.bf16.gmra.mxu0 %v4327
        %v5368 = vpop.f32.mrf.mxu0
        %v5369 = vadd.f32 %v5280, %v5368
        %v5370 = vpop.f32.mrf.mxu0
        %v5371 = vadd.f32 %v5282, %v5370
        %5372 = vmatmul.bf16.gmra.mxu0 %v4336
        %v5373 = vpop.f32.mrf.mxu0
        %v5374 = vadd.f32 %v5285, %v5373
        %v5375 = vpop.f32.mrf.mxu0
        %v5376 = vadd.f32 %v5287, %v5375
        %5377 = vmatmul.bf16.gmra.mxu0 %v4345
        %v5378 = vpop.f32.mrf.mxu0
        %v5379 = vadd.f32 %v5290, %v5378
        %v5380 = vpop.f32.mrf.mxu0
        %v5381 = vadd.f32 %v5292, %v5380
        %5382 = vmatmul.bf16.gmra.mxu0 %v4354
        %v5383 = vpop.f32.mrf.mxu0
        %v5384 = vadd.f32 %v5295, %v5383
        %v5385 = vpop.f32.mrf.mxu0
        %v5386 = vadd.f32 %v5297, %v5385
        %5387 = vmatmul.bf16.gmra.mxu0 %v4363
        %v5388 = vpop.f32.mrf.mxu0
        %v5389 = vadd.f32 %v5300, %v5388
        %v5390 = vpop.f32.mrf.mxu0
        %v5391 = vadd.f32 %v5302, %v5390
        %5392 = vmatmul.bf16.gmra.mxu0 %v4372
        %v5393 = vpop.f32.mrf.mxu0
        %v5394 = vadd.f32 %v5305, %v5393
        %v5395 = vpop.f32.mrf.mxu0
        %v5396 = vadd.f32 %v5307, %v5395
        %5397 = vdwg.mxu0
        %5398 = vmatpush.bf16.msra.mxu0 %v4856
        %5399 = vmatpush.bf16.msra.mxu0 %v4855
        %5400 = vmatpush.bf16.msra.mxu0 %v4854
        %5401 = vmatpush.bf16.msra.mxu0 %v4853
        %5402 = vmatpush.bf16.msra.mxu0 %v4852
        %5403 = vmatpush.bf16.msra.mxu0 %v4851
        %5404 = vmatpush.bf16.msra.mxu0 %v4850
        %5405 = vmatpush.bf16.msra.mxu0 %v4849
        %5406 = vmatmul.bf16.gmra.mxu0 %v4238
        %v5407 = vpop.f32.mrf.mxu0
        %v5408 = vadd.f32 %v5319, %v5407
        %v5409 = vpop.f32.mrf.mxu0
        %v5410 = vadd.f32 %v5321, %v5409
        %5411 = vmatmul.bf16.gmra.mxu0 %v4247
        %v5412 = vpop.f32.mrf.mxu0
        %v5413 = vadd.f32 %v5324, %v5412
        %v5414 = vpop.f32.mrf.mxu0
        %v5415 = vadd.f32 %v5326, %v5414
        %5416 = vmatmul.bf16.gmra.mxu0 %v4256
        %v5417 = vpop.f32.mrf.mxu0
        %v5418 = vadd.f32 %v5329, %v5417
        %v5419 = vpop.f32.mrf.mxu0
        %v5420 = vadd.f32 %v5331, %v5419
        %5421 = vmatmul.bf16.gmra.mxu0 %v4265
        %v5422 = vpop.f32.mrf.mxu0
        %v5423 = vadd.f32 %v5334, %v5422
        %v5424 = vpop.f32.mrf.mxu0
        %v5425 = vadd.f32 %v5336, %v5424
        %5426 = vmatmul.bf16.gmra.mxu0 %v4274
        %v5427 = vpop.f32.mrf.mxu0
        %v5428 = vadd.f32 %v5339, %v5427
        %v5429 = vpop.f32.mrf.mxu0
        %v5430 = vadd.f32 %v5341, %v5429
        %5431 = vmatmul.bf16.gmra.mxu0 %v4283
        %v5432 = vpop.f32.mrf.mxu0
        %v5433 = vadd.f32 %v5344, %v5432
        %v5434 = vpop.f32.mrf.mxu0
        %v5435 = vadd.f32 %v5346, %v5434
        %5436 = vmatmul.bf16.gmra.mxu0 %v4292
        %v5437 = vpop.f32.mrf.mxu0
        %v5438 = vadd.f32 %v5349, %v5437
        %v5439 = vpop.f32.mrf.mxu0
        %v5440 = vadd.f32 %v5351, %v5439
        %5441 = vmatmul.bf16.gmra.mxu0 %v4301
        %v5442 = vpop.f32.mrf.mxu0
        %v5443 = vadd.f32 %v5354, %v5442
        %v5444 = vpop.f32.mrf.mxu0
        %v5445 = vadd.f32 %v5356, %v5444
        %5446 = vmatmul.bf16.gmra.mxu0 %v4310
        %v5447 = vpop.f32.mrf.mxu0
        %v5448 = vadd.f32 %v5359, %v5447
        %v5449 = vpop.f32.mrf.mxu0
        %v5450 = vadd.f32 %v5361, %v5449
        %5451 = vmatmul.bf16.gmra.mxu0 %v4319
        %v5452 = vpop.f32.mrf.mxu0
        %v5453 = vadd.f32 %v5364, %v5452
        %v5454 = vpop.f32.mrf.mxu0
        %v5455 = vadd.f32 %v5366, %v5454
        %5456 = vmatmul.bf16.gmra.mxu0 %v4328
        %v5457 = vpop.f32.mrf.mxu0
        %v5458 = vadd.f32 %v5369, %v5457
        %v5459 = vpop.f32.mrf.mxu0
        %v5460 = vadd.f32 %v5371, %v5459
        %5461 = vmatmul.bf16.gmra.mxu0 %v4337
        %v5462 = vpop.f32.mrf.mxu0
        %v5463 = vadd.f32 %v5374, %v5462
        %v5464 = vpop.f32.mrf.mxu0
        %v5465 = vadd.f32 %v5376, %v5464
        %5466 = vmatmul.bf16.gmra.mxu0 %v4346
        %v5467 = vpop.f32.mrf.mxu0
        %v5468 = vadd.f32 %v5379, %v5467
        %v5469 = vpop.f32.mrf.mxu0
        %v5470 = vadd.f32 %v5381, %v5469
        %5471 = vmatmul.bf16.gmra.mxu0 %v4355
        %v5472 = vpop.f32.mrf.mxu0
        %v5473 = vadd.f32 %v5384, %v5472
        %v5474 = vpop.f32.mrf.mxu0
        %v5475 = vadd.f32 %v5386, %v5474
        %5476 = vmatmul.bf16.gmra.mxu0 %v4364
        %v5477 = vpop.f32.mrf.mxu0
        %v5478 = vadd.f32 %v5389, %v5477
        %v5479 = vpop.f32.mrf.mxu0
        %v5480 = vadd.f32 %v5391, %v5479
        %5481 = vmatmul.bf16.gmra.mxu0 %v4373
        %v5482 = vpop.f32.mrf.mxu0
        %v5483 = vadd.f32 %v5394, %v5482
        %v5484 = vpop.f32.mrf.mxu0
        %v5485 = vadd.f32 %v5396, %v5484
        %5486 = vdwg.mxu0
        %5487 = vmatpush.bf16.msra.mxu0 %v4864
        %5488 = vmatpush.bf16.msra.mxu0 %v4863
        %5489 = vmatpush.bf16.msra.mxu0 %v4862
        %5490 = vmatpush.bf16.msra.mxu0 %v4861
        %5491 = vmatpush.bf16.msra.mxu0 %v4860
        %5492 = vmatpush.bf16.msra.mxu0 %v4859
        %5493 = vmatpush.bf16.msra.mxu0 %v4858
        %5494 = vmatpush.bf16.msra.mxu0 %v4857
        %5495 = vmatmul.bf16.gmra.mxu0 %v4239
        %v5496 = vpop.f32.mrf.mxu0
        %v5497 = vadd.f32 %v5408, %v5496
        %v5498 = vpop.f32.mrf.mxu0
        %v5499 = vadd.f32 %v5410, %v5498
        %5500 = vmatmul.bf16.gmra.mxu0 %v4248
        %v5501 = vpop.f32.mrf.mxu0
        %v5502 = vadd.f32 %v5413, %v5501
        %v5503 = vpop.f32.mrf.mxu0
        %v5504 = vadd.f32 %v5415, %v5503
        %5505 = vmatmul.bf16.gmra.mxu0 %v4257
        %v5506 = vpop.f32.mrf.mxu0
        %v5507 = vadd.f32 %v5418, %v5506
        %v5508 = vpop.f32.mrf.mxu0
        %v5509 = vadd.f32 %v5420, %v5508
        %5510 = vmatmul.bf16.gmra.mxu0 %v4266
        %v5511 = vpop.f32.mrf.mxu0
        %v5512 = vadd.f32 %v5423, %v5511
        %v5513 = vpop.f32.mrf.mxu0
        %v5514 = vadd.f32 %v5425, %v5513
        %5515 = vmatmul.bf16.gmra.mxu0 %v4275
        %v5516 = vpop.f32.mrf.mxu0
        %v5517 = vadd.f32 %v5428, %v5516
        %v5518 = vpop.f32.mrf.mxu0
        %v5519 = vadd.f32 %v5430, %v5518
        %5520 = vmatmul.bf16.gmra.mxu0 %v4284
        %v5521 = vpop.f32.mrf.mxu0
        %v5522 = vadd.f32 %v5433, %v5521
        %v5523 = vpop.f32.mrf.mxu0
        %v5524 = vadd.f32 %v5435, %v5523
        %5525 = vmatmul.bf16.gmra.mxu0 %v4293
        %v5526 = vpop.f32.mrf.mxu0
        %v5527 = vadd.f32 %v5438, %v5526
        %v5528 = vpop.f32.mrf.mxu0
        %v5529 = vadd.f32 %v5440, %v5528
        %5530 = vmatmul.bf16.gmra.mxu0 %v4302
        %v5531 = vpop.f32.mrf.mxu0
        %v5532 = vadd.f32 %v5443, %v5531
        %v5533 = vpop.f32.mrf.mxu0
        %v5534 = vadd.f32 %v5445, %v5533
        %5535 = vmatmul.bf16.gmra.mxu0 %v4311
        %v5536 = vpop.f32.mrf.mxu0
        %v5537 = vadd.f32 %v5448, %v5536
        %v5538 = vpop.f32.mrf.mxu0
        %v5539 = vadd.f32 %v5450, %v5538
        %5540 = vmatmul.bf16.gmra.mxu0 %v4320
        %v5541 = vpop.f32.mrf.mxu0
        %v5542 = vadd.f32 %v5453, %v5541
        %v5543 = vpop.f32.mrf.mxu0
        %v5544 = vadd.f32 %v5455, %v5543
        %5545 = vmatmul.bf16.gmra.mxu0 %v4329
        %v5546 = vpop.f32.mrf.mxu0
        %v5547 = vadd.f32 %v5458, %v5546
        %v5548 = vpop.f32.mrf.mxu0
        %v5549 = vadd.f32 %v5460, %v5548
        %5550 = vmatmul.bf16.gmra.mxu0 %v4338
        %v5551 = vpop.f32.mrf.mxu0
        %v5552 = vadd.f32 %v5463, %v5551
        %v5553 = vpop.f32.mrf.mxu0
        %v5554 = vadd.f32 %v5465, %v5553
        %5555 = vmatmul.bf16.gmra.mxu0 %v4347
        %v5556 = vpop.f32.mrf.mxu0
        %v5557 = vadd.f32 %v5468, %v5556
        %v5558 = vpop.f32.mrf.mxu0
        %v5559 = vadd.f32 %v5470, %v5558
        %5560 = vmatmul.bf16.gmra.mxu0 %v4356
        %v5561 = vpop.f32.mrf.mxu0
        %v5562 = vadd.f32 %v5473, %v5561
        %v5563 = vpop.f32.mrf.mxu0
        %v5564 = vadd.f32 %v5475, %v5563
        %5565 = vmatmul.bf16.gmra.mxu0 %v4365
        %v5566 = vpop.f32.mrf.mxu0
        %v5567 = vadd.f32 %v5478, %v5566
        %v5568 = vpop.f32.mrf.mxu0
        %v5569 = vadd.f32 %v5480, %v5568
        %5570 = vmatmul.bf16.gmra.mxu0 %v4374
        %v5571 = vpop.f32.mrf.mxu0
        %v5572 = vadd.f32 %v5483, %v5571
        %v5573 = vpop.f32.mrf.mxu0
        %v5574 = vadd.f32 %v5485, %v5573
        %5575 = vdwg.mxu0
        %5576 = vmatpush.bf16.msra.mxu0 %v4872
        %5577 = vmatpush.bf16.msra.mxu0 %v4871
        %5578 = vmatpush.bf16.msra.mxu0 %v4870
        %5579 = vmatpush.bf16.msra.mxu0 %v4869
        %5580 = vmatpush.bf16.msra.mxu0 %v4868
        %5581 = vmatpush.bf16.msra.mxu0 %v4867
        %5582 = vmatpush.bf16.msra.mxu0 %v4866
        %5583 = vmatpush.bf16.msra.mxu0 %v4865
        %5584 = vmatmul.bf16.gmra.mxu0 %v4240
        %v5585 = vpop.f32.mrf.mxu0
        %v5586 = vadd.f32 %v5497, %v5585
        %v5587 = vpop.f32.mrf.mxu0
        %v5588 = vadd.f32 %v5499, %v5587
        %5589 = vmatmul.bf16.gmra.mxu0 %v4249
        %v5590 = vpop.f32.mrf.mxu0
        %v5591 = vadd.f32 %v5502, %v5590
        %v5592 = vpop.f32.mrf.mxu0
        %v5593 = vadd.f32 %v5504, %v5592
        %5594 = vmatmul.bf16.gmra.mxu0 %v4258
        %v5595 = vpop.f32.mrf.mxu0
        %v5596 = vadd.f32 %v5507, %v5595
        %v5597 = vpop.f32.mrf.mxu0
        %v5598 = vadd.f32 %v5509, %v5597
        %5599 = vmatmul.bf16.gmra.mxu0 %v4267
        %v5600 = vpop.f32.mrf.mxu0
        %v5601 = vadd.f32 %v5512, %v5600
        %v5602 = vpop.f32.mrf.mxu0
        %v5603 = vadd.f32 %v5514, %v5602
        %5604 = vmatmul.bf16.gmra.mxu0 %v4276
        %v5605 = vpop.f32.mrf.mxu0
        %v5606 = vadd.f32 %v5517, %v5605
        %v5607 = vpop.f32.mrf.mxu0
        %v5608 = vadd.f32 %v5519, %v5607
        %5609 = vmatmul.bf16.gmra.mxu0 %v4285
        %v5610 = vpop.f32.mrf.mxu0
        %v5611 = vadd.f32 %v5522, %v5610
        %v5612 = vpop.f32.mrf.mxu0
        %v5613 = vadd.f32 %v5524, %v5612
        %5614 = vmatmul.bf16.gmra.mxu0 %v4294
        %v5615 = vpop.f32.mrf.mxu0
        %v5616 = vadd.f32 %v5527, %v5615
        %v5617 = vpop.f32.mrf.mxu0
        %v5618 = vadd.f32 %v5529, %v5617
        %5619 = vmatmul.bf16.gmra.mxu0 %v4303
        %v5620 = vpop.f32.mrf.mxu0
        %v5621 = vadd.f32 %v5532, %v5620
        %v5622 = vpop.f32.mrf.mxu0
        %v5623 = vadd.f32 %v5534, %v5622
        %5624 = vmatmul.bf16.gmra.mxu0 %v4312
        %v5625 = vpop.f32.mrf.mxu0
        %v5626 = vadd.f32 %v5537, %v5625
        %v5627 = vpop.f32.mrf.mxu0
        %v5628 = vadd.f32 %v5539, %v5627
        %5629 = vmatmul.bf16.gmra.mxu0 %v4321
        %v5630 = vpop.f32.mrf.mxu0
        %v5631 = vadd.f32 %v5542, %v5630
        %v5632 = vpop.f32.mrf.mxu0
        %v5633 = vadd.f32 %v5544, %v5632
        %5634 = vmatmul.bf16.gmra.mxu0 %v4330
        %v5635 = vpop.f32.mrf.mxu0
        %v5636 = vadd.f32 %v5547, %v5635
        %v5637 = vpop.f32.mrf.mxu0
        %v5638 = vadd.f32 %v5549, %v5637
        %5639 = vmatmul.bf16.gmra.mxu0 %v4339
        %v5640 = vpop.f32.mrf.mxu0
        %v5641 = vadd.f32 %v5552, %v5640
        %v5642 = vpop.f32.mrf.mxu0
        %v5643 = vadd.f32 %v5554, %v5642
        %5644 = vmatmul.bf16.gmra.mxu0 %v4348
        %v5645 = vpop.f32.mrf.mxu0
        %v5646 = vadd.f32 %v5557, %v5645
        %v5647 = vpop.f32.mrf.mxu0
        %v5648 = vadd.f32 %v5559, %v5647
        %5649 = vmatmul.bf16.gmra.mxu0 %v4357
        %v5650 = vpop.f32.mrf.mxu0
        %v5651 = vadd.f32 %v5562, %v5650
        %v5652 = vpop.f32.mrf.mxu0
        %v5653 = vadd.f32 %v5564, %v5652
        %5654 = vmatmul.bf16.gmra.mxu0 %v4366
        %v5655 = vpop.f32.mrf.mxu0
        %v5656 = vadd.f32 %v5567, %v5655
        %v5657 = vpop.f32.mrf.mxu0
        %v5658 = vadd.f32 %v5569, %v5657
        %5659 = vmatmul.bf16.gmra.mxu0 %v4375
        %v5660 = vpop.f32.mrf.mxu0
        %v5661 = vadd.f32 %v5572, %v5660
        %v5662 = vpop.f32.mrf.mxu0
        %v5663 = vadd.f32 %v5574, %v5662
        %5664 = vdwg.mxu0
        %5665 = vmatpush.bf16.msra.mxu0 %v4880
        %5666 = vmatpush.bf16.msra.mxu0 %v4879
        %5667 = vmatpush.bf16.msra.mxu0 %v4878
        %5668 = vmatpush.bf16.msra.mxu0 %v4877
        %5669 = vmatpush.bf16.msra.mxu0 %v4876
        %5670 = vmatpush.bf16.msra.mxu0 %v4875
        %5671 = vmatpush.bf16.msra.mxu0 %v4874
        %5672 = vmatpush.bf16.msra.mxu0 %v4873
        %5673 = vmatmul.bf16.gmra.mxu0 %v4241
        %v5674 = vpop.f32.mrf.mxu0
        %v5675 = vadd.f32 %v5586, %v5674
        %v5676 = vpop.f32.mrf.mxu0
        %v5677 = vadd.f32 %v5588, %v5676
        %5678 = vmatmul.bf16.gmra.mxu0 %v4250
        %v5679 = vpop.f32.mrf.mxu0
        %v5680 = vadd.f32 %v5591, %v5679
        %v5681 = vpop.f32.mrf.mxu0
        %v5682 = vadd.f32 %v5593, %v5681
        %5683 = vmatmul.bf16.gmra.mxu0 %v4259
        %v5684 = vpop.f32.mrf.mxu0
        %v5685 = vadd.f32 %v5596, %v5684
        %v5686 = vpop.f32.mrf.mxu0
        %v5687 = vadd.f32 %v5598, %v5686
        %5688 = vmatmul.bf16.gmra.mxu0 %v4268
        %v5689 = vpop.f32.mrf.mxu0
        %v5690 = vadd.f32 %v5601, %v5689
        %v5691 = vpop.f32.mrf.mxu0
        %v5692 = vadd.f32 %v5603, %v5691
        %5693 = vmatmul.bf16.gmra.mxu0 %v4277
        %v5694 = vpop.f32.mrf.mxu0
        %v5695 = vadd.f32 %v5606, %v5694
        %v5696 = vpop.f32.mrf.mxu0
        %v5697 = vadd.f32 %v5608, %v5696
        %5698 = vmatmul.bf16.gmra.mxu0 %v4286
        %v5699 = vpop.f32.mrf.mxu0
        %v5700 = vadd.f32 %v5611, %v5699
        %v5701 = vpop.f32.mrf.mxu0
        %v5702 = vadd.f32 %v5613, %v5701
        %5703 = vmatmul.bf16.gmra.mxu0 %v4295
        %v5704 = vpop.f32.mrf.mxu0
        %v5705 = vadd.f32 %v5616, %v5704
        %v5706 = vpop.f32.mrf.mxu0
        %v5707 = vadd.f32 %v5618, %v5706
        %5708 = vmatmul.bf16.gmra.mxu0 %v4304
        %v5709 = vpop.f32.mrf.mxu0
        %v5710 = vadd.f32 %v5621, %v5709
        %v5711 = vpop.f32.mrf.mxu0
        %v5712 = vadd.f32 %v5623, %v5711
        %5713 = vmatmul.bf16.gmra.mxu0 %v4313
        %v5714 = vpop.f32.mrf.mxu0
        %v5715 = vadd.f32 %v5626, %v5714
        %v5716 = vpop.f32.mrf.mxu0
        %v5717 = vadd.f32 %v5628, %v5716
        %5718 = vmatmul.bf16.gmra.mxu0 %v4322
        %v5719 = vpop.f32.mrf.mxu0
        %v5720 = vadd.f32 %v5631, %v5719
        %v5721 = vpop.f32.mrf.mxu0
        %v5722 = vadd.f32 %v5633, %v5721
        %5723 = vmatmul.bf16.gmra.mxu0 %v4331
        %v5724 = vpop.f32.mrf.mxu0
        %v5725 = vadd.f32 %v5636, %v5724
        %v5726 = vpop.f32.mrf.mxu0
        %v5727 = vadd.f32 %v5638, %v5726
        %5728 = vmatmul.bf16.gmra.mxu0 %v4340
        %v5729 = vpop.f32.mrf.mxu0
        %v5730 = vadd.f32 %v5641, %v5729
        %v5731 = vpop.f32.mrf.mxu0
        %v5732 = vadd.f32 %v5643, %v5731
        %5733 = vmatmul.bf16.gmra.mxu0 %v4349
        %v5734 = vpop.f32.mrf.mxu0
        %v5735 = vadd.f32 %v5646, %v5734
        %v5736 = vpop.f32.mrf.mxu0
        %v5737 = vadd.f32 %v5648, %v5736
        %5738 = vmatmul.bf16.gmra.mxu0 %v4358
        %v5739 = vpop.f32.mrf.mxu0
        %v5740 = vadd.f32 %v5651, %v5739
        %v5741 = vpop.f32.mrf.mxu0
        %v5742 = vadd.f32 %v5653, %v5741
        %5743 = vmatmul.bf16.gmra.mxu0 %v4367
        %v5744 = vpop.f32.mrf.mxu0
        %v5745 = vadd.f32 %v5656, %v5744
        %v5746 = vpop.f32.mrf.mxu0
        %v5747 = vadd.f32 %v5658, %v5746
        %5748 = vmatmul.bf16.gmra.mxu0 %v4376
        %v5749 = vpop.f32.mrf.mxu0
        %v5750 = vadd.f32 %v5661, %v5749
        %v5751 = vpop.f32.mrf.mxu0
        %v5752 = vadd.f32 %v5663, %v5751
        %5753 = vdwg.mxu0
        %v5754 = vadd.f32 %v5675, %v5677
        %v5755 = vadd.f32 %v5754, %v5680
        %v5756 = vadd.f32 %v5755, %v5682
        %v5757 = vadd.f32 %v5756, %v5685
        %v5758 = vadd.f32 %v5757, %v5687
        %v5759 = vadd.f32 %v5758, %v5690
        %v5760 = vadd.f32 %v5759, %v5692
        %v5761 = vadd.f32 %v5760, %v5695
        %v5762 = vadd.f32 %v5761, %v5697
        %v5763 = vadd.f32 %v5762, %v5700
        %v5764 = vadd.f32 %v5763, %v5702
        %v5765 = vadd.f32 %v5764, %v5705
        %v5766 = vadd.f32 %v5765, %v5707
        %v5767 = vadd.f32 %v5766, %v5710
        %v5768 = vadd.f32 %v5767, %v5712
        %v5769 = vadd.f32 %v5768, %v5715
        %v5770 = vadd.f32 %v5769, %v5717
        %v5771 = vadd.f32 %v5770, %v5720
        %v5772 = vadd.f32 %v5771, %v5722
        %v5773 = vadd.f32 %v5772, %v5725
        %v5774 = vadd.f32 %v5773, %v5727
        %v5775 = vadd.f32 %v5774, %v5730
        %v5776 = vadd.f32 %v5775, %v5732
        %v5777 = vadd.f32 %v5776, %v5735
        %v5778 = vadd.f32 %v5777, %v5737
        %v5779 = vadd.f32 %v5778, %v5740
        %v5780 = vadd.f32 %v5779, %v5742
        %v5781 = vadd.f32 %v5780, %v5745
        %v5782 = vadd.f32 %v5781, %v5747
        %v5783 = vadd.f32 %v5782, %v5750
        %v5784 = vadd.f32 %v5783, %v5752
        %v5785 = vrot.slane %v5784, 4
        %v5786 = vadd.f32 %v5784, %v5785
        %v5787 = vrot.slane %v5786, 2
        %v5788 = vadd.f32 %v5786, %v5787
        %v5789 = vrot.slane %v5788, 1
        %v5790 = vadd.f32 %v5788, %v5789
        %v5791 = vrcp.pop 256.0
        %v5792 = vmul.f32 256.0, %v5791
        %v5793 = vsub.f32 1.0, %v5792
        %v5794 = vmul.f32 %v5791, %v5793
        %v5795 = vadd.f32 %v5791, %v5794
        %vm5796 = vweird.f32 %v5791
        %v5797 = vsel %vm5796, %v5791, %v5795
        %v5798 = vmul.f32 %v5790, %v5797
        %v5799 = vsub.f32 %v5675, %v5798
        %v5800 = vsub.f32 %v5677, %v5798
        %v5801 = vsub.f32 %v5680, %v5798
        %v5802 = vsub.f32 %v5682, %v5798
        %v5803 = vsub.f32 %v5685, %v5798
        %v5804 = vsub.f32 %v5687, %v5798
        %v5805 = vsub.f32 %v5690, %v5798
        %v5806 = vsub.f32 %v5692, %v5798
        %v5807 = vsub.f32 %v5695, %v5798
        %v5808 = vsub.f32 %v5697, %v5798
        %v5809 = vsub.f32 %v5700, %v5798
        %v5810 = vsub.f32 %v5702, %v5798
        %v5811 = vsub.f32 %v5705, %v5798
        %v5812 = vsub.f32 %v5707, %v5798
        %v5813 = vsub.f32 %v5710, %v5798
        %v5814 = vsub.f32 %v5712, %v5798
        %v5815 = vsub.f32 %v5715, %v5798
        %v5816 = vsub.f32 %v5717, %v5798
        %v5817 = vsub.f32 %v5720, %v5798
        %v5818 = vsub.f32 %v5722, %v5798
        %v5819 = vsub.f32 %v5725, %v5798
        %v5820 = vsub.f32 %v5727, %v5798
        %v5821 = vsub.f32 %v5730, %v5798
        %v5822 = vsub.f32 %v5732, %v5798
        %v5823 = vsub.f32 %v5735, %v5798
        %v5824 = vsub.f32 %v5737, %v5798
        %v5825 = vsub.f32 %v5740, %v5798
        %v5826 = vsub.f32 %v5742, %v5798
        %v5827 = vsub.f32 %v5745, %v5798
        %v5828 = vsub.f32 %v5747, %v5798
        %v5829 = vsub.f32 %v5750, %v5798
        %v5830 = vsub.f32 %v5752, %v5798
        %v5831 = vmul.f32 %v5799, %v5799
        %v5832 = vmul.f32 %v5800, %v5800
        %v5833 = vmul.f32 %v5801, %v5801
        %v5834 = vmul.f32 %v5802, %v5802
        %v5835 = vmul.f32 %v5803, %v5803
        %v5836 = vmul.f32 %v5804, %v5804
        %v5837 = vmul.f32 %v5805, %v5805
        %v5838 = vmul.f32 %v5806, %v5806
        %v5839 = vmul.f32 %v5807, %v5807
        %v5840 = vmul.f32 %v5808, %v5808
        %v5841 = vmul.f32 %v5809, %v5809
        %v5842 = vmul.f32 %v5810, %v5810
        %v5843 = vmul.f32 %v5811, %v5811
        %v5844 = vmul.f32 %v5812, %v5812
        %v5845 = vmul.f32 %v5813, %v5813
        %v5846 = vmul.f32 %v5814, %v5814
        %v5847 = vmul.f32 %v5815, %v5815
        %v5848 = vmul.f32 %v5816, %v5816
        %v5849 = vmul.f32 %v5817, %v5817
        %v5850 = vmul.f32 %v5818, %v5818
        %v5851 = vmul.f32 %v5819, %v5819
        %v5852 = vmul.f32 %v5820, %v5820
        %v5853 = vmul.f32 %v5821, %v5821
        %v5854 = vmul.f32 %v5822, %v5822
        %v5855 = vmul.f32 %v5823, %v5823
        %v5856 = vmul.f32 %v5824, %v5824
        %v5857 = vmul.f32 %v5825, %v5825
        %v5858 = vmul.f32 %v5826, %v5826
        %v5859 = vmul.f32 %v5827, %v5827
        %v5860 = vmul.f32 %v5828, %v5828
        %v5861 = vmul.f32 %v5829, %v5829
        %v5862 = vmul.f32 %v5830, %v5830
        %v5863 = vadd.f32 %v5831, %v5832
        %v5864 = vadd.f32 %v5863, %v5833
        %v5865 = vadd.f32 %v5864, %v5834
        %v5866 = vadd.f32 %v5865, %v5835
        %v5867 = vadd.f32 %v5866, %v5836
        %v5868 = vadd.f32 %v5867, %v5837
        %v5869 = vadd.f32 %v5868, %v5838
        %v5870 = vadd.f32 %v5869, %v5839
        %v5871 = vadd.f32 %v5870, %v5840
        %v5872 = vadd.f32 %v5871, %v5841
        %v5873 = vadd.f32 %v5872, %v5842
        %v5874 = vadd.f32 %v5873, %v5843
        %v5875 = vadd.f32 %v5874, %v5844
        %v5876 = vadd.f32 %v5875, %v5845
        %v5877 = vadd.f32 %v5876, %v5846
        %v5878 = vadd.f32 %v5877, %v5847
        %v5879 = vadd.f32 %v5878, %v5848
        %v5880 = vadd.f32 %v5879, %v5849
        %v5881 = vadd.f32 %v5880, %v5850
        %v5882 = vadd.f32 %v5881, %v5851
        %v5883 = vadd.f32 %v5882, %v5852
        %v5884 = vadd.f32 %v5883, %v5853
        %v5885 = vadd.f32 %v5884, %v5854
        %v5886 = vadd.f32 %v5885, %v5855
        %v5887 = vadd.f32 %v5886, %v5856
        %v5888 = vadd.f32 %v5887, %v5857
        %v5889 = vadd.f32 %v5888, %v5858
        %v5890 = vadd.f32 %v5889, %v5859
        %v5891 = vadd.f32 %v5890, %v5860
        %v5892 = vadd.f32 %v5891, %v5861
        %v5893 = vadd.f32 %v5892, %v5862
        %v5894 = vrot.slane %v5893, 4
        %v5895 = vadd.f32 %v5893, %v5894
        %v5896 = vrot.slane %v5895, 2
        %v5897 = vadd.f32 %v5895, %v5896
        %v5898 = vrot.slane %v5897, 1
        %v5899 = vadd.f32 %v5897, %v5898
        %v5900 = vmul.f32 %v5899, %v5797
        %v5901 = vadd.f32 %v5900, 1e-05
        %v5902 = vrsqrt.pop %v5901
        %v5903 = vmul.f32 %v5902, %v5901
        %v5904 = vmul.f32 %v5903, %v5902
        %v5905 = vmul.f32 0.5, %v5904
        %v5906 = vsub.f32 1.5, %v5905
        %v5907 = vmul.f32 %v5902, %v5906
        %vm5908 = vweird.f32 %v5901
        %vm5909 = vweird.f32 %v5902
        %vm5910 = vmor %vm5908, %vm5909
        %v5911 = vsel %vm5910, %v5902, %v5907
        %v5912 = vmul.f32 %v5799, %v5911
        %v5913 = vmul.f32 %v5800, %v5911
        %v5914 = vmul.f32 %v5801, %v5911
        %v5915 = vmul.f32 %v5802, %v5911
        %v5916 = vmul.f32 %v5803, %v5911
        %v5917 = vmul.f32 %v5804, %v5911
        %v5918 = vmul.f32 %v5805, %v5911
        %v5919 = vmul.f32 %v5806, %v5911
        %v5920 = vmul.f32 %v5807, %v5911
        %v5921 = vmul.f32 %v5808, %v5911
        %v5922 = vmul.f32 %v5809, %v5911
        %v5923 = vmul.f32 %v5810, %v5911
        %v5924 = vmul.f32 %v5811, %v5911
        %v5925 = vmul.f32 %v5812, %v5911
        %v5926 = vmul.f32 %v5813, %v5911
        %v5927 = vmul.f32 %v5814, %v5911
        %v5928 = vmul.f32 %v5815, %v5911
        %v5929 = vmul.f32 %v5816, %v5911
        %v5930 = vmul.f32 %v5817, %v5911
        %v5931 = vmul.f32 %v5818, %v5911
        %v5932 = vmul.f32 %v5819, %v5911
        %v5933 = vmul.f32 %v5820, %v5911
        %v5934 = vmul.f32 %v5821, %v5911
        %v5935 = vmul.f32 %v5822, %v5911
        %v5936 = vmul.f32 %v5823, %v5911
        %v5937 = vmul.f32 %v5824, %v5911
        %v5938 = vmul.f32 %v5825, %v5911
        %v5939 = vmul.f32 %v5826, %v5911
        %v5940 = vmul.f32 %v5827, %v5911
        %v5941 = vmul.f32 %v5828, %v5911
        %v5942 = vmul.f32 %v5829, %v5911
        %v5943 = vmul.f32 %v5830, %v5911
        %v5944 = vmax.f32 %v5912, 0.0
        %v5945 = vmax.f32 %v5913, 0.0
        %v5946 = vmax.f32 %v5914, 0.0
        %v5947 = vmax.f32 %v5915, 0.0
        %v5948 = vmax.f32 %v5916, 0.0
        %v5949 = vmax.f32 %v5917, 0.0
        %v5950 = vmax.f32 %v5918, 0.0
        %v5951 = vmax.f32 %v5919, 0.0
        %v5952 = vmax.f32 %v5920, 0.0
        %v5953 = vmax.f32 %v5921, 0.0
        %v5954 = vmax.f32 %v5922, 0.0
        %v5955 = vmax.f32 %v5923, 0.0
        %v5956 = vmax.f32 %v5924, 0.0
        %v5957 = vmax.f32 %v5925, 0.0
        %v5958 = vmax.f32 %v5926, 0.0
        %v5959 = vmax.f32 %v5927, 0.0
        %v5960 = vmax.f32 %v5928, 0.0
        %v5961 = vmax.f32 %v5929, 0.0
        %v5962 = vmax.f32 %v5930, 0.0
        %v5963 = vmax.f32 %v5931, 0.0
        %v5964 = vmax.f32 %v5932, 0.0
        %v5965 = vmax.f32 %v5933, 0.0
        %v5966 = vmax.f32 %v5934, 0.0
        %v5967 = vmax.f32 %v5935, 0.0
        %v5968 = vmax.f32 %v5936, 0.0
        %v5969 = vmax.f32 %v5937, 0.0
        %v5970 = vmax.f32 %v5938, 0.0
        %v5971 = vmax.f32 %v5939, 0.0
        %v5972 = vmax.f32 %v5940, 0.0
        %v5973 = vmax.f32 %v5941, 0.0
        %v5974 = vmax.f32 %v5942, 0.0
        %v5975 = vmax.f32 %v5943, 0.0
        %v5976 = vpack.c.bf16 %v5944, %v5944
        %v5977 = vpack.c.bf16 %v5945, %v5945
        %v5978 = vpack.c.bf16 %v5946, %v5946
        %v5979 = vpack.c.bf16 %v5947, %v5947
        %v5980 = vpack.c.bf16 %v5948, %v5948
        %v5981 = vpack.c.bf16 %v5949, %v5949
        %v5982 = vpack.c.bf16 %v5950, %v5950
        %v5983 = vpack.c.bf16 %v5951, %v5951
        %v5984 = vpack.c.bf16 %v5952, %v5952
        %v5985 = vpack.c.bf16 %v5953, %v5953
        %v5986 = vpack.c.bf16 %v5954, %v5954
        %v5987 = vpack.c.bf16 %v5955, %v5955
        %v5988 = vpack.c.bf16 %v5956, %v5956
        %v5989 = vpack.c.bf16 %v5957, %v5957
        %v5990 = vpack.c.bf16 %v5958, %v5958
        %v5991 = vpack.c.bf16 %v5959, %v5959
        %v5992 = vpack.c.bf16 %v5960, %v5960
        %v5993 = vpack.c.bf16 %v5961, %v5961
        %v5994 = vpack.c.bf16 %v5962, %v5962
        %v5995 = vpack.c.bf16 %v5963, %v5963
        %v5996 = vpack.c.bf16 %v5964, %v5964
        %v5997 = vpack.c.bf16 %v5965, %v5965
        %v5998 = vpack.c.bf16 %v5966, %v5966
        %v5999 = vpack.c.bf16 %v5967, %v5967
        %v6000 = vpack.c.bf16 %v5968, %v5968
        %v6001 = vpack.c.bf16 %v5969, %v5969
        %v6002 = vpack.c.bf16 %v5970, %v5970
        %v6003 = vpack.c.bf16 %v5971, %v5971
        %v6004 = vpack.c.bf16 %v5972, %v5972
        %v6005 = vpack.c.bf16 %v5973, %v5973
        %v6006 = vpack.c.bf16 %v5974, %v5974
        %v6007 = vpack.c.bf16 %v5975, %v5975
        %v6009 = vshrl.u32 %v5976, 16
        %v6011 = vrot.slane %v6009, 7
        %v6012 = vshll.u32 %v5976, 16
        %v6014 = vor.u32 %v6011, %v6012
        %v6015 = vrot.slane %v6011, 4
        %v6017 = vshrl.u32 %v5977, 16
        %v6019 = vrot.slane %v6017, 7
        %v6020 = vshll.u32 %v5977, 16
        %v6022 = vor.u32 %v6019, %v6020
        %v6023 = vsel %vm235, %v6015, %v6022
        %v6024 = vrot.slane %v6019, 4
        %v6026 = vshrl.u32 %v5978, 16
        %v6028 = vrot.slane %v6026, 7
        %v6029 = vshll.u32 %v5978, 16
        %v6031 = vor.u32 %v6028, %v6029
        %v6032 = vrot.slane %v6028, 4
        %v6034 = vshrl.u32 %v5979, 16
        %v6036 = vrot.slane %v6034, 7
        %v6037 = vshll.u32 %v5979, 16
        %v6039 = vor.u32 %v6036, %v6037
        %v6040 = vsel %vm235, %v6032, %v6039
        %v6041 = vrot.slane %v6036, 4
        %v6043 = vshrl.u32 %v5980, 16
        %v6045 = vrot.slane %v6043, 7
        %v6046 = vshll.u32 %v5980, 16
        %v6048 = vor.u32 %v6045, %v6046
        %v6049 = vrot.slane %v6045, 4
        %v6051 = vshrl.u32 %v5981, 16
        %v6053 = vrot.slane %v6051, 7
        %v6054 = vshll.u32 %v5981, 16
        %v6056 = vor.u32 %v6053, %v6054
        %v6057 = vsel %vm235, %v6049, %v6056
        %v6058 = vrot.slane %v6053, 4
        %v6060 = vshrl.u32 %v5982, 16
        %v6062 = vrot.slane %v6060, 7
        %v6063 = vshll.u32 %v5982, 16
        %v6065 = vor.u32 %v6062, %v6063
        %v6066 = vrot.slane %v6062, 4
        %v6068 = vshrl.u32 %v5983, 16
        %v6070 = vrot.slane %v6068, 7
        %v6071 = vshll.u32 %v5983, 16
        %v6073 = vor.u32 %v6070, %v6071
        %v6074 = vsel %vm235, %v6066, %v6073
        %v6075 = vrot.slane %v6070, 4
        %v6077 = vshrl.u32 %v5984, 16
        %v6079 = vrot.slane %v6077, 7
        %v6080 = vshll.u32 %v5984, 16
        %v6082 = vor.u32 %v6079, %v6080
        %v6083 = vrot.slane %v6079, 4
        %v6085 = vshrl.u32 %v5985, 16
        %v6087 = vrot.slane %v6085, 7
        %v6088 = vshll.u32 %v5985, 16
        %v6090 = vor.u32 %v6087, %v6088
        %v6091 = vsel %vm235, %v6083, %v6090
        %v6092 = vrot.slane %v6087, 4
        %v6094 = vshrl.u32 %v5986, 16
        %v6096 = vrot.slane %v6094, 7
        %v6097 = vshll.u32 %v5986, 16
        %v6099 = vor.u32 %v6096, %v6097
        %v6100 = vrot.slane %v6096, 4
        %v6102 = vshrl.u32 %v5987, 16
        %v6104 = vrot.slane %v6102, 7
        %v6105 = vshll.u32 %v5987, 16
        %v6107 = vor.u32 %v6104, %v6105
        %v6108 = vsel %vm235, %v6100, %v6107
        %v6109 = vrot.slane %v6104, 4
        %v6111 = vshrl.u32 %v5988, 16
        %v6113 = vrot.slane %v6111, 7
        %v6114 = vshll.u32 %v5988, 16
        %v6116 = vor.u32 %v6113, %v6114
        %v6117 = vrot.slane %v6113, 4
        %v6119 = vshrl.u32 %v5989, 16
        %v6121 = vrot.slane %v6119, 7
        %v6122 = vshll.u32 %v5989, 16
        %v6124 = vor.u32 %v6121, %v6122
        %v6125 = vsel %vm235, %v6117, %v6124
        %v6126 = vrot.slane %v6121, 4
        %v6128 = vshrl.u32 %v5990, 16
        %v6130 = vrot.slane %v6128, 7
        %v6131 = vshll.u32 %v5990, 16
        %v6133 = vor.u32 %v6130, %v6131
        %v6134 = vrot.slane %v6130, 4
        %v6136 = vshrl.u32 %v5991, 16
        %v6138 = vrot.slane %v6136, 7
        %v6139 = vshll.u32 %v5991, 16
        %v6141 = vor.u32 %v6138, %v6139
        %v6142 = vsel %vm235, %v6134, %v6141
        %v6143 = vrot.slane %v6138, 4
        %v6145 = vshrl.u32 %v5992, 16
        %v6147 = vrot.slane %v6145, 7
        %v6148 = vshll.u32 %v5992, 16
        %v6150 = vor.u32 %v6147, %v6148
        %v6151 = vrot.slane %v6147, 4
        %v6153 = vshrl.u32 %v5993, 16
        %v6155 = vrot.slane %v6153, 7
        %v6156 = vshll.u32 %v5993, 16
        %v6158 = vor.u32 %v6155, %v6156
        %v6159 = vsel %vm235, %v6151, %v6158
        %v6160 = vrot.slane %v6155, 4
        %v6162 = vshrl.u32 %v5994, 16
        %v6164 = vrot.slane %v6162, 7
        %v6165 = vshll.u32 %v5994, 16
        %v6167 = vor.u32 %v6164, %v6165
        %v6168 = vrot.slane %v6164, 4
        %v6170 = vshrl.u32 %v5995, 16
        %v6172 = vrot.slane %v6170, 7
        %v6173 = vshll.u32 %v5995, 16
        %v6175 = vor.u32 %v6172, %v6173
        %v6176 = vsel %vm235, %v6168, %v6175
        %v6177 = vrot.slane %v6172, 4
        %v6179 = vshrl.u32 %v5996, 16
        %v6181 = vrot.slane %v6179, 7
        %v6182 = vshll.u32 %v5996, 16
        %v6184 = vor.u32 %v6181, %v6182
        %v6185 = vrot.slane %v6181, 4
        %v6187 = vshrl.u32 %v5997, 16
        %v6189 = vrot.slane %v6187, 7
        %v6190 = vshll.u32 %v5997, 16
        %v6192 = vor.u32 %v6189, %v6190
        %v6193 = vsel %vm235, %v6185, %v6192
        %v6194 = vrot.slane %v6189, 4
        %v6196 = vshrl.u32 %v5998, 16
        %v6198 = vrot.slane %v6196, 7
        %v6199 = vshll.u32 %v5998, 16
        %v6201 = vor.u32 %v6198, %v6199
        %v6202 = vrot.slane %v6198, 4
        %v6204 = vshrl.u32 %v5999, 16
        %v6206 = vrot.slane %v6204, 7
        %v6207 = vshll.u32 %v5999, 16
        %v6209 = vor.u32 %v6206, %v6207
        %v6210 = vsel %vm235, %v6202, %v6209
        %v6211 = vrot.slane %v6206, 4
        %v6213 = vshrl.u32 %v6000, 16
        %v6215 = vrot.slane %v6213, 7
        %v6216 = vshll.u32 %v6000, 16
        %v6218 = vor.u32 %v6215, %v6216
        %v6219 = vrot.slane %v6215, 4
        %v6221 = vshrl.u32 %v6001, 16
        %v6223 = vrot.slane %v6221, 7
        %v6224 = vshll.u32 %v6001, 16
        %v6226 = vor.u32 %v6223, %v6224
        %v6227 = vsel %vm235, %v6219, %v6226
        %v6228 = vrot.slane %v6223, 4
        %v6230 = vshrl.u32 %v6002, 16
        %v6232 = vrot.slane %v6230, 7
        %v6233 = vshll.u32 %v6002, 16
        %v6235 = vor.u32 %v6232, %v6233
        %v6236 = vrot.slane %v6232, 4
        %v6238 = vshrl.u32 %v6003, 16
        %v6240 = vrot.slane %v6238, 7
        %v6241 = vshll.u32 %v6003, 16
        %v6243 = vor.u32 %v6240, %v6241
        %v6244 = vsel %vm235, %v6236, %v6243
        %v6245 = vrot.slane %v6240, 4
        %v6247 = vshrl.u32 %v6004, 16
        %v6249 = vrot.slane %v6247, 7
        %v6250 = vshll.u32 %v6004, 16
        %v6252 = vor.u32 %v6249, %v6250
        %v6253 = vrot.slane %v6249, 4
        %v6255 = vshrl.u32 %v6005, 16
        %v6257 = vrot.slane %v6255, 7
        %v6258 = vshll.u32 %v6005, 16
        %v6260 = vor.u32 %v6257, %v6258
        %v6261 = vsel %vm235, %v6253, %v6260
        %v6262 = vrot.slane %v6257, 4
        %v6264 = vshrl.u32 %v6006, 16
        %v6266 = vrot.slane %v6264, 7
        %v6267 = vshll.u32 %v6006, 16
        %v6269 = vor.u32 %v6266, %v6267
        %v6270 = vrot.slane %v6266, 4
        %v6272 = vshrl.u32 %v6007, 16
        %v6274 = vrot.slane %v6272, 7
        %v6275 = vshll.u32 %v6007, 16
        %v6277 = vor.u32 %v6274, %v6275
        %v6278 = vsel %vm235, %v6270, %v6277
        %v6279 = vrot.slane %v6274, 4
        %v6328 = vld [vmem:[%s556] sm:$0xf]
        %v6329 = vsel %vm559, %v6014, %v6328
        %6330 = vst [vmem:[%s556] sm:$0xf] %v6329
        %6331 = vst [vmem:[%s556 + $0x4] sm:$0xf] %v6023
        %v6332 = vld [vmem:[%s556 + $0x8] sm:$0x1]
        %v6333 = vsel %vm565, %v6024, %v6332
        %6334 = vst [vmem:[%s556 + $0x8] sm:$0x1] %v6333
        %v6335 = vld [vmem:[%s556 + $0xc] sm:$0xf]
        %v6336 = vsel %vm559, %v6031, %v6335
        %6337 = vst [vmem:[%s556 + $0xc] sm:$0xf] %v6336
        %6338 = vst [vmem:[%s556 + $0x10] sm:$0xf] %v6040
        %v6339 = vld [vmem:[%s556 + $0x14] sm:$0x1]
        %v6340 = vsel %vm565, %v6041, %v6339
        %6341 = vst [vmem:[%s556 + $0x14] sm:$0x1] %v6340
        %v6342 = vld [vmem:[%s556 + $0x18] sm:$0xf]
        %v6343 = vsel %vm559, %v6048, %v6342
        %6344 = vst [vmem:[%s556 + $0x18] sm:$0xf] %v6343
        %6345 = vst [vmem:[%s556 + $0x1c] sm:$0xf] %v6057
        %v6346 = vld [vmem:[%s556 + $0x20] sm:$0x1]
        %v6347 = vsel %vm565, %v6058, %v6346
        %6348 = vst [vmem:[%s556 + $0x20] sm:$0x1] %v6347
        %v6349 = vld [vmem:[%s556 + $0x24] sm:$0xf]
        %v6350 = vsel %vm559, %v6065, %v6349
        %6351 = vst [vmem:[%s556 + $0x24] sm:$0xf] %v6350
        %6352 = vst [vmem:[%s556 + $0x28] sm:$0xf] %v6074
        %v6353 = vld [vmem:[%s556 + $0x2c] sm:$0x1]
        %v6354 = vsel %vm565, %v6075, %v6353
        %6355 = vst [vmem:[%s556 + $0x2c] sm:$0x1] %v6354
        %v6356 = vld [vmem:[%s556 + $0x30] sm:$0xf]
        %v6357 = vsel %vm559, %v6082, %v6356
        %6358 = vst [vmem:[%s556 + $0x30] sm:$0xf] %v6357
        %6359 = vst [vmem:[%s556 + $0x34] sm:$0xf] %v6091
        %v6360 = vld [vmem:[%s556 + $0x38] sm:$0x1]
        %v6361 = vsel %vm565, %v6092, %v6360
        %6362 = vst [vmem:[%s556 + $0x38] sm:$0x1] %v6361
        %v6363 = vld [vmem:[%s556 + $0x3c] sm:$0xf]
        %v6364 = vsel %vm559, %v6099, %v6363
        %6365 = vst [vmem:[%s556 + $0x3c] sm:$0xf] %v6364
        %6366 = vst [vmem:[%s556 + $0x40] sm:$0xf] %v6108
        %v6367 = vld [vmem:[%s556 + $0x44] sm:$0x1]
        %v6368 = vsel %vm565, %v6109, %v6367
        %6369 = vst [vmem:[%s556 + $0x44] sm:$0x1] %v6368
        %v6370 = vld [vmem:[%s556 + $0x48] sm:$0xf]
        %v6371 = vsel %vm559, %v6116, %v6370
        %6372 = vst [vmem:[%s556 + $0x48] sm:$0xf] %v6371
        %6373 = vst [vmem:[%s556 + $0x4c] sm:$0xf] %v6125
        %v6374 = vld [vmem:[%s556 + $0x50] sm:$0x1]
        %v6375 = vsel %vm565, %v6126, %v6374
        %6376 = vst [vmem:[%s556 + $0x50] sm:$0x1] %v6375
        %v6377 = vld [vmem:[%s556 + $0x54] sm:$0xf]
        %v6378 = vsel %vm559, %v6133, %v6377
        %6379 = vst [vmem:[%s556 + $0x54] sm:$0xf] %v6378
        %6380 = vst [vmem:[%s556 + $0x58] sm:$0xf] %v6142
        %v6381 = vld [vmem:[%s556 + $0x5c] sm:$0x1]
        %v6382 = vsel %vm565, %v6143, %v6381
        %6383 = vst [vmem:[%s556 + $0x5c] sm:$0x1] %v6382
        %v6384 = vld [vmem:[%s556 + $0x60] sm:$0xf]
        %v6385 = vsel %vm559, %v6150, %v6384
        %6386 = vst [vmem:[%s556 + $0x60] sm:$0xf] %v6385
        %6387 = vst [vmem:[%s556 + $0x64] sm:$0xf] %v6159
        %v6388 = vld [vmem:[%s556 + $0x68] sm:$0x1]
        %v6389 = vsel %vm565, %v6160, %v6388
        %6390 = vst [vmem:[%s556 + $0x68] sm:$0x1] %v6389
        %v6391 = vld [vmem:[%s556 + $0x6c] sm:$0xf]
        %v6392 = vsel %vm559, %v6167, %v6391
        %6393 = vst [vmem:[%s556 + $0x6c] sm:$0xf] %v6392
        %6394 = vst [vmem:[%s556 + $0x70] sm:$0xf] %v6176
        %v6395 = vld [vmem:[%s556 + $0x74] sm:$0x1]
        %v6396 = vsel %vm565, %v6177, %v6395
        %6397 = vst [vmem:[%s556 + $0x74] sm:$0x1] %v6396
        %v6398 = vld [vmem:[%s556 + $0x78] sm:$0xf]
        %v6399 = vsel %vm559, %v6184, %v6398
        %6400 = vst [vmem:[%s556 + $0x78] sm:$0xf] %v6399
        %6401 = vst [vmem:[%s556 + $0x7c] sm:$0xf] %v6193
        %v6402 = vld [vmem:[%s556 + $0x80] sm:$0x1]
        %v6403 = vsel %vm565, %v6194, %v6402
        %6404 = vst [vmem:[%s556 + $0x80] sm:$0x1] %v6403
        %v6405 = vld [vmem:[%s556 + $0x84] sm:$0xf]
        %v6406 = vsel %vm559, %v6201, %v6405
        %6407 = vst [vmem:[%s556 + $0x84] sm:$0xf] %v6406
        %6408 = vst [vmem:[%s556 + $0x88] sm:$0xf] %v6210
        %v6409 = vld [vmem:[%s556 + $0x8c] sm:$0x1]
        %v6410 = vsel %vm565, %v6211, %v6409
        %6411 = vst [vmem:[%s556 + $0x8c] sm:$0x1] %v6410
        %v6412 = vld [vmem:[%s556 + $0x90] sm:$0xf]
        %v6413 = vsel %vm559, %v6218, %v6412
        %6414 = vst [vmem:[%s556 + $0x90] sm:$0xf] %v6413
        %6415 = vst [vmem:[%s556 + $0x94] sm:$0xf] %v6227
        %v6416 = vld [vmem:[%s556 + $0x98] sm:$0x1]
        %v6417 = vsel %vm565, %v6228, %v6416
        %6418 = vst [vmem:[%s556 + $0x98] sm:$0x1] %v6417
        %v6419 = vld [vmem:[%s556 + $0x9c] sm:$0xf]
        %v6420 = vsel %vm559, %v6235, %v6419
        %6421 = vst [vmem:[%s556 + $0x9c] sm:$0xf] %v6420
        %6422 = vst [vmem:[%s556 + $0xa0] sm:$0xf] %v6244
        %v6423 = vld [vmem:[%s556 + $0xa4] sm:$0x1]
        %v6424 = vsel %vm565, %v6245, %v6423
        %6425 = vst [vmem:[%s556 + $0xa4] sm:$0x1] %v6424
        %v6426 = vld [vmem:[%s556 + $0xa8] sm:$0xf]
        %v6427 = vsel %vm559, %v6252, %v6426
        %6428 = vst [vmem:[%s556 + $0xa8] sm:$0xf] %v6427
        %6429 = vst [vmem:[%s556 + $0xac] sm:$0xf] %v6261
        %v6430 = vld [vmem:[%s556 + $0xb0] sm:$0x1]
        %v6431 = vsel %vm565, %v6262, %v6430
        %6432 = vst [vmem:[%s556 + $0xb0] sm:$0x1] %v6431
        %v6433 = vld [vmem:[%s556 + $0xb4] sm:$0xf]
        %v6434 = vsel %vm559, %v6269, %v6433
        %6435 = vst [vmem:[%s556 + $0xb4] sm:$0xf] %v6434
        %6436 = vst [vmem:[%s556 + $0xb8] sm:$0xf] %v6278
        %v6437 = vld [vmem:[%s556 + $0xbc] sm:$0x1]
        %v6438 = vsel %vm565, %v6279, %v6437
        %6439 = vst [vmem:[%s556 + $0xbc] sm:$0x1] %v6438
        %v6440 = vld [vmem:[#allocation2] sm:$0xf]
        %v6441 = vsel %vm559, %v6031, %v6440
        %6442 = vst [vmem:[#allocation2] sm:$0xf] %v6441
        %6443 = vst [vmem:[#allocation2 + $0x4] sm:$0xf] %v6040
        %v6444 = vld [vmem:[#allocation2 + $0x8] sm:$0x1]
        %v6445 = vsel %vm565, %v6041, %v6444
        %6446 = vst [vmem:[#allocation2 + $0x8] sm:$0x1] %v6445
        %v6447 = vld [vmem:[%s681] sm:$0xf]
        %v6448 = vsel %vm559, %v6252, %v6447
        %6449 = vst [vmem:[%s681] sm:$0xf] %v6448
        %6450 = vst [vmem:[%s681 + $0x4] sm:$0xf] %v6261
        %v6451 = vld [vmem:[%s681 + $0x8] sm:$0x1]
        %v6452 = vsel %vm565, %v6262, %v6451
        %6453 = vst [vmem:[%s681 + $0x8] sm:$0x1] %v6452
        %v6454 = vld [vmem:[#allocation2] sm:$0x2]
        %v6455 = vld [vmem:[#allocation2 + $0xc] sm:$0x2]
        %v6456 = vld [vmem:[#allocation2 + $0x18] sm:$0x2]
        %v6457 = vld [vmem:[#allocation2 + $0x24] sm:$0x2]
        %v6458 = vld [vmem:[#allocation2 + $0x30] sm:$0x2]
        %v6459 = vld [vmem:[#allocation2 + $0x3c] sm:$0x2]
        %v6460 = vld [vmem:[#allocation2 + $0x48] sm:$0x2]
        %v6461 = vld [vmem:[#allocation2 + $0x54] sm:$0x2]
        %v6462 = vld [vmem:[#allocation2 + $0x60] sm:$0x2]
        %v6463 = vld [vmem:[#allocation2 + $0x6c] sm:$0x2]
        %v6464 = vld [vmem:[#allocation2 + $0x78] sm:$0x2]
        %v6465 = vld [vmem:[#allocation2 + $0x84] sm:$0x2]
        %v6466 = vld [vmem:[#allocation2 + $0x90] sm:$0x2]
        %v6467 = vld [vmem:[#allocation2 + $0x9c] sm:$0x2]
        %v6468 = vld [vmem:[#allocation2 + $0xa8] sm:$0x2]
        %v6469 = vld [vmem:[#allocation2 + $0xb4] sm:$0x2]
        %v6470 = vld [vmem:[#allocation2 + $0xc0] sm:$0x2]
        %v6471 = vld [vmem:[#allocation2 + $0xcc] sm:$0x2]
        %v6490 = vrot.slane %v6454, 5
        %v6491 = vrot.slane %v6490, 4
        %v6492 = vrot.slane %v6455, 5
        %v6493 = vrot.slane %v6492, 4
        %v6494 = vrot.slane %v6456, 5
        %v6495 = vrot.slane %v6494, 4
        %v6496 = vrot.slane %v6457, 5
        %v6497 = vrot.slane %v6496, 4
        %v6498 = vrot.slane %v6458, 5
        %v6499 = vrot.slane %v6498, 4
        %v6500 = vrot.slane %v6459, 5
        %v6501 = vrot.slane %v6500, 4
        %v6502 = vrot.slane %v6460, 5
        %v6503 = vrot.slane %v6502, 4
        %v6504 = vrot.slane %v6461, 5
        %v6505 = vrot.slane %v6504, 4
        %v6506 = vrot.slane %v6462, 5
        %v6507 = vrot.slane %v6506, 4
        %v6508 = vrot.slane %v6463, 5
        %v6509 = vrot.slane %v6508, 4
        %v6510 = vrot.slane %v6464, 5
        %v6511 = vrot.slane %v6510, 4
        %v6512 = vrot.slane %v6465, 5
        %v6513 = vrot.slane %v6512, 4
        %v6514 = vrot.slane %v6466, 5
        %v6515 = vrot.slane %v6514, 4
        %v6516 = vrot.slane %v6467, 5
        %v6517 = vrot.slane %v6516, 4
        %v6518 = vrot.slane %v6468, 5
        %v6519 = vrot.slane %v6518, 4
        %v6520 = vrot.slane %v6469, 5
        %v6521 = vrot.slane %v6520, 4
        %v6522 = vrot.slane %v6470, 5
        %v6523 = vrot.slane %v6522, 4
        %v6524 = vrot.slane %v6471, 5
        %v6525 = vrot.slane %v6524, 4
        %v6544 = vld [vmem:[#allocation2] sm:$0x1]
        %v6545 = vsel %vm565, %v6491, %v6544
        %6546 = vst [vmem:[#allocation2] sm:$0x1] %v6545
        %v6547 = vld [vmem:[#allocation2 + $0xc] sm:$0x1]
        %v6548 = vsel %vm565, %v6493, %v6547
        %6549 = vst [vmem:[#allocation2 + $0xc] sm:$0x1] %v6548
        %v6550 = vld [vmem:[#allocation2 + $0x18] sm:$0x1]
        %v6551 = vsel %vm565, %v6495, %v6550
        %6552 = vst [vmem:[#allocation2 + $0x18] sm:$0x1] %v6551
        %v6553 = vld [vmem:[#allocation2 + $0x24] sm:$0x1]
        %v6554 = vsel %vm565, %v6497, %v6553
        %6555 = vst [vmem:[#allocation2 + $0x24] sm:$0x1] %v6554
        %v6556 = vld [vmem:[#allocation2 + $0x30] sm:$0x1]
        %v6557 = vsel %vm565, %v6499, %v6556
        %6558 = vst [vmem:[#allocation2 + $0x30] sm:$0x1] %v6557
        %v6559 = vld [vmem:[#allocation2 + $0x3c] sm:$0x1]
        %v6560 = vsel %vm565, %v6501, %v6559
        %6561 = vst [vmem:[#allocation2 + $0x3c] sm:$0x1] %v6560
        %v6562 = vld [vmem:[#allocation2 + $0x48] sm:$0x1]
        %v6563 = vsel %vm565, %v6503, %v6562
        %6564 = vst [vmem:[#allocation2 + $0x48] sm:$0x1] %v6563
        %v6565 = vld [vmem:[#allocation2 + $0x54] sm:$0x1]
        %v6566 = vsel %vm565, %v6505, %v6565
        %6567 = vst [vmem:[#allocation2 + $0x54] sm:$0x1] %v6566
        %v6568 = vld [vmem:[#allocation2 + $0x60] sm:$0x1]
        %v6569 = vsel %vm565, %v6507, %v6568
        %6570 = vst [vmem:[#allocation2 + $0x60] sm:$0x1] %v6569
        %v6571 = vld [vmem:[#allocation2 + $0x6c] sm:$0x1]
        %v6572 = vsel %vm565, %v6509, %v6571
        %6573 = vst [vmem:[#allocation2 + $0x6c] sm:$0x1] %v6572
        %v6574 = vld [vmem:[#allocation2 + $0x78] sm:$0x1]
        %v6575 = vsel %vm565, %v6511, %v6574
        %6576 = vst [vmem:[#allocation2 + $0x78] sm:$0x1] %v6575
        %v6577 = vld [vmem:[#allocation2 + $0x84] sm:$0x1]
        %v6578 = vsel %vm565, %v6513, %v6577
        %6579 = vst [vmem:[#allocation2 + $0x84] sm:$0x1] %v6578
        %v6580 = vld [vmem:[#allocation2 + $0x90] sm:$0x1]
        %v6581 = vsel %vm565, %v6515, %v6580
        %6582 = vst [vmem:[#allocation2 + $0x90] sm:$0x1] %v6581
        %v6583 = vld [vmem:[#allocation2 + $0x9c] sm:$0x1]
        %v6584 = vsel %vm565, %v6517, %v6583
        %6585 = vst [vmem:[#allocation2 + $0x9c] sm:$0x1] %v6584
        %v6586 = vld [vmem:[#allocation2 + $0xa8] sm:$0x1]
        %v6587 = vsel %vm565, %v6519, %v6586
        %6588 = vst [vmem:[#allocation2 + $0xa8] sm:$0x1] %v6587
        %v6589 = vld [vmem:[#allocation2 + $0xb4] sm:$0x1]
        %v6590 = vsel %vm565, %v6521, %v6589
        %6591 = vst [vmem:[#allocation2 + $0xb4] sm:$0x1] %v6590
        %v6592 = vld [vmem:[#allocation2 + $0xc0] sm:$0x1]
        %v6593 = vsel %vm565, %v6523, %v6592
        %6594 = vst [vmem:[#allocation2 + $0xc0] sm:$0x1] %v6593
        %v6595 = vld [vmem:[#allocation2 + $0xcc] sm:$0x1]
        %v6596 = vsel %vm565, %v6525, %v6595
        %6597 = vst [vmem:[#allocation2 + $0xcc] sm:$0x1] %v6596
        %v6598 = vld [vmem:[#allocation2 + $0x4] sm:$0x8]
        %v6599 = vld [vmem:[#allocation2 + $0x10] sm:$0x8]
        %v6600 = vld [vmem:[#allocation2 + $0x1c] sm:$0x8]
        %v6601 = vld [vmem:[#allocation2 + $0x28] sm:$0x8]
        %v6602 = vld [vmem:[#allocation2 + $0x34] sm:$0x8]
        %v6603 = vld [vmem:[#allocation2 + $0x40] sm:$0x8]
        %v6604 = vld [vmem:[#allocation2 + $0x4c] sm:$0x8]
        %v6605 = vld [vmem:[#allocation2 + $0x58] sm:$0x8]
        %v6606 = vld [vmem:[#allocation2 + $0x64] sm:$0x8]
        %v6607 = vld [vmem:[#allocation2 + $0x70] sm:$0x8]
        %v6608 = vld [vmem:[#allocation2 + $0x7c] sm:$0x8]
        %v6609 = vld [vmem:[#allocation2 + $0x88] sm:$0x8]
        %v6610 = vld [vmem:[#allocation2 + $0x94] sm:$0x8]
        %v6611 = vld [vmem:[#allocation2 + $0xa0] sm:$0x8]
        %v6612 = vld [vmem:[#allocation2 + $0xac] sm:$0x8]
        %v6613 = vld [vmem:[#allocation2 + $0xb8] sm:$0x8]
        %v6614 = vld [vmem:[#allocation2 + $0xc4] sm:$0x8]
        %v6615 = vld [vmem:[#allocation2 + $0xd0] sm:$0x8]
        %v6634 = vrot.slane %v6598, 7
        %v6635 = vrot.slane %v6634, 4
        %v6636 = vrot.slane %v6599, 7
        %v6637 = vrot.slane %v6636, 4
        %v6638 = vrot.slane %v6600, 7
        %v6639 = vrot.slane %v6638, 4
        %v6640 = vrot.slane %v6601, 7
        %v6641 = vrot.slane %v6640, 4
        %v6642 = vrot.slane %v6602, 7
        %v6643 = vrot.slane %v6642, 4
        %v6644 = vrot.slane %v6603, 7
        %v6645 = vrot.slane %v6644, 4
        %v6646 = vrot.slane %v6604, 7
        %v6647 = vrot.slane %v6646, 4
        %v6648 = vrot.slane %v6605, 7
        %v6649 = vrot.slane %v6648, 4
        %v6650 = vrot.slane %v6606, 7
        %v6651 = vrot.slane %v6650, 4
        %v6652 = vrot.slane %v6607, 7
        %v6653 = vrot.slane %v6652, 4
        %v6654 = vrot.slane %v6608, 7
        %v6655 = vrot.slane %v6654, 4
        %v6656 = vrot.slane %v6609, 7
        %v6657 = vrot.slane %v6656, 4
        %v6658 = vrot.slane %v6610, 7
        %v6659 = vrot.slane %v6658, 4
        %v6660 = vrot.slane %v6611, 7
        %v6661 = vrot.slane %v6660, 4
        %v6662 = vrot.slane %v6612, 7
        %v6663 = vrot.slane %v6662, 4
        %v6664 = vrot.slane %v6613, 7
        %v6665 = vrot.slane %v6664, 4
        %v6666 = vrot.slane %v6614, 7
        %v6667 = vrot.slane %v6666, 4
        %v6668 = vrot.slane %v6615, 7
        %v6669 = vrot.slane %v6668, 4
        %v6688 = vld [vmem:[#allocation2 + $0x8] sm:$0x1]
        %v6689 = vsel %vm923, %v6635, %v6688
        %6690 = vst [vmem:[#allocation2 + $0x8] sm:$0x1] %v6689
        %v6691 = vld [vmem:[#allocation2 + $0x14] sm:$0x1]
        %v6692 = vsel %vm923, %v6637, %v6691
        %6693 = vst [vmem:[#allocation2 + $0x14] sm:$0x1] %v6692
        %v6694 = vld [vmem:[#allocation2 + $0x20] sm:$0x1]
        %v6695 = vsel %vm923, %v6639, %v6694
        %6696 = vst [vmem:[#allocation2 + $0x20] sm:$0x1] %v6695
        %v6697 = vld [vmem:[#allocation2 + $0x2c] sm:$0x1]
        %v6698 = vsel %vm923, %v6641, %v6697
        %6699 = vst [vmem:[#allocation2 + $0x2c] sm:$0x1] %v6698
        %v6700 = vld [vmem:[#allocation2 + $0x38] sm:$0x1]
        %v6701 = vsel %vm923, %v6643, %v6700
        %6702 = vst [vmem:[#allocation2 + $0x38] sm:$0x1] %v6701
        %v6703 = vld [vmem:[#allocation2 + $0x44] sm:$0x1]
        %v6704 = vsel %vm923, %v6645, %v6703
        %6705 = vst [vmem:[#allocation2 + $0x44] sm:$0x1] %v6704
        %v6706 = vld [vmem:[#allocation2 + $0x50] sm:$0x1]
        %v6707 = vsel %vm923, %v6647, %v6706
        %6708 = vst [vmem:[#allocation2 + $0x50] sm:$0x1] %v6707
        %v6709 = vld [vmem:[#allocation2 + $0x5c] sm:$0x1]
        %v6710 = vsel %vm923, %v6649, %v6709
        %6711 = vst [vmem:[#allocation2 + $0x5c] sm:$0x1] %v6710
        %v6712 = vld [vmem:[#allocation2 + $0x68] sm:$0x1]
        %v6713 = vsel %vm923, %v6651, %v6712
        %6714 = vst [vmem:[#allocation2 + $0x68] sm:$0x1] %v6713
        %v6715 = vld [vmem:[#allocation2 + $0x74] sm:$0x1]
        %v6716 = vsel %vm923, %v6653, %v6715
        %6717 = vst [vmem:[#allocation2 + $0x74] sm:$0x1] %v6716
        %v6718 = vld [vmem:[#allocation2 + $0x80] sm:$0x1]
        %v6719 = vsel %vm923, %v6655, %v6718
        %6720 = vst [vmem:[#allocation2 + $0x80] sm:$0x1] %v6719
        %v6721 = vld [vmem:[#allocation2 + $0x8c] sm:$0x1]
        %v6722 = vsel %vm923, %v6657, %v6721
        %6723 = vst [vmem:[#allocation2 + $0x8c] sm:$0x1] %v6722
        %v6724 = vld [vmem:[#allocation2 + $0x98] sm:$0x1]
        %v6725 = vsel %vm923, %v6659, %v6724
        %6726 = vst [vmem:[#allocation2 + $0x98] sm:$0x1] %v6725
        %v6727 = vld [vmem:[#allocation2 + $0xa4] sm:$0x1]
        %v6728 = vsel %vm923, %v6661, %v6727
        %6729 = vst [vmem:[#allocation2 + $0xa4] sm:$0x1] %v6728
        %v6730 = vld [vmem:[#allocation2 + $0xb0] sm:$0x1]
        %v6731 = vsel %vm923, %v6663, %v6730
        %6732 = vst [vmem:[#allocation2 + $0xb0] sm:$0x1] %v6731
        %v6733 = vld [vmem:[#allocation2 + $0xbc] sm:$0x1]
        %v6734 = vsel %vm923, %v6665, %v6733
        %6735 = vst [vmem:[#allocation2 + $0xbc] sm:$0x1] %v6734
        %v6736 = vld [vmem:[#allocation2 + $0xc8] sm:$0x1]
        %v6737 = vsel %vm923, %v6667, %v6736
        %6738 = vst [vmem:[#allocation2 + $0xc8] sm:$0x1] %v6737
        %v6739 = vld [vmem:[#allocation2 + $0xd4] sm:$0x1]
        %v6740 = vsel %vm923, %v6669, %v6739
        %6741 = vst [vmem:[#allocation2 + $0xd4] sm:$0x1] %v6740
        %v6742 = vld [vmem:[#allocation2] sm:$0xf]
        %v6743 = vld [vmem:[#allocation2 + $0x4] sm:$0xf]
        %v6744 = vld [vmem:[#allocation2 + $0xc] sm:$0xf]
        %v6745 = vld [vmem:[#allocation2 + $0x10] sm:$0xf]
        %v6746 = vld [vmem:[#allocation2 + $0x18] sm:$0xf]
        %v6747 = vld [vmem:[#allocation2 + $0x1c] sm:$0xf]
        %v6748 = vld [vmem:[#allocation2 + $0x24] sm:$0xf]
        %v6749 = vld [vmem:[#allocation2 + $0x28] sm:$0xf]
        %v6750 = vld [vmem:[#allocation2 + $0x30] sm:$0xf]
        %v6751 = vld [vmem:[#allocation2 + $0x34] sm:$0xf]
        %v6752 = vld [vmem:[#allocation2 + $0x3c] sm:$0xf]
        %v6753 = vld [vmem:[#allocation2 + $0x40] sm:$0xf]
        %v6754 = vld [vmem:[#allocation2 + $0x48] sm:$0xf]
        %v6755 = vld [vmem:[#allocation2 + $0x4c] sm:$0xf]
        %v6756 = vld [vmem:[#allocation2 + $0x54] sm:$0xf]
        %v6757 = vld [vmem:[#allocation2 + $0x58] sm:$0xf]
        %v6758 = vld [vmem:[#allocation2 + $0x60] sm:$0xf]
        %v6759 = vld [vmem:[#allocation2 + $0x64] sm:$0xf]
        %v6760 = vld [vmem:[#allocation2 + $0x6c] sm:$0xf]
        %v6761 = vld [vmem:[#allocation2 + $0x70] sm:$0xf]
        %v6762 = vld [vmem:[#allocation2 + $0x78] sm:$0xf]
        %v6763 = vld [vmem:[#allocation2 + $0x7c] sm:$0xf]
        %v6764 = vld [vmem:[#allocation2 + $0x84] sm:$0xf]
        %v6765 = vld [vmem:[#allocation2 + $0x88] sm:$0xf]
        %v6766 = vld [vmem:[#allocation2 + $0x90] sm:$0xf]
        %v6767 = vld [vmem:[#allocation2 + $0x94] sm:$0xf]
        %v6768 = vld [vmem:[#allocation2 + $0x9c] sm:$0xf]
        %v6769 = vld [vmem:[#allocation2 + $0xa0] sm:$0xf]
        %v6770 = vld [vmem:[#allocation2 + $0xa8] sm:$0xf]
        %v6771 = vld [vmem:[#allocation2 + $0xac] sm:$0xf]
        %v6772 = vld [vmem:[#allocation2 + $0xb4] sm:$0xf]
        %v6773 = vld [vmem:[#allocation2 + $0xb8] sm:$0xf]
        %6774 = vst [vmem:[#allocation3] sm:$0xf] %v6742
        %6775 = vst [vmem:[#allocation3 + $0x24] sm:$0xf] %v6743
        %6776 = vst [vmem:[#allocation3 + $0x48] sm:$0xf] %v6744
        %6777 = vst [vmem:[#allocation3 + $0x6c] sm:$0xf] %v6745
        %6778 = vst [vmem:[#allocation3 + $0x90] sm:$0xf] %v6746
        %6779 = vst [vmem:[#allocation3 + $0xb4] sm:$0xf] %v6747
        %6780 = vst [vmem:[#allocation3 + $0xd8] sm:$0xf] %v6748
        %6781 = vst [vmem:[#allocation3 + $0xfc] sm:$0xf] %v6749
        %6782 = vst [vmem:[#allocation3 + $0x120] sm:$0xf] %v6750
        %6783 = vst [vmem:[#allocation3 + $0x144] sm:$0xf] %v6751
        %6784 = vst [vmem:[#allocation3 + $0x168] sm:$0xf] %v6752
        %6785 = vst [vmem:[#allocation3 + $0x18c] sm:$0xf] %v6753
        %6786 = vst [vmem:[#allocation3 + $0x1b0] sm:$0xf] %v6754
        %6787 = vst [vmem:[#allocation3 + $0x1d4] sm:$0xf] %v6755
        %6788 = vst [vmem:[#allocation3 + $0x1f8] sm:$0xf] %v6756
        %6789 = vst [vmem:[#allocation3 + $0x21c] sm:$0xf] %v6757
        %6790 = vst [vmem:[#allocation3 + $0x240] sm:$0xf] %v6758
        %6791 = vst [vmem:[#allocation3 + $0x264] sm:$0xf] %v6759
        %6792 = vst [vmem:[#allocation3 + $0x288] sm:$0xf] %v6760
        %6793 = vst [vmem:[#allocation3 + $0x2ac] sm:$0xf] %v6761
        %6794 = vst [vmem:[#allocation3 + $0x2d0] sm:$0xf] %v6762
        %6795 = vst [vmem:[#allocation3 + $0x2f4] sm:$0xf] %v6763
        %6796 = vst [vmem:[#allocation3 + $0x318] sm:$0xf] %v6764
        %6797 = vst [vmem:[#allocation3 + $0x33c] sm:$0xf] %v6765
        %6798 = vst [vmem:[#allocation3 + $0x360] sm:$0xf] %v6766
        %6799 = vst [vmem:[#allocation3 + $0x384] sm:$0xf] %v6767
        %6800 = vst [vmem:[#allocation3 + $0x3a8] sm:$0xf] %v6768
        %6801 = vst [vmem:[#allocation3 + $0x3cc] sm:$0xf] %v6769
        %6802 = vst [vmem:[#allocation3 + $0x3f0] sm:$0xf] %v6770
        %6803 = vst [vmem:[#allocation3 + $0x414] sm:$0xf] %v6771
        %6804 = vst [vmem:[#allocation3 + $0x438] sm:$0xf] %v6772
        %6805 = vst [vmem:[#allocation3 + $0x45c] sm:$0xf] %v6773
        %v6806 = vld [vmem:[#allocation2] sm:$0xf]
        %v6807 = vld [vmem:[#allocation2 + $0x4] sm:$0xf]
        %v6808 = vld [vmem:[#allocation2 + $0x8] sm:$0x1]
        %v6809 = vld [vmem:[#allocation2 + $0xc] sm:$0xf]
        %v6810 = vld [vmem:[#allocation2 + $0x10] sm:$0xf]
        %v6811 = vld [vmem:[#allocation2 + $0x14] sm:$0x1]
        %v6812 = vld [vmem:[#allocation2 + $0x18] sm:$0xf]
        %v6813 = vld [vmem:[#allocation2 + $0x1c] sm:$0xf]
        %v6814 = vld [vmem:[#allocation2 + $0x20] sm:$0x1]
        %v6815 = vld [vmem:[#allocation2 + $0x24] sm:$0xf]
        %v6816 = vld [vmem:[#allocation2 + $0x28] sm:$0xf]
        %v6817 = vld [vmem:[#allocation2 + $0x2c] sm:$0x1]
        %v6818 = vld [vmem:[#allocation2 + $0x30] sm:$0xf]
        %v6819 = vld [vmem:[#allocation2 + $0x34] sm:$0xf]
        %v6820 = vld [vmem:[#allocation2 + $0x38] sm:$0x1]
        %v6821 = vld [vmem:[#allocation2 + $0x3c] sm:$0xf]
        %v6822 = vld [vmem:[#allocation2 + $0x40] sm:$0xf]
        %v6823 = vld [vmem:[#allocation2 + $0x44] sm:$0x1]
        %v6824 = vld [vmem:[#allocation2 + $0x48] sm:$0xf]
        %v6825 = vld [vmem:[#allocation2 + $0x4c] sm:$0xf]
        %v6826 = vld [vmem:[#allocation2 + $0x50] sm:$0x1]
        %v6827 = vld [vmem:[#allocation2 + $0x54] sm:$0xf]
        %v6828 = vld [vmem:[#allocation2 + $0x58] sm:$0xf]
        %v6829 = vld [vmem:[#allocation2 + $0x5c] sm:$0x1]
        %v6830 = vld [vmem:[#allocation2 + $0x60] sm:$0xf]
        %v6831 = vld [vmem:[#allocation2 + $0x64] sm:$0xf]
        %v6832 = vld [vmem:[#allocation2 + $0x68] sm:$0x1]
        %v6833 = vld [vmem:[#allocation2 + $0x6c] sm:$0xf]
        %v6834 = vld [vmem:[#allocation2 + $0x70] sm:$0xf]
        %v6835 = vld [vmem:[#allocation2 + $0x74] sm:$0x1]
        %v6836 = vld [vmem:[#allocation2 + $0x78] sm:$0xf]
        %v6837 = vld [vmem:[#allocation2 + $0x7c] sm:$0xf]
        %v6838 = vld [vmem:[#allocation2 + $0x80] sm:$0x1]
        %v6839 = vld [vmem:[#allocation2 + $0x84] sm:$0xf]
        %v6840 = vld [vmem:[#allocation2 + $0x88] sm:$0xf]
        %v6841 = vld [vmem:[#allocation2 + $0x8c] sm:$0x1]
        %v6842 = vld [vmem:[#allocation2 + $0x90] sm:$0xf]
        %v6843 = vld [vmem:[#allocation2 + $0x94] sm:$0xf]
        %v6844 = vld [vmem:[#allocation2 + $0x98] sm:$0x1]
        %v6845 = vld [vmem:[#allocation2 + $0x9c] sm:$0xf]
        %v6846 = vld [vmem:[#allocation2 + $0xa0] sm:$0xf]
        %v6847 = vld [vmem:[#allocation2 + $0xa4] sm:$0x1]
        %v6848 = vld [vmem:[#allocation2 + $0xa8] sm:$0xf]
        %v6849 = vld [vmem:[#allocation2 + $0xac] sm:$0xf]
        %v6850 = vld [vmem:[#allocation2 + $0xb0] sm:$0x1]
        %v6851 = vld [vmem:[#allocation2 + $0xb4] sm:$0xf]
        %v6852 = vld [vmem:[#allocation2 + $0xb8] sm:$0xf]
        %v6853 = vld [vmem:[#allocation2 + $0xbc] sm:$0x1]
        %v6855 = vshrl.u32 %v6806, 16
        %v6857 = vrot.slane %v6855, 4
        %v6858 = vshll.u32 %v6806, 16
        %v6860 = vrot.slane %v6858, 5
        %v6861 = vor.u32 %v6857, %v6860
        %v6862 = vrot.slane %v6861, 4
        %v6864 = vshll.u32 %v6807, 16
        %v6866 = vrot.slane %v6864, 5
        %v6867 = vsel %vm1092, %v6862, %v6866
        %v6868 = vshrl.u32 %v6807, 16
        %v6870 = vrot.slane %v6868, 4
        %v6871 = vor.u32 %v6870, %v6866
        %v6872 = vrot.slane %v6871, 4
        %v6874 = vshll.u32 %v6808, 16
        %v6876 = vrot.slane %v6874, 5
        %v6877 = vsel %vm1092, %v6872, %v6876
        %v6879 = vshrl.u32 %v6809, 16
        %v6881 = vrot.slane %v6879, 4
        %v6882 = vshll.u32 %v6809, 16
        %v6884 = vrot.slane %v6882, 5
        %v6885 = vor.u32 %v6881, %v6884
        %v6886 = vrot.slane %v6885, 4
        %v6888 = vshll.u32 %v6810, 16
        %v6890 = vrot.slane %v6888, 5
        %v6891 = vsel %vm1092, %v6886, %v6890
        %v6892 = vshrl.u32 %v6810, 16
        %v6894 = vrot.slane %v6892, 4
        %v6895 = vor.u32 %v6894, %v6890
        %v6896 = vrot.slane %v6895, 4
        %v6898 = vshll.u32 %v6811, 16
        %v6900 = vrot.slane %v6898, 5
        %v6901 = vsel %vm1092, %v6896, %v6900
        %v6903 = vshrl.u32 %v6812, 16
        %v6905 = vrot.slane %v6903, 4
        %v6906 = vshll.u32 %v6812, 16
        %v6908 = vrot.slane %v6906, 5
        %v6909 = vor.u32 %v6905, %v6908
        %v6910 = vrot.slane %v6909, 4
        %v6912 = vshll.u32 %v6813, 16
        %v6914 = vrot.slane %v6912, 5
        %v6915 = vsel %vm1092, %v6910, %v6914
        %v6916 = vshrl.u32 %v6813, 16
        %v6918 = vrot.slane %v6916, 4
        %v6919 = vor.u32 %v6918, %v6914
        %v6920 = vrot.slane %v6919, 4
        %v6922 = vshll.u32 %v6814, 16
        %v6924 = vrot.slane %v6922, 5
        %v6925 = vsel %vm1092, %v6920, %v6924
        %v6927 = vshrl.u32 %v6815, 16
        %v6929 = vrot.slane %v6927, 4
        %v6930 = vshll.u32 %v6815, 16
        %v6932 = vrot.slane %v6930, 5
        %v6933 = vor.u32 %v6929, %v6932
        %v6934 = vrot.slane %v6933, 4
        %v6936 = vshll.u32 %v6816, 16
        %v6938 = vrot.slane %v6936, 5
        %v6939 = vsel %vm1092, %v6934, %v6938
        %v6940 = vshrl.u32 %v6816, 16
        %v6942 = vrot.slane %v6940, 4
        %v6943 = vor.u32 %v6942, %v6938
        %v6944 = vrot.slane %v6943, 4
        %v6946 = vshll.u32 %v6817, 16
        %v6948 = vrot.slane %v6946, 5
        %v6949 = vsel %vm1092, %v6944, %v6948
        %v6951 = vshrl.u32 %v6818, 16
        %v6953 = vrot.slane %v6951, 4
        %v6954 = vshll.u32 %v6818, 16
        %v6956 = vrot.slane %v6954, 5
        %v6957 = vor.u32 %v6953, %v6956
        %v6958 = vrot.slane %v6957, 4
        %v6960 = vshll.u32 %v6819, 16
        %v6962 = vrot.slane %v6960, 5
        %v6963 = vsel %vm1092, %v6958, %v6962
        %v6964 = vshrl.u32 %v6819, 16
        %v6966 = vrot.slane %v6964, 4
        %v6967 = vor.u32 %v6966, %v6962
        %v6968 = vrot.slane %v6967, 4
        %v6970 = vshll.u32 %v6820, 16
        %v6972 = vrot.slane %v6970, 5
        %v6973 = vsel %vm1092, %v6968, %v6972
        %v6975 = vshrl.u32 %v6821, 16
        %v6977 = vrot.slane %v6975, 4
        %v6978 = vshll.u32 %v6821, 16
        %v6980 = vrot.slane %v6978, 5
        %v6981 = vor.u32 %v6977, %v6980
        %v6982 = vrot.slane %v6981, 4
        %v6984 = vshll.u32 %v6822, 16
        %v6986 = vrot.slane %v6984, 5
        %v6987 = vsel %vm1092, %v6982, %v6986
        %v6988 = vshrl.u32 %v6822, 16
        %v6990 = vrot.slane %v6988, 4
        %v6991 = vor.u32 %v6990, %v6986
        %v6992 = vrot.slane %v6991, 4
        %v6994 = vshll.u32 %v6823, 16
        %v6996 = vrot.slane %v6994, 5
        %v6997 = vsel %vm1092, %v6992, %v6996
        %v6999 = vshrl.u32 %v6824, 16
        %v7001 = vrot.slane %v6999, 4
        %v7002 = vshll.u32 %v6824, 16
        %v7004 = vrot.slane %v7002, 5
        %v7005 = vor.u32 %v7001, %v7004
        %v7006 = vrot.slane %v7005, 4
        %v7008 = vshll.u32 %v6825, 16
        %v7010 = vrot.slane %v7008, 5
        %v7011 = vsel %vm1092, %v7006, %v7010
        %v7012 = vshrl.u32 %v6825, 16
        %v7014 = vrot.slane %v7012, 4
        %v7015 = vor.u32 %v7014, %v7010
        %v7016 = vrot.slane %v7015, 4
        %v7018 = vshll.u32 %v6826, 16
        %v7020 = vrot.slane %v7018, 5
        %v7021 = vsel %vm1092, %v7016, %v7020
        %v7023 = vshrl.u32 %v6827, 16
        %v7025 = vrot.slane %v7023, 4
        %v7026 = vshll.u32 %v6827, 16
        %v7028 = vrot.slane %v7026, 5
        %v7029 = vor.u32 %v7025, %v7028
        %v7030 = vrot.slane %v7029, 4
        %v7032 = vshll.u32 %v6828, 16
        %v7034 = vrot.slane %v7032, 5
        %v7035 = vsel %vm1092, %v7030, %v7034
        %v7036 = vshrl.u32 %v6828, 16
        %v7038 = vrot.slane %v7036, 4
        %v7039 = vor.u32 %v7038, %v7034
        %v7040 = vrot.slane %v7039, 4
        %v7042 = vshll.u32 %v6829, 16
        %v7044 = vrot.slane %v7042, 5
        %v7045 = vsel %vm1092, %v7040, %v7044
        %v7047 = vshrl.u32 %v6830, 16
        %v7049 = vrot.slane %v7047, 4
        %v7050 = vshll.u32 %v6830, 16
        %v7052 = vrot.slane %v7050, 5
        %v7053 = vor.u32 %v7049, %v7052
        %v7054 = vrot.slane %v7053, 4
        %v7056 = vshll.u32 %v6831, 16
        %v7058 = vrot.slane %v7056, 5
        %v7059 = vsel %vm1092, %v7054, %v7058
        %v7060 = vshrl.u32 %v6831, 16
        %v7062 = vrot.slane %v7060, 4
        %v7063 = vor.u32 %v7062, %v7058
        %v7064 = vrot.slane %v7063, 4
        %v7066 = vshll.u32 %v6832, 16
        %v7068 = vrot.slane %v7066, 5
        %v7069 = vsel %vm1092, %v7064, %v7068
        %v7071 = vshrl.u32 %v6833, 16
        %v7073 = vrot.slane %v7071, 4
        %v7074 = vshll.u32 %v6833, 16
        %v7076 = vrot.slane %v7074, 5
        %v7077 = vor.u32 %v7073, %v7076
        %v7078 = vrot.slane %v7077, 4
        %v7080 = vshll.u32 %v6834, 16
        %v7082 = vrot.slane %v7080, 5
        %v7083 = vsel %vm1092, %v7078, %v7082
        %v7084 = vshrl.u32 %v6834, 16
        %v7086 = vrot.slane %v7084, 4
        %v7087 = vor.u32 %v7086, %v7082
        %v7088 = vrot.slane %v7087, 4
        %v7090 = vshll.u32 %v6835, 16
        %v7092 = vrot.slane %v7090, 5
        %v7093 = vsel %vm1092, %v7088, %v7092
        %v7095 = vshrl.u32 %v6836, 16
        %v7097 = vrot.slane %v7095, 4
        %v7098 = vshll.u32 %v6836, 16
        %v7100 = vrot.slane %v7098, 5
        %v7101 = vor.u32 %v7097, %v7100
        %v7102 = vrot.slane %v7101, 4
        %v7104 = vshll.u32 %v6837, 16
        %v7106 = vrot.slane %v7104, 5
        %v7107 = vsel %vm1092, %v7102, %v7106
        %v7108 = vshrl.u32 %v6837, 16
        %v7110 = vrot.slane %v7108, 4
        %v7111 = vor.u32 %v7110, %v7106
        %v7112 = vrot.slane %v7111, 4
        %v7114 = vshll.u32 %v6838, 16
        %v7116 = vrot.slane %v7114, 5
        %v7117 = vsel %vm1092, %v7112, %v7116
        %v7119 = vshrl.u32 %v6839, 16
        %v7121 = vrot.slane %v7119, 4
        %v7122 = vshll.u32 %v6839, 16
        %v7124 = vrot.slane %v7122, 5
        %v7125 = vor.u32 %v7121, %v7124
        %v7126 = vrot.slane %v7125, 4
        %v7128 = vshll.u32 %v6840, 16
        %v7130 = vrot.slane %v7128, 5
        %v7131 = vsel %vm1092, %v7126, %v7130
        %v7132 = vshrl.u32 %v6840, 16
        %v7134 = vrot.slane %v7132, 4
        %v7135 = vor.u32 %v7134, %v7130
        %v7136 = vrot.slane %v7135, 4
        %v7138 = vshll.u32 %v6841, 16
        %v7140 = vrot.slane %v7138, 5
        %v7141 = vsel %vm1092, %v7136, %v7140
        %v7143 = vshrl.u32 %v6842, 16
        %v7145 = vrot.slane %v7143, 4
        %v7146 = vshll.u32 %v6842, 16
        %v7148 = vrot.slane %v7146, 5
        %v7149 = vor.u32 %v7145, %v7148
        %v7150 = vrot.slane %v7149, 4
        %v7152 = vshll.u32 %v6843, 16
        %v7154 = vrot.slane %v7152, 5
        %v7155 = vsel %vm1092, %v7150, %v7154
        %v7156 = vshrl.u32 %v6843, 16
        %v7158 = vrot.slane %v7156, 4
        %v7159 = vor.u32 %v7158, %v7154
        %v7160 = vrot.slane %v7159, 4
        %v7162 = vshll.u32 %v6844, 16
        %v7164 = vrot.slane %v7162, 5
        %v7165 = vsel %vm1092, %v7160, %v7164
        %v7167 = vshrl.u32 %v6845, 16
        %v7169 = vrot.slane %v7167, 4
        %v7170 = vshll.u32 %v6845, 16
        %v7172 = vrot.slane %v7170, 5
        %v7173 = vor.u32 %v7169, %v7172
        %v7174 = vrot.slane %v7173, 4
        %v7176 = vshll.u32 %v6846, 16
        %v7178 = vrot.slane %v7176, 5
        %v7179 = vsel %vm1092, %v7174, %v7178
        %v7180 = vshrl.u32 %v6846, 16
        %v7182 = vrot.slane %v7180, 4
        %v7183 = vor.u32 %v7182, %v7178
        %v7184 = vrot.slane %v7183, 4
        %v7186 = vshll.u32 %v6847, 16
        %v7188 = vrot.slane %v7186, 5
        %v7189 = vsel %vm1092, %v7184, %v7188
        %v7191 = vshrl.u32 %v6848, 16
        %v7193 = vrot.slane %v7191, 4
        %v7194 = vshll.u32 %v6848, 16
        %v7196 = vrot.slane %v7194, 5
        %v7197 = vor.u32 %v7193, %v7196
        %v7198 = vrot.slane %v7197, 4
        %v7200 = vshll.u32 %v6849, 16
        %v7202 = vrot.slane %v7200, 5
        %v7203 = vsel %vm1092, %v7198, %v7202
        %v7204 = vshrl.u32 %v6849, 16
        %v7206 = vrot.slane %v7204, 4
        %v7207 = vor.u32 %v7206, %v7202
        %v7208 = vrot.slane %v7207, 4
        %v7210 = vshll.u32 %v6850, 16
        %v7212 = vrot.slane %v7210, 5
        %v7213 = vsel %vm1092, %v7208, %v7212
        %v7215 = vshrl.u32 %v6851, 16
        %v7217 = vrot.slane %v7215, 4
        %v7218 = vshll.u32 %v6851, 16
        %v7220 = vrot.slane %v7218, 5
        %v7221 = vor.u32 %v7217, %v7220
        %v7222 = vrot.slane %v7221, 4
        %v7224 = vshll.u32 %v6852, 16
        %v7226 = vrot.slane %v7224, 5
        %v7227 = vsel %vm1092, %v7222, %v7226
        %v7228 = vshrl.u32 %v6852, 16
        %v7230 = vrot.slane %v7228, 4
        %v7231 = vor.u32 %v7230, %v7226
        %v7232 = vrot.slane %v7231, 4
        %v7234 = vshll.u32 %v6853, 16
        %v7236 = vrot.slane %v7234, 5
        %v7237 = vsel %vm1092, %v7232, %v7236
        %7270 = vst [vmem:[#allocation3 + $0x4] sm:$0xf] %v6867
        %7271 = vst [vmem:[#allocation3 + $0x28] sm:$0xf] %v6877
        %7272 = vst [vmem:[#allocation3 + $0x4c] sm:$0xf] %v6891
        %7273 = vst [vmem:[#allocation3 + $0x70] sm:$0xf] %v6901
        %7274 = vst [vmem:[#allocation3 + $0x94] sm:$0xf] %v6915
        %7275 = vst [vmem:[#allocation3 + $0xb8] sm:$0xf] %v6925
        %7276 = vst [vmem:[#allocation3 + $0xdc] sm:$0xf] %v6939
        %7277 = vst [vmem:[#allocation3 + $0x100] sm:$0xf] %v6949
        %7278 = vst [vmem:[#allocation3 + $0x124] sm:$0xf] %v6963
        %7279 = vst [vmem:[#allocation3 + $0x148] sm:$0xf] %v6973
        %7280 = vst [vmem:[#allocation3 + $0x16c] sm:$0xf] %v6987
        %7281 = vst [vmem:[#allocation3 + $0x190] sm:$0xf] %v6997
        %7282 = vst [vmem:[#allocation3 + $0x1b4] sm:$0xf] %v7011
        %7283 = vst [vmem:[#allocation3 + $0x1d8] sm:$0xf] %v7021
        %7284 = vst [vmem:[#allocation3 + $0x1fc] sm:$0xf] %v7035
        %7285 = vst [vmem:[#allocation3 + $0x220] sm:$0xf] %v7045
        %7286 = vst [vmem:[#allocation3 + $0x244] sm:$0xf] %v7059
        %7287 = vst [vmem:[#allocation3 + $0x268] sm:$0xf] %v7069
        %7288 = vst [vmem:[#allocation3 + $0x28c] sm:$0xf] %v7083
        %7289 = vst [vmem:[#allocation3 + $0x2b0] sm:$0xf] %v7093
        %7290 = vst [vmem:[#allocation3 + $0x2d4] sm:$0xf] %v7107
        %7291 = vst [vmem:[#allocation3 + $0x2f8] sm:$0xf] %v7117
        %7292 = vst [vmem:[#allocation3 + $0x31c] sm:$0xf] %v7131
        %7293 = vst [vmem:[#allocation3 + $0x340] sm:$0xf] %v7141
        %7294 = vst [vmem:[#allocation3 + $0x364] sm:$0xf] %v7155
        %7295 = vst [vmem:[#allocation3 + $0x388] sm:$0xf] %v7165
        %7296 = vst [vmem:[#allocation3 + $0x3ac] sm:$0xf] %v7179
        %7297 = vst [vmem:[#allocation3 + $0x3d0] sm:$0xf] %v7189
        %7298 = vst [vmem:[#allocation3 + $0x3f4] sm:$0xf] %v7203
        %7299 = vst [vmem:[#allocation3 + $0x418] sm:$0xf] %v7213
        %7300 = vst [vmem:[#allocation3 + $0x43c] sm:$0xf] %v7227
        %7301 = vst [vmem:[#allocation3 + $0x460] sm:$0xf] %v7237
        %v7302 = vld [vmem:[#allocation2] sm:$0xe]
        %v7303 = vld [vmem:[#allocation2 + $0x4] sm:$0xf]
        %v7304 = vld [vmem:[#allocation2 + $0x8] sm:$0x1]
        %v7305 = vld [vmem:[#allocation2 + $0xc] sm:$0xe]
        %v7306 = vld [vmem:[#allocation2 + $0x10] sm:$0xf]
        %v7307 = vld [vmem:[#allocation2 + $0x14] sm:$0x1]
        %v7308 = vld [vmem:[#allocation2 + $0x18] sm:$0xe]
        %v7309 = vld [vmem:[#allocation2 + $0x1c] sm:$0xf]
        %v7310 = vld [vmem:[#allocation2 + $0x20] sm:$0x1]
        %v7311 = vld [vmem:[#allocation2 + $0x24] sm:$0xe]
        %v7312 = vld [vmem:[#allocation2 + $0x28] sm:$0xf]
        %v7313 = vld [vmem:[#allocation2 + $0x2c] sm:$0x1]
        %v7314 = vld [vmem:[#allocation2 + $0x30] sm:$0xe]
        %v7315 = vld [vmem:[#allocation2 + $0x34] sm:$0xf]
        %v7316 = vld [vmem:[#allocation2 + $0x38] sm:$0x1]
        %v7317 = vld [vmem:[#allocation2 + $0x3c] sm:$0xe]
        %v7318 = vld [vmem:[#allocation2 + $0x40] sm:$0xf]
        %v7319 = vld [vmem:[#allocation2 + $0x44] sm:$0x1]
        %v7320 = vld [vmem:[#allocation2 + $0x48] sm:$0xe]
        %v7321 = vld [vmem:[#allocation2 + $0x4c] sm:$0xf]
        %v7322 = vld [vmem:[#allocation2 + $0x50] sm:$0x1]
        %v7323 = vld [vmem:[#allocation2 + $0x54] sm:$0xe]
        %v7324 = vld [vmem:[#allocation2 + $0x58] sm:$0xf]
        %v7325 = vld [vmem:[#allocation2 + $0x5c] sm:$0x1]
        %v7326 = vld [vmem:[#allocation2 + $0x60] sm:$0xe]
        %v7327 = vld [vmem:[#allocation2 + $0x64] sm:$0xf]
        %v7328 = vld [vmem:[#allocation2 + $0x68] sm:$0x1]
        %v7329 = vld [vmem:[#allocation2 + $0x6c] sm:$0xe]
        %v7330 = vld [vmem:[#allocation2 + $0x70] sm:$0xf]
        %v7331 = vld [vmem:[#allocation2 + $0x74] sm:$0x1]
        %v7332 = vld [vmem:[#allocation2 + $0x78] sm:$0xe]
        %v7333 = vld [vmem:[#allocation2 + $0x7c] sm:$0xf]
        %v7334 = vld [vmem:[#allocation2 + $0x80] sm:$0x1]
        %v7335 = vld [vmem:[#allocation2 + $0x84] sm:$0xe]
        %v7336 = vld [vmem:[#allocation2 + $0x88] sm:$0xf]
        %v7337 = vld [vmem:[#allocation2 + $0x8c] sm:$0x1]
        %v7338 = vld [vmem:[#allocation2 + $0x90] sm:$0xe]
        %v7339 = vld [vmem:[#allocation2 + $0x94] sm:$0xf]
        %v7340 = vld [vmem:[#allocation2 + $0x98] sm:$0x1]
        %v7341 = vld [vmem:[#allocation2 + $0x9c] sm:$0xe]
        %v7342 = vld [vmem:[#allocation2 + $0xa0] sm:$0xf]
        %v7343 = vld [vmem:[#allocation2 + $0xa4] sm:$0x1]
        %v7344 = vld [vmem:[#allocation2 + $0xa8] sm:$0xe]
        %v7345 = vld [vmem:[#allocation2 + $0xac] sm:$0xf]
        %v7346 = vld [vmem:[#allocation2 + $0xb0] sm:$0x1]
        %v7347 = vld [vmem:[#allocation2 + $0xb4] sm:$0xe]
        %v7348 = vld [vmem:[#allocation2 + $0xb8] sm:$0xf]
        %v7349 = vld [vmem:[#allocation2 + $0xbc] sm:$0x1]
        %v7398 = vrot.slane %v7302, 5
        %v7399 = vrot.slane %v7398, 4
        %v7400 = vrot.slane %v7303, 5
        %v7401 = vsel %vm1639, %v7399, %v7400
        %v7402 = vrot.slane %v7400, 4
        %v7403 = vrot.slane %v7304, 5
        %v7404 = vsel %vm1639, %v7402, %v7403
        %v7405 = vrot.slane %v7305, 5
        %v7406 = vrot.slane %v7405, 4
        %v7407 = vrot.slane %v7306, 5
        %v7408 = vsel %vm1639, %v7406, %v7407
        %v7409 = vrot.slane %v7407, 4
        %v7410 = vrot.slane %v7307, 5
        %v7411 = vsel %vm1639, %v7409, %v7410
        %v7412 = vrot.slane %v7308, 5
        %v7413 = vrot.slane %v7412, 4
        %v7414 = vrot.slane %v7309, 5
        %v7415 = vsel %vm1639, %v7413, %v7414
        %v7416 = vrot.slane %v7414, 4
        %v7417 = vrot.slane %v7310, 5
        %v7418 = vsel %vm1639, %v7416, %v7417
        %v7419 = vrot.slane %v7311, 5
        %v7420 = vrot.slane %v7419, 4
        %v7421 = vrot.slane %v7312, 5
        %v7422 = vsel %vm1639, %v7420, %v7421
        %v7423 = vrot.slane %v7421, 4
        %v7424 = vrot.slane %v7313, 5
        %v7425 = vsel %vm1639, %v7423, %v7424
        %v7426 = vrot.slane %v7314, 5
        %v7427 = vrot.slane %v7426, 4
        %v7428 = vrot.slane %v7315, 5
        %v7429 = vsel %vm1639, %v7427, %v7428
        %v7430 = vrot.slane %v7428, 4
        %v7431 = vrot.slane %v7316, 5
        %v7432 = vsel %vm1639, %v7430, %v7431
        %v7433 = vrot.slane %v7317, 5
        %v7434 = vrot.slane %v7433, 4
        %v7435 = vrot.slane %v7318, 5
        %v7436 = vsel %vm1639, %v7434, %v7435
        %v7437 = vrot.slane %v7435, 4
        %v7438 = vrot.slane %v7319, 5
        %v7439 = vsel %vm1639, %v7437, %v7438
        %v7440 = vrot.slane %v7320, 5
        %v7441 = vrot.slane %v7440, 4
        %v7442 = vrot.slane %v7321, 5
        %v7443 = vsel %vm1639, %v7441, %v7442
        %v7444 = vrot.slane %v7442, 4
        %v7445 = vrot.slane %v7322, 5
        %v7446 = vsel %vm1639, %v7444, %v7445
        %v7447 = vrot.slane %v7323, 5
        %v7448 = vrot.slane %v7447, 4
        %v7449 = vrot.slane %v7324, 5
        %v7450 = vsel %vm1639, %v7448, %v7449
        %v7451 = vrot.slane %v7449, 4
        %v7452 = vrot.slane %v7325, 5
        %v7453 = vsel %vm1639, %v7451, %v7452
        %v7454 = vrot.slane %v7326, 5
        %v7455 = vrot.slane %v7454, 4
        %v7456 = vrot.slane %v7327, 5
        %v7457 = vsel %vm1639, %v7455, %v7456
        %v7458 = vrot.slane %v7456, 4
        %v7459 = vrot.slane %v7328, 5
        %v7460 = vsel %vm1639, %v7458, %v7459
        %v7461 = vrot.slane %v7329, 5
        %v7462 = vrot.slane %v7461, 4
        %v7463 = vrot.slane %v7330, 5
        %v7464 = vsel %vm1639, %v7462, %v7463
        %v7465 = vrot.slane %v7463, 4
        %v7466 = vrot.slane %v7331, 5
        %v7467 = vsel %vm1639, %v7465, %v7466
        %v7468 = vrot.slane %v7332, 5
        %v7469 = vrot.slane %v7468, 4
        %v7470 = vrot.slane %v7333, 5
        %v7471 = vsel %vm1639, %v7469, %v7470
        %v7472 = vrot.slane %v7470, 4
        %v7473 = vrot.slane %v7334, 5
        %v7474 = vsel %vm1639, %v7472, %v7473
        %v7475 = vrot.slane %v7335, 5
        %v7476 = vrot.slane %v7475, 4
        %v7477 = vrot.slane %v7336, 5
        %v7478 = vsel %vm1639, %v7476, %v7477
        %v7479 = vrot.slane %v7477, 4
        %v7480 = vrot.slane %v7337, 5
        %v7481 = vsel %vm1639, %v7479, %v7480
        %v7482 = vrot.slane %v7338, 5
        %v7483 = vrot.slane %v7482, 4
        %v7484 = vrot.slane %v7339, 5
        %v7485 = vsel %vm1639, %v7483, %v7484
        %v7486 = vrot.slane %v7484, 4
        %v7487 = vrot.slane %v7340, 5
        %v7488 = vsel %vm1639, %v7486, %v7487
        %v7489 = vrot.slane %v7341, 5
        %v7490 = vrot.slane %v7489, 4
        %v7491 = vrot.slane %v7342, 5
        %v7492 = vsel %vm1639, %v7490, %v7491
        %v7493 = vrot.slane %v7491, 4
        %v7494 = vrot.slane %v7343, 5
        %v7495 = vsel %vm1639, %v7493, %v7494
        %v7496 = vrot.slane %v7344, 5
        %v7497 = vrot.slane %v7496, 4
        %v7498 = vrot.slane %v7345, 5
        %v7499 = vsel %vm1639, %v7497, %v7498
        %v7500 = vrot.slane %v7498, 4
        %v7501 = vrot.slane %v7346, 5
        %v7502 = vsel %vm1639, %v7500, %v7501
        %v7503 = vrot.slane %v7347, 5
        %v7504 = vrot.slane %v7503, 4
        %v7505 = vrot.slane %v7348, 5
        %v7506 = vsel %vm1639, %v7504, %v7505
        %v7507 = vrot.slane %v7505, 4
        %v7508 = vrot.slane %v7349, 5
        %v7509 = vsel %vm1639, %v7507, %v7508
        %7542 = vst [vmem:[#allocation3 + $0x8] sm:$0xf] %v7401
        %7543 = vst [vmem:[#allocation3 + $0x2c] sm:$0xf] %v7404
        %7544 = vst [vmem:[#allocation3 + $0x50] sm:$0xf] %v7408
        %7545 = vst [vmem:[#allocation3 + $0x74] sm:$0xf] %v7411
        %7546 = vst [vmem:[#allocation3 + $0x98] sm:$0xf] %v7415
        %7547 = vst [vmem:[#allocation3 + $0xbc] sm:$0xf] %v7418
        %7548 = vst [vmem:[#allocation3 + $0xe0] sm:$0xf] %v7422
        %7549 = vst [vmem:[#allocation3 + $0x104] sm:$0xf] %v7425
        %7550 = vst [vmem:[#allocation3 + $0x128] sm:$0xf] %v7429
        %7551 = vst [vmem:[#allocation3 + $0x14c] sm:$0xf] %v7432
        %7552 = vst [vmem:[#allocation3 + $0x170] sm:$0xf] %v7436
        %7553 = vst [vmem:[#allocation3 + $0x194] sm:$0xf] %v7439
        %7554 = vst [vmem:[#allocation3 + $0x1b8] sm:$0xf] %v7443
        %7555 = vst [vmem:[#allocation3 + $0x1dc] sm:$0xf] %v7446
        %7556 = vst [vmem:[#allocation3 + $0x200] sm:$0xf] %v7450
        %7557 = vst [vmem:[#allocation3 + $0x224] sm:$0xf] %v7453
        %7558 = vst [vmem:[#allocation3 + $0x248] sm:$0xf] %v7457
        %7559 = vst [vmem:[#allocation3 + $0x26c] sm:$0xf] %v7460
        %7560 = vst [vmem:[#allocation3 + $0x290] sm:$0xf] %v7464
        %7561 = vst [vmem:[#allocation3 + $0x2b4] sm:$0xf] %v7467
        %7562 = vst [vmem:[#allocation3 + $0x2d8] sm:$0xf] %v7471
        %7563 = vst [vmem:[#allocation3 + $0x2fc] sm:$0xf] %v7474
        %7564 = vst [vmem:[#allocation3 + $0x320] sm:$0xf] %v7478
        %7565 = vst [vmem:[#allocation3 + $0x344] sm:$0xf] %v7481
        %7566 = vst [vmem:[#allocation3 + $0x368] sm:$0xf] %v7485
        %7567 = vst [vmem:[#allocation3 + $0x38c] sm:$0xf] %v7488
        %7568 = vst [vmem:[#allocation3 + $0x3b0] sm:$0xf] %v7492
        %7569 = vst [vmem:[#allocation3 + $0x3d4] sm:$0xf] %v7495
        %7570 = vst [vmem:[#allocation3 + $0x3f8] sm:$0xf] %v7499
        %7571 = vst [vmem:[#allocation3 + $0x41c] sm:$0xf] %v7502
        %7572 = vst [vmem:[#allocation3 + $0x440] sm:$0xf] %v7506
        %7573 = vst [vmem:[#allocation3 + $0x464] sm:$0xf] %v7509
        %v7574 = vld [vmem:[%s556] sm:$0xf]
        %v7575 = vld [vmem:[%s556 + $0x4] sm:$0xf]
        %v7576 = vld [vmem:[%s556 + $0xc] sm:$0xf]
        %v7577 = vld [vmem:[%s556 + $0x10] sm:$0xf]
        %v7578 = vld [vmem:[%s556 + $0x18] sm:$0xf]
        %v7579 = vld [vmem:[%s556 + $0x1c] sm:$0xf]
        %v7580 = vld [vmem:[%s556 + $0x24] sm:$0xf]
        %v7581 = vld [vmem:[%s556 + $0x28] sm:$0xf]
        %v7582 = vld [vmem:[%s556 + $0x30] sm:$0xf]
        %v7583 = vld [vmem:[%s556 + $0x34] sm:$0xf]
        %v7584 = vld [vmem:[%s556 + $0x3c] sm:$0xf]
        %v7585 = vld [vmem:[%s556 + $0x40] sm:$0xf]
        %v7586 = vld [vmem:[%s556 + $0x48] sm:$0xf]
        %v7587 = vld [vmem:[%s556 + $0x4c] sm:$0xf]
        %v7588 = vld [vmem:[%s556 + $0x54] sm:$0xf]
        %v7589 = vld [vmem:[%s556 + $0x58] sm:$0xf]
        %v7590 = vld [vmem:[%s556 + $0x60] sm:$0xf]
        %v7591 = vld [vmem:[%s556 + $0x64] sm:$0xf]
        %v7592 = vld [vmem:[%s556 + $0x6c] sm:$0xf]
        %v7593 = vld [vmem:[%s556 + $0x70] sm:$0xf]
        %v7594 = vld [vmem:[%s556 + $0x78] sm:$0xf]
        %v7595 = vld [vmem:[%s556 + $0x7c] sm:$0xf]
        %v7596 = vld [vmem:[%s556 + $0x84] sm:$0xf]
        %v7597 = vld [vmem:[%s556 + $0x88] sm:$0xf]
        %v7598 = vld [vmem:[%s556 + $0x90] sm:$0xf]
        %v7599 = vld [vmem:[%s556 + $0x94] sm:$0xf]
        %v7600 = vld [vmem:[%s556 + $0x9c] sm:$0xf]
        %v7601 = vld [vmem:[%s556 + $0xa0] sm:$0xf]
        %v7602 = vld [vmem:[%s556 + $0xa8] sm:$0xf]
        %v7603 = vld [vmem:[%s556 + $0xac] sm:$0xf]
        %v7604 = vld [vmem:[%s556 + $0xb4] sm:$0xf]
        %v7605 = vld [vmem:[%s556 + $0xb8] sm:$0xf]
        %7606 = vst [vmem:[#allocation3 + $0xc] sm:$0xf] %v7574
        %7607 = vst [vmem:[#allocation3 + $0x30] sm:$0xf] %v7575
        %7608 = vst [vmem:[#allocation3 + $0x54] sm:$0xf] %v7576
        %7609 = vst [vmem:[#allocation3 + $0x78] sm:$0xf] %v7577
        %7610 = vst [vmem:[#allocation3 + $0x9c] sm:$0xf] %v7578
        %7611 = vst [vmem:[#allocation3 + $0xc0] sm:$0xf] %v7579
        %7612 = vst [vmem:[#allocation3 + $0xe4] sm:$0xf] %v7580
        %7613 = vst [vmem:[#allocation3 + $0x108] sm:$0xf] %v7581
        %7614 = vst [vmem:[#allocation3 + $0x12c] sm:$0xf] %v7582
        %7615 = vst [vmem:[#allocation3 + $0x150] sm:$0xf] %v7583
        %7616 = vst [vmem:[#allocation3 + $0x174] sm:$0xf] %v7584
        %7617 = vst [vmem:[#allocation3 + $0x198] sm:$0xf] %v7585
        %7618 = vst [vmem:[#allocation3 + $0x1bc] sm:$0xf] %v7586
        %7619 = vst [vmem:[#allocation3 + $0x1e0] sm:$0xf] %v7587
        %7620 = vst [vmem:[#allocation3 + $0x204] sm:$0xf] %v7588
        %7621 = vst [vmem:[#allocation3 + $0x228] sm:$0xf] %v7589
        %7622 = vst [vmem:[#allocation3 + $0x24c] sm:$0xf] %v7590
        %7623 = vst [vmem:[#allocation3 + $0x270] sm:$0xf] %v7591
        %7624 = vst [vmem:[#allocation3 + $0x294] sm:$0xf] %v7592
        %7625 = vst [vmem:[#allocation3 + $0x2b8] sm:$0xf] %v7593
        %7626 = vst [vmem:[#allocation3 + $0x2dc] sm:$0xf] %v7594
        %7627 = vst [vmem:[#allocation3 + $0x300] sm:$0xf] %v7595
        %7628 = vst [vmem:[#allocation3 + $0x324] sm:$0xf] %v7596
        %7629 = vst [vmem:[#allocation3 + $0x348] sm:$0xf] %v7597
        %7630 = vst [vmem:[#allocation3 + $0x36c] sm:$0xf] %v7598
        %7631 = vst [vmem:[#allocation3 + $0x390] sm:$0xf] %v7599
        %7632 = vst [vmem:[#allocation3 + $0x3b4] sm:$0xf] %v7600
        %7633 = vst [vmem:[#allocation3 + $0x3d8] sm:$0xf] %v7601
        %7634 = vst [vmem:[#allocation3 + $0x3fc] sm:$0xf] %v7602
        %7635 = vst [vmem:[#allocation3 + $0x420] sm:$0xf] %v7603
        %7636 = vst [vmem:[#allocation3 + $0x444] sm:$0xf] %v7604
        %7637 = vst [vmem:[#allocation3 + $0x468] sm:$0xf] %v7605
        %v7638 = vld [vmem:[%s556] sm:$0xf]
        %v7639 = vld [vmem:[%s556 + $0x4] sm:$0xf]
        %v7640 = vld [vmem:[%s556 + $0x8] sm:$0x1]
        %v7641 = vld [vmem:[%s556 + $0xc] sm:$0xf]
        %v7642 = vld [vmem:[%s556 + $0x10] sm:$0xf]
        %v7643 = vld [vmem:[%s556 + $0x14] sm:$0x1]
        %v7644 = vld [vmem:[%s556 + $0x18] sm:$0xf]
        %v7645 = vld [vmem:[%s556 + $0x1c] sm:$0xf]
        %v7646 = vld [vmem:[%s556 + $0x20] sm:$0x1]
        %v7647 = vld [vmem:[%s556 + $0x24] sm:$0xf]
        %v7648 = vld [vmem:[%s556 + $0x28] sm:$0xf]
        %v7649 = vld [vmem:[%s556 + $0x2c] sm:$0x1]
        %v7650 = vld [vmem:[%s556 + $0x30] sm:$0xf]
        %v7651 = vld [vmem:[%s556 + $0x34] sm:$0xf]
        %v7652 = vld [vmem:[%s556 + $0x38] sm:$0x1]
        %v7653 = vld [vmem:[%s556 + $0x3c] sm:$0xf]
        %v7654 = vld [vmem:[%s556 + $0x40] sm:$0xf]
        %v7655 = vld [vmem:[%s556 + $0x44] sm:$0x1]
        %v7656 = vld [vmem:[%s556 + $0x48] sm:$0xf]
        %v7657 = vld [vmem:[%s556 + $0x4c] sm:$0xf]
        %v7658 = vld [vmem:[%s556 + $0x50] sm:$0x1]
        %v7659 = vld [vmem:[%s556 + $0x54] sm:$0xf]
        %v7660 = vld [vmem:[%s556 + $0x58] sm:$0xf]
        %v7661 = vld [vmem:[%s556 + $0x5c] sm:$0x1]
        %v7662 = vld [vmem:[%s556 + $0x60] sm:$0xf]
        %v7663 = vld [vmem:[%s556 + $0x64] sm:$0xf]
        %v7664 = vld [vmem:[%s556 + $0x68] sm:$0x1]
        %v7665 = vld [vmem:[%s556 + $0x6c] sm:$0xf]
        %v7666 = vld [vmem:[%s556 + $0x70] sm:$0xf]
        %v7667 = vld [vmem:[%s556 + $0x74] sm:$0x1]
        %v7668 = vld [vmem:[%s556 + $0x78] sm:$0xf]
        %v7669 = vld [vmem:[%s556 + $0x7c] sm:$0xf]
        %v7670 = vld [vmem:[%s556 + $0x80] sm:$0x1]
        %v7671 = vld [vmem:[%s556 + $0x84] sm:$0xf]
        %v7672 = vld [vmem:[%s556 + $0x88] sm:$0xf]
        %v7673 = vld [vmem:[%s556 + $0x8c] sm:$0x1]
        %v7674 = vld [vmem:[%s556 + $0x90] sm:$0xf]
        %v7675 = vld [vmem:[%s556 + $0x94] sm:$0xf]
        %v7676 = vld [vmem:[%s556 + $0x98] sm:$0x1]
        %v7677 = vld [vmem:[%s556 + $0x9c] sm:$0xf]
        %v7678 = vld [vmem:[%s556 + $0xa0] sm:$0xf]
        %v7679 = vld [vmem:[%s556 + $0xa4] sm:$0x1]
        %v7680 = vld [vmem:[%s556 + $0xa8] sm:$0xf]
        %v7681 = vld [vmem:[%s556 + $0xac] sm:$0xf]
        %v7682 = vld [vmem:[%s556 + $0xb0] sm:$0x1]
        %v7683 = vld [vmem:[%s556 + $0xb4] sm:$0xf]
        %v7684 = vld [vmem:[%s556 + $0xb8] sm:$0xf]
        %v7685 = vld [vmem:[%s556 + $0xbc] sm:$0x1]
        %v7687 = vshrl.u32 %v7638, 16
        %v7689 = vrot.slane %v7687, 4
        %v7690 = vshll.u32 %v7638, 16
        %v7692 = vrot.slane %v7690, 5
        %v7693 = vor.u32 %v7689, %v7692
        %v7694 = vrot.slane %v7693, 4
        %v7696 = vshll.u32 %v7639, 16
        %v7698 = vrot.slane %v7696, 5
        %v7699 = vsel %vm1092, %v7694, %v7698
        %v7700 = vshrl.u32 %v7639, 16
        %v7702 = vrot.slane %v7700, 4
        %v7703 = vor.u32 %v7702, %v7698
        %v7704 = vrot.slane %v7703, 4
        %v7706 = vshll.u32 %v7640, 16
        %v7708 = vrot.slane %v7706, 5
        %v7709 = vsel %vm1092, %v7704, %v7708
        %v7711 = vshrl.u32 %v7641, 16
        %v7713 = vrot.slane %v7711, 4
        %v7714 = vshll.u32 %v7641, 16
        %v7716 = vrot.slane %v7714, 5
        %v7717 = vor.u32 %v7713, %v7716
        %v7718 = vrot.slane %v7717, 4
        %v7720 = vshll.u32 %v7642, 16
        %v7722 = vrot.slane %v7720, 5
        %v7723 = vsel %vm1092, %v7718, %v7722
        %v7724 = vshrl.u32 %v7642, 16
        %v7726 = vrot.slane %v7724, 4
        %v7727 = vor.u32 %v7726, %v7722
        %v7728 = vrot.slane %v7727, 4
        %v7730 = vshll.u32 %v7643, 16
        %v7732 = vrot.slane %v7730, 5
        %v7733 = vsel %vm1092, %v7728, %v7732
        %v7735 = vshrl.u32 %v7644, 16
        %v7737 = vrot.slane %v7735, 4
        %v7738 = vshll.u32 %v7644, 16
        %v7740 = vrot.slane %v7738, 5
        %v7741 = vor.u32 %v7737, %v7740
        %v7742 = vrot.slane %v7741, 4
        %v7744 = vshll.u32 %v7645, 16
        %v7746 = vrot.slane %v7744, 5
        %v7747 = vsel %vm1092, %v7742, %v7746
        %v7748 = vshrl.u32 %v7645, 16
        %v7750 = vrot.slane %v7748, 4
        %v7751 = vor.u32 %v7750, %v7746
        %v7752 = vrot.slane %v7751, 4
        %v7754 = vshll.u32 %v7646, 16
        %v7756 = vrot.slane %v7754, 5
        %v7757 = vsel %vm1092, %v7752, %v7756
        %v7759 = vshrl.u32 %v7647, 16
        %v7761 = vrot.slane %v7759, 4
        %v7762 = vshll.u32 %v7647, 16
        %v7764 = vrot.slane %v7762, 5
        %v7765 = vor.u32 %v7761, %v7764
        %v7766 = vrot.slane %v7765, 4
        %v7768 = vshll.u32 %v7648, 16
        %v7770 = vrot.slane %v7768, 5
        %v7771 = vsel %vm1092, %v7766, %v7770
        %v7772 = vshrl.u32 %v7648, 16
        %v7774 = vrot.slane %v7772, 4
        %v7775 = vor.u32 %v7774, %v7770
        %v7776 = vrot.slane %v7775, 4
        %v7778 = vshll.u32 %v7649, 16
        %v7780 = vrot.slane %v7778, 5
        %v7781 = vsel %vm1092, %v7776, %v7780
        %v7783 = vshrl.u32 %v7650, 16
        %v7785 = vrot.slane %v7783, 4
        %v7786 = vshll.u32 %v7650, 16
        %v7788 = vrot.slane %v7786, 5
        %v7789 = vor.u32 %v7785, %v7788
        %v7790 = vrot.slane %v7789, 4
        %v7792 = vshll.u32 %v7651, 16
        %v7794 = vrot.slane %v7792, 5
        %v7795 = vsel %vm1092, %v7790, %v7794
        %v7796 = vshrl.u32 %v7651, 16
        %v7798 = vrot.slane %v7796, 4
        %v7799 = vor.u32 %v7798, %v7794
        %v7800 = vrot.slane %v7799, 4
        %v7802 = vshll.u32 %v7652, 16
        %v7804 = vrot.slane %v7802, 5
        %v7805 = vsel %vm1092, %v7800, %v7804
        %v7807 = vshrl.u32 %v7653, 16
        %v7809 = vrot.slane %v7807, 4
        %v7810 = vshll.u32 %v7653, 16
        %v7812 = vrot.slane %v7810, 5
        %v7813 = vor.u32 %v7809, %v7812
        %v7814 = vrot.slane %v7813, 4
        %v7816 = vshll.u32 %v7654, 16
        %v7818 = vrot.slane %v7816, 5
        %v7819 = vsel %vm1092, %v7814, %v7818
        %v7820 = vshrl.u32 %v7654, 16
        %v7822 = vrot.slane %v7820, 4
        %v7823 = vor.u32 %v7822, %v7818
        %v7824 = vrot.slane %v7823, 4
        %v7826 = vshll.u32 %v7655, 16
        %v7828 = vrot.slane %v7826, 5
        %v7829 = vsel %vm1092, %v7824, %v7828
        %v7831 = vshrl.u32 %v7656, 16
        %v7833 = vrot.slane %v7831, 4
        %v7834 = vshll.u32 %v7656, 16
        %v7836 = vrot.slane %v7834, 5
        %v7837 = vor.u32 %v7833, %v7836
        %v7838 = vrot.slane %v7837, 4
        %v7840 = vshll.u32 %v7657, 16
        %v7842 = vrot.slane %v7840, 5
        %v7843 = vsel %vm1092, %v7838, %v7842
        %v7844 = vshrl.u32 %v7657, 16
        %v7846 = vrot.slane %v7844, 4
        %v7847 = vor.u32 %v7846, %v7842
        %v7848 = vrot.slane %v7847, 4
        %v7850 = vshll.u32 %v7658, 16
        %v7852 = vrot.slane %v7850, 5
        %v7853 = vsel %vm1092, %v7848, %v7852
        %v7855 = vshrl.u32 %v7659, 16
        %v7857 = vrot.slane %v7855, 4
        %v7858 = vshll.u32 %v7659, 16
        %v7860 = vrot.slane %v7858, 5
        %v7861 = vor.u32 %v7857, %v7860
        %v7862 = vrot.slane %v7861, 4
        %v7864 = vshll.u32 %v7660, 16
        %v7866 = vrot.slane %v7864, 5
        %v7867 = vsel %vm1092, %v7862, %v7866
        %v7868 = vshrl.u32 %v7660, 16
        %v7870 = vrot.slane %v7868, 4
        %v7871 = vor.u32 %v7870, %v7866
        %v7872 = vrot.slane %v7871, 4
        %v7874 = vshll.u32 %v7661, 16
        %v7876 = vrot.slane %v7874, 5
        %v7877 = vsel %vm1092, %v7872, %v7876
        %v7879 = vshrl.u32 %v7662, 16
        %v7881 = vrot.slane %v7879, 4
        %v7882 = vshll.u32 %v7662, 16
        %v7884 = vrot.slane %v7882, 5
        %v7885 = vor.u32 %v7881, %v7884
        %v7886 = vrot.slane %v7885, 4
        %v7888 = vshll.u32 %v7663, 16
        %v7890 = vrot.slane %v7888, 5
        %v7891 = vsel %vm1092, %v7886, %v7890
        %v7892 = vshrl.u32 %v7663, 16
        %v7894 = vrot.slane %v7892, 4
        %v7895 = vor.u32 %v7894, %v7890
        %v7896 = vrot.slane %v7895, 4
        %v7898 = vshll.u32 %v7664, 16
        %v7900 = vrot.slane %v7898, 5
        %v7901 = vsel %vm1092, %v7896, %v7900
        %v7903 = vshrl.u32 %v7665, 16
        %v7905 = vrot.slane %v7903, 4
        %v7906 = vshll.u32 %v7665, 16
        %v7908 = vrot.slane %v7906, 5
        %v7909 = vor.u32 %v7905, %v7908
        %v7910 = vrot.slane %v7909, 4
        %v7912 = vshll.u32 %v7666, 16
        %v7914 = vrot.slane %v7912, 5
        %v7915 = vsel %vm1092, %v7910, %v7914
        %v7916 = vshrl.u32 %v7666, 16
        %v7918 = vrot.slane %v7916, 4
        %v7919 = vor.u32 %v7918, %v7914
        %v7920 = vrot.slane %v7919, 4
        %v7922 = vshll.u32 %v7667, 16
        %v7924 = vrot.slane %v7922, 5
        %v7925 = vsel %vm1092, %v7920, %v7924
        %v7927 = vshrl.u32 %v7668, 16
        %v7929 = vrot.slane %v7927, 4
        %v7930 = vshll.u32 %v7668, 16
        %v7932 = vrot.slane %v7930, 5
        %v7933 = vor.u32 %v7929, %v7932
        %v7934 = vrot.slane %v7933, 4
        %v7936 = vshll.u32 %v7669, 16
        %v7938 = vrot.slane %v7936, 5
        %v7939 = vsel %vm1092, %v7934, %v7938
        %v7940 = vshrl.u32 %v7669, 16
        %v7942 = vrot.slane %v7940, 4
        %v7943 = vor.u32 %v7942, %v7938
        %v7944 = vrot.slane %v7943, 4
        %v7946 = vshll.u32 %v7670, 16
        %v7948 = vrot.slane %v7946, 5
        %v7949 = vsel %vm1092, %v7944, %v7948
        %v7951 = vshrl.u32 %v7671, 16
        %v7953 = vrot.slane %v7951, 4
        %v7954 = vshll.u32 %v7671, 16
        %v7956 = vrot.slane %v7954, 5
        %v7957 = vor.u32 %v7953, %v7956
        %v7958 = vrot.slane %v7957, 4
        %v7960 = vshll.u32 %v7672, 16
        %v7962 = vrot.slane %v7960, 5
        %v7963 = vsel %vm1092, %v7958, %v7962
        %v7964 = vshrl.u32 %v7672, 16
        %v7966 = vrot.slane %v7964, 4
        %v7967 = vor.u32 %v7966, %v7962
        %v7968 = vrot.slane %v7967, 4
        %v7970 = vshll.u32 %v7673, 16
        %v7972 = vrot.slane %v7970, 5
        %v7973 = vsel %vm1092, %v7968, %v7972
        %v7975 = vshrl.u32 %v7674, 16
        %v7977 = vrot.slane %v7975, 4
        %v7978 = vshll.u32 %v7674, 16
        %v7980 = vrot.slane %v7978, 5
        %v7981 = vor.u32 %v7977, %v7980
        %v7982 = vrot.slane %v7981, 4
        %v7984 = vshll.u32 %v7675, 16
        %v7986 = vrot.slane %v7984, 5
        %v7987 = vsel %vm1092, %v7982, %v7986
        %v7988 = vshrl.u32 %v7675, 16
        %v7990 = vrot.slane %v7988, 4
        %v7991 = vor.u32 %v7990, %v7986
        %v7992 = vrot.slane %v7991, 4
        %v7994 = vshll.u32 %v7676, 16
        %v7996 = vrot.slane %v7994, 5
        %v7997 = vsel %vm1092, %v7992, %v7996
        %v7999 = vshrl.u32 %v7677, 16
        %v8001 = vrot.slane %v7999, 4
        %v8002 = vshll.u32 %v7677, 16
        %v8004 = vrot.slane %v8002, 5
        %v8005 = vor.u32 %v8001, %v8004
        %v8006 = vrot.slane %v8005, 4
        %v8008 = vshll.u32 %v7678, 16
        %v8010 = vrot.slane %v8008, 5
        %v8011 = vsel %vm1092, %v8006, %v8010
        %v8012 = vshrl.u32 %v7678, 16
        %v8014 = vrot.slane %v8012, 4
        %v8015 = vor.u32 %v8014, %v8010
        %v8016 = vrot.slane %v8015, 4
        %v8018 = vshll.u32 %v7679, 16
        %v8020 = vrot.slane %v8018, 5
        %v8021 = vsel %vm1092, %v8016, %v8020
        %v8023 = vshrl.u32 %v7680, 16
        %v8025 = vrot.slane %v8023, 4
        %v8026 = vshll.u32 %v7680, 16
        %v8028 = vrot.slane %v8026, 5
        %v8029 = vor.u32 %v8025, %v8028
        %v8030 = vrot.slane %v8029, 4
        %v8032 = vshll.u32 %v7681, 16
        %v8034 = vrot.slane %v8032, 5
        %v8035 = vsel %vm1092, %v8030, %v8034
        %v8036 = vshrl.u32 %v7681, 16
        %v8038 = vrot.slane %v8036, 4
        %v8039 = vor.u32 %v8038, %v8034
        %v8040 = vrot.slane %v8039, 4
        %v8042 = vshll.u32 %v7682, 16
        %v8044 = vrot.slane %v8042, 5
        %v8045 = vsel %vm1092, %v8040, %v8044
        %v8047 = vshrl.u32 %v7683, 16
        %v8049 = vrot.slane %v8047, 4
        %v8050 = vshll.u32 %v7683, 16
        %v8052 = vrot.slane %v8050, 5
        %v8053 = vor.u32 %v8049, %v8052
        %v8054 = vrot.slane %v8053, 4
        %v8056 = vshll.u32 %v7684, 16
        %v8058 = vrot.slane %v8056, 5
        %v8059 = vsel %vm1092, %v8054, %v8058
        %v8060 = vshrl.u32 %v7684, 16
        %v8062 = vrot.slane %v8060, 4
        %v8063 = vor.u32 %v8062, %v8058
        %v8064 = vrot.slane %v8063, 4
        %v8066 = vshll.u32 %v7685, 16
        %v8068 = vrot.slane %v8066, 5
        %v8069 = vsel %vm1092, %v8064, %v8068
        %8102 = vst [vmem:[#allocation3 + $0x10] sm:$0xf] %v7699
        %8103 = vst [vmem:[#allocation3 + $0x34] sm:$0xf] %v7709
        %8104 = vst [vmem:[#allocation3 + $0x58] sm:$0xf] %v7723
        %8105 = vst [vmem:[#allocation3 + $0x7c] sm:$0xf] %v7733
        %8106 = vst [vmem:[#allocation3 + $0xa0] sm:$0xf] %v7747
        %8107 = vst [vmem:[#allocation3 + $0xc4] sm:$0xf] %v7757
        %8108 = vst [vmem:[#allocation3 + $0xe8] sm:$0xf] %v7771
        %8109 = vst [vmem:[#allocation3 + $0x10c] sm:$0xf] %v7781
        %8110 = vst [vmem:[#allocation3 + $0x130] sm:$0xf] %v7795
        %8111 = vst [vmem:[#allocation3 + $0x154] sm:$0xf] %v7805
        %8112 = vst [vmem:[#allocation3 + $0x178] sm:$0xf] %v7819
        %8113 = vst [vmem:[#allocation3 + $0x19c] sm:$0xf] %v7829
        %8114 = vst [vmem:[#allocation3 + $0x1c0] sm:$0xf] %v7843
        %8115 = vst [vmem:[#allocation3 + $0x1e4] sm:$0xf] %v7853
        %8116 = vst [vmem:[#allocation3 + $0x208] sm:$0xf] %v7867
        %8117 = vst [vmem:[#allocation3 + $0x22c] sm:$0xf] %v7877
        %8118 = vst [vmem:[#allocation3 + $0x250] sm:$0xf] %v7891
        %8119 = vst [vmem:[#allocation3 + $0x274] sm:$0xf] %v7901
        %8120 = vst [vmem:[#allocation3 + $0x298] sm:$0xf] %v7915
        %8121 = vst [vmem:[#allocation3 + $0x2bc] sm:$0xf] %v7925
        %8122 = vst [vmem:[#allocation3 + $0x2e0] sm:$0xf] %v7939
        %8123 = vst [vmem:[#allocation3 + $0x304] sm:$0xf] %v7949
        %8124 = vst [vmem:[#allocation3 + $0x328] sm:$0xf] %v7963
        %8125 = vst [vmem:[#allocation3 + $0x34c] sm:$0xf] %v7973
        %8126 = vst [vmem:[#allocation3 + $0x370] sm:$0xf] %v7987
        %8127 = vst [vmem:[#allocation3 + $0x394] sm:$0xf] %v7997
        %8128 = vst [vmem:[#allocation3 + $0x3b8] sm:$0xf] %v8011
        %8129 = vst [vmem:[#allocation3 + $0x3dc] sm:$0xf] %v8021
        %8130 = vst [vmem:[#allocation3 + $0x400] sm:$0xf] %v8035
        %8131 = vst [vmem:[#allocation3 + $0x424] sm:$0xf] %v8045
        %8132 = vst [vmem:[#allocation3 + $0x448] sm:$0xf] %v8059
        %8133 = vst [vmem:[#allocation3 + $0x46c] sm:$0xf] %v8069
        %v8134 = vld [vmem:[%s556] sm:$0xe]
        %v8135 = vld [vmem:[%s556 + $0x4] sm:$0xf]
        %v8136 = vld [vmem:[%s556 + $0x8] sm:$0x1]
        %v8137 = vld [vmem:[%s556 + $0xc] sm:$0xe]
        %v8138 = vld [vmem:[%s556 + $0x10] sm:$0xf]
        %v8139 = vld [vmem:[%s556 + $0x14] sm:$0x1]
        %v8140 = vld [vmem:[%s556 + $0x18] sm:$0xe]
        %v8141 = vld [vmem:[%s556 + $0x1c] sm:$0xf]
        %v8142 = vld [vmem:[%s556 + $0x20] sm:$0x1]
        %v8143 = vld [vmem:[%s556 + $0x24] sm:$0xe]
        %v8144 = vld [vmem:[%s556 + $0x28] sm:$0xf]
        %v8145 = vld [vmem:[%s556 + $0x2c] sm:$0x1]
        %v8146 = vld [vmem:[%s556 + $0x30] sm:$0xe]
        %v8147 = vld [vmem:[%s556 + $0x34] sm:$0xf]
        %v8148 = vld [vmem:[%s556 + $0x38] sm:$0x1]
        %v8149 = vld [vmem:[%s556 + $0x3c] sm:$0xe]
        %v8150 = vld [vmem:[%s556 + $0x40] sm:$0xf]
        %v8151 = vld [vmem:[%s556 + $0x44] sm:$0x1]
        %v8152 = vld [vmem:[%s556 + $0x48] sm:$0xe]
        %v8153 = vld [vmem:[%s556 + $0x4c] sm:$0xf]
        %v8154 = vld [vmem:[%s556 + $0x50] sm:$0x1]
        %v8155 = vld [vmem:[%s556 + $0x54] sm:$0xe]
        %v8156 = vld [vmem:[%s556 + $0x58] sm:$0xf]
        %v8157 = vld [vmem:[%s556 + $0x5c] sm:$0x1]
        %v8158 = vld [vmem:[%s556 + $0x60] sm:$0xe]
        %v8159 = vld [vmem:[%s556 + $0x64] sm:$0xf]
        %v8160 = vld [vmem:[%s556 + $0x68] sm:$0x1]
        %v8161 = vld [vmem:[%s556 + $0x6c] sm:$0xe]
        %v8162 = vld [vmem:[%s556 + $0x70] sm:$0xf]
        %v8163 = vld [vmem:[%s556 + $0x74] sm:$0x1]
        %v8164 = vld [vmem:[%s556 + $0x78] sm:$0xe]
        %v8165 = vld [vmem:[%s556 + $0x7c] sm:$0xf]
        %v8166 = vld [vmem:[%s556 + $0x80] sm:$0x1]
        %v8167 = vld [vmem:[%s556 + $0x84] sm:$0xe]
        %v8168 = vld [vmem:[%s556 + $0x88] sm:$0xf]
        %v8169 = vld [vmem:[%s556 + $0x8c] sm:$0x1]
        %v8170 = vld [vmem:[%s556 + $0x90] sm:$0xe]
        %v8171 = vld [vmem:[%s556 + $0x94] sm:$0xf]
        %v8172 = vld [vmem:[%s556 + $0x98] sm:$0x1]
        %v8173 = vld [vmem:[%s556 + $0x9c] sm:$0xe]
        %v8174 = vld [vmem:[%s556 + $0xa0] sm:$0xf]
        %v8175 = vld [vmem:[%s556 + $0xa4] sm:$0x1]
        %v8176 = vld [vmem:[%s556 + $0xa8] sm:$0xe]
        %v8177 = vld [vmem:[%s556 + $0xac] sm:$0xf]
        %v8178 = vld [vmem:[%s556 + $0xb0] sm:$0x1]
        %v8179 = vld [vmem:[%s556 + $0xb4] sm:$0xe]
        %v8180 = vld [vmem:[%s556 + $0xb8] sm:$0xf]
        %v8181 = vld [vmem:[%s556 + $0xbc] sm:$0x1]
        %v8230 = vrot.slane %v8134, 5
        %v8231 = vrot.slane %v8230, 4
        %v8232 = vrot.slane %v8135, 5
        %v8233 = vsel %vm1639, %v8231, %v8232
        %v8234 = vrot.slane %v8232, 4
        %v8235 = vrot.slane %v8136, 5
        %v8236 = vsel %vm1639, %v8234, %v8235
        %v8237 = vrot.slane %v8137, 5
        %v8238 = vrot.slane %v8237, 4
        %v8239 = vrot.slane %v8138, 5
        %v8240 = vsel %vm1639, %v8238, %v8239
        %v8241 = vrot.slane %v8239, 4
        %v8242 = vrot.slane %v8139, 5
        %v8243 = vsel %vm1639, %v8241, %v8242
        %v8244 = vrot.slane %v8140, 5
        %v8245 = vrot.slane %v8244, 4
        %v8246 = vrot.slane %v8141, 5
        %v8247 = vsel %vm1639, %v8245, %v8246
        %v8248 = vrot.slane %v8246, 4
        %v8249 = vrot.slane %v8142, 5
        %v8250 = vsel %vm1639, %v8248, %v8249
        %v8251 = vrot.slane %v8143, 5
        %v8252 = vrot.slane %v8251, 4
        %v8253 = vrot.slane %v8144, 5
        %v8254 = vsel %vm1639, %v8252, %v8253
        %v8255 = vrot.slane %v8253, 4
        %v8256 = vrot.slane %v8145, 5
        %v8257 = vsel %vm1639, %v8255, %v8256
        %v8258 = vrot.slane %v8146, 5
        %v8259 = vrot.slane %v8258, 4
        %v8260 = vrot.slane %v8147, 5
        %v8261 = vsel %vm1639, %v8259, %v8260
        %v8262 = vrot.slane %v8260, 4
        %v8263 = vrot.slane %v8148, 5
        %v8264 = vsel %vm1639, %v8262, %v8263
        %v8265 = vrot.slane %v8149, 5
        %v8266 = vrot.slane %v8265, 4
        %v8267 = vrot.slane %v8150, 5
        %v8268 = vsel %vm1639, %v8266, %v8267
        %v8269 = vrot.slane %v8267, 4
        %v8270 = vrot.slane %v8151, 5
        %v8271 = vsel %vm1639, %v8269, %v8270
        %v8272 = vrot.slane %v8152, 5
        %v8273 = vrot.slane %v8272, 4
        %v8274 = vrot.slane %v8153, 5
        %v8275 = vsel %vm1639, %v8273, %v8274
        %v8276 = vrot.slane %v8274, 4
        %v8277 = vrot.slane %v8154, 5
        %v8278 = vsel %vm1639, %v8276, %v8277
        %v8279 = vrot.slane %v8155, 5
        %v8280 = vrot.slane %v8279, 4
        %v8281 = vrot.slane %v8156, 5
        %v8282 = vsel %vm1639, %v8280, %v8281
        %v8283 = vrot.slane %v8281, 4
        %v8284 = vrot.slane %v8157, 5
        %v8285 = vsel %vm1639, %v8283, %v8284
        %v8286 = vrot.slane %v8158, 5
        %v8287 = vrot.slane %v8286, 4
        %v8288 = vrot.slane %v8159, 5
        %v8289 = vsel %vm1639, %v8287, %v8288
        %v8290 = vrot.slane %v8288, 4
        %v8291 = vrot.slane %v8160, 5
        %v8292 = vsel %vm1639, %v8290, %v8291
        %v8293 = vrot.slane %v8161, 5
        %v8294 = vrot.slane %v8293, 4
        %v8295 = vrot.slane %v8162, 5
        %v8296 = vsel %vm1639, %v8294, %v8295
        %v8297 = vrot.slane %v8295, 4
        %v8298 = vrot.slane %v8163, 5
        %v8299 = vsel %vm1639, %v8297, %v8298
        %v8300 = vrot.slane %v8164, 5
        %v8301 = vrot.slane %v8300, 4
        %v8302 = vrot.slane %v8165, 5
        %v8303 = vsel %vm1639, %v8301, %v8302
        %v8304 = vrot.slane %v8302, 4
        %v8305 = vrot.slane %v8166, 5
        %v8306 = vsel %vm1639, %v8304, %v8305
        %v8307 = vrot.slane %v8167, 5
        %v8308 = vrot.slane %v8307, 4
        %v8309 = vrot.slane %v8168, 5
        %v8310 = vsel %vm1639, %v8308, %v8309
        %v8311 = vrot.slane %v8309, 4
        %v8312 = vrot.slane %v8169, 5
        %v8313 = vsel %vm1639, %v8311, %v8312
        %v8314 = vrot.slane %v8170, 5
        %v8315 = vrot.slane %v8314, 4
        %v8316 = vrot.slane %v8171, 5
        %v8317 = vsel %vm1639, %v8315, %v8316
        %v8318 = vrot.slane %v8316, 4
        %v8319 = vrot.slane %v8172, 5
        %v8320 = vsel %vm1639, %v8318, %v8319
        %v8321 = vrot.slane %v8173, 5
        %v8322 = vrot.slane %v8321, 4
        %v8323 = vrot.slane %v8174, 5
        %v8324 = vsel %vm1639, %v8322, %v8323
        %v8325 = vrot.slane %v8323, 4
        %v8326 = vrot.slane %v8175, 5
        %v8327 = vsel %vm1639, %v8325, %v8326
        %v8328 = vrot.slane %v8176, 5
        %v8329 = vrot.slane %v8328, 4
        %v8330 = vrot.slane %v8177, 5
        %v8331 = vsel %vm1639, %v8329, %v8330
        %v8332 = vrot.slane %v8330, 4
        %v8333 = vrot.slane %v8178, 5
        %v8334 = vsel %vm1639, %v8332, %v8333
        %v8335 = vrot.slane %v8179, 5
        %v8336 = vrot.slane %v8335, 4
        %v8337 = vrot.slane %v8180, 5
        %v8338 = vsel %vm1639, %v8336, %v8337
        %v8339 = vrot.slane %v8337, 4
        %v8340 = vrot.slane %v8181, 5
        %v8341 = vsel %vm1639, %v8339, %v8340
        %8374 = vst [vmem:[#allocation3 + $0x14] sm:$0xf] %v8233
        %8375 = vst [vmem:[#allocation3 + $0x38] sm:$0xf] %v8236
        %8376 = vst [vmem:[#allocation3 + $0x5c] sm:$0xf] %v8240
        %8377 = vst [vmem:[#allocation3 + $0x80] sm:$0xf] %v8243
        %8378 = vst [vmem:[#allocation3 + $0xa4] sm:$0xf] %v8247
        %8379 = vst [vmem:[#allocation3 + $0xc8] sm:$0xf] %v8250
        %8380 = vst [vmem:[#allocation3 + $0xec] sm:$0xf] %v8254
        %8381 = vst [vmem:[#allocation3 + $0x110] sm:$0xf] %v8257
        %8382 = vst [vmem:[#allocation3 + $0x134] sm:$0xf] %v8261
        %8383 = vst [vmem:[#allocation3 + $0x158] sm:$0xf] %v8264
        %8384 = vst [vmem:[#allocation3 + $0x17c] sm:$0xf] %v8268
        %8385 = vst [vmem:[#allocation3 + $0x1a0] sm:$0xf] %v8271
        %8386 = vst [vmem:[#allocation3 + $0x1c4] sm:$0xf] %v8275
        %8387 = vst [vmem:[#allocation3 + $0x1e8] sm:$0xf] %v8278
        %8388 = vst [vmem:[#allocation3 + $0x20c] sm:$0xf] %v8282
        %8389 = vst [vmem:[#allocation3 + $0x230] sm:$0xf] %v8285
        %8390 = vst [vmem:[#allocation3 + $0x254] sm:$0xf] %v8289
        %8391 = vst [vmem:[#allocation3 + $0x278] sm:$0xf] %v8292
        %8392 = vst [vmem:[#allocation3 + $0x29c] sm:$0xf] %v8296
        %8393 = vst [vmem:[#allocation3 + $0x2c0] sm:$0xf] %v8299
        %8394 = vst [vmem:[#allocation3 + $0x2e4] sm:$0xf] %v8303
        %8395 = vst [vmem:[#allocation3 + $0x308] sm:$0xf] %v8306
        %8396 = vst [vmem:[#allocation3 + $0x32c] sm:$0xf] %v8310
        %8397 = vst [vmem:[#allocation3 + $0x350] sm:$0xf] %v8313
        %8398 = vst [vmem:[#allocation3 + $0x374] sm:$0xf] %v8317
        %8399 = vst [vmem:[#allocation3 + $0x398] sm:$0xf] %v8320
        %8400 = vst [vmem:[#allocation3 + $0x3bc] sm:$0xf] %v8324
        %8401 = vst [vmem:[#allocation3 + $0x3e0] sm:$0xf] %v8327
        %8402 = vst [vmem:[#allocation3 + $0x404] sm:$0xf] %v8331
        %8403 = vst [vmem:[#allocation3 + $0x428] sm:$0xf] %v8334
        %8404 = vst [vmem:[#allocation3 + $0x44c] sm:$0xf] %v8338
        %8405 = vst [vmem:[#allocation3 + $0x470] sm:$0xf] %v8341
        %v8406 = vld [vmem:[%s2648] sm:$0xf]
        %v8407 = vld [vmem:[%s2648 + $0x4] sm:$0xf]
        %v8408 = vld [vmem:[%s2648 + $0xc] sm:$0xf]
        %v8409 = vld [vmem:[%s2648 + $0x10] sm:$0xf]
        %v8410 = vld [vmem:[%s2648 + $0x18] sm:$0xf]
        %v8411 = vld [vmem:[%s2648 + $0x1c] sm:$0xf]
        %v8412 = vld [vmem:[%s2648 + $0x24] sm:$0xf]
        %v8413 = vld [vmem:[%s2648 + $0x28] sm:$0xf]
        %v8414 = vld [vmem:[%s2648 + $0x30] sm:$0xf]
        %v8415 = vld [vmem:[%s2648 + $0x34] sm:$0xf]
        %v8416 = vld [vmem:[%s2648 + $0x3c] sm:$0xf]
        %v8417 = vld [vmem:[%s2648 + $0x40] sm:$0xf]
        %v8418 = vld [vmem:[%s2648 + $0x48] sm:$0xf]
        %v8419 = vld [vmem:[%s2648 + $0x4c] sm:$0xf]
        %v8420 = vld [vmem:[%s2648 + $0x54] sm:$0xf]
        %v8421 = vld [vmem:[%s2648 + $0x58] sm:$0xf]
        %v8422 = vld [vmem:[%s2648 + $0x60] sm:$0xf]
        %v8423 = vld [vmem:[%s2648 + $0x64] sm:$0xf]
        %v8424 = vld [vmem:[%s2648 + $0x6c] sm:$0xf]
        %v8425 = vld [vmem:[%s2648 + $0x70] sm:$0xf]
        %v8426 = vld [vmem:[%s2648 + $0x78] sm:$0xf]
        %v8427 = vld [vmem:[%s2648 + $0x7c] sm:$0xf]
        %v8428 = vld [vmem:[%s2648 + $0x84] sm:$0xf]
        %v8429 = vld [vmem:[%s2648 + $0x88] sm:$0xf]
        %v8430 = vld [vmem:[%s2648 + $0x90] sm:$0xf]
        %v8431 = vld [vmem:[%s2648 + $0x94] sm:$0xf]
        %v8432 = vld [vmem:[%s2648 + $0x9c] sm:$0xf]
        %v8433 = vld [vmem:[%s2648 + $0xa0] sm:$0xf]
        %v8434 = vld [vmem:[%s2648 + $0xa8] sm:$0xf]
        %v8435 = vld [vmem:[%s2648 + $0xac] sm:$0xf]
        %v8436 = vld [vmem:[%s2648 + $0xb4] sm:$0xf]
        %v8437 = vld [vmem:[%s2648 + $0xb8] sm:$0xf]
        %8438 = vst [vmem:[#allocation3 + $0x18] sm:$0xf] %v8406
        %8439 = vst [vmem:[#allocation3 + $0x3c] sm:$0xf] %v8407
        %8440 = vst [vmem:[#allocation3 + $0x60] sm:$0xf] %v8408
        %8441 = vst [vmem:[#allocation3 + $0x84] sm:$0xf] %v8409
        %8442 = vst [vmem:[#allocation3 + $0xa8] sm:$0xf] %v8410
        %8443 = vst [vmem:[#allocation3 + $0xcc] sm:$0xf] %v8411
        %8444 = vst [vmem:[#allocation3 + $0xf0] sm:$0xf] %v8412
        %8445 = vst [vmem:[#allocation3 + $0x114] sm:$0xf] %v8413
        %8446 = vst [vmem:[#allocation3 + $0x138] sm:$0xf] %v8414
        %8447 = vst [vmem:[#allocation3 + $0x15c] sm:$0xf] %v8415
        %8448 = vst [vmem:[#allocation3 + $0x180] sm:$0xf] %v8416
        %8449 = vst [vmem:[#allocation3 + $0x1a4] sm:$0xf] %v8417
        %8450 = vst [vmem:[#allocation3 + $0x1c8] sm:$0xf] %v8418
        %8451 = vst [vmem:[#allocation3 + $0x1ec] sm:$0xf] %v8419
        %8452 = vst [vmem:[#allocation3 + $0x210] sm:$0xf] %v8420
        %8453 = vst [vmem:[#allocation3 + $0x234] sm:$0xf] %v8421
        %8454 = vst [vmem:[#allocation3 + $0x258] sm:$0xf] %v8422
        %8455 = vst [vmem:[#allocation3 + $0x27c] sm:$0xf] %v8423
        %8456 = vst [vmem:[#allocation3 + $0x2a0] sm:$0xf] %v8424
        %8457 = vst [vmem:[#allocation3 + $0x2c4] sm:$0xf] %v8425
        %8458 = vst [vmem:[#allocation3 + $0x2e8] sm:$0xf] %v8426
        %8459 = vst [vmem:[#allocation3 + $0x30c] sm:$0xf] %v8427
        %8460 = vst [vmem:[#allocation3 + $0x330] sm:$0xf] %v8428
        %8461 = vst [vmem:[#allocation3 + $0x354] sm:$0xf] %v8429
        %8462 = vst [vmem:[#allocation3 + $0x378] sm:$0xf] %v8430
        %8463 = vst [vmem:[#allocation3 + $0x39c] sm:$0xf] %v8431
        %8464 = vst [vmem:[#allocation3 + $0x3c0] sm:$0xf] %v8432
        %8465 = vst [vmem:[#allocation3 + $0x3e4] sm:$0xf] %v8433
        %8466 = vst [vmem:[#allocation3 + $0x408] sm:$0xf] %v8434
        %8467 = vst [vmem:[#allocation3 + $0x42c] sm:$0xf] %v8435
        %8468 = vst [vmem:[#allocation3 + $0x450] sm:$0xf] %v8436
        %8469 = vst [vmem:[#allocation3 + $0x474] sm:$0xf] %v8437
        %v8470 = vld [vmem:[%s2648] sm:$0xf]
        %v8471 = vld [vmem:[%s2648 + $0x4] sm:$0xf]
        %v8472 = vld [vmem:[%s2648 + $0x8] sm:$0x1]
        %v8473 = vld [vmem:[%s2648 + $0xc] sm:$0xf]
        %v8474 = vld [vmem:[%s2648 + $0x10] sm:$0xf]
        %v8475 = vld [vmem:[%s2648 + $0x14] sm:$0x1]
        %v8476 = vld [vmem:[%s2648 + $0x18] sm:$0xf]
        %v8477 = vld [vmem:[%s2648 + $0x1c] sm:$0xf]
        %v8478 = vld [vmem:[%s2648 + $0x20] sm:$0x1]
        %v8479 = vld [vmem:[%s2648 + $0x24] sm:$0xf]
        %v8480 = vld [vmem:[%s2648 + $0x28] sm:$0xf]
        %v8481 = vld [vmem:[%s2648 + $0x2c] sm:$0x1]
        %v8482 = vld [vmem:[%s2648 + $0x30] sm:$0xf]
        %v8483 = vld [vmem:[%s2648 + $0x34] sm:$0xf]
        %v8484 = vld [vmem:[%s2648 + $0x38] sm:$0x1]
        %v8485 = vld [vmem:[%s2648 + $0x3c] sm:$0xf]
        %v8486 = vld [vmem:[%s2648 + $0x40] sm:$0xf]
        %v8487 = vld [vmem:[%s2648 + $0x44] sm:$0x1]
        %v8488 = vld [vmem:[%s2648 + $0x48] sm:$0xf]
        %v8489 = vld [vmem:[%s2648 + $0x4c] sm:$0xf]
        %v8490 = vld [vmem:[%s2648 + $0x50] sm:$0x1]
        %v8491 = vld [vmem:[%s2648 + $0x54] sm:$0xf]
        %v8492 = vld [vmem:[%s2648 + $0x58] sm:$0xf]
        %v8493 = vld [vmem:[%s2648 + $0x5c] sm:$0x1]
        %v8494 = vld [vmem:[%s2648 + $0x60] sm:$0xf]
        %v8495 = vld [vmem:[%s2648 + $0x64] sm:$0xf]
        %v8496 = vld [vmem:[%s2648 + $0x68] sm:$0x1]
        %v8497 = vld [vmem:[%s2648 + $0x6c] sm:$0xf]
        %v8498 = vld [vmem:[%s2648 + $0x70] sm:$0xf]
        %v8499 = vld [vmem:[%s2648 + $0x74] sm:$0x1]
        %v8500 = vld [vmem:[%s2648 + $0x78] sm:$0xf]
        %v8501 = vld [vmem:[%s2648 + $0x7c] sm:$0xf]
        %v8502 = vld [vmem:[%s2648 + $0x80] sm:$0x1]
        %v8503 = vld [vmem:[%s2648 + $0x84] sm:$0xf]
        %v8504 = vld [vmem:[%s2648 + $0x88] sm:$0xf]
        %v8505 = vld [vmem:[%s2648 + $0x8c] sm:$0x1]
        %v8506 = vld [vmem:[%s2648 + $0x90] sm:$0xf]
        %v8507 = vld [vmem:[%s2648 + $0x94] sm:$0xf]
        %v8508 = vld [vmem:[%s2648 + $0x98] sm:$0x1]
        %v8509 = vld [vmem:[%s2648 + $0x9c] sm:$0xf]
        %v8510 = vld [vmem:[%s2648 + $0xa0] sm:$0xf]
        %v8511 = vld [vmem:[%s2648 + $0xa4] sm:$0x1]
        %v8512 = vld [vmem:[%s2648 + $0xa8] sm:$0xf]
        %v8513 = vld [vmem:[%s2648 + $0xac] sm:$0xf]
        %v8514 = vld [vmem:[%s2648 + $0xb0] sm:$0x1]
        %v8515 = vld [vmem:[%s2648 + $0xb4] sm:$0xf]
        %v8516 = vld [vmem:[%s2648 + $0xb8] sm:$0xf]
        %v8517 = vld [vmem:[%s2648 + $0xbc] sm:$0x1]
        %v8519 = vshrl.u32 %v8470, 16
        %v8521 = vrot.slane %v8519, 4
        %v8522 = vshll.u32 %v8470, 16
        %v8524 = vrot.slane %v8522, 5
        %v8525 = vor.u32 %v8521, %v8524
        %v8526 = vrot.slane %v8525, 4
        %v8528 = vshll.u32 %v8471, 16
        %v8530 = vrot.slane %v8528, 5
        %v8531 = vsel %vm1092, %v8526, %v8530
        %v8532 = vshrl.u32 %v8471, 16
        %v8534 = vrot.slane %v8532, 4
        %v8535 = vor.u32 %v8534, %v8530
        %v8536 = vrot.slane %v8535, 4
        %v8538 = vshll.u32 %v8472, 16
        %v8540 = vrot.slane %v8538, 5
        %v8541 = vsel %vm1092, %v8536, %v8540
        %v8543 = vshrl.u32 %v8473, 16
        %v8545 = vrot.slane %v8543, 4
        %v8546 = vshll.u32 %v8473, 16
        %v8548 = vrot.slane %v8546, 5
        %v8549 = vor.u32 %v8545, %v8548
        %v8550 = vrot.slane %v8549, 4
        %v8552 = vshll.u32 %v8474, 16
        %v8554 = vrot.slane %v8552, 5
        %v8555 = vsel %vm1092, %v8550, %v8554
        %v8556 = vshrl.u32 %v8474, 16
        %v8558 = vrot.slane %v8556, 4
        %v8559 = vor.u32 %v8558, %v8554
        %v8560 = vrot.slane %v8559, 4
        %v8562 = vshll.u32 %v8475, 16
        %v8564 = vrot.slane %v8562, 5
        %v8565 = vsel %vm1092, %v8560, %v8564
        %v8567 = vshrl.u32 %v8476, 16
        %v8569 = vrot.slane %v8567, 4
        %v8570 = vshll.u32 %v8476, 16
        %v8572 = vrot.slane %v8570, 5
        %v8573 = vor.u32 %v8569, %v8572
        %v8574 = vrot.slane %v8573, 4
        %v8576 = vshll.u32 %v8477, 16
        %v8578 = vrot.slane %v8576, 5
        %v8579 = vsel %vm1092, %v8574, %v8578
        %v8580 = vshrl.u32 %v8477, 16
        %v8582 = vrot.slane %v8580, 4
        %v8583 = vor.u32 %v8582, %v8578
        %v8584 = vrot.slane %v8583, 4
        %v8586 = vshll.u32 %v8478, 16
        %v8588 = vrot.slane %v8586, 5
        %v8589 = vsel %vm1092, %v8584, %v8588
        %v8591 = vshrl.u32 %v8479, 16
        %v8593 = vrot.slane %v8591, 4
        %v8594 = vshll.u32 %v8479, 16
        %v8596 = vrot.slane %v8594, 5
        %v8597 = vor.u32 %v8593, %v8596
        %v8598 = vrot.slane %v8597, 4
        %v8600 = vshll.u32 %v8480, 16
        %v8602 = vrot.slane %v8600, 5
        %v8603 = vsel %vm1092, %v8598, %v8602
        %v8604 = vshrl.u32 %v8480, 16
        %v8606 = vrot.slane %v8604, 4
        %v8607 = vor.u32 %v8606, %v8602
        %v8608 = vrot.slane %v8607, 4
        %v8610 = vshll.u32 %v8481, 16
        %v8612 = vrot.slane %v8610, 5
        %v8613 = vsel %vm1092, %v8608, %v8612
        %v8615 = vshrl.u32 %v8482, 16
        %v8617 = vrot.slane %v8615, 4
        %v8618 = vshll.u32 %v8482, 16
        %v8620 = vrot.slane %v8618, 5
        %v8621 = vor.u32 %v8617, %v8620
        %v8622 = vrot.slane %v8621, 4
        %v8624 = vshll.u32 %v8483, 16
        %v8626 = vrot.slane %v8624, 5
        %v8627 = vsel %vm1092, %v8622, %v8626
        %v8628 = vshrl.u32 %v8483, 16
        %v8630 = vrot.slane %v8628, 4
        %v8631 = vor.u32 %v8630, %v8626
        %v8632 = vrot.slane %v8631, 4
        %v8634 = vshll.u32 %v8484, 16
        %v8636 = vrot.slane %v8634, 5
        %v8637 = vsel %vm1092, %v8632, %v8636
        %v8639 = vshrl.u32 %v8485, 16
        %v8641 = vrot.slane %v8639, 4
        %v8642 = vshll.u32 %v8485, 16
        %v8644 = vrot.slane %v8642, 5
        %v8645 = vor.u32 %v8641, %v8644
        %v8646 = vrot.slane %v8645, 4
        %v8648 = vshll.u32 %v8486, 16
        %v8650 = vrot.slane %v8648, 5
        %v8651 = vsel %vm1092, %v8646, %v8650
        %v8652 = vshrl.u32 %v8486, 16
        %v8654 = vrot.slane %v8652, 4
        %v8655 = vor.u32 %v8654, %v8650
        %v8656 = vrot.slane %v8655, 4
        %v8658 = vshll.u32 %v8487, 16
        %v8660 = vrot.slane %v8658, 5
        %v8661 = vsel %vm1092, %v8656, %v8660
        %v8663 = vshrl.u32 %v8488, 16
        %v8665 = vrot.slane %v8663, 4
        %v8666 = vshll.u32 %v8488, 16
        %v8668 = vrot.slane %v8666, 5
        %v8669 = vor.u32 %v8665, %v8668
        %v8670 = vrot.slane %v8669, 4
        %v8672 = vshll.u32 %v8489, 16
        %v8674 = vrot.slane %v8672, 5
        %v8675 = vsel %vm1092, %v8670, %v8674
        %v8676 = vshrl.u32 %v8489, 16
        %v8678 = vrot.slane %v8676, 4
        %v8679 = vor.u32 %v8678, %v8674
        %v8680 = vrot.slane %v8679, 4
        %v8682 = vshll.u32 %v8490, 16
        %v8684 = vrot.slane %v8682, 5
        %v8685 = vsel %vm1092, %v8680, %v8684
        %v8687 = vshrl.u32 %v8491, 16
        %v8689 = vrot.slane %v8687, 4
        %v8690 = vshll.u32 %v8491, 16
        %v8692 = vrot.slane %v8690, 5
        %v8693 = vor.u32 %v8689, %v8692
        %v8694 = vrot.slane %v8693, 4
        %v8696 = vshll.u32 %v8492, 16
        %v8698 = vrot.slane %v8696, 5
        %v8699 = vsel %vm1092, %v8694, %v8698
        %v8700 = vshrl.u32 %v8492, 16
        %v8702 = vrot.slane %v8700, 4
        %v8703 = vor.u32 %v8702, %v8698
        %v8704 = vrot.slane %v8703, 4
        %v8706 = vshll.u32 %v8493, 16
        %v8708 = vrot.slane %v8706, 5
        %v8709 = vsel %vm1092, %v8704, %v8708
        %v8711 = vshrl.u32 %v8494, 16
        %v8713 = vrot.slane %v8711, 4
        %v8714 = vshll.u32 %v8494, 16
        %v8716 = vrot.slane %v8714, 5
        %v8717 = vor.u32 %v8713, %v8716
        %v8718 = vrot.slane %v8717, 4
        %v8720 = vshll.u32 %v8495, 16
        %v8722 = vrot.slane %v8720, 5
        %v8723 = vsel %vm1092, %v8718, %v8722
        %v8724 = vshrl.u32 %v8495, 16
        %v8726 = vrot.slane %v8724, 4
        %v8727 = vor.u32 %v8726, %v8722
        %v8728 = vrot.slane %v8727, 4
        %v8730 = vshll.u32 %v8496, 16
        %v8732 = vrot.slane %v8730, 5
        %v8733 = vsel %vm1092, %v8728, %v8732
        %v8735 = vshrl.u32 %v8497, 16
        %v8737 = vrot.slane %v8735, 4
        %v8738 = vshll.u32 %v8497, 16
        %v8740 = vrot.slane %v8738, 5
        %v8741 = vor.u32 %v8737, %v8740
        %v8742 = vrot.slane %v8741, 4
        %v8744 = vshll.u32 %v8498, 16
        %v8746 = vrot.slane %v8744, 5
        %v8747 = vsel %vm1092, %v8742, %v8746
        %v8748 = vshrl.u32 %v8498, 16
        %v8750 = vrot.slane %v8748, 4
        %v8751 = vor.u32 %v8750, %v8746
        %v8752 = vrot.slane %v8751, 4
        %v8754 = vshll.u32 %v8499, 16
        %v8756 = vrot.slane %v8754, 5
        %v8757 = vsel %vm1092, %v8752, %v8756
        %v8759 = vshrl.u32 %v8500, 16
        %v8761 = vrot.slane %v8759, 4
        %v8762 = vshll.u32 %v8500, 16
        %v8764 = vrot.slane %v8762, 5
        %v8765 = vor.u32 %v8761, %v8764
        %v8766 = vrot.slane %v8765, 4
        %v8768 = vshll.u32 %v8501, 16
        %v8770 = vrot.slane %v8768, 5
        %v8771 = vsel %vm1092, %v8766, %v8770
        %v8772 = vshrl.u32 %v8501, 16
        %v8774 = vrot.slane %v8772, 4
        %v8775 = vor.u32 %v8774, %v8770
        %v8776 = vrot.slane %v8775, 4
        %v8778 = vshll.u32 %v8502, 16
        %v8780 = vrot.slane %v8778, 5
        %v8781 = vsel %vm1092, %v8776, %v8780
        %v8783 = vshrl.u32 %v8503, 16
        %v8785 = vrot.slane %v8783, 4
        %v8786 = vshll.u32 %v8503, 16
        %v8788 = vrot.slane %v8786, 5
        %v8789 = vor.u32 %v8785, %v8788
        %v8790 = vrot.slane %v8789, 4
        %v8792 = vshll.u32 %v8504, 16
        %v8794 = vrot.slane %v8792, 5
        %v8795 = vsel %vm1092, %v8790, %v8794
        %v8796 = vshrl.u32 %v8504, 16
        %v8798 = vrot.slane %v8796, 4
        %v8799 = vor.u32 %v8798, %v8794
        %v8800 = vrot.slane %v8799, 4
        %v8802 = vshll.u32 %v8505, 16
        %v8804 = vrot.slane %v8802, 5
        %v8805 = vsel %vm1092, %v8800, %v8804
        %v8807 = vshrl.u32 %v8506, 16
        %v8809 = vrot.slane %v8807, 4
        %v8810 = vshll.u32 %v8506, 16
        %v8812 = vrot.slane %v8810, 5
        %v8813 = vor.u32 %v8809, %v8812
        %v8814 = vrot.slane %v8813, 4
        %v8816 = vshll.u32 %v8507, 16
        %v8818 = vrot.slane %v8816, 5
        %v8819 = vsel %vm1092, %v8814, %v8818
        %v8820 = vshrl.u32 %v8507, 16
        %v8822 = vrot.slane %v8820, 4
        %v8823 = vor.u32 %v8822, %v8818
        %v8824 = vrot.slane %v8823, 4
        %v8826 = vshll.u32 %v8508, 16
        %v8828 = vrot.slane %v8826, 5
        %v8829 = vsel %vm1092, %v8824, %v8828
        %v8831 = vshrl.u32 %v8509, 16
        %v8833 = vrot.slane %v8831, 4
        %v8834 = vshll.u32 %v8509, 16
        %v8836 = vrot.slane %v8834, 5
        %v8837 = vor.u32 %v8833, %v8836
        %v8838 = vrot.slane %v8837, 4
        %v8840 = vshll.u32 %v8510, 16
        %v8842 = vrot.slane %v8840, 5
        %v8843 = vsel %vm1092, %v8838, %v8842
        %v8844 = vshrl.u32 %v8510, 16
        %v8846 = vrot.slane %v8844, 4
        %v8847 = vor.u32 %v8846, %v8842
        %v8848 = vrot.slane %v8847, 4
        %v8850 = vshll.u32 %v8511, 16
        %v8852 = vrot.slane %v8850, 5
        %v8853 = vsel %vm1092, %v8848, %v8852
        %v8855 = vshrl.u32 %v8512, 16
        %v8857 = vrot.slane %v8855, 4
        %v8858 = vshll.u32 %v8512, 16
        %v8860 = vrot.slane %v8858, 5
        %v8861 = vor.u32 %v8857, %v8860
        %v8862 = vrot.slane %v8861, 4
        %v8864 = vshll.u32 %v8513, 16
        %v8866 = vrot.slane %v8864, 5
        %v8867 = vsel %vm1092, %v8862, %v8866
        %v8868 = vshrl.u32 %v8513, 16
        %v8870 = vrot.slane %v8868, 4
        %v8871 = vor.u32 %v8870, %v8866
        %v8872 = vrot.slane %v8871, 4
        %v8874 = vshll.u32 %v8514, 16
        %v8876 = vrot.slane %v8874, 5
        %v8877 = vsel %vm1092, %v8872, %v8876
        %v8879 = vshrl.u32 %v8515, 16
        %v8881 = vrot.slane %v8879, 4
        %v8882 = vshll.u32 %v8515, 16
        %v8884 = vrot.slane %v8882, 5
        %v8885 = vor.u32 %v8881, %v8884
        %v8886 = vrot.slane %v8885, 4
        %v8888 = vshll.u32 %v8516, 16
        %v8890 = vrot.slane %v8888, 5
        %v8891 = vsel %vm1092, %v8886, %v8890
        %v8892 = vshrl.u32 %v8516, 16
        %v8894 = vrot.slane %v8892, 4
        %v8895 = vor.u32 %v8894, %v8890
        %v8896 = vrot.slane %v8895, 4
        %v8898 = vshll.u32 %v8517, 16
        %v8900 = vrot.slane %v8898, 5
        %v8901 = vsel %vm1092, %v8896, %v8900
        %8934 = vst [vmem:[#allocation3 + $0x1c] sm:$0xf] %v8531
        %8935 = vst [vmem:[#allocation3 + $0x40] sm:$0xf] %v8541
        %8936 = vst [vmem:[#allocation3 + $0x64] sm:$0xf] %v8555
        %8937 = vst [vmem:[#allocation3 + $0x88] sm:$0xf] %v8565
        %8938 = vst [vmem:[#allocation3 + $0xac] sm:$0xf] %v8579
        %8939 = vst [vmem:[#allocation3 + $0xd0] sm:$0xf] %v8589
        %8940 = vst [vmem:[#allocation3 + $0xf4] sm:$0xf] %v8603
        %8941 = vst [vmem:[#allocation3 + $0x118] sm:$0xf] %v8613
        %8942 = vst [vmem:[#allocation3 + $0x13c] sm:$0xf] %v8627
        %8943 = vst [vmem:[#allocation3 + $0x160] sm:$0xf] %v8637
        %8944 = vst [vmem:[#allocation3 + $0x184] sm:$0xf] %v8651
        %8945 = vst [vmem:[#allocation3 + $0x1a8] sm:$0xf] %v8661
        %8946 = vst [vmem:[#allocation3 + $0x1cc] sm:$0xf] %v8675
        %8947 = vst [vmem:[#allocation3 + $0x1f0] sm:$0xf] %v8685
        %8948 = vst [vmem:[#allocation3 + $0x214] sm:$0xf] %v8699
        %8949 = vst [vmem:[#allocation3 + $0x238] sm:$0xf] %v8709
        %8950 = vst [vmem:[#allocation3 + $0x25c] sm:$0xf] %v8723
        %8951 = vst [vmem:[#allocation3 + $0x280] sm:$0xf] %v8733
        %8952 = vst [vmem:[#allocation3 + $0x2a4] sm:$0xf] %v8747
        %8953 = vst [vmem:[#allocation3 + $0x2c8] sm:$0xf] %v8757
        %8954 = vst [vmem:[#allocation3 + $0x2ec] sm:$0xf] %v8771
        %8955 = vst [vmem:[#allocation3 + $0x310] sm:$0xf] %v8781
        %8956 = vst [vmem:[#allocation3 + $0x334] sm:$0xf] %v8795
        %8957 = vst [vmem:[#allocation3 + $0x358] sm:$0xf] %v8805
        %8958 = vst [vmem:[#allocation3 + $0x37c] sm:$0xf] %v8819
        %8959 = vst [vmem:[#allocation3 + $0x3a0] sm:$0xf] %v8829
        %8960 = vst [vmem:[#allocation3 + $0x3c4] sm:$0xf] %v8843
        %8961 = vst [vmem:[#allocation3 + $0x3e8] sm:$0xf] %v8853
        %8962 = vst [vmem:[#allocation3 + $0x40c] sm:$0xf] %v8867
        %8963 = vst [vmem:[#allocation3 + $0x430] sm:$0xf] %v8877
        %8964 = vst [vmem:[#allocation3 + $0x454] sm:$0xf] %v8891
        %8965 = vst [vmem:[#allocation3 + $0x478] sm:$0xf] %v8901
        %v8966 = vld [vmem:[%s2648] sm:$0xe]
        %v8967 = vld [vmem:[%s2648 + $0x4] sm:$0xf]
        %v8968 = vld [vmem:[%s2648 + $0x8] sm:$0x1]
        %v8969 = vld [vmem:[%s2648 + $0xc] sm:$0xe]
        %v8970 = vld [vmem:[%s2648 + $0x10] sm:$0xf]
        %v8971 = vld [vmem:[%s2648 + $0x14] sm:$0x1]
        %v8972 = vld [vmem:[%s2648 + $0x18] sm:$0xe]
        %v8973 = vld [vmem:[%s2648 + $0x1c] sm:$0xf]
        %v8974 = vld [vmem:[%s2648 + $0x20] sm:$0x1]
        %v8975 = vld [vmem:[%s2648 + $0x24] sm:$0xe]
        %v8976 = vld [vmem:[%s2648 + $0x28] sm:$0xf]
        %v8977 = vld [vmem:[%s2648 + $0x2c] sm:$0x1]
        %v8978 = vld [vmem:[%s2648 + $0x30] sm:$0xe]
        %v8979 = vld [vmem:[%s2648 + $0x34] sm:$0xf]
        %v8980 = vld [vmem:[%s2648 + $0x38] sm:$0x1]
        %v8981 = vld [vmem:[%s2648 + $0x3c] sm:$0xe]
        %v8982 = vld [vmem:[%s2648 + $0x40] sm:$0xf]
        %v8983 = vld [vmem:[%s2648 + $0x44] sm:$0x1]
        %v8984 = vld [vmem:[%s2648 + $0x48] sm:$0xe]
        %v8985 = vld [vmem:[%s2648 + $0x4c] sm:$0xf]
        %v8986 = vld [vmem:[%s2648 + $0x50] sm:$0x1]
        %v8987 = vld [vmem:[%s2648 + $0x54] sm:$0xe]
        %v8988 = vld [vmem:[%s2648 + $0x58] sm:$0xf]
        %v8989 = vld [vmem:[%s2648 + $0x5c] sm:$0x1]
        %v8990 = vld [vmem:[%s2648 + $0x60] sm:$0xe]
        %v8991 = vld [vmem:[%s2648 + $0x64] sm:$0xf]
        %v8992 = vld [vmem:[%s2648 + $0x68] sm:$0x1]
        %v8993 = vld [vmem:[%s2648 + $0x6c] sm:$0xe]
        %v8994 = vld [vmem:[%s2648 + $0x70] sm:$0xf]
        %v8995 = vld [vmem:[%s2648 + $0x74] sm:$0x1]
        %v8996 = vld [vmem:[%s2648 + $0x78] sm:$0xe]
        %v8997 = vld [vmem:[%s2648 + $0x7c] sm:$0xf]
        %v8998 = vld [vmem:[%s2648 + $0x80] sm:$0x1]
        %v8999 = vld [vmem:[%s2648 + $0x84] sm:$0xe]
        %v9000 = vld [vmem:[%s2648 + $0x88] sm:$0xf]
        %v9001 = vld [vmem:[%s2648 + $0x8c] sm:$0x1]
        %v9002 = vld [vmem:[%s2648 + $0x90] sm:$0xe]
        %v9003 = vld [vmem:[%s2648 + $0x94] sm:$0xf]
        %v9004 = vld [vmem:[%s2648 + $0x98] sm:$0x1]
        %v9005 = vld [vmem:[%s2648 + $0x9c] sm:$0xe]
        %v9006 = vld [vmem:[%s2648 + $0xa0] sm:$0xf]
        %v9007 = vld [vmem:[%s2648 + $0xa4] sm:$0x1]
        %v9008 = vld [vmem:[%s2648 + $0xa8] sm:$0xe]
        %v9009 = vld [vmem:[%s2648 + $0xac] sm:$0xf]
        %v9010 = vld [vmem:[%s2648 + $0xb0] sm:$0x1]
        %v9011 = vld [vmem:[%s2648 + $0xb4] sm:$0xe]
        %v9012 = vld [vmem:[%s2648 + $0xb8] sm:$0xf]
        %v9013 = vld [vmem:[%s2648 + $0xbc] sm:$0x1]
        %v9062 = vrot.slane %v8966, 5
        %v9063 = vrot.slane %v9062, 4
        %v9064 = vrot.slane %v8967, 5
        %v9065 = vsel %vm1639, %v9063, %v9064
        %v9066 = vrot.slane %v9064, 4
        %v9067 = vrot.slane %v8968, 5
        %v9068 = vsel %vm1639, %v9066, %v9067
        %v9069 = vrot.slane %v8969, 5
        %v9070 = vrot.slane %v9069, 4
        %v9071 = vrot.slane %v8970, 5
        %v9072 = vsel %vm1639, %v9070, %v9071
        %v9073 = vrot.slane %v9071, 4
        %v9074 = vrot.slane %v8971, 5
        %v9075 = vsel %vm1639, %v9073, %v9074
        %v9076 = vrot.slane %v8972, 5
        %v9077 = vrot.slane %v9076, 4
        %v9078 = vrot.slane %v8973, 5
        %v9079 = vsel %vm1639, %v9077, %v9078
        %v9080 = vrot.slane %v9078, 4
        %v9081 = vrot.slane %v8974, 5
        %v9082 = vsel %vm1639, %v9080, %v9081
        %v9083 = vrot.slane %v8975, 5
        %v9084 = vrot.slane %v9083, 4
        %v9085 = vrot.slane %v8976, 5
        %v9086 = vsel %vm1639, %v9084, %v9085
        %v9087 = vrot.slane %v9085, 4
        %v9088 = vrot.slane %v8977, 5
        %v9089 = vsel %vm1639, %v9087, %v9088
        %v9090 = vrot.slane %v8978, 5
        %v9091 = vrot.slane %v9090, 4
        %v9092 = vrot.slane %v8979, 5
        %v9093 = vsel %vm1639, %v9091, %v9092
        %v9094 = vrot.slane %v9092, 4
        %v9095 = vrot.slane %v8980, 5
        %v9096 = vsel %vm1639, %v9094, %v9095
        %v9097 = vrot.slane %v8981, 5
        %v9098 = vrot.slane %v9097, 4
        %v9099 = vrot.slane %v8982, 5
        %v9100 = vsel %vm1639, %v9098, %v9099
        %v9101 = vrot.slane %v9099, 4
        %v9102 = vrot.slane %v8983, 5
        %v9103 = vsel %vm1639, %v9101, %v9102
        %v9104 = vrot.slane %v8984, 5
        %v9105 = vrot.slane %v9104, 4
        %v9106 = vrot.slane %v8985, 5
        %v9107 = vsel %vm1639, %v9105, %v9106
        %v9108 = vrot.slane %v9106, 4
        %v9109 = vrot.slane %v8986, 5
        %v9110 = vsel %vm1639, %v9108, %v9109
        %v9111 = vrot.slane %v8987, 5
        %v9112 = vrot.slane %v9111, 4
        %v9113 = vrot.slane %v8988, 5
        %v9114 = vsel %vm1639, %v9112, %v9113
        %v9115 = vrot.slane %v9113, 4
        %v9116 = vrot.slane %v8989, 5
        %v9117 = vsel %vm1639, %v9115, %v9116
        %v9118 = vrot.slane %v8990, 5
        %v9119 = vrot.slane %v9118, 4
        %v9120 = vrot.slane %v8991, 5
        %v9121 = vsel %vm1639, %v9119, %v9120
        %v9122 = vrot.slane %v9120, 4
        %v9123 = vrot.slane %v8992, 5
        %v9124 = vsel %vm1639, %v9122, %v9123
        %v9125 = vrot.slane %v8993, 5
        %v9126 = vrot.slane %v9125, 4
        %v9127 = vrot.slane %v8994, 5
        %v9128 = vsel %vm1639, %v9126, %v9127
        %v9129 = vrot.slane %v9127, 4
        %v9130 = vrot.slane %v8995, 5
        %v9131 = vsel %vm1639, %v9129, %v9130
        %v9132 = vrot.slane %v8996, 5
        %v9133 = vrot.slane %v9132, 4
        %v9134 = vrot.slane %v8997, 5
        %v9135 = vsel %vm1639, %v9133, %v9134
        %v9136 = vrot.slane %v9134, 4
        %v9137 = vrot.slane %v8998, 5
        %v9138 = vsel %vm1639, %v9136, %v9137
        %v9139 = vrot.slane %v8999, 5
        %v9140 = vrot.slane %v9139, 4
        %v9141 = vrot.slane %v9000, 5
        %v9142 = vsel %vm1639, %v9140, %v9141
        %v9143 = vrot.slane %v9141, 4
        %v9144 = vrot.slane %v9001, 5
        %v9145 = vsel %vm1639, %v9143, %v9144
        %v9146 = vrot.slane %v9002, 5
        %v9147 = vrot.slane %v9146, 4
        %v9148 = vrot.slane %v9003, 5
        %v9149 = vsel %vm1639, %v9147, %v9148
        %v9150 = vrot.slane %v9148, 4
        %v9151 = vrot.slane %v9004, 5
        %v9152 = vsel %vm1639, %v9150, %v9151
        %v9153 = vrot.slane %v9005, 5
        %v9154 = vrot.slane %v9153, 4
        %v9155 = vrot.slane %v9006, 5
        %v9156 = vsel %vm1639, %v9154, %v9155
        %v9157 = vrot.slane %v9155, 4
        %v9158 = vrot.slane %v9007, 5
        %v9159 = vsel %vm1639, %v9157, %v9158
        %v9160 = vrot.slane %v9008, 5
        %v9161 = vrot.slane %v9160, 4
        %v9162 = vrot.slane %v9009, 5
        %v9163 = vsel %vm1639, %v9161, %v9162
        %v9164 = vrot.slane %v9162, 4
        %v9165 = vrot.slane %v9010, 5
        %v9166 = vsel %vm1639, %v9164, %v9165
        %v9167 = vrot.slane %v9011, 5
        %v9168 = vrot.slane %v9167, 4
        %v9169 = vrot.slane %v9012, 5
        %v9170 = vsel %vm1639, %v9168, %v9169
        %v9171 = vrot.slane %v9169, 4
        %v9172 = vrot.slane %v9013, 5
        %v9173 = vsel %vm1639, %v9171, %v9172
        %9206 = vst [vmem:[#allocation3 + $0x20] sm:$0xf] %v9065
        %9207 = vst [vmem:[#allocation3 + $0x44] sm:$0xf] %v9068
        %9208 = vst [vmem:[#allocation3 + $0x68] sm:$0xf] %v9072
        %9209 = vst [vmem:[#allocation3 + $0x8c] sm:$0xf] %v9075
        %9210 = vst [vmem:[#allocation3 + $0xb0] sm:$0xf] %v9079
        %9211 = vst [vmem:[#allocation3 + $0xd4] sm:$0xf] %v9082
        %9212 = vst [vmem:[#allocation3 + $0xf8] sm:$0xf] %v9086
        %9213 = vst [vmem:[#allocation3 + $0x11c] sm:$0xf] %v9089
        %9214 = vst [vmem:[#allocation3 + $0x140] sm:$0xf] %v9093
        %9215 = vst [vmem:[#allocation3 + $0x164] sm:$0xf] %v9096
        %9216 = vst [vmem:[#allocation3 + $0x188] sm:$0xf] %v9100
        %9217 = vst [vmem:[#allocation3 + $0x1ac] sm:$0xf] %v9103
        %9218 = vst [vmem:[#allocation3 + $0x1d0] sm:$0xf] %v9107
        %9219 = vst [vmem:[#allocation3 + $0x1f4] sm:$0xf] %v9110
        %9220 = vst [vmem:[#allocation3 + $0x218] sm:$0xf] %v9114
        %9221 = vst [vmem:[#allocation3 + $0x23c] sm:$0xf] %v9117
        %9222 = vst [vmem:[#allocation3 + $0x260] sm:$0xf] %v9121
        %9223 = vst [vmem:[#allocation3 + $0x284] sm:$0xf] %v9124
        %9224 = vst [vmem:[#allocation3 + $0x2a8] sm:$0xf] %v9128
        %9225 = vst [vmem:[#allocation3 + $0x2cc] sm:$0xf] %v9131
        %9226 = vst [vmem:[#allocation3 + $0x2f0] sm:$0xf] %v9135
        %9227 = vst [vmem:[#allocation3 + $0x314] sm:$0xf] %v9138
        %9228 = vst [vmem:[#allocation3 + $0x338] sm:$0xf] %v9142
        %9229 = vst [vmem:[#allocation3 + $0x35c] sm:$0xf] %v9145
        %9230 = vst [vmem:[#allocation3 + $0x380] sm:$0xf] %v9149
        %9231 = vst [vmem:[#allocation3 + $0x3a4] sm:$0xf] %v9152
        %9232 = vst [vmem:[#allocation3 + $0x3c8] sm:$0xf] %v9156
        %9233 = vst [vmem:[#allocation3 + $0x3ec] sm:$0xf] %v9159
        %9234 = vst [vmem:[#allocation3 + $0x410] sm:$0xf] %v9163
        %9235 = vst [vmem:[#allocation3 + $0x434] sm:$0xf] %v9166
        %9236 = vst [vmem:[#allocation3 + $0x458] sm:$0xf] %v9170
        %9237 = vst [vmem:[#allocation3 + $0x47c] sm:$0xf] %v9173
        %v9238 = vld [vmem:[#allocation3] sm:$0xff]
        %v9239 = vld [vmem:[#allocation3 + $0x8] sm:$0xff]
        %v9240 = vld [vmem:[#allocation3 + $0x10] sm:$0xff]
        %v9241 = vld [vmem:[#allocation3 + $0x18] sm:$0xff]
        %v9242 = vld [vmem:[#allocation3 + $0x20] sm:$0xf]
        %v9243 = vld [vmem:[#allocation3 + $0x24] sm:$0xff]
        %v9244 = vld [vmem:[#allocation3 + $0x2c] sm:$0xff]
        %v9245 = vld [vmem:[#allocation3 + $0x34] sm:$0xff]
        %v9246 = vld [vmem:[#allocation3 + $0x3c] sm:$0xff]
        %v9247 = vld [vmem:[#allocation3 + $0x44] sm:$0xf]
        %v9248 = vld [vmem:[#allocation3 + $0x48] sm:$0xff]
        %v9249 = vld [vmem:[#allocation3 + $0x50] sm:$0xff]
        %v9250 = vld [vmem:[#allocation3 + $0x58] sm:$0xff]
        %v9251 = vld [vmem:[#allocation3 + $0x60] sm:$0xff]
        %v9252 = vld [vmem:[#allocation3 + $0x68] sm:$0xf]
        %v9253 = vld [vmem:[#allocation3 + $0x6c] sm:$0xff]
        %v9254 = vld [vmem:[#allocation3 + $0x74] sm:$0xff]
        %v9255 = vld [vmem:[#allocation3 + $0x7c] sm:$0xff]
        %v9256 = vld [vmem:[#allocation3 + $0x84] sm:$0xff]
        %v9257 = vld [vmem:[#allocation3 + $0x8c] sm:$0xf]
        %v9258 = vld [vmem:[#allocation3 + $0x90] sm:$0xff]
        %v9259 = vld [vmem:[#allocation3 + $0x98] sm:$0xff]
        %v9260 = vld [vmem:[#allocation3 + $0xa0] sm:$0xff]
        %v9261 = vld [vmem:[#allocation3 + $0xa8] sm:$0xff]
        %v9262 = vld [vmem:[#allocation3 + $0xb0] sm:$0xf]
        %v9263 = vld [vmem:[#allocation3 + $0xb4] sm:$0xff]
        %v9264 = vld [vmem:[#allocation3 + $0xbc] sm:$0xff]
        %v9265 = vld [vmem:[#allocation3 + $0xc4] sm:$0xff]
        %v9266 = vld [vmem:[#allocation3 + $0xcc] sm:$0xff]
        %v9267 = vld [vmem:[#allocation3 + $0xd4] sm:$0xf]
        %v9268 = vld [vmem:[#allocation3 + $0xd8] sm:$0xff]
        %v9269 = vld [vmem:[#allocation3 + $0xe0] sm:$0xff]
        %v9270 = vld [vmem:[#allocation3 + $0xe8] sm:$0xff]
        %v9271 = vld [vmem:[#allocation3 + $0xf0] sm:$0xff]
        %v9272 = vld [vmem:[#allocation3 + $0xf8] sm:$0xf]
        %v9273 = vld [vmem:[#allocation3 + $0xfc] sm:$0xff]
        %v9274 = vld [vmem:[#allocation3 + $0x104] sm:$0xff]
        %v9275 = vld [vmem:[#allocation3 + $0x10c] sm:$0xff]
        %v9276 = vld [vmem:[#allocation3 + $0x114] sm:$0xff]
        %v9277 = vld [vmem:[#allocation3 + $0x11c] sm:$0xf]
        %v9278 = vld [vmem:[#allocation3 + $0x120] sm:$0xff]
        %v9279 = vld [vmem:[#allocation3 + $0x128] sm:$0xff]
        %v9280 = vld [vmem:[#allocation3 + $0x130] sm:$0xff]
        %v9281 = vld [vmem:[#allocation3 + $0x138] sm:$0xff]
        %v9282 = vld [vmem:[#allocation3 + $0x140] sm:$0xf]
        %v9283 = vld [vmem:[#allocation3 + $0x144] sm:$0xff]
        %v9284 = vld [vmem:[#allocation3 + $0x14c] sm:$0xff]
        %v9285 = vld [vmem:[#allocation3 + $0x154] sm:$0xff]
        %v9286 = vld [vmem:[#allocation3 + $0x15c] sm:$0xff]
        %v9287 = vld [vmem:[#allocation3 + $0x164] sm:$0xf]
        %v9288 = vld [vmem:[#allocation3 + $0x168] sm:$0xff]
        %v9289 = vld [vmem:[#allocation3 + $0x170] sm:$0xff]
        %v9290 = vld [vmem:[#allocation3 + $0x178] sm:$0xff]
        %v9291 = vld [vmem:[#allocation3 + $0x180] sm:$0xff]
        %v9292 = vld [vmem:[#allocation3 + $0x188] sm:$0xf]
        %v9293 = vld [vmem:[#allocation3 + $0x18c] sm:$0xff]
        %v9294 = vld [vmem:[#allocation3 + $0x194] sm:$0xff]
        %v9295 = vld [vmem:[#allocation3 + $0x19c] sm:$0xff]
        %v9296 = vld [vmem:[#allocation3 + $0x1a4] sm:$0xff]
        %v9297 = vld [vmem:[#allocation3 + $0x1ac] sm:$0xf]
        %v9298 = vld [vmem:[#allocation3 + $0x1b0] sm:$0xff]
        %v9299 = vld [vmem:[#allocation3 + $0x1b8] sm:$0xff]
        %v9300 = vld [vmem:[#allocation3 + $0x1c0] sm:$0xff]
        %v9301 = vld [vmem:[#allocation3 + $0x1c8] sm:$0xff]
        %v9302 = vld [vmem:[#allocation3 + $0x1d0] sm:$0xf]
        %v9303 = vld [vmem:[#allocation3 + $0x1d4] sm:$0xff]
        %v9304 = vld [vmem:[#allocation3 + $0x1dc] sm:$0xff]
        %v9305 = vld [vmem:[#allocation3 + $0x1e4] sm:$0xff]
        %v9306 = vld [vmem:[#allocation3 + $0x1ec] sm:$0xff]
        %v9307 = vld [vmem:[#allocation3 + $0x1f4] sm:$0xf]
        %v9308 = vld [vmem:[#allocation3 + $0x1f8] sm:$0xff]
        %v9309 = vld [vmem:[#allocation3 + $0x200] sm:$0xff]
        %v9310 = vld [vmem:[#allocation3 + $0x208] sm:$0xff]
        %v9311 = vld [vmem:[#allocation3 + $0x210] sm:$0xff]
        %v9312 = vld [vmem:[#allocation3 + $0x218] sm:$0xf]
        %v9313 = vld [vmem:[#allocation3 + $0x21c] sm:$0xff]
        %v9314 = vld [vmem:[#allocation3 + $0x224] sm:$0xff]
        %v9315 = vld [vmem:[#allocation3 + $0x22c] sm:$0xff]
        %v9316 = vld [vmem:[#allocation3 + $0x234] sm:$0xff]
        %v9317 = vld [vmem:[#allocation3 + $0x23c] sm:$0xf]
        %v9318 = vld [vmem:[#allocation3 + $0x240] sm:$0xff]
        %v9319 = vld [vmem:[#allocation3 + $0x248] sm:$0xff]
        %v9320 = vld [vmem:[#allocation3 + $0x250] sm:$0xff]
        %v9321 = vld [vmem:[#allocation3 + $0x258] sm:$0xff]
        %v9322 = vld [vmem:[#allocation3 + $0x260] sm:$0xf]
        %v9323 = vld [vmem:[#allocation3 + $0x264] sm:$0xff]
        %v9324 = vld [vmem:[#allocation3 + $0x26c] sm:$0xff]
        %v9325 = vld [vmem:[#allocation3 + $0x274] sm:$0xff]
        %v9326 = vld [vmem:[#allocation3 + $0x27c] sm:$0xff]
        %v9327 = vld [vmem:[#allocation3 + $0x284] sm:$0xf]
        %v9328 = vld [vmem:[#allocation3 + $0x288] sm:$0xff]
        %v9329 = vld [vmem:[#allocation3 + $0x290] sm:$0xff]
        %v9330 = vld [vmem:[#allocation3 + $0x298] sm:$0xff]
        %v9331 = vld [vmem:[#allocation3 + $0x2a0] sm:$0xff]
        %v9332 = vld [vmem:[#allocation3 + $0x2a8] sm:$0xf]
        %v9333 = vld [vmem:[#allocation3 + $0x2ac] sm:$0xff]
        %v9334 = vld [vmem:[#allocation3 + $0x2b4] sm:$0xff]
        %v9335 = vld [vmem:[#allocation3 + $0x2bc] sm:$0xff]
        %v9336 = vld [vmem:[#allocation3 + $0x2c4] sm:$0xff]
        %v9337 = vld [vmem:[#allocation3 + $0x2cc] sm:$0xf]
        %v9338 = vld [vmem:[#allocation3 + $0x2d0] sm:$0xff]
        %v9339 = vld [vmem:[#allocation3 + $0x2d8] sm:$0xff]
        %v9340 = vld [vmem:[#allocation3 + $0x2e0] sm:$0xff]
        %v9341 = vld [vmem:[#allocation3 + $0x2e8] sm:$0xff]
        %v9342 = vld [vmem:[#allocation3 + $0x2f0] sm:$0xf]
        %v9343 = vld [vmem:[#allocation3 + $0x2f4] sm:$0xff]
        %v9344 = vld [vmem:[#allocation3 + $0x2fc] sm:$0xff]
        %v9345 = vld [vmem:[#allocation3 + $0x304] sm:$0xff]
        %v9346 = vld [vmem:[#allocation3 + $0x30c] sm:$0xff]
        %v9347 = vld [vmem:[#allocation3 + $0x314] sm:$0xf]
        %v9348 = vld [vmem:[#allocation3 + $0x318] sm:$0xff]
        %v9349 = vld [vmem:[#allocation3 + $0x320] sm:$0xff]
        %v9350 = vld [vmem:[#allocation3 + $0x328] sm:$0xff]
        %v9351 = vld [vmem:[#allocation3 + $0x330] sm:$0xff]
        %v9352 = vld [vmem:[#allocation3 + $0x338] sm:$0xf]
        %v9353 = vld [vmem:[#allocation3 + $0x33c] sm:$0xff]
        %v9354 = vld [vmem:[#allocation3 + $0x344] sm:$0xff]
        %v9355 = vld [vmem:[#allocation3 + $0x34c] sm:$0xff]
        %v9356 = vld [vmem:[#allocation3 + $0x354] sm:$0xff]
        %v9357 = vld [vmem:[#allocation3 + $0x35c] sm:$0xf]
        %v9358 = vld [vmem:[#allocation3 + $0x360] sm:$0xff]
        %v9359 = vld [vmem:[#allocation3 + $0x368] sm:$0xff]
        %v9360 = vld [vmem:[#allocation3 + $0x370] sm:$0xff]
        %v9361 = vld [vmem:[#allocation3 + $0x378] sm:$0xff]
        %v9362 = vld [vmem:[#allocation3 + $0x380] sm:$0xf]
        %v9363 = vld [vmem:[#allocation3 + $0x384] sm:$0xff]
        %v9364 = vld [vmem:[#allocation3 + $0x38c] sm:$0xff]
        %v9365 = vld [vmem:[#allocation3 + $0x394] sm:$0xff]
        %v9366 = vld [vmem:[#allocation3 + $0x39c] sm:$0xff]
        %v9367 = vld [vmem:[#allocation3 + $0x3a4] sm:$0xf]
        %v9368 = vld [vmem:[#allocation3 + $0x3a8] sm:$0xff]
        %v9369 = vld [vmem:[#allocation3 + $0x3b0] sm:$0xff]
        %v9370 = vld [vmem:[#allocation3 + $0x3b8] sm:$0xff]
        %v9371 = vld [vmem:[#allocation3 + $0x3c0] sm:$0xff]
        %v9372 = vld [vmem:[#allocation3 + $0x3c8] sm:$0xf]
        %v9373 = vld [vmem:[#allocation3 + $0x3cc] sm:$0xff]
        %v9374 = vld [vmem:[#allocation3 + $0x3d4] sm:$0xff]
        %v9375 = vld [vmem:[#allocation3 + $0x3dc] sm:$0xff]
        %v9376 = vld [vmem:[#allocation3 + $0x3e4] sm:$0xff]
        %v9377 = vld [vmem:[#allocation3 + $0x3ec] sm:$0xf]
        %v9378 = vld [vmem:[#allocation3 + $0x3f0] sm:$0xff]
        %v9379 = vld [vmem:[#allocation3 + $0x3f8] sm:$0xff]
        %v9380 = vld [vmem:[#allocation3 + $0x400] sm:$0xff]
        %v9381 = vld [vmem:[#allocation3 + $0x408] sm:$0xff]
        %v9382 = vld [vmem:[#allocation3 + $0x410] sm:$0xf]
        %v9383 = vld [vmem:[#allocation3 + $0x414] sm:$0xff]
        %v9384 = vld [vmem:[#allocation3 + $0x41c] sm:$0xff]
        %v9385 = vld [vmem:[#allocation3 + $0x424] sm:$0xff]
        %v9386 = vld [vmem:[#allocation3 + $0x42c] sm:$0xff]
        %v9387 = vld [vmem:[#allocation3 + $0x434] sm:$0xf]
        %v9388 = vld [vmem:[#allocation3 + $0x438] sm:$0xff]
        %v9389 = vld [vmem:[#allocation3 + $0x440] sm:$0xff]
        %v9390 = vld [vmem:[#allocation3 + $0x448] sm:$0xff]
        %v9391 = vld [vmem:[#allocation3 + $0x450] sm:$0xff]
        %v9392 = vld [vmem:[#allocation3 + $0x458] sm:$0xf]
        %v9393 = vld [vmem:[#allocation3 + $0x45c] sm:$0xff]
        %v9394 = vld [vmem:[#allocation3 + $0x464] sm:$0xff]
        %v9395 = vld [vmem:[#allocation3 + $0x46c] sm:$0xff]
        %v9396 = vld [vmem:[#allocation3 + $0x474] sm:$0xff]
        %v9397 = vld [vmem:[#allocation3 + $0x47c] sm:$0xf]
        %v9398 = vld [vmem:[%s2] sm:$0xf]
        %v9399 = vld [vmem:[%s2 + $0x4] sm:$0xf]
        %v9400 = vld [vmem:[%s2 + $0x8] sm:$0xf]
        %v9401 = vld [vmem:[%s2 + $0xc] sm:$0xf]
        %v9402 = vld [vmem:[%s2 + $0x10] sm:$0xf]
        %v9403 = vld [vmem:[%s2 + $0x14] sm:$0xf]
        %v9404 = vld [vmem:[%s2 + $0x18] sm:$0xf]
        %v9405 = vld [vmem:[%s2 + $0x1c] sm:$0xf]
        %v9406 = vld [vmem:[%s2 + $0x20] sm:$0xf]
        %v9407 = vld [vmem:[%s2 + $0x24] sm:$0xf]
        %v9408 = vld [vmem:[%s2 + $0x28] sm:$0xf]
        %v9409 = vld [vmem:[%s2 + $0x2c] sm:$0xf]
        %v9410 = vld [vmem:[%s2 + $0x30] sm:$0xf]
        %v9411 = vld [vmem:[%s2 + $0x34] sm:$0xf]
        %v9412 = vld [vmem:[%s2 + $0x38] sm:$0xf]
        %v9413 = vld [vmem:[%s2 + $0x3c] sm:$0xf]
        %v9414 = vld [vmem:[%s2 + $0x40] sm:$0xf]
        %v9415 = vld [vmem:[%s2 + $0x44] sm:$0xf]
        %v9416 = vld [vmem:[%s2 + $0x48] sm:$0xf]
        %v9417 = vld [vmem:[%s2 + $0x4c] sm:$0xf]
        %v9418 = vld [vmem:[%s2 + $0x50] sm:$0xf]
        %v9419 = vld [vmem:[%s2 + $0x54] sm:$0xf]
        %v9420 = vld [vmem:[%s2 + $0x58] sm:$0xf]
        %v9421 = vld [vmem:[%s2 + $0x5c] sm:$0xf]
        %v9422 = vld [vmem:[%s2 + $0x60] sm:$0xf]
        %v9423 = vld [vmem:[%s2 + $0x64] sm:$0xf]
        %v9424 = vld [vmem:[%s2 + $0x68] sm:$0xf]
        %v9425 = vld [vmem:[%s2 + $0x6c] sm:$0xf]
        %v9426 = vld [vmem:[%s2 + $0x70] sm:$0xf]
        %v9427 = vld [vmem:[%s2 + $0x74] sm:$0xf]
        %v9428 = vld [vmem:[%s2 + $0x78] sm:$0xf]
        %v9429 = vld [vmem:[%s2 + $0x7c] sm:$0xf]
        %v9430 = vld [vmem:[%s2 + $0x80] sm:$0xf]
        %v9431 = vld [vmem:[%s2 + $0x84] sm:$0xf]
        %v9432 = vld [vmem:[%s2 + $0x88] sm:$0xf]
        %v9433 = vld [vmem:[%s2 + $0x8c] sm:$0xf]
        %v9434 = vld [vmem:[%s2 + $0x90] sm:$0xf]
        %v9435 = vld [vmem:[%s2 + $0x94] sm:$0xf]
        %v9436 = vld [vmem:[%s2 + $0x98] sm:$0xf]
        %v9437 = vld [vmem:[%s2 + $0x9c] sm:$0xf]
        %v9438 = vld [vmem:[%s2 + $0xa0] sm:$0xf]
        %v9439 = vld [vmem:[%s2 + $0xa4] sm:$0xf]
        %v9440 = vld [vmem:[%s2 + $0xa8] sm:$0xf]
        %v9441 = vld [vmem:[%s2 + $0xac] sm:$0xf]
        %v9442 = vld [vmem:[%s2 + $0xb0] sm:$0xf]
        %v9443 = vld [vmem:[%s2 + $0xb4] sm:$0xf]
        %v9444 = vld [vmem:[%s2 + $0xb8] sm:$0xf]
        %v9445 = vld [vmem:[%s2 + $0xbc] sm:$0xf]
        %v9446 = vld [vmem:[%s2 + $0xc0] sm:$0xf]
        %v9447 = vld [vmem:[%s2 + $0xc4] sm:$0xf]
        %v9448 = vld [vmem:[%s2 + $0xc8] sm:$0xf]
        %v9449 = vld [vmem:[%s2 + $0xcc] sm:$0xf]
        %v9450 = vld [vmem:[%s2 + $0xd0] sm:$0xf]
        %v9451 = vld [vmem:[%s2 + $0xd4] sm:$0xf]
        %v9452 = vld [vmem:[%s2 + $0xd8] sm:$0xf]
        %v9453 = vld [vmem:[%s2 + $0xdc] sm:$0xf]
        %v9454 = vld [vmem:[%s2 + $0xe0] sm:$0xf]
        %v9455 = vld [vmem:[%s2 + $0xe4] sm:$0xf]
        %v9456 = vld [vmem:[%s2 + $0xe8] sm:$0xf]
        %v9457 = vld [vmem:[%s2 + $0xec] sm:$0xf]
        %v9458 = vld [vmem:[%s2 + $0xf0] sm:$0xf]
        %v9459 = vld [vmem:[%s2 + $0xf4] sm:$0xf]
        %v9460 = vld [vmem:[%s2 + $0xf8] sm:$0xf]
        %v9461 = vld [vmem:[%s2 + $0xfc] sm:$0xf]
        %v9462 = vld [vmem:[%s2 + $0x100] sm:$0xf]
        %v9463 = vld [vmem:[%s2 + $0x104] sm:$0xf]
        %v9464 = vld [vmem:[%s2 + $0x108] sm:$0xf]
        %v9465 = vld [vmem:[%s2 + $0x10c] sm:$0xf]
        %v9466 = vld [vmem:[%s2 + $0x110] sm:$0xf]
        %v9467 = vld [vmem:[%s2 + $0x114] sm:$0xf]
        %v9468 = vld [vmem:[%s2 + $0x118] sm:$0xf]
        %v9469 = vld [vmem:[%s2 + $0x11c] sm:$0xf]
        %v9470 = vld [vmem:[%s2 + $0x120] sm:$0xf]
        %v9471 = vld [vmem:[%s2 + $0x124] sm:$0xf]
        %v9472 = vld [vmem:[%s2 + $0x128] sm:$0xf]
        %v9473 = vld [vmem:[%s2 + $0x12c] sm:$0xf]
        %v9474 = vld [vmem:[%s2 + $0x130] sm:$0xf]
        %v9475 = vld [vmem:[%s2 + $0x134] sm:$0xf]
        %v9476 = vld [vmem:[%s2 + $0x138] sm:$0xf]
        %v9477 = vld [vmem:[%s2 + $0x13c] sm:$0xf]
        %v9478 = vld [vmem:[%s2 + $0x140] sm:$0xf]
        %v9479 = vld [vmem:[%s2 + $0x144] sm:$0xf]
        %v9480 = vld [vmem:[%s2 + $0x148] sm:$0xf]
        %v9481 = vld [vmem:[%s2 + $0x14c] sm:$0xf]
        %v9482 = vld [vmem:[%s2 + $0x150] sm:$0xf]
        %v9483 = vld [vmem:[%s2 + $0x154] sm:$0xf]
        %v9484 = vld [vmem:[%s2 + $0x158] sm:$0xf]
        %v9485 = vld [vmem:[%s2 + $0x15c] sm:$0xf]
        %v9486 = vld [vmem:[%s2 + $0x160] sm:$0xf]
        %v9487 = vld [vmem:[%s2 + $0x164] sm:$0xf]
        %v9488 = vld [vmem:[%s2 + $0x168] sm:$0xf]
        %v9489 = vld [vmem:[%s2 + $0x16c] sm:$0xf]
        %v9490 = vld [vmem:[%s2 + $0x170] sm:$0xf]
        %v9491 = vld [vmem:[%s2 + $0x174] sm:$0xf]
        %v9492 = vld [vmem:[%s2 + $0x178] sm:$0xf]
        %v9493 = vld [vmem:[%s2 + $0x17c] sm:$0xf]
        %v9494 = vld [vmem:[%s2 + $0x180] sm:$0xf]
        %v9495 = vld [vmem:[%s2 + $0x184] sm:$0xf]
        %v9496 = vld [vmem:[%s2 + $0x188] sm:$0xf]
        %v9497 = vld [vmem:[%s2 + $0x18c] sm:$0xf]
        %v9498 = vld [vmem:[%s2 + $0x190] sm:$0xf]
        %v9499 = vld [vmem:[%s2 + $0x194] sm:$0xf]
        %v9500 = vld [vmem:[%s2 + $0x198] sm:$0xf]
        %v9501 = vld [vmem:[%s2 + $0x19c] sm:$0xf]
        %v9502 = vld [vmem:[%s2 + $0x1a0] sm:$0xf]
        %v9503 = vld [vmem:[%s2 + $0x1a4] sm:$0xf]
        %v9504 = vld [vmem:[%s2 + $0x1a8] sm:$0xf]
        %v9505 = vld [vmem:[%s2 + $0x1ac] sm:$0xf]
        %v9506 = vld [vmem:[%s2 + $0x1b0] sm:$0xf]
        %v9507 = vld [vmem:[%s2 + $0x1b4] sm:$0xf]
        %v9508 = vld [vmem:[%s2 + $0x1b8] sm:$0xf]
        %v9509 = vld [vmem:[%s2 + $0x1bc] sm:$0xf]
        %v9510 = vld [vmem:[%s2 + $0x1c0] sm:$0xf]
        %v9511 = vld [vmem:[%s2 + $0x1c4] sm:$0xf]
        %v9512 = vld [vmem:[%s2 + $0x1c8] sm:$0xf]
        %v9513 = vld [vmem:[%s2 + $0x1cc] sm:$0xf]
        %v9514 = vld [vmem:[%s2 + $0x1d0] sm:$0xf]
        %v9515 = vld [vmem:[%s2 + $0x1d4] sm:$0xf]
        %v9516 = vld [vmem:[%s2 + $0x1d8] sm:$0xf]
        %v9517 = vld [vmem:[%s2 + $0x1dc] sm:$0xf]
        %v9518 = vld [vmem:[%s2 + $0x1e0] sm:$0xf]
        %v9519 = vld [vmem:[%s2 + $0x1e4] sm:$0xf]
        %v9520 = vld [vmem:[%s2 + $0x1e8] sm:$0xf]
        %v9521 = vld [vmem:[%s2 + $0x1ec] sm:$0xf]
        %v9522 = vld [vmem:[%s2 + $0x1f0] sm:$0xf]
        %v9523 = vld [vmem:[%s2 + $0x1f4] sm:$0xf]
        %v9524 = vld [vmem:[%s2 + $0x1f8] sm:$0xf]
        %v9525 = vld [vmem:[%s2 + $0x1fc] sm:$0xf]
        %v9526 = vld [vmem:[%s2 + $0x200] sm:$0xf]
        %v9527 = vld [vmem:[%s2 + $0x204] sm:$0xf]
        %v9528 = vld [vmem:[%s2 + $0x208] sm:$0xf]
        %v9529 = vld [vmem:[%s2 + $0x20c] sm:$0xf]
        %v9530 = vld [vmem:[%s2 + $0x210] sm:$0xf]
        %v9531 = vld [vmem:[%s2 + $0x214] sm:$0xf]
        %v9532 = vld [vmem:[%s2 + $0x218] sm:$0xf]
        %v9533 = vld [vmem:[%s2 + $0x21c] sm:$0xf]
        %v9534 = vld [vmem:[%s2 + $0x220] sm:$0xf]
        %v9535 = vld [vmem:[%s2 + $0x224] sm:$0xf]
        %v9536 = vld [vmem:[%s2 + $0x228] sm:$0xf]
        %v9537 = vld [vmem:[%s2 + $0x22c] sm:$0xf]
        %v9538 = vld [vmem:[%s2 + $0x230] sm:$0xf]
        %v9539 = vld [vmem:[%s2 + $0x234] sm:$0xf]
        %v9540 = vld [vmem:[%s2 + $0x238] sm:$0xf]
        %v9541 = vld [vmem:[%s2 + $0x23c] sm:$0xf]
        %v9702 = vunpack.c.l.b16 %v9238
        %v9703 = vunpack.c.h.b16 %v9238
        %v9704 = vunpack.c.l.b16 %v9239
        %v9705 = vunpack.c.h.b16 %v9239
        %v9706 = vunpack.c.l.b16 %v9240
        %v9707 = vunpack.c.h.b16 %v9240
        %v9708 = vunpack.c.l.b16 %v9241
        %v9709 = vunpack.c.h.b16 %v9241
        %v9710 = vunpack.c.l.b16 %v9242
        %v9711 = vunpack.c.l.b16 %v9243
        %v9712 = vunpack.c.h.b16 %v9243
        %v9713 = vunpack.c.l.b16 %v9244
        %v9714 = vunpack.c.h.b16 %v9244
        %v9715 = vunpack.c.l.b16 %v9245
        %v9716 = vunpack.c.h.b16 %v9245
        %v9717 = vunpack.c.l.b16 %v9246
        %v9718 = vunpack.c.h.b16 %v9246
        %v9719 = vunpack.c.l.b16 %v9247
        %v9720 = vunpack.c.l.b16 %v9248
        %v9721 = vunpack.c.h.b16 %v9248
        %v9722 = vunpack.c.l.b16 %v9249
        %v9723 = vunpack.c.h.b16 %v9249
        %v9724 = vunpack.c.l.b16 %v9250
        %v9725 = vunpack.c.h.b16 %v9250
        %v9726 = vunpack.c.l.b16 %v9251
        %v9727 = vunpack.c.h.b16 %v9251
        %v9728 = vunpack.c.l.b16 %v9252
        %v9729 = vunpack.c.l.b16 %v9253
        %v9730 = vunpack.c.h.b16 %v9253
        %v9731 = vunpack.c.l.b16 %v9254
        %v9732 = vunpack.c.h.b16 %v9254
        %v9733 = vunpack.c.l.b16 %v9255
        %v9734 = vunpack.c.h.b16 %v9255
        %v9735 = vunpack.c.l.b16 %v9256
        %v9736 = vunpack.c.h.b16 %v9256
        %v9737 = vunpack.c.l.b16 %v9257
        %v9738 = vunpack.c.l.b16 %v9258
        %v9739 = vunpack.c.h.b16 %v9258
        %v9740 = vunpack.c.l.b16 %v9259
        %v9741 = vunpack.c.h.b16 %v9259
        %v9742 = vunpack.c.l.b16 %v9260
        %v9743 = vunpack.c.h.b16 %v9260
        %v9744 = vunpack.c.l.b16 %v9261
        %v9745 = vunpack.c.h.b16 %v9261
        %v9746 = vunpack.c.l.b16 %v9262
        %v9747 = vunpack.c.l.b16 %v9263
        %v9748 = vunpack.c.h.b16 %v9263
        %v9749 = vunpack.c.l.b16 %v9264
        %v9750 = vunpack.c.h.b16 %v9264
        %v9751 = vunpack.c.l.b16 %v9265
        %v9752 = vunpack.c.h.b16 %v9265
        %v9753 = vunpack.c.l.b16 %v9266
        %v9754 = vunpack.c.h.b16 %v9266
        %v9755 = vunpack.c.l.b16 %v9267
        %v9756 = vunpack.c.l.b16 %v9268
        %v9757 = vunpack.c.h.b16 %v9268
        %v9758 = vunpack.c.l.b16 %v9269
        %v9759 = vunpack.c.h.b16 %v9269
        %v9760 = vunpack.c.l.b16 %v9270
        %v9761 = vunpack.c.h.b16 %v9270
        %v9762 = vunpack.c.l.b16 %v9271
        %v9763 = vunpack.c.h.b16 %v9271
        %v9764 = vunpack.c.l.b16 %v9272
        %v9765 = vunpack.c.l.b16 %v9273
        %v9766 = vunpack.c.h.b16 %v9273
        %v9767 = vunpack.c.l.b16 %v9274
        %v9768 = vunpack.c.h.b16 %v9274
        %v9769 = vunpack.c.l.b16 %v9275
        %v9770 = vunpack.c.h.b16 %v9275
        %v9771 = vunpack.c.l.b16 %v9276
        %v9772 = vunpack.c.h.b16 %v9276
        %v9773 = vunpack.c.l.b16 %v9277
        %v9774 = vunpack.c.l.b16 %v9278
        %v9775 = vunpack.c.h.b16 %v9278
        %v9776 = vunpack.c.l.b16 %v9279
        %v9777 = vunpack.c.h.b16 %v9279
        %v9778 = vunpack.c.l.b16 %v9280
        %v9779 = vunpack.c.h.b16 %v9280
        %v9780 = vunpack.c.l.b16 %v9281
        %v9781 = vunpack.c.h.b16 %v9281
        %v9782 = vunpack.c.l.b16 %v9282
        %v9783 = vunpack.c.l.b16 %v9283
        %v9784 = vunpack.c.h.b16 %v9283
        %v9785 = vunpack.c.l.b16 %v9284
        %v9786 = vunpack.c.h.b16 %v9284
        %v9787 = vunpack.c.l.b16 %v9285
        %v9788 = vunpack.c.h.b16 %v9285
        %v9789 = vunpack.c.l.b16 %v9286
        %v9790 = vunpack.c.h.b16 %v9286
        %v9791 = vunpack.c.l.b16 %v9287
        %v9792 = vunpack.c.l.b16 %v9288
        %v9793 = vunpack.c.h.b16 %v9288
        %v9794 = vunpack.c.l.b16 %v9289
        %v9795 = vunpack.c.h.b16 %v9289
        %v9796 = vunpack.c.l.b16 %v9290
        %v9797 = vunpack.c.h.b16 %v9290
        %v9798 = vunpack.c.l.b16 %v9291
        %v9799 = vunpack.c.h.b16 %v9291
        %v9800 = vunpack.c.l.b16 %v9292
        %v9801 = vunpack.c.l.b16 %v9293
        %v9802 = vunpack.c.h.b16 %v9293
        %v9803 = vunpack.c.l.b16 %v9294
        %v9804 = vunpack.c.h.b16 %v9294
        %v9805 = vunpack.c.l.b16 %v9295
        %v9806 = vunpack.c.h.b16 %v9295
        %v9807 = vunpack.c.l.b16 %v9296
        %v9808 = vunpack.c.h.b16 %v9296
        %v9809 = vunpack.c.l.b16 %v9297
        %v9810 = vunpack.c.l.b16 %v9298
        %v9811 = vunpack.c.h.b16 %v9298
        %v9812 = vunpack.c.l.b16 %v9299
        %v9813 = vunpack.c.h.b16 %v9299
        %v9814 = vunpack.c.l.b16 %v9300
        %v9815 = vunpack.c.h.b16 %v9300
        %v9816 = vunpack.c.l.b16 %v9301
        %v9817 = vunpack.c.h.b16 %v9301
        %v9818 = vunpack.c.l.b16 %v9302
        %v9819 = vunpack.c.l.b16 %v9303
        %v9820 = vunpack.c.h.b16 %v9303
        %v9821 = vunpack.c.l.b16 %v9304
        %v9822 = vunpack.c.h.b16 %v9304
        %v9823 = vunpack.c.l.b16 %v9305
        %v9824 = vunpack.c.h.b16 %v9305
        %v9825 = vunpack.c.l.b16 %v9306
        %v9826 = vunpack.c.h.b16 %v9306
        %v9827 = vunpack.c.l.b16 %v9307
        %v9828 = vunpack.c.l.b16 %v9308
        %v9829 = vunpack.c.h.b16 %v9308
        %v9830 = vunpack.c.l.b16 %v9309
        %v9831 = vunpack.c.h.b16 %v9309
        %v9832 = vunpack.c.l.b16 %v9310
        %v9833 = vunpack.c.h.b16 %v9310
        %v9834 = vunpack.c.l.b16 %v9311
        %v9835 = vunpack.c.h.b16 %v9311
        %v9836 = vunpack.c.l.b16 %v9312
        %v9837 = vunpack.c.l.b16 %v9313
        %v9838 = vunpack.c.h.b16 %v9313
        %v9839 = vunpack.c.l.b16 %v9314
        %v9840 = vunpack.c.h.b16 %v9314
        %v9841 = vunpack.c.l.b16 %v9315
        %v9842 = vunpack.c.h.b16 %v9315
        %v9843 = vunpack.c.l.b16 %v9316
        %v9844 = vunpack.c.h.b16 %v9316
        %v9845 = vunpack.c.l.b16 %v9317
        %v9846 = vunpack.c.l.b16 %v9318
        %v9847 = vunpack.c.h.b16 %v9318
        %v9848 = vunpack.c.l.b16 %v9319
        %v9849 = vunpack.c.h.b16 %v9319
        %v9850 = vunpack.c.l.b16 %v9320
        %v9851 = vunpack.c.h.b16 %v9320
        %v9852 = vunpack.c.l.b16 %v9321
        %v9853 = vunpack.c.h.b16 %v9321
        %v9854 = vunpack.c.l.b16 %v9322
        %v9855 = vunpack.c.l.b16 %v9323
        %v9856 = vunpack.c.h.b16 %v9323
        %v9857 = vunpack.c.l.b16 %v9324
        %v9858 = vunpack.c.h.b16 %v9324
        %v9859 = vunpack.c.l.b16 %v9325
        %v9860 = vunpack.c.h.b16 %v9325
        %v9861 = vunpack.c.l.b16 %v9326
        %v9862 = vunpack.c.h.b16 %v9326
        %v9863 = vunpack.c.l.b16 %v9327
        %v9864 = vunpack.c.l.b16 %v9328
        %v9865 = vunpack.c.h.b16 %v9328
        %v9866 = vunpack.c.l.b16 %v9329
        %v9867 = vunpack.c.h.b16 %v9329
        %v9868 = vunpack.c.l.b16 %v9330
        %v9869 = vunpack.c.h.b16 %v9330
        %v9870 = vunpack.c.l.b16 %v9331
        %v9871 = vunpack.c.h.b16 %v9331
        %v9872 = vunpack.c.l.b16 %v9332
        %v9873 = vunpack.c.l.b16 %v9333
        %v9874 = vunpack.c.h.b16 %v9333
        %v9875 = vunpack.c.l.b16 %v9334
        %v9876 = vunpack.c.h.b16 %v9334
        %v9877 = vunpack.c.l.b16 %v9335
        %v9878 = vunpack.c.h.b16 %v9335
        %v9879 = vunpack.c.l.b16 %v9336
        %v9880 = vunpack.c.h.b16 %v9336
        %v9881 = vunpack.c.l.b16 %v9337
        %v9882 = vunpack.c.l.b16 %v9338
        %v9883 = vunpack.c.h.b16 %v9338
        %v9884 = vunpack.c.l.b16 %v9339
        %v9885 = vunpack.c.h.b16 %v9339
        %v9886 = vunpack.c.l.b16 %v9340
        %v9887 = vunpack.c.h.b16 %v9340
        %v9888 = vunpack.c.l.b16 %v9341
        %v9889 = vunpack.c.h.b16 %v9341
        %v9890 = vunpack.c.l.b16 %v9342
        %v9891 = vunpack.c.l.b16 %v9343
        %v9892 = vunpack.c.h.b16 %v9343
        %v9893 = vunpack.c.l.b16 %v9344
        %v9894 = vunpack.c.h.b16 %v9344
        %v9895 = vunpack.c.l.b16 %v9345
        %v9896 = vunpack.c.h.b16 %v9345
        %v9897 = vunpack.c.l.b16 %v9346
        %v9898 = vunpack.c.h.b16 %v9346
        %v9899 = vunpack.c.l.b16 %v9347
        %v9900 = vunpack.c.l.b16 %v9348
        %v9901 = vunpack.c.h.b16 %v9348
        %v9902 = vunpack.c.l.b16 %v9349
        %v9903 = vunpack.c.h.b16 %v9349
        %v9904 = vunpack.c.l.b16 %v9350
        %v9905 = vunpack.c.h.b16 %v9350
        %v9906 = vunpack.c.l.b16 %v9351
        %v9907 = vunpack.c.h.b16 %v9351
        %v9908 = vunpack.c.l.b16 %v9352
        %v9909 = vunpack.c.l.b16 %v9353
        %v9910 = vunpack.c.h.b16 %v9353
        %v9911 = vunpack.c.l.b16 %v9354
        %v9912 = vunpack.c.h.b16 %v9354
        %v9913 = vunpack.c.l.b16 %v9355
        %v9914 = vunpack.c.h.b16 %v9355
        %v9915 = vunpack.c.l.b16 %v9356
        %v9916 = vunpack.c.h.b16 %v9356
        %v9917 = vunpack.c.l.b16 %v9357
        %v9918 = vunpack.c.l.b16 %v9358
        %v9919 = vunpack.c.h.b16 %v9358
        %v9920 = vunpack.c.l.b16 %v9359
        %v9921 = vunpack.c.h.b16 %v9359
        %v9922 = vunpack.c.l.b16 %v9360
        %v9923 = vunpack.c.h.b16 %v9360
        %v9924 = vunpack.c.l.b16 %v9361
        %v9925 = vunpack.c.h.b16 %v9361
        %v9926 = vunpack.c.l.b16 %v9362
        %v9927 = vunpack.c.l.b16 %v9363
        %v9928 = vunpack.c.h.b16 %v9363
        %v9929 = vunpack.c.l.b16 %v9364
        %v9930 = vunpack.c.h.b16 %v9364
        %v9931 = vunpack.c.l.b16 %v9365
        %v9932 = vunpack.c.h.b16 %v9365
        %v9933 = vunpack.c.l.b16 %v9366
        %v9934 = vunpack.c.h.b16 %v9366
        %v9935 = vunpack.c.l.b16 %v9367
        %v9936 = vunpack.c.l.b16 %v9368
        %v9937 = vunpack.c.h.b16 %v9368
        %v9938 = vunpack.c.l.b16 %v9369
        %v9939 = vunpack.c.h.b16 %v9369
        %v9940 = vunpack.c.l.b16 %v9370
        %v9941 = vunpack.c.h.b16 %v9370
        %v9942 = vunpack.c.l.b16 %v9371
        %v9943 = vunpack.c.h.b16 %v9371
        %v9944 = vunpack.c.l.b16 %v9372
        %v9945 = vunpack.c.l.b16 %v9373
        %v9946 = vunpack.c.h.b16 %v9373
        %v9947 = vunpack.c.l.b16 %v9374
        %v9948 = vunpack.c.h.b16 %v9374
        %v9949 = vunpack.c.l.b16 %v9375
        %v9950 = vunpack.c.h.b16 %v9375
        %v9951 = vunpack.c.l.b16 %v9376
        %v9952 = vunpack.c.h.b16 %v9376
        %v9953 = vunpack.c.l.b16 %v9377
        %v9954 = vunpack.c.l.b16 %v9378
        %v9955 = vunpack.c.h.b16 %v9378
        %v9956 = vunpack.c.l.b16 %v9379
        %v9957 = vunpack.c.h.b16 %v9379
        %v9958 = vunpack.c.l.b16 %v9380
        %v9959 = vunpack.c.h.b16 %v9380
        %v9960 = vunpack.c.l.b16 %v9381
        %v9961 = vunpack.c.h.b16 %v9381
        %v9962 = vunpack.c.l.b16 %v9382
        %v9963 = vunpack.c.l.b16 %v9383
        %v9964 = vunpack.c.h.b16 %v9383
        %v9965 = vunpack.c.l.b16 %v9384
        %v9966 = vunpack.c.h.b16 %v9384
        %v9967 = vunpack.c.l.b16 %v9385
        %v9968 = vunpack.c.h.b16 %v9385
        %v9969 = vunpack.c.l.b16 %v9386
        %v9970 = vunpack.c.h.b16 %v9386
        %v9971 = vunpack.c.l.b16 %v9387
        %v9972 = vunpack.c.l.b16 %v9388
        %v9973 = vunpack.c.h.b16 %v9388
        %v9974 = vunpack.c.l.b16 %v9389
        %v9975 = vunpack.c.h.b16 %v9389
        %v9976 = vunpack.c.l.b16 %v9390
        %v9977 = vunpack.c.h.b16 %v9390
        %v9978 = vunpack.c.l.b16 %v9391
        %v9979 = vunpack.c.h.b16 %v9391
        %v9980 = vunpack.c.l.b16 %v9392
        %v9981 = vunpack.c.l.b16 %v9393
        %v9982 = vunpack.c.h.b16 %v9393
        %v9983 = vunpack.c.l.b16 %v9394
        %v9984 = vunpack.c.h.b16 %v9394
        %v9985 = vunpack.c.l.b16 %v9395
        %v9986 = vunpack.c.h.b16 %v9395
        %v9987 = vunpack.c.l.b16 %v9396
        %v9988 = vunpack.c.h.b16 %v9396
        %v9989 = vunpack.c.l.b16 %v9397
        %v9990 = vpack.c.b16 %v9711, %v9702
        %v9991 = vpack.c.b16 %v9712, %v9703
        %v9992 = vpack.c.b16 %v9713, %v9704
        %v9993 = vpack.c.b16 %v9714, %v9705
        %v9994 = vpack.c.b16 %v9715, %v9706
        %v9995 = vpack.c.b16 %v9716, %v9707
        %v9996 = vpack.c.b16 %v9717, %v9708
        %v9997 = vpack.c.b16 %v9718, %v9709
        %v9998 = vpack.c.b16 %v9719, %v9710
        %v9999 = vpack.c.b16 %v9729, %v9720
        %v10000 = vpack.c.b16 %v9730, %v9721
        %v10001 = vpack.c.b16 %v9731, %v9722
        %v10002 = vpack.c.b16 %v9732, %v9723
        %v10003 = vpack.c.b16 %v9733, %v9724
        %v10004 = vpack.c.b16 %v9734, %v9725
        %v10005 = vpack.c.b16 %v9735, %v9726
        %v10006 = vpack.c.b16 %v9736, %v9727
        %v10007 = vpack.c.b16 %v9737, %v9728
        %v10008 = vpack.c.b16 %v9747, %v9738
        %v10009 = vpack.c.b16 %v9748, %v9739
        %v10010 = vpack.c.b16 %v9749, %v9740
        %v10011 = vpack.c.b16 %v9750, %v9741
        %v10012 = vpack.c.b16 %v9751, %v9742
        %v10013 = vpack.c.b16 %v9752, %v9743
        %v10014 = vpack.c.b16 %v9753, %v9744
        %v10015 = vpack.c.b16 %v9754, %v9745
        %v10016 = vpack.c.b16 %v9755, %v9746
        %v10017 = vpack.c.b16 %v9765, %v9756
        %v10018 = vpack.c.b16 %v9766, %v9757
        %v10019 = vpack.c.b16 %v9767, %v9758
        %v10020 = vpack.c.b16 %v9768, %v9759
        %v10021 = vpack.c.b16 %v9769, %v9760
        %v10022 = vpack.c.b16 %v9770, %v9761
        %v10023 = vpack.c.b16 %v9771, %v9762
        %v10024 = vpack.c.b16 %v9772, %v9763
        %v10025 = vpack.c.b16 %v9773, %v9764
        %v10026 = vpack.c.b16 %v9783, %v9774
        %v10027 = vpack.c.b16 %v9784, %v9775
        %v10028 = vpack.c.b16 %v9785, %v9776
        %v10029 = vpack.c.b16 %v9786, %v9777
        %v10030 = vpack.c.b16 %v9787, %v9778
        %v10031 = vpack.c.b16 %v9788, %v9779
        %v10032 = vpack.c.b16 %v9789, %v9780
        %v10033 = vpack.c.b16 %v9790, %v9781
        %v10034 = vpack.c.b16 %v9791, %v9782
        %v10035 = vpack.c.b16 %v9801, %v9792
        %v10036 = vpack.c.b16 %v9802, %v9793
        %v10037 = vpack.c.b16 %v9803, %v9794
        %v10038 = vpack.c.b16 %v9804, %v9795
        %v10039 = vpack.c.b16 %v9805, %v9796
        %v10040 = vpack.c.b16 %v9806, %v9797
        %v10041 = vpack.c.b16 %v9807, %v9798
        %v10042 = vpack.c.b16 %v9808, %v9799
        %v10043 = vpack.c.b16 %v9809, %v9800
        %v10044 = vpack.c.b16 %v9819, %v9810
        %v10045 = vpack.c.b16 %v9820, %v9811
        %v10046 = vpack.c.b16 %v9821, %v9812
        %v10047 = vpack.c.b16 %v9822, %v9813
        %v10048 = vpack.c.b16 %v9823, %v9814
        %v10049 = vpack.c.b16 %v9824, %v9815
        %v10050 = vpack.c.b16 %v9825, %v9816
        %v10051 = vpack.c.b16 %v9826, %v9817
        %v10052 = vpack.c.b16 %v9827, %v9818
        %v10053 = vpack.c.b16 %v9837, %v9828
        %v10054 = vpack.c.b16 %v9838, %v9829
        %v10055 = vpack.c.b16 %v9839, %v9830
        %v10056 = vpack.c.b16 %v9840, %v9831
        %v10057 = vpack.c.b16 %v9841, %v9832
        %v10058 = vpack.c.b16 %v9842, %v9833
        %v10059 = vpack.c.b16 %v9843, %v9834
        %v10060 = vpack.c.b16 %v9844, %v9835
        %v10061 = vpack.c.b16 %v9845, %v9836
        %v10062 = vpack.c.b16 %v9855, %v9846
        %v10063 = vpack.c.b16 %v9856, %v9847
        %v10064 = vpack.c.b16 %v9857, %v9848
        %v10065 = vpack.c.b16 %v9858, %v9849
        %v10066 = vpack.c.b16 %v9859, %v9850
        %v10067 = vpack.c.b16 %v9860, %v9851
        %v10068 = vpack.c.b16 %v9861, %v9852
        %v10069 = vpack.c.b16 %v9862, %v9853
        %v10070 = vpack.c.b16 %v9863, %v9854
        %v10071 = vpack.c.b16 %v9873, %v9864
        %v10072 = vpack.c.b16 %v9874, %v9865
        %v10073 = vpack.c.b16 %v9875, %v9866
        %v10074 = vpack.c.b16 %v9876, %v9867
        %v10075 = vpack.c.b16 %v9877, %v9868
        %v10076 = vpack.c.b16 %v9878, %v9869
        %v10077 = vpack.c.b16 %v9879, %v9870
        %v10078 = vpack.c.b16 %v9880, %v9871
        %v10079 = vpack.c.b16 %v9881, %v9872
        %v10080 = vpack.c.b16 %v9891, %v9882
        %v10081 = vpack.c.b16 %v9892, %v9883
        %v10082 = vpack.c.b16 %v9893, %v9884
        %v10083 = vpack.c.b16 %v9894, %v9885
        %v10084 = vpack.c.b16 %v9895, %v9886
        %v10085 = vpack.c.b16 %v9896, %v9887
        %v10086 = vpack.c.b16 %v9897, %v9888
        %v10087 = vpack.c.b16 %v9898, %v9889
        %v10088 = vpack.c.b16 %v9899, %v9890
        %v10089 = vpack.c.b16 %v9909, %v9900
        %v10090 = vpack.c.b16 %v9910, %v9901
        %v10091 = vpack.c.b16 %v9911, %v9902
        %v10092 = vpack.c.b16 %v9912, %v9903
        %v10093 = vpack.c.b16 %v9913, %v9904
        %v10094 = vpack.c.b16 %v9914, %v9905
        %v10095 = vpack.c.b16 %v9915, %v9906
        %v10096 = vpack.c.b16 %v9916, %v9907
        %v10097 = vpack.c.b16 %v9917, %v9908
        %v10098 = vpack.c.b16 %v9927, %v9918
        %v10099 = vpack.c.b16 %v9928, %v9919
        %v10100 = vpack.c.b16 %v9929, %v9920
        %v10101 = vpack.c.b16 %v9930, %v9921
        %v10102 = vpack.c.b16 %v9931, %v9922
        %v10103 = vpack.c.b16 %v9932, %v9923
        %v10104 = vpack.c.b16 %v9933, %v9924
        %v10105 = vpack.c.b16 %v9934, %v9925
        %v10106 = vpack.c.b16 %v9935, %v9926
        %v10107 = vpack.c.b16 %v9945, %v9936
        %v10108 = vpack.c.b16 %v9946, %v9937
        %v10109 = vpack.c.b16 %v9947, %v9938
        %v10110 = vpack.c.b16 %v9948, %v9939
        %v10111 = vpack.c.b16 %v9949, %v9940
        %v10112 = vpack.c.b16 %v9950, %v9941
        %v10113 = vpack.c.b16 %v9951, %v9942
        %v10114 = vpack.c.b16 %v9952, %v9943
        %v10115 = vpack.c.b16 %v9953, %v9944
        %v10116 = vpack.c.b16 %v9963, %v9954
        %v10117 = vpack.c.b16 %v9964, %v9955
        %v10118 = vpack.c.b16 %v9965, %v9956
        %v10119 = vpack.c.b16 %v9966, %v9957
        %v10120 = vpack.c.b16 %v9967, %v9958
        %v10121 = vpack.c.b16 %v9968, %v9959
        %v10122 = vpack.c.b16 %v9969, %v9960
        %v10123 = vpack.c.b16 %v9970, %v9961
        %v10124 = vpack.c.b16 %v9971, %v9962
        %v10125 = vpack.c.b16 %v9981, %v9972
        %v10126 = vpack.c.b16 %v9982, %v9973
        %v10127 = vpack.c.b16 %v9983, %v9974
        %v10128 = vpack.c.b16 %v9984, %v9975
        %v10129 = vpack.c.b16 %v9985, %v9976
        %v10130 = vpack.c.b16 %v9986, %v9977
        %v10131 = vpack.c.b16 %v9987, %v9978
        %v10132 = vpack.c.b16 %v9988, %v9979
        %v10133 = vpack.c.b16 %v9989, %v9980
        %v10422 = vunpack.c.l.b16 %v9398
        %v10423 = vunpack.c.l.b16 %v9399
        %v10424 = vunpack.c.l.b16 %v9400
        %v10425 = vunpack.c.l.b16 %v9401
        %v10426 = vunpack.c.l.b16 %v9402
        %v10427 = vunpack.c.l.b16 %v9403
        %v10428 = vunpack.c.l.b16 %v9404
        %v10429 = vunpack.c.l.b16 %v9405
        %v10430 = vunpack.c.l.b16 %v9406
        %v10431 = vunpack.c.l.b16 %v9407
        %v10432 = vunpack.c.l.b16 %v9408
        %v10433 = vunpack.c.l.b16 %v9409
        %v10434 = vunpack.c.l.b16 %v9410
        %v10435 = vunpack.c.l.b16 %v9411
        %v10436 = vunpack.c.l.b16 %v9412
        %v10437 = vunpack.c.l.b16 %v9413
        %v10438 = vunpack.c.l.b16 %v9414
        %v10439 = vunpack.c.l.b16 %v9415
        %v10440 = vunpack.c.l.b16 %v9416
        %v10441 = vunpack.c.l.b16 %v9417
        %v10442 = vunpack.c.l.b16 %v9418
        %v10443 = vunpack.c.l.b16 %v9419
        %v10444 = vunpack.c.l.b16 %v9420
        %v10445 = vunpack.c.l.b16 %v9421
        %v10446 = vunpack.c.l.b16 %v9422
        %v10447 = vunpack.c.l.b16 %v9423
        %v10448 = vunpack.c.l.b16 %v9424
        %v10449 = vunpack.c.l.b16 %v9425
        %v10450 = vunpack.c.l.b16 %v9426
        %v10451 = vunpack.c.l.b16 %v9427
        %v10452 = vunpack.c.l.b16 %v9428
        %v10453 = vunpack.c.l.b16 %v9429
        %v10454 = vunpack.c.l.b16 %v9430
        %v10455 = vunpack.c.l.b16 %v9431
        %v10456 = vunpack.c.l.b16 %v9432
        %v10457 = vunpack.c.l.b16 %v9433
        %v10458 = vunpack.c.l.b16 %v9434
        %v10459 = vunpack.c.l.b16 %v9435
        %v10460 = vunpack.c.l.b16 %v9436
        %v10461 = vunpack.c.l.b16 %v9437
        %v10462 = vunpack.c.l.b16 %v9438
        %v10463 = vunpack.c.l.b16 %v9439
        %v10464 = vunpack.c.l.b16 %v9440
        %v10465 = vunpack.c.l.b16 %v9441
        %v10466 = vunpack.c.l.b16 %v9442
        %v10467 = vunpack.c.l.b16 %v9443
        %v10468 = vunpack.c.l.b16 %v9444
        %v10469 = vunpack.c.l.b16 %v9445
        %v10470 = vunpack.c.l.b16 %v9446
        %v10471 = vunpack.c.l.b16 %v9447
        %v10472 = vunpack.c.l.b16 %v9448
        %v10473 = vunpack.c.l.b16 %v9449
        %v10474 = vunpack.c.l.b16 %v9450
        %v10475 = vunpack.c.l.b16 %v9451
        %v10476 = vunpack.c.l.b16 %v9452
        %v10477 = vunpack.c.l.b16 %v9453
        %v10478 = vunpack.c.l.b16 %v9454
        %v10479 = vunpack.c.l.b16 %v9455
        %v10480 = vunpack.c.l.b16 %v9456
        %v10481 = vunpack.c.l.b16 %v9457
        %v10482 = vunpack.c.l.b16 %v9458
        %v10483 = vunpack.c.l.b16 %v9459
        %v10484 = vunpack.c.l.b16 %v9460
        %v10485 = vunpack.c.l.b16 %v9461
        %v10486 = vunpack.c.l.b16 %v9462
        %v10487 = vunpack.c.l.b16 %v9463
        %v10488 = vunpack.c.l.b16 %v9464
        %v10489 = vunpack.c.l.b16 %v9465
        %v10490 = vunpack.c.l.b16 %v9466
        %v10491 = vunpack.c.l.b16 %v9467
        %v10492 = vunpack.c.l.b16 %v9468
        %v10493 = vunpack.c.l.b16 %v9469
        %v10494 = vunpack.c.l.b16 %v9470
        %v10495 = vunpack.c.l.b16 %v9471
        %v10496 = vunpack.c.l.b16 %v9472
        %v10497 = vunpack.c.l.b16 %v9473
        %v10498 = vunpack.c.l.b16 %v9474
        %v10499 = vunpack.c.l.b16 %v9475
        %v10500 = vunpack.c.l.b16 %v9476
        %v10501 = vunpack.c.l.b16 %v9477
        %v10502 = vunpack.c.l.b16 %v9478
        %v10503 = vunpack.c.l.b16 %v9479
        %v10504 = vunpack.c.l.b16 %v9480
        %v10505 = vunpack.c.l.b16 %v9481
        %v10506 = vunpack.c.l.b16 %v9482
        %v10507 = vunpack.c.l.b16 %v9483
        %v10508 = vunpack.c.l.b16 %v9484
        %v10509 = vunpack.c.l.b16 %v9485
        %v10510 = vunpack.c.l.b16 %v9486
        %v10511 = vunpack.c.l.b16 %v9487
        %v10512 = vunpack.c.l.b16 %v9488
        %v10513 = vunpack.c.l.b16 %v9489
        %v10514 = vunpack.c.l.b16 %v9490
        %v10515 = vunpack.c.l.b16 %v9491
        %v10516 = vunpack.c.l.b16 %v9492
        %v10517 = vunpack.c.l.b16 %v9493
        %v10518 = vunpack.c.l.b16 %v9494
        %v10519 = vunpack.c.l.b16 %v9495
        %v10520 = vunpack.c.l.b16 %v9496
        %v10521 = vunpack.c.l.b16 %v9497
        %v10522 = vunpack.c.l.b16 %v9498
        %v10523 = vunpack.c.l.b16 %v9499
        %v10524 = vunpack.c.l.b16 %v9500
        %v10525 = vunpack.c.l.b16 %v9501
        %v10526 = vunpack.c.l.b16 %v9502
        %v10527 = vunpack.c.l.b16 %v9503
        %v10528 = vunpack.c.l.b16 %v9504
        %v10529 = vunpack.c.l.b16 %v9505
        %v10530 = vunpack.c.l.b16 %v9506
        %v10531 = vunpack.c.l.b16 %v9507
        %v10532 = vunpack.c.l.b16 %v9508
        %v10533 = vunpack.c.l.b16 %v9509
        %v10534 = vunpack.c.l.b16 %v9510
        %v10535 = vunpack.c.l.b16 %v9511
        %v10536 = vunpack.c.l.b16 %v9512
        %v10537 = vunpack.c.l.b16 %v9513
        %v10538 = vunpack.c.l.b16 %v9514
        %v10539 = vunpack.c.l.b16 %v9515
        %v10540 = vunpack.c.l.b16 %v9516
        %v10541 = vunpack.c.l.b16 %v9517
        %v10542 = vunpack.c.l.b16 %v9518
        %v10543 = vunpack.c.l.b16 %v9519
        %v10544 = vunpack.c.l.b16 %v9520
        %v10545 = vunpack.c.l.b16 %v9521
        %v10546 = vunpack.c.l.b16 %v9522
        %v10547 = vunpack.c.l.b16 %v9523
        %v10548 = vunpack.c.l.b16 %v9524
        %v10549 = vunpack.c.l.b16 %v9525
        %v10550 = vunpack.c.l.b16 %v9526
        %v10551 = vunpack.c.l.b16 %v9527
        %v10552 = vunpack.c.l.b16 %v9528
        %v10553 = vunpack.c.l.b16 %v9529
        %v10554 = vunpack.c.l.b16 %v9530
        %v10555 = vunpack.c.l.b16 %v9531
        %v10556 = vunpack.c.l.b16 %v9532
        %v10557 = vunpack.c.l.b16 %v9533
        %v10558 = vunpack.c.l.b16 %v9534
        %v10559 = vunpack.c.l.b16 %v9535
        %v10560 = vunpack.c.l.b16 %v9536
        %v10561 = vunpack.c.l.b16 %v9537
        %v10562 = vunpack.c.l.b16 %v9538
        %v10563 = vunpack.c.l.b16 %v9539
        %v10564 = vunpack.c.l.b16 %v9540
        %v10565 = vunpack.c.l.b16 %v9541
        %v10566 = vpack.c.b16 %v10423, %v10422
        %v10567 = vpack.c.b16 %v10425, %v10424
        %v10568 = vpack.c.b16 %v10427, %v10426
        %v10569 = vpack.c.b16 %v10429, %v10428
        %v10570 = vpack.c.b16 %v10431, %v10430
        %v10571 = vpack.c.b16 %v10433, %v10432
        %v10572 = vpack.c.b16 %v10435, %v10434
        %v10573 = vpack.c.b16 %v10437, %v10436
        %v10574 = vpack.c.b16 %v10439, %v10438
        %v10575 = vpack.c.b16 %v10441, %v10440
        %v10576 = vpack.c.b16 %v10443, %v10442
        %v10577 = vpack.c.b16 %v10445, %v10444
        %v10578 = vpack.c.b16 %v10447, %v10446
        %v10579 = vpack.c.b16 %v10449, %v10448
        %v10580 = vpack.c.b16 %v10451, %v10450
        %v10581 = vpack.c.b16 %v10453, %v10452
        %v10582 = vpack.c.b16 %v10455, %v10454
        %v10583 = vpack.c.b16 %v10457, %v10456
        %v10584 = vpack.c.b16 %v10459, %v10458
        %v10585 = vpack.c.b16 %v10461, %v10460
        %v10586 = vpack.c.b16 %v10463, %v10462
        %v10587 = vpack.c.b16 %v10465, %v10464
        %v10588 = vpack.c.b16 %v10467, %v10466
        %v10589 = vpack.c.b16 %v10469, %v10468
        %v10590 = vpack.c.b16 %v10471, %v10470
        %v10591 = vpack.c.b16 %v10473, %v10472
        %v10592 = vpack.c.b16 %v10475, %v10474
        %v10593 = vpack.c.b16 %v10477, %v10476
        %v10594 = vpack.c.b16 %v10479, %v10478
        %v10595 = vpack.c.b16 %v10481, %v10480
        %v10596 = vpack.c.b16 %v10483, %v10482
        %v10597 = vpack.c.b16 %v10485, %v10484
        %v10598 = vpack.c.b16 %v10487, %v10486
        %v10599 = vpack.c.b16 %v10489, %v10488
        %v10600 = vpack.c.b16 %v10491, %v10490
        %v10601 = vpack.c.b16 %v10493, %v10492
        %v10602 = vpack.c.b16 %v10495, %v10494
        %v10603 = vpack.c.b16 %v10497, %v10496
        %v10604 = vpack.c.b16 %v10499, %v10498
        %v10605 = vpack.c.b16 %v10501, %v10500
        %v10606 = vpack.c.b16 %v10503, %v10502
        %v10607 = vpack.c.b16 %v10505, %v10504
        %v10608 = vpack.c.b16 %v10507, %v10506
        %v10609 = vpack.c.b16 %v10509, %v10508
        %v10610 = vpack.c.b16 %v10511, %v10510
        %v10611 = vpack.c.b16 %v10513, %v10512
        %v10612 = vpack.c.b16 %v10515, %v10514
        %v10613 = vpack.c.b16 %v10517, %v10516
        %v10614 = vpack.c.b16 %v10519, %v10518
        %v10615 = vpack.c.b16 %v10521, %v10520
        %v10616 = vpack.c.b16 %v10523, %v10522
        %v10617 = vpack.c.b16 %v10525, %v10524
        %v10618 = vpack.c.b16 %v10527, %v10526
        %v10619 = vpack.c.b16 %v10529, %v10528
        %v10620 = vpack.c.b16 %v10531, %v10530
        %v10621 = vpack.c.b16 %v10533, %v10532
        %v10622 = vpack.c.b16 %v10535, %v10534
        %v10623 = vpack.c.b16 %v10537, %v10536
        %v10624 = vpack.c.b16 %v10539, %v10538
        %v10625 = vpack.c.b16 %v10541, %v10540
        %v10626 = vpack.c.b16 %v10543, %v10542
        %v10627 = vpack.c.b16 %v10545, %v10544
        %v10628 = vpack.c.b16 %v10547, %v10546
        %v10629 = vpack.c.b16 %v10549, %v10548
        %v10630 = vpack.c.b16 %v10551, %v10550
        %v10631 = vpack.c.b16 %v10553, %v10552
        %v10632 = vpack.c.b16 %v10555, %v10554
        %v10633 = vpack.c.b16 %v10557, %v10556
        %v10634 = vpack.c.b16 %v10559, %v10558
        %v10635 = vpack.c.b16 %v10561, %v10560
        %v10636 = vpack.c.b16 %v10563, %v10562
        %v10637 = vpack.c.b16 %v10565, %v10564
        %10710 = vmatpush.bf16.msra.mxu0 %v10573
        %10711 = vmatpush.bf16.msra.mxu0 %v10572
        %10712 = vmatpush.bf16.msra.mxu0 %v10571
        %10713 = vmatpush.bf16.msra.mxu0 %v10570
        %10714 = vmatpush.bf16.msra.mxu0 %v10569
        %10715 = vmatpush.bf16.msra.mxu0 %v10568
        %10716 = vmatpush.bf16.msra.mxu0 %v10567
        %10717 = vmatpush.bf16.msra.mxu0 %v10566
        %10718 = vmatmul.bf16.gmra.mxu0 %v9990
        %v10719 = vpop.f32.mrf.mxu0
        %v10720 = vadd.f32 0.0, %v10719
        %v10721 = vpop.f32.mrf.mxu0
        %v10722 = vadd.f32 0.0, %v10721
        %10723 = vmatmul.bf16.gmra.mxu0 %v9999
        %v10724 = vpop.f32.mrf.mxu0
        %v10725 = vadd.f32 0.0, %v10724
        %v10726 = vpop.f32.mrf.mxu0
        %v10727 = vadd.f32 0.0, %v10726
        %10728 = vmatmul.bf16.gmra.mxu0 %v10008
        %v10729 = vpop.f32.mrf.mxu0
        %v10730 = vadd.f32 0.0, %v10729
        %v10731 = vpop.f32.mrf.mxu0
        %v10732 = vadd.f32 0.0, %v10731
        %10733 = vmatmul.bf16.gmra.mxu0 %v10017
        %v10734 = vpop.f32.mrf.mxu0
        %v10735 = vadd.f32 0.0, %v10734
        %v10736 = vpop.f32.mrf.mxu0
        %v10737 = vadd.f32 0.0, %v10736
        %10738 = vmatmul.bf16.gmra.mxu0 %v10026
        %v10739 = vpop.f32.mrf.mxu0
        %v10740 = vadd.f32 0.0, %v10739
        %v10741 = vpop.f32.mrf.mxu0
        %v10742 = vadd.f32 0.0, %v10741
        %10743 = vmatmul.bf16.gmra.mxu0 %v10035
        %v10744 = vpop.f32.mrf.mxu0
        %v10745 = vadd.f32 0.0, %v10744
        %v10746 = vpop.f32.mrf.mxu0
        %v10747 = vadd.f32 0.0, %v10746
        %10748 = vmatmul.bf16.gmra.mxu0 %v10044
        %v10749 = vpop.f32.mrf.mxu0
        %v10750 = vadd.f32 0.0, %v10749
        %v10751 = vpop.f32.mrf.mxu0
        %v10752 = vadd.f32 0.0, %v10751
        %10753 = vmatmul.bf16.gmra.mxu0 %v10053
        %v10754 = vpop.f32.mrf.mxu0
        %v10755 = vadd.f32 0.0, %v10754
        %v10756 = vpop.f32.mrf.mxu0
        %v10757 = vadd.f32 0.0, %v10756
        %10758 = vmatmul.bf16.gmra.mxu0 %v10062
        %v10759 = vpop.f32.mrf.mxu0
        %v10760 = vadd.f32 0.0, %v10759
        %v10761 = vpop.f32.mrf.mxu0
        %v10762 = vadd.f32 0.0, %v10761
        %10763 = vmatmul.bf16.gmra.mxu0 %v10071
        %v10764 = vpop.f32.mrf.mxu0
        %v10765 = vadd.f32 0.0, %v10764
        %v10766 = vpop.f32.mrf.mxu0
        %v10767 = vadd.f32 0.0, %v10766
        %10768 = vmatmul.bf16.gmra.mxu0 %v10080
        %v10769 = vpop.f32.mrf.mxu0
        %v10770 = vadd.f32 0.0, %v10769
        %v10771 = vpop.f32.mrf.mxu0
        %v10772 = vadd.f32 0.0, %v10771
        %10773 = vmatmul.bf16.gmra.mxu0 %v10089
        %v10774 = vpop.f32.mrf.mxu0
        %v10775 = vadd.f32 0.0, %v10774
        %v10776 = vpop.f32.mrf.mxu0
        %v10777 = vadd.f32 0.0, %v10776
        %10778 = vmatmul.bf16.gmra.mxu0 %v10098
        %v10779 = vpop.f32.mrf.mxu0
        %v10780 = vadd.f32 0.0, %v10779
        %v10781 = vpop.f32.mrf.mxu0
        %v10782 = vadd.f32 0.0, %v10781
        %10783 = vmatmul.bf16.gmra.mxu0 %v10107
        %v10784 = vpop.f32.mrf.mxu0
        %v10785 = vadd.f32 0.0, %v10784
        %v10786 = vpop.f32.mrf.mxu0
        %v10787 = vadd.f32 0.0, %v10786
        %10788 = vmatmul.bf16.gmra.mxu0 %v10116
        %v10789 = vpop.f32.mrf.mxu0
        %v10790 = vadd.f32 0.0, %v10789
        %v10791 = vpop.f32.mrf.mxu0
        %v10792 = vadd.f32 0.0, %v10791
        %10793 = vmatmul.bf16.gmra.mxu0 %v10125
        %v10794 = vpop.f32.mrf.mxu0
        %v10795 = vadd.f32 0.0, %v10794
        %v10796 = vpop.f32.mrf.mxu0
        %v10797 = vadd.f32 0.0, %v10796
        %10798 = vdwg.mxu0
        %10799 = vmatpush.bf16.msra.mxu0 %v10581
        %10800 = vmatpush.bf16.msra.mxu0 %v10580
        %10801 = vmatpush.bf16.msra.mxu0 %v10579
        %10802 = vmatpush.bf16.msra.mxu0 %v10578
        %10803 = vmatpush.bf16.msra.mxu0 %v10577
        %10804 = vmatpush.bf16.msra.mxu0 %v10576
        %10805 = vmatpush.bf16.msra.mxu0 %v10575
        %10806 = vmatpush.bf16.msra.mxu0 %v10574
        %10807 = vmatmul.bf16.gmra.mxu0 %v9991
        %v10808 = vpop.f32.mrf.mxu0
        %v10809 = vadd.f32 %v10720, %v10808
        %v10810 = vpop.f32.mrf.mxu0
        %v10811 = vadd.f32 %v10722, %v10810
        %10812 = vmatmul.bf16.gmra.mxu0 %v10000
        %v10813 = vpop.f32.mrf.mxu0
        %v10814 = vadd.f32 %v10725, %v10813
        %v10815 = vpop.f32.mrf.mxu0
        %v10816 = vadd.f32 %v10727, %v10815
        %10817 = vmatmul.bf16.gmra.mxu0 %v10009
        %v10818 = vpop.f32.mrf.mxu0
        %v10819 = vadd.f32 %v10730, %v10818
        %v10820 = vpop.f32.mrf.mxu0
        %v10821 = vadd.f32 %v10732, %v10820
        %10822 = vmatmul.bf16.gmra.mxu0 %v10018
        %v10823 = vpop.f32.mrf.mxu0
        %v10824 = vadd.f32 %v10735, %v10823
        %v10825 = vpop.f32.mrf.mxu0
        %v10826 = vadd.f32 %v10737, %v10825
        %10827 = vmatmul.bf16.gmra.mxu0 %v10027
        %v10828 = vpop.f32.mrf.mxu0
        %v10829 = vadd.f32 %v10740, %v10828
        %v10830 = vpop.f32.mrf.mxu0
        %v10831 = vadd.f32 %v10742, %v10830
        %10832 = vmatmul.bf16.gmra.mxu0 %v10036
        %v10833 = vpop.f32.mrf.mxu0
        %v10834 = vadd.f32 %v10745, %v10833
        %v10835 = vpop.f32.mrf.mxu0
        %v10836 = vadd.f32 %v10747, %v10835
        %10837 = vmatmul.bf16.gmra.mxu0 %v10045
        %v10838 = vpop.f32.mrf.mxu0
        %v10839 = vadd.f32 %v10750, %v10838
        %v10840 = vpop.f32.mrf.mxu0
        %v10841 = vadd.f32 %v10752, %v10840
        %10842 = vmatmul.bf16.gmra.mxu0 %v10054
        %v10843 = vpop.f32.mrf.mxu0
        %v10844 = vadd.f32 %v10755, %v10843
        %v10845 = vpop.f32.mrf.mxu0
        %v10846 = vadd.f32 %v10757, %v10845
        %10847 = vmatmul.bf16.gmra.mxu0 %v10063
        %v10848 = vpop.f32.mrf.mxu0
        %v10849 = vadd.f32 %v10760, %v10848
        %v10850 = vpop.f32.mrf.mxu0
        %v10851 = vadd.f32 %v10762, %v10850
        %10852 = vmatmul.bf16.gmra.mxu0 %v10072
        %v10853 = vpop.f32.mrf.mxu0
        %v10854 = vadd.f32 %v10765, %v10853
        %v10855 = vpop.f32.mrf.mxu0
        %v10856 = vadd.f32 %v10767, %v10855
        %10857 = vmatmul.bf16.gmra.mxu0 %v10081
        %v10858 = vpop.f32.mrf.mxu0
        %v10859 = vadd.f32 %v10770, %v10858
        %v10860 = vpop.f32.mrf.mxu0
        %v10861 = vadd.f32 %v10772, %v10860
        %10862 = vmatmul.bf16.gmra.mxu0 %v10090
        %v10863 = vpop.f32.mrf.mxu0
        %v10864 = vadd.f32 %v10775, %v10863
        %v10865 = vpop.f32.mrf.mxu0
        %v10866 = vadd.f32 %v10777, %v10865
        %10867 = vmatmul.bf16.gmra.mxu0 %v10099
        %v10868 = vpop.f32.mrf.mxu0
        %v10869 = vadd.f32 %v10780, %v10868
        %v10870 = vpop.f32.mrf.mxu0
        %v10871 = vadd.f32 %v10782, %v10870
        %10872 = vmatmul.bf16.gmra.mxu0 %v10108
        %v10873 = vpop.f32.mrf.mxu0
        %v10874 = vadd.f32 %v10785, %v10873
        %v10875 = vpop.f32.mrf.mxu0
        %v10876 = vadd.f32 %v10787, %v10875
        %10877 = vmatmul.bf16.gmra.mxu0 %v10117
        %v10878 = vpop.f32.mrf.mxu0
        %v10879 = vadd.f32 %v10790, %v10878
        %v10880 = vpop.f32.mrf.mxu0
        %v10881 = vadd.f32 %v10792, %v10880
        %10882 = vmatmul.bf16.gmra.mxu0 %v10126
        %v10883 = vpop.f32.mrf.mxu0
        %v10884 = vadd.f32 %v10795, %v10883
        %v10885 = vpop.f32.mrf.mxu0
        %v10886 = vadd.f32 %v10797, %v10885
        %10887 = vdwg.mxu0
        %10888 = vmatpush.bf16.msra.mxu0 %v10589
        %10889 = vmatpush.bf16.msra.mxu0 %v10588
        %10890 = vmatpush.bf16.msra.mxu0 %v10587
        %10891 = vmatpush.bf16.msra.mxu0 %v10586
        %10892 = vmatpush.bf16.msra.mxu0 %v10585
        %10893 = vmatpush.bf16.msra.mxu0 %v10584
        %10894 = vmatpush.bf16.msra.mxu0 %v10583
        %10895 = vmatpush.bf16.msra.mxu0 %v10582
        %10896 = vmatmul.bf16.gmra.mxu0 %v9992
        %v10897 = vpop.f32.mrf.mxu0
        %v10898 = vadd.f32 %v10809, %v10897
        %v10899 = vpop.f32.mrf.mxu0
        %v10900 = vadd.f32 %v10811, %v10899
        %10901 = vmatmul.bf16.gmra.mxu0 %v10001
        %v10902 = vpop.f32.mrf.mxu0
        %v10903 = vadd.f32 %v10814, %v10902
        %v10904 = vpop.f32.mrf.mxu0
        %v10905 = vadd.f32 %v10816, %v10904
        %10906 = vmatmul.bf16.gmra.mxu0 %v10010
        %v10907 = vpop.f32.mrf.mxu0
        %v10908 = vadd.f32 %v10819, %v10907
        %v10909 = vpop.f32.mrf.mxu0
        %v10910 = vadd.f32 %v10821, %v10909
        %10911 = vmatmul.bf16.gmra.mxu0 %v10019
        %v10912 = vpop.f32.mrf.mxu0
        %v10913 = vadd.f32 %v10824, %v10912
        %v10914 = vpop.f32.mrf.mxu0
        %v10915 = vadd.f32 %v10826, %v10914
        %10916 = vmatmul.bf16.gmra.mxu0 %v10028
        %v10917 = vpop.f32.mrf.mxu0
        %v10918 = vadd.f32 %v10829, %v10917
        %v10919 = vpop.f32.mrf.mxu0
        %v10920 = vadd.f32 %v10831, %v10919
        %10921 = vmatmul.bf16.gmra.mxu0 %v10037
        %v10922 = vpop.f32.mrf.mxu0
        %v10923 = vadd.f32 %v10834, %v10922
        %v10924 = vpop.f32.mrf.mxu0
        %v10925 = vadd.f32 %v10836, %v10924
        %10926 = vmatmul.bf16.gmra.mxu0 %v10046
        %v10927 = vpop.f32.mrf.mxu0
        %v10928 = vadd.f32 %v10839, %v10927
        %v10929 = vpop.f32.mrf.mxu0
        %v10930 = vadd.f32 %v10841, %v10929
        %10931 = vmatmul.bf16.gmra.mxu0 %v10055
        %v10932 = vpop.f32.mrf.mxu0
        %v10933 = vadd.f32 %v10844, %v10932
        %v10934 = vpop.f32.mrf.mxu0
        %v10935 = vadd.f32 %v10846, %v10934
        %10936 = vmatmul.bf16.gmra.mxu0 %v10064
        %v10937 = vpop.f32.mrf.mxu0
        %v10938 = vadd.f32 %v10849, %v10937
        %v10939 = vpop.f32.mrf.mxu0
        %v10940 = vadd.f32 %v10851, %v10939
        %10941 = vmatmul.bf16.gmra.mxu0 %v10073
        %v10942 = vpop.f32.mrf.mxu0
        %v10943 = vadd.f32 %v10854, %v10942
        %v10944 = vpop.f32.mrf.mxu0
        %v10945 = vadd.f32 %v10856, %v10944
        %10946 = vmatmul.bf16.gmra.mxu0 %v10082
        %v10947 = vpop.f32.mrf.mxu0
        %v10948 = vadd.f32 %v10859, %v10947
        %v10949 = vpop.f32.mrf.mxu0
        %v10950 = vadd.f32 %v10861, %v10949
        %10951 = vmatmul.bf16.gmra.mxu0 %v10091
        %v10952 = vpop.f32.mrf.mxu0
        %v10953 = vadd.f32 %v10864, %v10952
        %v10954 = vpop.f32.mrf.mxu0
        %v10955 = vadd.f32 %v10866, %v10954
        %10956 = vmatmul.bf16.gmra.mxu0 %v10100
        %v10957 = vpop.f32.mrf.mxu0
        %v10958 = vadd.f32 %v10869, %v10957
        %v10959 = vpop.f32.mrf.mxu0
        %v10960 = vadd.f32 %v10871, %v10959
        %10961 = vmatmul.bf16.gmra.mxu0 %v10109
        %v10962 = vpop.f32.mrf.mxu0
        %v10963 = vadd.f32 %v10874, %v10962
        %v10964 = vpop.f32.mrf.mxu0
        %v10965 = vadd.f32 %v10876, %v10964
        %10966 = vmatmul.bf16.gmra.mxu0 %v10118
        %v10967 = vpop.f32.mrf.mxu0
        %v10968 = vadd.f32 %v10879, %v10967
        %v10969 = vpop.f32.mrf.mxu0
        %v10970 = vadd.f32 %v10881, %v10969
        %10971 = vmatmul.bf16.gmra.mxu0 %v10127
        %v10972 = vpop.f32.mrf.mxu0
        %v10973 = vadd.f32 %v10884, %v10972
        %v10974 = vpop.f32.mrf.mxu0
        %v10975 = vadd.f32 %v10886, %v10974
        %10976 = vdwg.mxu0
        %10977 = vmatpush.bf16.msra.mxu0 %v10597
        %10978 = vmatpush.bf16.msra.mxu0 %v10596
        %10979 = vmatpush.bf16.msra.mxu0 %v10595
        %10980 = vmatpush.bf16.msra.mxu0 %v10594
        %10981 = vmatpush.bf16.msra.mxu0 %v10593
        %10982 = vmatpush.bf16.msra.mxu0 %v10592
        %10983 = vmatpush.bf16.msra.mxu0 %v10591
        %10984 = vmatpush.bf16.msra.mxu0 %v10590
        %10985 = vmatmul.bf16.gmra.mxu0 %v9993
        %v10986 = vpop.f32.mrf.mxu0
        %v10987 = vadd.f32 %v10898, %v10986
        %v10988 = vpop.f32.mrf.mxu0
        %v10989 = vadd.f32 %v10900, %v10988
        %10990 = vmatmul.bf16.gmra.mxu0 %v10002
        %v10991 = vpop.f32.mrf.mxu0
        %v10992 = vadd.f32 %v10903, %v10991
        %v10993 = vpop.f32.mrf.mxu0
        %v10994 = vadd.f32 %v10905, %v10993
        %10995 = vmatmul.bf16.gmra.mxu0 %v10011
        %v10996 = vpop.f32.mrf.mxu0
        %v10997 = vadd.f32 %v10908, %v10996
        %v10998 = vpop.f32.mrf.mxu0
        %v10999 = vadd.f32 %v10910, %v10998
        %11000 = vmatmul.bf16.gmra.mxu0 %v10020
        %v11001 = vpop.f32.mrf.mxu0
        %v11002 = vadd.f32 %v10913, %v11001
        %v11003 = vpop.f32.mrf.mxu0
        %v11004 = vadd.f32 %v10915, %v11003
        %11005 = vmatmul.bf16.gmra.mxu0 %v10029
        %v11006 = vpop.f32.mrf.mxu0
        %v11007 = vadd.f32 %v10918, %v11006
        %v11008 = vpop.f32.mrf.mxu0
        %v11009 = vadd.f32 %v10920, %v11008
        %11010 = vmatmul.bf16.gmra.mxu0 %v10038
        %v11011 = vpop.f32.mrf.mxu0
        %v11012 = vadd.f32 %v10923, %v11011
        %v11013 = vpop.f32.mrf.mxu0
        %v11014 = vadd.f32 %v10925, %v11013
        %11015 = vmatmul.bf16.gmra.mxu0 %v10047
        %v11016 = vpop.f32.mrf.mxu0
        %v11017 = vadd.f32 %v10928, %v11016
        %v11018 = vpop.f32.mrf.mxu0
        %v11019 = vadd.f32 %v10930, %v11018
        %11020 = vmatmul.bf16.gmra.mxu0 %v10056
        %v11021 = vpop.f32.mrf.mxu0
        %v11022 = vadd.f32 %v10933, %v11021
        %v11023 = vpop.f32.mrf.mxu0
        %v11024 = vadd.f32 %v10935, %v11023
        %11025 = vmatmul.bf16.gmra.mxu0 %v10065
        %v11026 = vpop.f32.mrf.mxu0
        %v11027 = vadd.f32 %v10938, %v11026
        %v11028 = vpop.f32.mrf.mxu0
        %v11029 = vadd.f32 %v10940, %v11028
        %11030 = vmatmul.bf16.gmra.mxu0 %v10074
        %v11031 = vpop.f32.mrf.mxu0
        %v11032 = vadd.f32 %v10943, %v11031
        %v11033 = vpop.f32.mrf.mxu0
        %v11034 = vadd.f32 %v10945, %v11033
        %11035 = vmatmul.bf16.gmra.mxu0 %v10083
        %v11036 = vpop.f32.mrf.mxu0
        %v11037 = vadd.f32 %v10948, %v11036
        %v11038 = vpop.f32.mrf.mxu0
        %v11039 = vadd.f32 %v10950, %v11038
        %11040 = vmatmul.bf16.gmra.mxu0 %v10092
        %v11041 = vpop.f32.mrf.mxu0
        %v11042 = vadd.f32 %v10953, %v11041
        %v11043 = vpop.f32.mrf.mxu0
        %v11044 = vadd.f32 %v10955, %v11043
        %11045 = vmatmul.bf16.gmra.mxu0 %v10101
        %v11046 = vpop.f32.mrf.mxu0
        %v11047 = vadd.f32 %v10958, %v11046
        %v11048 = vpop.f32.mrf.mxu0
        %v11049 = vadd.f32 %v10960, %v11048
        %11050 = vmatmul.bf16.gmra.mxu0 %v10110
        %v11051 = vpop.f32.mrf.mxu0
        %v11052 = vadd.f32 %v10963, %v11051
        %v11053 = vpop.f32.mrf.mxu0
        %v11054 = vadd.f32 %v10965, %v11053
        %11055 = vmatmul.bf16.gmra.mxu0 %v10119
        %v11056 = vpop.f32.mrf.mxu0
        %v11057 = vadd.f32 %v10968, %v11056
        %v11058 = vpop.f32.mrf.mxu0
        %v11059 = vadd.f32 %v10970, %v11058
        %11060 = vmatmul.bf16.gmra.mxu0 %v10128
        %v11061 = vpop.f32.mrf.mxu0
        %v11062 = vadd.f32 %v10973, %v11061
        %v11063 = vpop.f32.mrf.mxu0
        %v11064 = vadd.f32 %v10975, %v11063
        %11065 = vdwg.mxu0
        %11066 = vmatpush.bf16.msra.mxu0 %v10605
        %11067 = vmatpush.bf16.msra.mxu0 %v10604
        %11068 = vmatpush.bf16.msra.mxu0 %v10603
        %11069 = vmatpush.bf16.msra.mxu0 %v10602
        %11070 = vmatpush.bf16.msra.mxu0 %v10601
        %11071 = vmatpush.bf16.msra.mxu0 %v10600
        %11072 = vmatpush.bf16.msra.mxu0 %v10599
        %11073 = vmatpush.bf16.msra.mxu0 %v10598
        %11074 = vmatmul.bf16.gmra.mxu0 %v9994
        %v11075 = vpop.f32.mrf.mxu0
        %v11076 = vadd.f32 %v10987, %v11075
        %v11077 = vpop.f32.mrf.mxu0
        %v11078 = vadd.f32 %v10989, %v11077
        %11079 = vmatmul.bf16.gmra.mxu0 %v10003
        %v11080 = vpop.f32.mrf.mxu0
        %v11081 = vadd.f32 %v10992, %v11080
        %v11082 = vpop.f32.mrf.mxu0
        %v11083 = vadd.f32 %v10994, %v11082
        %11084 = vmatmul.bf16.gmra.mxu0 %v10012
        %v11085 = vpop.f32.mrf.mxu0
        %v11086 = vadd.f32 %v10997, %v11085
        %v11087 = vpop.f32.mrf.mxu0
        %v11088 = vadd.f32 %v10999, %v11087
        %11089 = vmatmul.bf16.gmra.mxu0 %v10021
        %v11090 = vpop.f32.mrf.mxu0
        %v11091 = vadd.f32 %v11002, %v11090
        %v11092 = vpop.f32.mrf.mxu0
        %v11093 = vadd.f32 %v11004, %v11092
        %11094 = vmatmul.bf16.gmra.mxu0 %v10030
        %v11095 = vpop.f32.mrf.mxu0
        %v11096 = vadd.f32 %v11007, %v11095
        %v11097 = vpop.f32.mrf.mxu0
        %v11098 = vadd.f32 %v11009, %v11097
        %11099 = vmatmul.bf16.gmra.mxu0 %v10039
        %v11100 = vpop.f32.mrf.mxu0
        %v11101 = vadd.f32 %v11012, %v11100
        %v11102 = vpop.f32.mrf.mxu0
        %v11103 = vadd.f32 %v11014, %v11102
        %11104 = vmatmul.bf16.gmra.mxu0 %v10048
        %v11105 = vpop.f32.mrf.mxu0
        %v11106 = vadd.f32 %v11017, %v11105
        %v11107 = vpop.f32.mrf.mxu0
        %v11108 = vadd.f32 %v11019, %v11107
        %11109 = vmatmul.bf16.gmra.mxu0 %v10057
        %v11110 = vpop.f32.mrf.mxu0
        %v11111 = vadd.f32 %v11022, %v11110
        %v11112 = vpop.f32.mrf.mxu0
        %v11113 = vadd.f32 %v11024, %v11112
        %11114 = vmatmul.bf16.gmra.mxu0 %v10066
        %v11115 = vpop.f32.mrf.mxu0
        %v11116 = vadd.f32 %v11027, %v11115
        %v11117 = vpop.f32.mrf.mxu0
        %v11118 = vadd.f32 %v11029, %v11117
        %11119 = vmatmul.bf16.gmra.mxu0 %v10075
        %v11120 = vpop.f32.mrf.mxu0
        %v11121 = vadd.f32 %v11032, %v11120
        %v11122 = vpop.f32.mrf.mxu0
        %v11123 = vadd.f32 %v11034, %v11122
        %11124 = vmatmul.bf16.gmra.mxu0 %v10084
        %v11125 = vpop.f32.mrf.mxu0
        %v11126 = vadd.f32 %v11037, %v11125
        %v11127 = vpop.f32.mrf.mxu0
        %v11128 = vadd.f32 %v11039, %v11127
        %11129 = vmatmul.bf16.gmra.mxu0 %v10093
        %v11130 = vpop.f32.mrf.mxu0
        %v11131 = vadd.f32 %v11042, %v11130
        %v11132 = vpop.f32.mrf.mxu0
        %v11133 = vadd.f32 %v11044, %v11132
        %11134 = vmatmul.bf16.gmra.mxu0 %v10102
        %v11135 = vpop.f32.mrf.mxu0
        %v11136 = vadd.f32 %v11047, %v11135
        %v11137 = vpop.f32.mrf.mxu0
        %v11138 = vadd.f32 %v11049, %v11137
        %11139 = vmatmul.bf16.gmra.mxu0 %v10111
        %v11140 = vpop.f32.mrf.mxu0
        %v11141 = vadd.f32 %v11052, %v11140
        %v11142 = vpop.f32.mrf.mxu0
        %v11143 = vadd.f32 %v11054, %v11142
        %11144 = vmatmul.bf16.gmra.mxu0 %v10120
        %v11145 = vpop.f32.mrf.mxu0
        %v11146 = vadd.f32 %v11057, %v11145
        %v11147 = vpop.f32.mrf.mxu0
        %v11148 = vadd.f32 %v11059, %v11147
        %11149 = vmatmul.bf16.gmra.mxu0 %v10129
        %v11150 = vpop.f32.mrf.mxu0
        %v11151 = vadd.f32 %v11062, %v11150
        %v11152 = vpop.f32.mrf.mxu0
        %v11153 = vadd.f32 %v11064, %v11152
        %11154 = vdwg.mxu0
        %11155 = vmatpush.bf16.msra.mxu0 %v10613
        %11156 = vmatpush.bf16.msra.mxu0 %v10612
        %11157 = vmatpush.bf16.msra.mxu0 %v10611
        %11158 = vmatpush.bf16.msra.mxu0 %v10610
        %11159 = vmatpush.bf16.msra.mxu0 %v10609
        %11160 = vmatpush.bf16.msra.mxu0 %v10608
        %11161 = vmatpush.bf16.msra.mxu0 %v10607
        %11162 = vmatpush.bf16.msra.mxu0 %v10606
        %11163 = vmatmul.bf16.gmra.mxu0 %v9995
        %v11164 = vpop.f32.mrf.mxu0
        %v11165 = vadd.f32 %v11076, %v11164
        %v11166 = vpop.f32.mrf.mxu0
        %v11167 = vadd.f32 %v11078, %v11166
        %11168 = vmatmul.bf16.gmra.mxu0 %v10004
        %v11169 = vpop.f32.mrf.mxu0
        %v11170 = vadd.f32 %v11081, %v11169
        %v11171 = vpop.f32.mrf.mxu0
        %v11172 = vadd.f32 %v11083, %v11171
        %11173 = vmatmul.bf16.gmra.mxu0 %v10013
        %v11174 = vpop.f32.mrf.mxu0
        %v11175 = vadd.f32 %v11086, %v11174
        %v11176 = vpop.f32.mrf.mxu0
        %v11177 = vadd.f32 %v11088, %v11176
        %11178 = vmatmul.bf16.gmra.mxu0 %v10022
        %v11179 = vpop.f32.mrf.mxu0
        %v11180 = vadd.f32 %v11091, %v11179
        %v11181 = vpop.f32.mrf.mxu0
        %v11182 = vadd.f32 %v11093, %v11181
        %11183 = vmatmul.bf16.gmra.mxu0 %v10031
        %v11184 = vpop.f32.mrf.mxu0
        %v11185 = vadd.f32 %v11096, %v11184
        %v11186 = vpop.f32.mrf.mxu0
        %v11187 = vadd.f32 %v11098, %v11186
        %11188 = vmatmul.bf16.gmra.mxu0 %v10040
        %v11189 = vpop.f32.mrf.mxu0
        %v11190 = vadd.f32 %v11101, %v11189
        %v11191 = vpop.f32.mrf.mxu0
        %v11192 = vadd.f32 %v11103, %v11191
        %11193 = vmatmul.bf16.gmra.mxu0 %v10049
        %v11194 = vpop.f32.mrf.mxu0
        %v11195 = vadd.f32 %v11106, %v11194
        %v11196 = vpop.f32.mrf.mxu0
        %v11197 = vadd.f32 %v11108, %v11196
        %11198 = vmatmul.bf16.gmra.mxu0 %v10058
        %v11199 = vpop.f32.mrf.mxu0
        %v11200 = vadd.f32 %v11111, %v11199
        %v11201 = vpop.f32.mrf.mxu0
        %v11202 = vadd.f32 %v11113, %v11201
        %11203 = vmatmul.bf16.gmra.mxu0 %v10067
        %v11204 = vpop.f32.mrf.mxu0
        %v11205 = vadd.f32 %v11116, %v11204
        %v11206 = vpop.f32.mrf.mxu0
        %v11207 = vadd.f32 %v11118, %v11206
        %11208 = vmatmul.bf16.gmra.mxu0 %v10076
        %v11209 = vpop.f32.mrf.mxu0
        %v11210 = vadd.f32 %v11121, %v11209
        %v11211 = vpop.f32.mrf.mxu0
        %v11212 = vadd.f32 %v11123, %v11211
        %11213 = vmatmul.bf16.gmra.mxu0 %v10085
        %v11214 = vpop.f32.mrf.mxu0
        %v11215 = vadd.f32 %v11126, %v11214
        %v11216 = vpop.f32.mrf.mxu0
        %v11217 = vadd.f32 %v11128, %v11216
        %11218 = vmatmul.bf16.gmra.mxu0 %v10094
        %v11219 = vpop.f32.mrf.mxu0
        %v11220 = vadd.f32 %v11131, %v11219
        %v11221 = vpop.f32.mrf.mxu0
        %v11222 = vadd.f32 %v11133, %v11221
        %11223 = vmatmul.bf16.gmra.mxu0 %v10103
        %v11224 = vpop.f32.mrf.mxu0
        %v11225 = vadd.f32 %v11136, %v11224
        %v11226 = vpop.f32.mrf.mxu0
        %v11227 = vadd.f32 %v11138, %v11226
        %11228 = vmatmul.bf16.gmra.mxu0 %v10112
        %v11229 = vpop.f32.mrf.mxu0
        %v11230 = vadd.f32 %v11141, %v11229
        %v11231 = vpop.f32.mrf.mxu0
        %v11232 = vadd.f32 %v11143, %v11231
        %11233 = vmatmul.bf16.gmra.mxu0 %v10121
        %v11234 = vpop.f32.mrf.mxu0
        %v11235 = vadd.f32 %v11146, %v11234
        %v11236 = vpop.f32.mrf.mxu0
        %v11237 = vadd.f32 %v11148, %v11236
        %11238 = vmatmul.bf16.gmra.mxu0 %v10130
        %v11239 = vpop.f32.mrf.mxu0
        %v11240 = vadd.f32 %v11151, %v11239
        %v11241 = vpop.f32.mrf.mxu0
        %v11242 = vadd.f32 %v11153, %v11241
        %11243 = vdwg.mxu0
        %11244 = vmatpush.bf16.msra.mxu0 %v10621
        %11245 = vmatpush.bf16.msra.mxu0 %v10620
        %11246 = vmatpush.bf16.msra.mxu0 %v10619
        %11247 = vmatpush.bf16.msra.mxu0 %v10618
        %11248 = vmatpush.bf16.msra.mxu0 %v10617
        %11249 = vmatpush.bf16.msra.mxu0 %v10616
        %11250 = vmatpush.bf16.msra.mxu0 %v10615
        %11251 = vmatpush.bf16.msra.mxu0 %v10614
        %11252 = vmatmul.bf16.gmra.mxu0 %v9996
        %v11253 = vpop.f32.mrf.mxu0
        %v11254 = vadd.f32 %v11165, %v11253
        %v11255 = vpop.f32.mrf.mxu0
        %v11256 = vadd.f32 %v11167, %v11255
        %11257 = vmatmul.bf16.gmra.mxu0 %v10005
        %v11258 = vpop.f32.mrf.mxu0
        %v11259 = vadd.f32 %v11170, %v11258
        %v11260 = vpop.f32.mrf.mxu0
        %v11261 = vadd.f32 %v11172, %v11260
        %11262 = vmatmul.bf16.gmra.mxu0 %v10014
        %v11263 = vpop.f32.mrf.mxu0
        %v11264 = vadd.f32 %v11175, %v11263
        %v11265 = vpop.f32.mrf.mxu0
        %v11266 = vadd.f32 %v11177, %v11265
        %11267 = vmatmul.bf16.gmra.mxu0 %v10023
        %v11268 = vpop.f32.mrf.mxu0
        %v11269 = vadd.f32 %v11180, %v11268
        %v11270 = vpop.f32.mrf.mxu0
        %v11271 = vadd.f32 %v11182, %v11270
        %11272 = vmatmul.bf16.gmra.mxu0 %v10032
        %v11273 = vpop.f32.mrf.mxu0
        %v11274 = vadd.f32 %v11185, %v11273
        %v11275 = vpop.f32.mrf.mxu0
        %v11276 = vadd.f32 %v11187, %v11275
        %11277 = vmatmul.bf16.gmra.mxu0 %v10041
        %v11278 = vpop.f32.mrf.mxu0
        %v11279 = vadd.f32 %v11190, %v11278
        %v11280 = vpop.f32.mrf.mxu0
        %v11281 = vadd.f32 %v11192, %v11280
        %11282 = vmatmul.bf16.gmra.mxu0 %v10050
        %v11283 = vpop.f32.mrf.mxu0
        %v11284 = vadd.f32 %v11195, %v11283
        %v11285 = vpop.f32.mrf.mxu0
        %v11286 = vadd.f32 %v11197, %v11285
        %11287 = vmatmul.bf16.gmra.mxu0 %v10059
        %v11288 = vpop.f32.mrf.mxu0
        %v11289 = vadd.f32 %v11200, %v11288
        %v11290 = vpop.f32.mrf.mxu0
        %v11291 = vadd.f32 %v11202, %v11290
        %11292 = vmatmul.bf16.gmra.mxu0 %v10068
        %v11293 = vpop.f32.mrf.mxu0
        %v11294 = vadd.f32 %v11205, %v11293
        %v11295 = vpop.f32.mrf.mxu0
        %v11296 = vadd.f32 %v11207, %v11295
        %11297 = vmatmul.bf16.gmra.mxu0 %v10077
        %v11298 = vpop.f32.mrf.mxu0
        %v11299 = vadd.f32 %v11210, %v11298
        %v11300 = vpop.f32.mrf.mxu0
        %v11301 = vadd.f32 %v11212, %v11300
        %11302 = vmatmul.bf16.gmra.mxu0 %v10086
        %v11303 = vpop.f32.mrf.mxu0
        %v11304 = vadd.f32 %v11215, %v11303
        %v11305 = vpop.f32.mrf.mxu0
        %v11306 = vadd.f32 %v11217, %v11305
        %11307 = vmatmul.bf16.gmra.mxu0 %v10095
        %v11308 = vpop.f32.mrf.mxu0
        %v11309 = vadd.f32 %v11220, %v11308
        %v11310 = vpop.f32.mrf.mxu0
        %v11311 = vadd.f32 %v11222, %v11310
        %11312 = vmatmul.bf16.gmra.mxu0 %v10104
        %v11313 = vpop.f32.mrf.mxu0
        %v11314 = vadd.f32 %v11225, %v11313
        %v11315 = vpop.f32.mrf.mxu0
        %v11316 = vadd.f32 %v11227, %v11315
        %11317 = vmatmul.bf16.gmra.mxu0 %v10113
        %v11318 = vpop.f32.mrf.mxu0
        %v11319 = vadd.f32 %v11230, %v11318
        %v11320 = vpop.f32.mrf.mxu0
        %v11321 = vadd.f32 %v11232, %v11320
        %11322 = vmatmul.bf16.gmra.mxu0 %v10122
        %v11323 = vpop.f32.mrf.mxu0
        %v11324 = vadd.f32 %v11235, %v11323
        %v11325 = vpop.f32.mrf.mxu0
        %v11326 = vadd.f32 %v11237, %v11325
        %11327 = vmatmul.bf16.gmra.mxu0 %v10131
        %v11328 = vpop.f32.mrf.mxu0
        %v11329 = vadd.f32 %v11240, %v11328
        %v11330 = vpop.f32.mrf.mxu0
        %v11331 = vadd.f32 %v11242, %v11330
        %11332 = vdwg.mxu0
        %11333 = vmatpush.bf16.msra.mxu0 %v10629
        %11334 = vmatpush.bf16.msra.mxu0 %v10628
        %11335 = vmatpush.bf16.msra.mxu0 %v10627
        %11336 = vmatpush.bf16.msra.mxu0 %v10626
        %11337 = vmatpush.bf16.msra.mxu0 %v10625
        %11338 = vmatpush.bf16.msra.mxu0 %v10624
        %11339 = vmatpush.bf16.msra.mxu0 %v10623
        %11340 = vmatpush.bf16.msra.mxu0 %v10622
        %11341 = vmatmul.bf16.gmra.mxu0 %v9997
        %v11342 = vpop.f32.mrf.mxu0
        %v11343 = vadd.f32 %v11254, %v11342
        %v11344 = vpop.f32.mrf.mxu0
        %v11345 = vadd.f32 %v11256, %v11344
        %11346 = vmatmul.bf16.gmra.mxu0 %v10006
        %v11347 = vpop.f32.mrf.mxu0
        %v11348 = vadd.f32 %v11259, %v11347
        %v11349 = vpop.f32.mrf.mxu0
        %v11350 = vadd.f32 %v11261, %v11349
        %11351 = vmatmul.bf16.gmra.mxu0 %v10015
        %v11352 = vpop.f32.mrf.mxu0
        %v11353 = vadd.f32 %v11264, %v11352
        %v11354 = vpop.f32.mrf.mxu0
        %v11355 = vadd.f32 %v11266, %v11354
        %11356 = vmatmul.bf16.gmra.mxu0 %v10024
        %v11357 = vpop.f32.mrf.mxu0
        %v11358 = vadd.f32 %v11269, %v11357
        %v11359 = vpop.f32.mrf.mxu0
        %v11360 = vadd.f32 %v11271, %v11359
        %11361 = vmatmul.bf16.gmra.mxu0 %v10033
        %v11362 = vpop.f32.mrf.mxu0
        %v11363 = vadd.f32 %v11274, %v11362
        %v11364 = vpop.f32.mrf.mxu0
        %v11365 = vadd.f32 %v11276, %v11364
        %11366 = vmatmul.bf16.gmra.mxu0 %v10042
        %v11367 = vpop.f32.mrf.mxu0
        %v11368 = vadd.f32 %v11279, %v11367
        %v11369 = vpop.f32.mrf.mxu0
        %v11370 = vadd.f32 %v11281, %v11369
        %11371 = vmatmul.bf16.gmra.mxu0 %v10051
        %v11372 = vpop.f32.mrf.mxu0
        %v11373 = vadd.f32 %v11284, %v11372
        %v11374 = vpop.f32.mrf.mxu0
        %v11375 = vadd.f32 %v11286, %v11374
        %11376 = vmatmul.bf16.gmra.mxu0 %v10060
        %v11377 = vpop.f32.mrf.mxu0
        %v11378 = vadd.f32 %v11289, %v11377
        %v11379 = vpop.f32.mrf.mxu0
        %v11380 = vadd.f32 %v11291, %v11379
        %11381 = vmatmul.bf16.gmra.mxu0 %v10069
        %v11382 = vpop.f32.mrf.mxu0
        %v11383 = vadd.f32 %v11294, %v11382
        %v11384 = vpop.f32.mrf.mxu0
        %v11385 = vadd.f32 %v11296, %v11384
        %11386 = vmatmul.bf16.gmra.mxu0 %v10078
        %v11387 = vpop.f32.mrf.mxu0
        %v11388 = vadd.f32 %v11299, %v11387
        %v11389 = vpop.f32.mrf.mxu0
        %v11390 = vadd.f32 %v11301, %v11389
        %11391 = vmatmul.bf16.gmra.mxu0 %v10087
        %v11392 = vpop.f32.mrf.mxu0
        %v11393 = vadd.f32 %v11304, %v11392
        %v11394 = vpop.f32.mrf.mxu0
        %v11395 = vadd.f32 %v11306, %v11394
        %11396 = vmatmul.bf16.gmra.mxu0 %v10096
        %v11397 = vpop.f32.mrf.mxu0
        %v11398 = vadd.f32 %v11309, %v11397
        %v11399 = vpop.f32.mrf.mxu0
        %v11400 = vadd.f32 %v11311, %v11399
        %11401 = vmatmul.bf16.gmra.mxu0 %v10105
        %v11402 = vpop.f32.mrf.mxu0
        %v11403 = vadd.f32 %v11314, %v11402
        %v11404 = vpop.f32.mrf.mxu0
        %v11405 = vadd.f32 %v11316, %v11404
        %11406 = vmatmul.bf16.gmra.mxu0 %v10114
        %v11407 = vpop.f32.mrf.mxu0
        %v11408 = vadd.f32 %v11319, %v11407
        %v11409 = vpop.f32.mrf.mxu0
        %v11410 = vadd.f32 %v11321, %v11409
        %11411 = vmatmul.bf16.gmra.mxu0 %v10123
        %v11412 = vpop.f32.mrf.mxu0
        %v11413 = vadd.f32 %v11324, %v11412
        %v11414 = vpop.f32.mrf.mxu0
        %v11415 = vadd.f32 %v11326, %v11414
        %11416 = vmatmul.bf16.gmra.mxu0 %v10132
        %v11417 = vpop.f32.mrf.mxu0
        %v11418 = vadd.f32 %v11329, %v11417
        %v11419 = vpop.f32.mrf.mxu0
        %v11420 = vadd.f32 %v11331, %v11419
        %11421 = vdwg.mxu0
        %11422 = vmatpush.bf16.msra.mxu0 %v10637
        %11423 = vmatpush.bf16.msra.mxu0 %v10636
        %11424 = vmatpush.bf16.msra.mxu0 %v10635
        %11425 = vmatpush.bf16.msra.mxu0 %v10634
        %11426 = vmatpush.bf16.msra.mxu0 %v10633
        %11427 = vmatpush.bf16.msra.mxu0 %v10632
        %11428 = vmatpush.bf16.msra.mxu0 %v10631
        %11429 = vmatpush.bf16.msra.mxu0 %v10630
        %11430 = vmatmul.bf16.gmra.mxu0 %v9998
        %v11431 = vpop.f32.mrf.mxu0
        %v11432 = vadd.f32 %v11343, %v11431
        %v11433 = vpop.f32.mrf.mxu0
        %v11434 = vadd.f32 %v11345, %v11433
        %11435 = vmatmul.bf16.gmra.mxu0 %v10007
        %v11436 = vpop.f32.mrf.mxu0
        %v11437 = vadd.f32 %v11348, %v11436
        %v11438 = vpop.f32.mrf.mxu0
        %v11439 = vadd.f32 %v11350, %v11438
        %11440 = vmatmul.bf16.gmra.mxu0 %v10016
        %v11441 = vpop.f32.mrf.mxu0
        %v11442 = vadd.f32 %v11353, %v11441
        %v11443 = vpop.f32.mrf.mxu0
        %v11444 = vadd.f32 %v11355, %v11443
        %11445 = vmatmul.bf16.gmra.mxu0 %v10025
        %v11446 = vpop.f32.mrf.mxu0
        %v11447 = vadd.f32 %v11358, %v11446
        %v11448 = vpop.f32.mrf.mxu0
        %v11449 = vadd.f32 %v11360, %v11448
        %11450 = vmatmul.bf16.gmra.mxu0 %v10034
        %v11451 = vpop.f32.mrf.mxu0
        %v11452 = vadd.f32 %v11363, %v11451
        %v11453 = vpop.f32.mrf.mxu0
        %v11454 = vadd.f32 %v11365, %v11453
        %11455 = vmatmul.bf16.gmra.mxu0 %v10043
        %v11456 = vpop.f32.mrf.mxu0
        %v11457 = vadd.f32 %v11368, %v11456
        %v11458 = vpop.f32.mrf.mxu0
        %v11459 = vadd.f32 %v11370, %v11458
        %11460 = vmatmul.bf16.gmra.mxu0 %v10052
        %v11461 = vpop.f32.mrf.mxu0
        %v11462 = vadd.f32 %v11373, %v11461
        %v11463 = vpop.f32.mrf.mxu0
        %v11464 = vadd.f32 %v11375, %v11463
        %11465 = vmatmul.bf16.gmra.mxu0 %v10061
        %v11466 = vpop.f32.mrf.mxu0
        %v11467 = vadd.f32 %v11378, %v11466
        %v11468 = vpop.f32.mrf.mxu0
        %v11469 = vadd.f32 %v11380, %v11468
        %11470 = vmatmul.bf16.gmra.mxu0 %v10070
        %v11471 = vpop.f32.mrf.mxu0
        %v11472 = vadd.f32 %v11383, %v11471
        %v11473 = vpop.f32.mrf.mxu0
        %v11474 = vadd.f32 %v11385, %v11473
        %11475 = vmatmul.bf16.gmra.mxu0 %v10079
        %v11476 = vpop.f32.mrf.mxu0
        %v11477 = vadd.f32 %v11388, %v11476
        %v11478 = vpop.f32.mrf.mxu0
        %v11479 = vadd.f32 %v11390, %v11478
        %11480 = vmatmul.bf16.gmra.mxu0 %v10088
        %v11481 = vpop.f32.mrf.mxu0
        %v11482 = vadd.f32 %v11393, %v11481
        %v11483 = vpop.f32.mrf.mxu0
        %v11484 = vadd.f32 %v11395, %v11483
        %11485 = vmatmul.bf16.gmra.mxu0 %v10097
        %v11486 = vpop.f32.mrf.mxu0
        %v11487 = vadd.f32 %v11398, %v11486
        %v11488 = vpop.f32.mrf.mxu0
        %v11489 = vadd.f32 %v11400, %v11488
        %11490 = vmatmul.bf16.gmra.mxu0 %v10106
        %v11491 = vpop.f32.mrf.mxu0
        %v11492 = vadd.f32 %v11403, %v11491
        %v11493 = vpop.f32.mrf.mxu0
        %v11494 = vadd.f32 %v11405, %v11493
        %11495 = vmatmul.bf16.gmra.mxu0 %v10115
        %v11496 = vpop.f32.mrf.mxu0
        %v11497 = vadd.f32 %v11408, %v11496
        %v11498 = vpop.f32.mrf.mxu0
        %v11499 = vadd.f32 %v11410, %v11498
        %11500 = vmatmul.bf16.gmra.mxu0 %v10124
        %v11501 = vpop.f32.mrf.mxu0
        %v11502 = vadd.f32 %v11413, %v11501
        %v11503 = vpop.f32.mrf.mxu0
        %v11504 = vadd.f32 %v11415, %v11503
        %11505 = vmatmul.bf16.gmra.mxu0 %v10133
        %v11506 = vpop.f32.mrf.mxu0
        %v11507 = vadd.f32 %v11418, %v11506
        %v11508 = vpop.f32.mrf.mxu0
        %v11509 = vadd.f32 %v11420, %v11508
        %11510 = vdwg.mxu0
        %v11511 = vadd.f32 %v11432, %v11434
        %v11512 = vadd.f32 %v11511, %v11437
        %v11513 = vadd.f32 %v11512, %v11439
        %v11514 = vadd.f32 %v11513, %v11442
        %v11515 = vadd.f32 %v11514, %v11444
        %v11516 = vadd.f32 %v11515, %v11447
        %v11517 = vadd.f32 %v11516, %v11449
        %v11518 = vadd.f32 %v11517, %v11452
        %v11519 = vadd.f32 %v11518, %v11454
        %v11520 = vadd.f32 %v11519, %v11457
        %v11521 = vadd.f32 %v11520, %v11459
        %v11522 = vadd.f32 %v11521, %v11462
        %v11523 = vadd.f32 %v11522, %v11464
        %v11524 = vadd.f32 %v11523, %v11467
        %v11525 = vadd.f32 %v11524, %v11469
        %v11526 = vadd.f32 %v11525, %v11472
        %v11527 = vadd.f32 %v11526, %v11474
        %v11528 = vadd.f32 %v11527, %v11477
        %v11529 = vadd.f32 %v11528, %v11479
        %v11530 = vadd.f32 %v11529, %v11482
        %v11531 = vadd.f32 %v11530, %v11484
        %v11532 = vadd.f32 %v11531, %v11487
        %v11533 = vadd.f32 %v11532, %v11489
        %v11534 = vadd.f32 %v11533, %v11492
        %v11535 = vadd.f32 %v11534, %v11494
        %v11536 = vadd.f32 %v11535, %v11497
        %v11537 = vadd.f32 %v11536, %v11499
        %v11538 = vadd.f32 %v11537, %v11502
        %v11539 = vadd.f32 %v11538, %v11504
        %v11540 = vadd.f32 %v11539, %v11507
        %v11541 = vadd.f32 %v11540, %v11509
        %v11542 = vrot.slane %v11541, 4
        %v11543 = vadd.f32 %v11541, %v11542
        %v11544 = vrot.slane %v11543, 2
        %v11545 = vadd.f32 %v11543, %v11544
        %v11546 = vrot.slane %v11545, 1
        %v11547 = vadd.f32 %v11545, %v11546
        %v11548 = vmul.f32 %v11547, %v5797
        %v11549 = vsub.f32 %v11432, %v11548
        %v11550 = vsub.f32 %v11434, %v11548
        %v11551 = vsub.f32 %v11437, %v11548
        %v11552 = vsub.f32 %v11439, %v11548
        %v11553 = vsub.f32 %v11442, %v11548
        %v11554 = vsub.f32 %v11444, %v11548
        %v11555 = vsub.f32 %v11447, %v11548
        %v11556 = vsub.f32 %v11449, %v11548
        %v11557 = vsub.f32 %v11452, %v11548
        %v11558 = vsub.f32 %v11454, %v11548
        %v11559 = vsub.f32 %v11457, %v11548
        %v11560 = vsub.f32 %v11459, %v11548
        %v11561 = vsub.f32 %v11462, %v11548
        %v11562 = vsub.f32 %v11464, %v11548
        %v11563 = vsub.f32 %v11467, %v11548
        %v11564 = vsub.f32 %v11469, %v11548
        %v11565 = vsub.f32 %v11472, %v11548
        %v11566 = vsub.f32 %v11474, %v11548
        %v11567 = vsub.f32 %v11477, %v11548
        %v11568 = vsub.f32 %v11479, %v11548
        %v11569 = vsub.f32 %v11482, %v11548
        %v11570 = vsub.f32 %v11484, %v11548
        %v11571 = vsub.f32 %v11487, %v11548
        %v11572 = vsub.f32 %v11489, %v11548
        %v11573 = vsub.f32 %v11492, %v11548
        %v11574 = vsub.f32 %v11494, %v11548
        %v11575 = vsub.f32 %v11497, %v11548
        %v11576 = vsub.f32 %v11499, %v11548
        %v11577 = vsub.f32 %v11502, %v11548
        %v11578 = vsub.f32 %v11504, %v11548
        %v11579 = vsub.f32 %v11507, %v11548
        %v11580 = vsub.f32 %v11509, %v11548
        %v11581 = vmul.f32 %v11549, %v11549
        %v11582 = vmul.f32 %v11550, %v11550
        %v11583 = vmul.f32 %v11551, %v11551
        %v11584 = vmul.f32 %v11552, %v11552
        %v11585 = vmul.f32 %v11553, %v11553
        %v11586 = vmul.f32 %v11554, %v11554
        %v11587 = vmul.f32 %v11555, %v11555
        %v11588 = vmul.f32 %v11556, %v11556
        %v11589 = vmul.f32 %v11557, %v11557
        %v11590 = vmul.f32 %v11558, %v11558
        %v11591 = vmul.f32 %v11559, %v11559
        %v11592 = vmul.f32 %v11560, %v11560
        %v11593 = vmul.f32 %v11561, %v11561
        %v11594 = vmul.f32 %v11562, %v11562
        %v11595 = vmul.f32 %v11563, %v11563
        %v11596 = vmul.f32 %v11564, %v11564
        %v11597 = vmul.f32 %v11565, %v11565
        %v11598 = vmul.f32 %v11566, %v11566
        %v11599 = vmul.f32 %v11567, %v11567
        %v11600 = vmul.f32 %v11568, %v11568
        %v11601 = vmul.f32 %v11569, %v11569
        %v11602 = vmul.f32 %v11570, %v11570
        %v11603 = vmul.f32 %v11571, %v11571
        %v11604 = vmul.f32 %v11572, %v11572
        %v11605 = vmul.f32 %v11573, %v11573
        %v11606 = vmul.f32 %v11574, %v11574
        %v11607 = vmul.f32 %v11575, %v11575
        %v11608 = vmul.f32 %v11576, %v11576
        %v11609 = vmul.f32 %v11577, %v11577
        %v11610 = vmul.f32 %v11578, %v11578
        %v11611 = vmul.f32 %v11579, %v11579
        %v11612 = vmul.f32 %v11580, %v11580
        %v11613 = vadd.f32 %v11581, %v11582
        %v11614 = vadd.f32 %v11613, %v11583
        %v11615 = vadd.f32 %v11614, %v11584
        %v11616 = vadd.f32 %v11615, %v11585
        %v11617 = vadd.f32 %v11616, %v11586
        %v11618 = vadd.f32 %v11617, %v11587
        %v11619 = vadd.f32 %v11618, %v11588
        %v11620 = vadd.f32 %v11619, %v11589
        %v11621 = vadd.f32 %v11620, %v11590
        %v11622 = vadd.f32 %v11621, %v11591
        %v11623 = vadd.f32 %v11622, %v11592
        %v11624 = vadd.f32 %v11623, %v11593
        %v11625 = vadd.f32 %v11624, %v11594
        %v11626 = vadd.f32 %v11625, %v11595
        %v11627 = vadd.f32 %v11626, %v11596
        %v11628 = vadd.f32 %v11627, %v11597
        %v11629 = vadd.f32 %v11628, %v11598
        %v11630 = vadd.f32 %v11629, %v11599
        %v11631 = vadd.f32 %v11630, %v11600
        %v11632 = vadd.f32 %v11631, %v11601
        %v11633 = vadd.f32 %v11632, %v11602
        %v11634 = vadd.f32 %v11633, %v11603
        %v11635 = vadd.f32 %v11634, %v11604
        %v11636 = vadd.f32 %v11635, %v11605
        %v11637 = vadd.f32 %v11636, %v11606
        %v11638 = vadd.f32 %v11637, %v11607
        %v11639 = vadd.f32 %v11638, %v11608
        %v11640 = vadd.f32 %v11639, %v11609
        %v11641 = vadd.f32 %v11640, %v11610
        %v11642 = vadd.f32 %v11641, %v11611
        %v11643 = vadd.f32 %v11642, %v11612
        %v11644 = vrot.slane %v11643, 4
        %v11645 = vadd.f32 %v11643, %v11644
        %v11646 = vrot.slane %v11645, 2
        %v11647 = vadd.f32 %v11645, %v11646
        %v11648 = vrot.slane %v11647, 1
        %v11649 = vadd.f32 %v11647, %v11648
        %v11650 = vmul.f32 %v11649, %v5797
        %v11651 = vadd.f32 %v11650, 1e-05
        %v11652 = vrsqrt.pop %v11651
        %v11653 = vmul.f32 %v11652, %v11651
        %v11654 = vmul.f32 %v11653, %v11652
        %v11655 = vmul.f32 0.5, %v11654
        %v11656 = vsub.f32 1.5, %v11655
        %v11657 = vmul.f32 %v11652, %v11656
        %vm11658 = vweird.f32 %v11651
        %vm11659 = vweird.f32 %v11652
        %vm11660 = vmor %vm11658, %vm11659
        %v11661 = vsel %vm11660, %v11652, %v11657
        %v11662 = vmul.f32 %v11549, %v11661
        %v11663 = vmul.f32 %v11550, %v11661
        %v11664 = vmul.f32 %v11551, %v11661
        %v11665 = vmul.f32 %v11552, %v11661
        %v11666 = vmul.f32 %v11553, %v11661
        %v11667 = vmul.f32 %v11554, %v11661
        %v11668 = vmul.f32 %v11555, %v11661
        %v11669 = vmul.f32 %v11556, %v11661
        %v11670 = vmul.f32 %v11557, %v11661
        %v11671 = vmul.f32 %v11558, %v11661
        %v11672 = vmul.f32 %v11559, %v11661
        %v11673 = vmul.f32 %v11560, %v11661
        %v11674 = vmul.f32 %v11561, %v11661
        %v11675 = vmul.f32 %v11562, %v11661
        %v11676 = vmul.f32 %v11563, %v11661
        %v11677 = vmul.f32 %v11564, %v11661
        %v11678 = vmul.f32 %v11565, %v11661
        %v11679 = vmul.f32 %v11566, %v11661
        %v11680 = vmul.f32 %v11567, %v11661
        %v11681 = vmul.f32 %v11568, %v11661
        %v11682 = vmul.f32 %v11569, %v11661
        %v11683 = vmul.f32 %v11570, %v11661
        %v11684 = vmul.f32 %v11571, %v11661
        %v11685 = vmul.f32 %v11572, %v11661
        %v11686 = vmul.f32 %v11573, %v11661
        %v11687 = vmul.f32 %v11574, %v11661
        %v11688 = vmul.f32 %v11575, %v11661
        %v11689 = vmul.f32 %v11576, %v11661
        %v11690 = vmul.f32 %v11577, %v11661
        %v11691 = vmul.f32 %v11578, %v11661
        %v11692 = vmul.f32 %v11579, %v11661
        %v11693 = vmul.f32 %v11580, %v11661
        %v11694 = vld [vmem:[%s168] sm:$0xff]
        %v11695 = vld [vmem:[%s168 + $0x8] sm:$0xff]
        %v11696 = vld [vmem:[%s168 + $0x10] sm:$0xff]
        %v11697 = vld [vmem:[%s168 + $0x18] sm:$0xff]
        %v11698 = vld [vmem:[%s168 + $0x20] sm:$0xff]
        %v11699 = vld [vmem:[%s168 + $0x28] sm:$0xff]
        %v11700 = vld [vmem:[%s168 + $0x30] sm:$0xff]
        %v11701 = vld [vmem:[%s168 + $0x38] sm:$0xff]
        %v11702 = vld [vmem:[%s168 + $0x40] sm:$0xff]
        %v11703 = vld [vmem:[%s168 + $0x48] sm:$0xff]
        %v11704 = vld [vmem:[%s168 + $0x50] sm:$0xff]
        %v11705 = vld [vmem:[%s168 + $0x58] sm:$0xff]
        %v11706 = vld [vmem:[%s168 + $0x60] sm:$0xff]
        %v11707 = vld [vmem:[%s168 + $0x68] sm:$0xff]
        %v11708 = vld [vmem:[%s168 + $0x70] sm:$0xff]
        %v11709 = vld [vmem:[%s168 + $0x78] sm:$0xff]
        %v11710 = vld [vmem:[%s168 + $0x80] sm:$0xff]
        %v11711 = vld [vmem:[%s168 + $0x88] sm:$0xff]
        %v11712 = vld [vmem:[%s168 + $0x90] sm:$0xff]
        %v11713 = vld [vmem:[%s168 + $0x98] sm:$0xff]
        %v11714 = vld [vmem:[%s168 + $0xa0] sm:$0xff]
        %v11715 = vld [vmem:[%s168 + $0xa8] sm:$0xff]
        %v11716 = vld [vmem:[%s168 + $0xb0] sm:$0xff]
        %v11717 = vld [vmem:[%s168 + $0xb8] sm:$0xff]
        %v11718 = vld [vmem:[%s168 + $0xc0] sm:$0xff]
        %v11719 = vld [vmem:[%s168 + $0xc8] sm:$0xff]
        %v11720 = vld [vmem:[%s168 + $0xd0] sm:$0xff]
        %v11721 = vld [vmem:[%s168 + $0xd8] sm:$0xff]
        %v11722 = vld [vmem:[%s168 + $0xe0] sm:$0xff]
        %v11723 = vld [vmem:[%s168 + $0xe8] sm:$0xff]
        %v11724 = vld [vmem:[%s168 + $0xf0] sm:$0xff]
        %v11725 = vld [vmem:[%s168 + $0xf8] sm:$0xff]
        %v11726 = vadd.f32 %v11662, %v11694
        %v11727 = vadd.f32 %v11663, %v11695
        %v11728 = vadd.f32 %v11664, %v11696
        %v11729 = vadd.f32 %v11665, %v11697
        %v11730 = vadd.f32 %v11666, %v11698
        %v11731 = vadd.f32 %v11667, %v11699
        %v11732 = vadd.f32 %v11668, %v11700
        %v11733 = vadd.f32 %v11669, %v11701
        %v11734 = vadd.f32 %v11670, %v11702
        %v11735 = vadd.f32 %v11671, %v11703
        %v11736 = vadd.f32 %v11672, %v11704
        %v11737 = vadd.f32 %v11673, %v11705
        %v11738 = vadd.f32 %v11674, %v11706
        %v11739 = vadd.f32 %v11675, %v11707
        %v11740 = vadd.f32 %v11676, %v11708
        %v11741 = vadd.f32 %v11677, %v11709
        %v11742 = vadd.f32 %v11678, %v11710
        %v11743 = vadd.f32 %v11679, %v11711
        %v11744 = vadd.f32 %v11680, %v11712
        %v11745 = vadd.f32 %v11681, %v11713
        %v11746 = vadd.f32 %v11682, %v11714
        %v11747 = vadd.f32 %v11683, %v11715
        %v11748 = vadd.f32 %v11684, %v11716
        %v11749 = vadd.f32 %v11685, %v11717
        %v11750 = vadd.f32 %v11686, %v11718
        %v11751 = vadd.f32 %v11687, %v11719
        %v11752 = vadd.f32 %v11688, %v11720
        %v11753 = vadd.f32 %v11689, %v11721
        %v11754 = vadd.f32 %v11690, %v11722
        %v11755 = vadd.f32 %v11691, %v11723
        %v11756 = vadd.f32 %v11692, %v11724
        %v11757 = vadd.f32 %v11693, %v11725
        %11758 = vst [vmem:[%s163] sm:$0xff] %v11726
        %11759 = vst [vmem:[%s163 + $0x8] sm:$0xff] %v11727
        %11760 = vst [vmem:[%s163 + $0x10] sm:$0xff] %v11728
        %11761 = vst [vmem:[%s163 + $0x18] sm:$0xff] %v11729
        %11762 = vst [vmem:[%s163 + $0x20] sm:$0xff] %v11730
        %11763 = vst [vmem:[%s163 + $0x28] sm:$0xff] %v11731
        %11764 = vst [vmem:[%s163 + $0x30] sm:$0xff] %v11732
        %11765 = vst [vmem:[%s163 + $0x38] sm:$0xff] %v11733
        %11766 = vst [vmem:[%s163 + $0x40] sm:$0xff] %v11734
        %11767 = vst [vmem:[%s163 + $0x48] sm:$0xff] %v11735
        %11768 = vst [vmem:[%s163 + $0x50] sm:$0xff] %v11736
        %11769 = vst [vmem:[%s163 + $0x58] sm:$0xff] %v11737
        %11770 = vst [vmem:[%s163 + $0x60] sm:$0xff] %v11738
        %11771 = vst [vmem:[%s163 + $0x68] sm:$0xff] %v11739
        %11772 = vst [vmem:[%s163 + $0x70] sm:$0xff] %v11740
        %11773 = vst [vmem:[%s163 + $0x78] sm:$0xff] %v11741
        %11774 = vst [vmem:[%s163 + $0x80] sm:$0xff] %v11742
        %11775 = vst [vmem:[%s163 + $0x88] sm:$0xff] %v11743
        %11776 = vst [vmem:[%s163 + $0x90] sm:$0xff] %v11744
        %11777 = vst [vmem:[%s163 + $0x98] sm:$0xff] %v11745
        %11778 = vst [vmem:[%s163 + $0xa0] sm:$0xff] %v11746
        %11779 = vst [vmem:[%s163 + $0xa8] sm:$0xff] %v11747
        %11780 = vst [vmem:[%s163 + $0xb0] sm:$0xff] %v11748
        %11781 = vst [vmem:[%s163 + $0xb8] sm:$0xff] %v11749
        %11782 = vst [vmem:[%s163 + $0xc0] sm:$0xff] %v11750
        %11783 = vst [vmem:[%s163 + $0xc8] sm:$0xff] %v11751
        %11784 = vst [vmem:[%s163 + $0xd0] sm:$0xff] %v11752
        %11785 = vst [vmem:[%s163 + $0xd8] sm:$0xff] %v11753
        %11786 = vst [vmem:[%s163 + $0xe0] sm:$0xff] %v11754
        %11787 = vst [vmem:[%s163 + $0xe8] sm:$0xff] %v11755
        %11788 = vst [vmem:[%s163 + $0xf0] sm:$0xff] %v11756
        %11789 = vst [vmem:[%s163 + $0xf8] sm:$0xff] %v11757
        %s11790 = sand.u32 %s93, 1
        %s11791 = scalar_lea.sflag [#allocation5], %s11790
        %s11792 = sand.u32 %s93, 1
        %s11793 = smul.addr %s11792, 256
        %s11794 = scalar_lea.vmem [#allocation4], %s11793
        // Predicated region
        $region33: #{resnet_block_pallas.1} parent=31 // pred_check
          %p11795 = pneg %p103
        $region34: #{resnet_block_pallas.1} parent=31 // pred_check_branch
          %11797 = sbr.rel (%p11795) target = $region36
        $region35: #{resnet_block_pallas.1} parent=31 // pred_region
          %11799 = vsyncadd %s11791, 0
          %s11800 = smul.addr %s17, 32
          %s11801 = smul.addr %s11800, 8
          %s11802 = scalar_lea.hbm %s3, %s11801
          %s11803 = sshll.u32 %s11794, 4
          %s11804 = int_to_ptr.vmem [resolvable:$true] %s11803
          %s11805 = sshll.u32 %s11802, 4
          %s11806 = int_to_ptr.hbm [resolvable:$true] %s11805
          %11811 = dma.vmem_to_hbm [thread:$0]  %s11804, 4096, %s11806, %s11791, 128, 128, 8
        $region36: #{resnet_block_pallas.1} parent=31 // pred_fallthru
          _
      $region32: #{resnet_block_pallas.1} parent=5 // pred_fallthru
        _
      %p11812 = scmp.le.s32.totalorder 2, %s12
      // Predicated region
      $region37: #{resnet_block_pallas.1} parent=5 // pred_check
        %p11813 = pneg %p11812
      $region38: #{resnet_block_pallas.1} parent=5 // pred_check_branch
        %11815 = sbr.rel (%p11813) target = $region40
      $region39: #{resnet_block_pallas.1} parent=5 // pred_region
        %s11816 = ssub.s32 %s12, 2
        // Predicated region
        $region41: #{resnet_block_pallas.1} parent=39 // pred_check
          %p11817 = pneg %p109
        $region42: #{resnet_block_pallas.1} parent=39 // pred_check_branch
          %11819 = sbr.rel (%p11817) target = $region44
        $region43: #{resnet_block_pallas.1} parent=39 // pred_region
          %s11820 = sand.u32 %s94, 1
          %s11821 = scalar_lea.sflag [#allocation5], %s11820
          %s11822 = sand.u32 %s94, 1
          %s11823 = smul.addr %s11822, 256
          %s11824 = scalar_lea.vmem [#allocation4], %s11823
          %11826 = dma.done %s11821, 4096
        $region44: #{resnet_block_pallas.1} parent=39 // pred_fallthru
          _
      $region40: #{resnet_block_pallas.1} parent=5 // pred_fallthru
        _
    $region6: #{resnet_block_pallas.1} parent=1 // loop_footer
      %s16 = sadd.s32 1, %s12
    $region7: #{resnet_block_pallas.1} parent=1 // loop_footer_branch
      %11 = sbr.rel target = $region3
    $region8: #{resnet_block_pallas.1} parent=1 // loop_exit
      _
    %11827 = vsyncpa [#allocation5], 1
    %s11828 = scalar_lea.sflag [#allocation5], 1
    %11829 = vsyncpa %s11828, 1

</llo_original>
